<compile_context>
chip_gen: v6e
topology: v6e:2x2x1
jax: 0.10.0
libtpu: 0.0.40
codegen_flags: <defaults>
</compile_context>

<pallas_src>
import functools

import numpy as np
import jax
import jax.numpy as jnp
from jax.experimental import pallas as pl
from jax.experimental.pallas import tpu as pltpu


# ------------------------------ fused kernel --------------------------------

def _rnd_fused_kernel(
    a0_ref,                                     # (B*L, C_in) input activations
    sel1_ref, sel2_ref, sel3_ref, selF_ref,     # constant tap-selection matrices
    pc1w_ref, pc1b_ref, pc2w_ref, pc2b_ref, pc3w_ref, pc3b_ref,
    pf1w_ref, pf1b_ref, pf2w_ref, pf2b_ref, pf3w_ref, pf3b_ref,
    tc1w_ref, tc1b_ref, tc2w_ref, tc2b_ref, tc3w_ref, tc3b_ref,
    tfw_ref, tfb_ref,
    o_ref,                                      # (B, 1) pairwise distance
):
    f32 = jnp.float32

    def act(y, kind):
        if kind == "lrelu":                     # nn.LeakyReLU default slope 0.01
            return jnp.where(y >= 0.0, y, 0.01 * y)
        if kind == "relu":
            return jnp.maximum(y, 0.0)
        return y

    def make_patches(a, sel_ref):
        # One (R_out, C_in) window per kernel tap: S_k @ A (static unrolled loop).
        return [
            jnp.dot(sel_ref[k], a, preferred_element_type=f32)
            for k in range(sel_ref.shape[0])
        ]

    def tap_matmul(patches, w_ref, b_ref, kind):
        # sum_k patch_k @ W_k, then bias + activation (f32 accumulation on MXU).
        acc = jnp.dot(patches[0], w_ref[0], preferred_element_type=f32)
        for k in range(1, len(patches)):
            acc = acc + jnp.dot(patches[k], w_ref[k], preferred_element_type=f32)
        return act(acc + b_ref[...], kind)

    def dense(a, w_ref, b_ref, kind):
        y = jnp.dot(a, w_ref[...], preferred_element_type=f32) + b_ref[...]
        return act(y, kind)

    a0 = a0_ref[...]
    patches1 = make_patches(a0, sel1_ref)       # conv1 windows, shared by branches

    def conv_fc_stack(c1w, c1b, c2w, c2b, c3w, c3b, fw, fb, fkind):
        h = tap_matmul(patches1, c1w, c1b, "lrelu")                     # conv1
        h = tap_matmul(make_patches(h, sel2_ref), c2w, c2b, "lrelu")    # conv2
        h = tap_matmul(make_patches(h, sel3_ref), c3w, c3b, "lrelu")    # conv3
        # Flatten + Linear (flatten order already folded into fw's layout)
        return tap_matmul(make_patches(h, selF_ref), fw, fb, fkind)

    # target branch: conv stack + Linear(880 -> output_dim)
    t_feat = conv_fc_stack(tc1w_ref, tc1b_ref, tc2w_ref, tc2b_ref,
                           tc3w_ref, tc3b_ref, tfw_ref, tfb_ref, None)

    # predictor branch: conv stack + Linear(880->440)+ReLU + Linear+ReLU + Linear
    p = conv_fc_stack(pc1w_ref, pc1b_ref, pc2w_ref, pc2b_ref,
                      pc3w_ref, pc3b_ref, pf1w_ref, pf1b_ref, "relu")
    p = dense(p, pf2w_ref, pf2b_ref, "relu")
    p_feat = dense(p, pf3w_ref, pf3b_ref, None)

    # nn.PairwiseDistance(p=2): ||x1 - x2 + eps||_2 with eps = 1e-6
    d = p_feat - t_feat + 1e-6
    o_ref[...] = jnp.sqrt(jnp.sum(d * d, axis=-1, keepdims=True))


# --------------------- host-side selection-matrix builders ------------------

@functools.lru_cache(maxsize=None)
def _conv_selectors(B, L_in, K, stride):
    """S_k (K, B*L_out, B*L_in): row b*L_out+lo picks input row b*L_in+lo*stride+k."""
    L_out = (L_in - K) // stride + 1
    sel = np.zeros((K, B * L_out, B * L_in), np.float32)
    for k in range(K):
        for b in range(B):
            for lo in range(L_out):
                sel[k, b * L_out + lo, b * L_in + lo * stride + k] = 1.0
    return jnp.asarray(sel), L_out


@functools.lru_cache(maxsize=None)
def _flatten_selectors(B, L):
    """T_l (L, B, B*L): tap l picks row b*L + l for every batch b."""
    sel = np.zeros((L, B, B * L), np.float32)
    for l in range(L):
        for b in range(B):
            sel[l, b, b * L + l] = 1.0
    return jnp.asarray(sel)


# ------------------------------ parameters ----------------------------------

def orthogonal(key, shape, gain):
    """Same semantics as torch.nn.init.orthogonal_ on a (rows, cols) matrix."""
    rows, cols = shape
    a = jax.random.normal(key, (max(rows, cols), min(rows, cols)), dtype=jnp.float32)
    q, r = jnp.linalg.qr(a)
    q = q * jnp.sign(jnp.diagonal(r))
    if rows < cols:
        q = q.T
    return gain * q[:rows, :cols]


def init_params(key, in_channels, output_dim, L):
    """Orthogonal(gain=sqrt(2)) weights, zero biases, pre-arranged for the kernel."""
    gain = float(np.sqrt(2.0))
    L1 = (L - 4) // 2 + 1
    L2 = (L1 - 3) // 2 + 1
    L3 = (L2 - 3) // 1 + 1
    assert 176 * L3 == 880, "spatial size must match nn.Linear(880, ...)"
    ks = jax.random.split(key, 10)

    def conv_w(k, c_out, c_in, ksz):
        # torch: orthogonal_ acts on the flattened (C_out, C_in*K) view.
        w = orthogonal(k, (c_out, c_in * ksz), gain).reshape(c_out, c_in, ksz)
        return jnp.transpose(w, (2, 1, 0))            # (K, C_in, C_out); W_k = w[:, :, k].T

    def flat_linear_w(k, out_f, c3, l3):
        # Linear consumes Flatten order j = c*L3 + l; re-arrange so spatial tap l
        # supplies the (C3, out) weight slice.
        w = orthogonal(k, (out_f, c3 * l3), gain).reshape(out_f, c3, l3)
        return jnp.transpose(w, (2, 1, 0))            # (L3, C3, out)

    def linear_w(k, out_f, in_f):
        return orthogonal(k, (out_f, in_f), gain).T   # (in, out)

    def bias(n):
        return jnp.zeros((1, n), jnp.float32)

    return {
        # predictor
        "p_conv1_w": conv_w(ks[0], 88, in_channels, 4),      "p_conv1_b": bias(88),
        "p_conv2_w": conv_w(ks[1], 176, 88, 3),              "p_conv2_b": bias(176),
        "p_conv3_w": conv_w(ks[2], 176, 176, 3),             "p_conv3_b": bias(176),
        "p_fc1_w": flat_linear_w(ks[3], 440, 176, L3),       "p_fc1_b": bias(440),
        "p_fc2_w": linear_w(ks[4], output_dim, 440),         "p_fc2_b": bias(output_dim),
        "p_fc3_w": linear_w(ks[5], output_dim, output_dim),  "p_fc3_b": bias(output_dim),
        # target (frozen in torch; independent weights)
        "t_conv1_w": conv_w(ks[6], 88, in_channels, 4),      "t_conv1_b": bias(88),
        "t_conv2_w": conv_w(ks[7], 176, 88, 3),              "t_conv2_b": bias(176),
        "t_conv3_w": conv_w(ks[8], 176, 176, 3),             "t_conv3_b": bias(176),
        "t_fc_w": flat_linear_w(ks[9], output_dim, 176, L3), "t_fc_b": bias(output_dim),
    }


# --------------------------- cost-estimate helper ----------------------------

def _cost_estimate(B, C_in, L, L1, L2, L3, out_dim, args):
    mm = 0
    # conv1 window gathers (shared)
    mm += 4 * 2 * (B * L1) * (B * L) * C_in
    for _branch in ("p", "t"):
        mm += 4 * 2 * (B * L1) * C_in * 88                      # conv1 taps
        mm += 3 * 2 * (B * L2) * (B * L1) * 88                  # conv2 gathers
        mm += 3 * 2 * (B * L2) * 88 * 176                       # conv2 taps
        mm += 3 * 2 * (B * L3) * (B * L2) * 176                 # conv3 gathers
        mm += 3 * 2 * (B * L3) * 176 * 176                      # conv3 taps
        mm += L3 * 2 * B * (B * L3) * 176                       # flatten gathers
    mm += L3 * 2 * B * 176 * 440                                # predictor fc1
    mm += L3 * 2 * B * 176 * out_dim                            # target fc
    mm += 2 * B * 440 * out_dim                                 # predictor fc2
    mm += 2 * B * out_dim * out_dim                             # predictor fc3
    bytes_in = sum(int(np.prod(a.shape)) * 4 for a in args)
    return pl.CostEstimate(flops=mm, transcendentals=B,         # one sqrt per row
                           bytes_accessed=bytes_in + B * 4)


# -------------------------------- forward -----------------------------------

def rnd_forward(params, x):
    """x: (B, C_in, L) float32 -> predict_error (B,) float32."""
    B, C_in, L = x.shape
    sel1, L1 = _conv_selectors(B, L, 4, 2)
    sel2, L2 = _conv_selectors(B, L1, 3, 2)
    sel3, L3 = _conv_selectors(B, L2, 3, 1)
    selF = _flatten_selectors(B, L3)
    out_dim = params["p_fc3_w"].shape[1]

    # (B, C, L) -> (B*L, C): rows = (batch, position), channels on the lane axis.
    a0 = jnp.transpose(x, (0, 2, 1)).reshape(B * L, C_in)

    args = (
        a0, sel1, sel2, sel3, selF,
        params["p_conv1_w"], params["p_conv1_b"],
        params["p_conv2_w"], params["p_conv2_b"],
        params["p_conv3_w"], params["p_conv3_b"],
        params["p_fc1_w"], params["p_fc1_b"],
        params["p_fc2_w"], params["p_fc2_b"],
        params["p_fc3_w"], params["p_fc3_b"],
        params["t_conv1_w"], params["t_conv1_b"],
        params["t_conv2_w"], params["t_conv2_b"],
        params["t_conv3_w"], params["t_conv3_b"],
        params["t_fc_w"], params["t_fc_b"],
    )

    # Single invocation, no grid: every operand is a full-array VMEM resident
    # (~4 MB padded total, well inside the scoped-VMEM budget on v5e/v6e/v7x).
    out = pl.pallas_call(
        _rnd_fused_kernel,
        out_shape=jax.ShapeDtypeStruct((B, 1), jnp.float32),
        compiler_params=pltpu.CompilerParams(vmem_limit_bytes=32 * 1024 * 1024),
        cost_estimate=_cost_estimate(B, C_in, L, L1, L2, L3, out_dim, args),
    )(*args)
    return out[:, 0]


# ---------------------------------- main -------------------------------------

if __name__ == "__main__":
    key = jax.random.PRNGKey(0)
    k_x, k_p = jax.random.split(key)

    # L = 32 satisfies the Flatten -> Linear(880) constraint: 32 -> 15 -> 7 -> 5,
    # and 176 * 5 = 880.
    B, C_in, L = 2, 4, 32
    output_dim = 32

    x = jax.random.normal(k_x, (B, C_in, L), dtype=jnp.float32)
    params = init_params(k_p, C_in, output_dim, L)

    fwd = jax.jit(rnd_forward)
    out = fwd(params, x)
    jax.block_until_ready(out)

    assert out.shape == (B,) and out.dtype == jnp.float32
    assert bool(jnp.all(jnp.isfinite(out)))
    print("KERNEL_OK")
</pallas_src>

<mosaic_0001>
module attributes {stable_mosaic.version = 11 : i64} {
  func.func @_rnd_fused_kernel(%arg0: memref<64x4xf32, #tpu.memory_space<vmem>>, %arg1: memref<4x30x64xf32, #tpu.memory_space<vmem>>, %arg2: memref<3x14x30xf32, #tpu.memory_space<vmem>>, %arg3: memref<3x10x14xf32, #tpu.memory_space<vmem>>, %arg4: memref<5x2x10xf32, #tpu.memory_space<vmem>>, %arg5: memref<4x4x88xf32, #tpu.memory_space<vmem>>, %arg6: memref<1x88xf32, #tpu.memory_space<vmem>>, %arg7: memref<3x88x176xf32, #tpu.memory_space<vmem>>, %arg8: memref<1x176xf32, #tpu.memory_space<vmem>>, %arg9: memref<3x176x176xf32, #tpu.memory_space<vmem>>, %arg10: memref<1x176xf32, #tpu.memory_space<vmem>>, %arg11: memref<5x176x440xf32, #tpu.memory_space<vmem>>, %arg12: memref<1x440xf32, #tpu.memory_space<vmem>>, %arg13: memref<440x32xf32, #tpu.memory_space<vmem>>, %arg14: memref<1x32xf32, #tpu.memory_space<vmem>>, %arg15: memref<32x32xf32, #tpu.memory_space<vmem>>, %arg16: memref<1x32xf32, #tpu.memory_space<vmem>>, %arg17: memref<4x4x88xf32, #tpu.memory_space<vmem>>, %arg18: memref<1x88xf32, #tpu.memory_space<vmem>>, %arg19: memref<3x88x176xf32, #tpu.memory_space<vmem>>, %arg20: memref<1x176xf32, #tpu.memory_space<vmem>>, %arg21: memref<3x176x176xf32, #tpu.memory_space<vmem>>, %arg22: memref<1x176xf32, #tpu.memory_space<vmem>>, %arg23: memref<5x176x32xf32, #tpu.memory_space<vmem>>, %arg24: memref<1x32xf32, #tpu.memory_space<vmem>>, %arg25: memref<2x1xf32, #tpu.memory_space<vmem>>) attributes {dimension_semantics = [], scalar_prefetch = 0 : i64, scratch_operands = 0 : i64, tpu.core_type = #tpu.core_type<tc>} {
    %c0 = arith.constant 0 : index
    %c0_0 = arith.constant 0 : index
    %0 = vector.load %arg0[%c0, %c0_0] : memref<64x4xf32, #tpu.memory_space<vmem>>, vector<64x4xf32>
    %c0_1 = arith.constant 0 : index
    %c0_2 = arith.constant 0 : index
    %c0_3 = arith.constant 0 : index
    %1 = vector.load %arg1[%c0_1, %c0_2, %c0_3] : memref<4x30x64xf32, #tpu.memory_space<vmem>>, vector<1x30x64xf32>
    %2 = vector.shape_cast %1 : vector<1x30x64xf32> to vector<30x64xf32>
    %cst = arith.constant dense<0.000000e+00> : vector<30x4xf32>
    %3 = tpu.matmul %2, %0, %cst {dimension_numbers = #tpu.dot_dimension_numbers<[1], [0], [0], [1], [0, 0, 1, 1], [], []>} : vector<30x64xf32>, vector<64x4xf32>, vector<30x4xf32> -> vector<30x4xf32>
    %c1 = arith.constant 1 : index
    %c0_4 = arith.constant 0 : index
    %c0_5 = arith.constant 0 : index
    %4 = vector.load %arg1[%c1, %c0_4, %c0_5] : memref<4x30x64xf32, #tpu.memory_space<vmem>>, vector<1x30x64xf32>
    %5 = vector.shape_cast %4 : vector<1x30x64xf32> to vector<30x64xf32>
    %cst_6 = arith.constant dense<0.000000e+00> : vector<30x4xf32>
    %6 = tpu.matmul %5, %0, %cst_6 {dimension_numbers = #tpu.dot_dimension_numbers<[1], [0], [0], [1], [0, 0, 1, 1], [], []>} : vector<30x64xf32>, vector<64x4xf32>, vector<30x4xf32> -> vector<30x4xf32>
    %c2 = arith.constant 2 : index
    %c0_7 = arith.constant 0 : index
    %c0_8 = arith.constant 0 : index
    %7 = vector.load %arg1[%c2, %c0_7, %c0_8] : memref<4x30x64xf32, #tpu.memory_space<vmem>>, vector<1x30x64xf32>
    %8 = vector.shape_cast %7 : vector<1x30x64xf32> to vector<30x64xf32>
    %cst_9 = arith.constant dense<0.000000e+00> : vector<30x4xf32>
    %9 = tpu.matmul %8, %0, %cst_9 {dimension_numbers = #tpu.dot_dimension_numbers<[1], [0], [0], [1], [0, 0, 1, 1], [], []>} : vector<30x64xf32>, vector<64x4xf32>, vector<30x4xf32> -> vector<30x4xf32>
    %c3 = arith.constant 3 : index
    %c0_10 = arith.constant 0 : index
    %c0_11 = arith.constant 0 : index
    %10 = vector.load %arg1[%c3, %c0_10, %c0_11] : memref<4x30x64xf32, #tpu.memory_space<vmem>>, vector<1x30x64xf32>
    %11 = vector.shape_cast %10 : vector<1x30x64xf32> to vector<30x64xf32>
    %cst_12 = arith.constant dense<0.000000e+00> : vector<30x4xf32>
    %12 = tpu.matmul %11, %0, %cst_12 {dimension_numbers = #tpu.dot_dimension_numbers<[1], [0], [0], [1], [0, 0, 1, 1], [], []>} : vector<30x64xf32>, vector<64x4xf32>, vector<30x4xf32> -> vector<30x4xf32>
    %c0_13 = arith.constant 0 : index
    %c0_14 = arith.constant 0 : index
    %c0_15 = arith.constant 0 : index
    %13 = vector.load %arg17[%c0_13, %c0_14, %c0_15] : memref<4x4x88xf32, #tpu.memory_space<vmem>>, vector<1x4x88xf32>
    %14 = vector.shape_cast %13 : vector<1x4x88xf32> to vector<4x88xf32>
    %cst_16 = arith.constant dense<0.000000e+00> : vector<30x88xf32>
    %15 = tpu.matmul %3, %14, %cst_16 {dimension_numbers = #tpu.dot_dimension_numbers<[1], [0], [0], [1], [0, 0, 1, 1], [], []>} : vector<30x4xf32>, vector<4x88xf32>, vector<30x88xf32> -> vector<30x88xf32>
    %c1_17 = arith.constant 1 : index
    %c0_18 = arith.constant 0 : index
    %c0_19 = arith.constant 0 : index
    %16 = vector.load %arg17[%c1_17, %c0_18, %c0_19] : memref<4x4x88xf32, #tpu.memory_space<vmem>>, vector<1x4x88xf32>
    %17 = vector.shape_cast %16 : vector<1x4x88xf32> to vector<4x88xf32>
    %cst_20 = arith.constant dense<0.000000e+00> : vector<30x88xf32>
    %18 = tpu.matmul %6, %17, %cst_20 {dimension_numbers = #tpu.dot_dimension_numbers<[1], [0], [0], [1], [0, 0, 1, 1], [], []>} : vector<30x4xf32>, vector<4x88xf32>, vector<30x88xf32> -> vector<30x88xf32>
    %19 = arith.addf %15, %18 : vector<30x88xf32>
    %c2_21 = arith.constant 2 : index
    %c0_22 = arith.constant 0 : index
    %c0_23 = arith.constant 0 : index
    %20 = vector.load %arg17[%c2_21, %c0_22, %c0_23] : memref<4x4x88xf32, #tpu.memory_space<vmem>>, vector<1x4x88xf32>
    %21 = vector.shape_cast %20 : vector<1x4x88xf32> to vector<4x88xf32>
    %cst_24 = arith.constant dense<0.000000e+00> : vector<30x88xf32>
    %22 = tpu.matmul %9, %21, %cst_24 {dimension_numbers = #tpu.dot_dimension_numbers<[1], [0], [0], [1], [0, 0, 1, 1], [], []>} : vector<30x4xf32>, vector<4x88xf32>, vector<30x88xf32> -> vector<30x88xf32>
    %23 = arith.addf %19, %22 : vector<30x88xf32>
    %c3_25 = arith.constant 3 : index
    %c0_26 = arith.constant 0 : index
    %c0_27 = arith.constant 0 : index
    %24 = vector.load %arg17[%c3_25, %c0_26, %c0_27] : memref<4x4x88xf32, #tpu.memory_space<vmem>>, vector<1x4x88xf32>
    %25 = vector.shape_cast %24 : vector<1x4x88xf32> to vector<4x88xf32>
    %cst_28 = arith.constant dense<0.000000e+00> : vector<30x88xf32>
    %26 = tpu.matmul %12, %25, %cst_28 {dimension_numbers = #tpu.dot_dimension_numbers<[1], [0], [0], [1], [0, 0, 1, 1], [], []>} : vector<30x4xf32>, vector<4x88xf32>, vector<30x88xf32> -> vector<30x88xf32>
    %27 = arith.addf %23, %26 : vector<30x88xf32>
    %c0_29 = arith.constant 0 : index
    %c0_30 = arith.constant 0 : index
    %28 = vector.load %arg18[%c0_29, %c0_30] : memref<1x88xf32, #tpu.memory_space<vmem>>, vector<1x88xf32>
    %29 = vector.broadcast %28 : vector<1x88xf32> to vector<30x88xf32>
    %30 = arith.addf %27, %29 : vector<30x88xf32>
    %cst_31 = arith.constant 0.000000e+00 : f32
    %31 = vector.broadcast %cst_31 : f32 to vector<30x88xf32>
    %32 = arith.cmpf oge, %30, %31 : vector<30x88xf32>
    %cst_32 = arith.constant 0.00999999977 : f32
    %33 = vector.broadcast %cst_32 : f32 to vector<30x88xf32>
    %34 = arith.mulf %33, %30 : vector<30x88xf32>
    %35 = arith.select %32, %30, %34 : vector<30x88xi1>, vector<30x88xf32>
    %c0_33 = arith.constant 0 : index
    %c0_34 = arith.constant 0 : index
    %c0_35 = arith.constant 0 : index
    %36 = vector.load %arg2[%c0_33, %c0_34, %c0_35] : memref<3x14x30xf32, #tpu.memory_space<vmem>>, vector<1x14x30xf32>
    %37 = vector.shape_cast %36 : vector<1x14x30xf32> to vector<14x30xf32>
    %cst_36 = arith.constant dense<0.000000e+00> : vector<14x88xf32>
    %38 = tpu.matmul %37, %35, %cst_36 {dimension_numbers = #tpu.dot_dimension_numbers<[1], [0], [0], [1], [0, 0, 1, 1], [], []>} : vector<14x30xf32>, vector<30x88xf32>, vector<14x88xf32> -> vector<14x88xf32>
    %c1_37 = arith.constant 1 : index
    %c0_38 = arith.constant 0 : index
    %c0_39 = arith.constant 0 : index
    %39 = vector.load %arg2[%c1_37, %c0_38, %c0_39] : memref<3x14x30xf32, #tpu.memory_space<vmem>>, vector<1x14x30xf32>
    %40 = vector.shape_cast %39 : vector<1x14x30xf32> to vector<14x30xf32>
    %cst_40 = arith.constant dense<0.000000e+00> : vector<14x88xf32>
    %41 = tpu.matmul %40, %35, %cst_40 {dimension_numbers = #tpu.dot_dimension_numbers<[1], [0], [0], [1], [0, 0, 1, 1], [], []>} : vector<14x30xf32>, vector<30x88xf32>, vector<14x88xf32> -> vector<14x88xf32>
    %c2_41 = arith.constant 2 : index
    %c0_42 = arith.constant 0 : index
    %c0_43 = arith.constant 0 : index
    %42 = vector.load %arg2[%c2_41, %c0_42, %c0_43] : memref<3x14x30xf32, #tpu.memory_space<vmem>>, vector<1x14x30xf32>
    %43 = vector.shape_cast %42 : vector<1x14x30xf32> to vector<14x30xf32>
    %cst_44 = arith.constant dense<0.000000e+00> : vector<14x88xf32>
    %44 = tpu.matmul %43, %35, %cst_44 {dimension_numbers = #tpu.dot_dimension_numbers<[1], [0], [0], [1], [0, 0, 1, 1], [], []>} : vector<14x30xf32>, vector<30x88xf32>, vector<14x88xf32> -> vector<14x88xf32>
    %c0_45 = arith.constant 0 : index
    %c0_46 = arith.constant 0 : index
    %c0_47 = arith.constant 0 : index
    %45 = vector.load %arg19[%c0_45, %c0_46, %c0_47] : memref<3x88x176xf32, #tpu.memory_space<vmem>>, vector<1x88x176xf32>
    %46 = vector.shape_cast %45 : vector<1x88x176xf32> to vector<88x176xf32>
    %cst_48 = arith.constant dense<0.000000e+00> : vector<14x176xf32>
    %47 = tpu.matmul %38, %46, %cst_48 {dimension_numbers = #tpu.dot_dimension_numbers<[1], [0], [0], [1], [0, 0, 1, 1], [], []>} : vector<14x88xf32>, vector<88x176xf32>, vector<14x176xf32> -> vector<14x176xf32>
    %c1_49 = arith.constant 1 : index
    %c0_50 = arith.constant 0 : index
    %c0_51 = arith.constant 0 : index
    %48 = vector.load %arg19[%c1_49, %c0_50, %c0_51] : memref<3x88x176xf32, #tpu.memory_space<vmem>>, vector<1x88x176xf32>
    %49 = vector.shape_cast %48 : vector<1x88x176xf32> to vector<88x176xf32>
    %cst_52 = arith.constant dense<0.000000e+00> : vector<14x176xf32>
    %50 = tpu.matmul %41, %49, %cst_52 {dimension_numbers = #tpu.dot_dimension_numbers<[1], [0], [0], [1], [0, 0, 1, 1], [], []>} : vector<14x88xf32>, vector<88x176xf32>, vector<14x176xf32> -> vector<14x176xf32>
    %51 = arith.addf %47, %50 : vector<14x176xf32>
    %c2_53 = arith.constant 2 : index
    %c0_54 = arith.constant 0 : index
    %c0_55 = arith.constant 0 : index
    %52 = vector.load %arg19[%c2_53, %c0_54, %c0_55] : memref<3x88x176xf32, #tpu.memory_space<vmem>>, vector<1x88x176xf32>
    %53 = vector.shape_cast %52 : vector<1x88x176xf32> to vector<88x176xf32>
    %cst_56 = arith.constant dense<0.000000e+00> : vector<14x176xf32>
    %54 = tpu.matmul %44, %53, %cst_56 {dimension_numbers = #tpu.dot_dimension_numbers<[1], [0], [0], [1], [0, 0, 1, 1], [], []>} : vector<14x88xf32>, vector<88x176xf32>, vector<14x176xf32> -> vector<14x176xf32>
    %55 = arith.addf %51, %54 : vector<14x176xf32>
    %c0_57 = arith.constant 0 : index
    %c0_58 = arith.constant 0 : index
    %56 = vector.load %arg20[%c0_57, %c0_58] : memref<1x176xf32, #tpu.memory_space<vmem>>, vector<1x176xf32>
    %57 = vector.broadcast %56 : vector<1x176xf32> to vector<14x176xf32>
    %58 = arith.addf %55, %57 : vector<14x176xf32>
    %cst_59 = arith.constant 0.000000e+00 : f32
    %59 = vector.broadcast %cst_59 : f32 to vector<14x176xf32>
    %60 = arith.cmpf oge, %58, %59 : vector<14x176xf32>
    %cst_60 = arith.constant 0.00999999977 : f32
    %61 = vector.broadcast %cst_60 : f32 to vector<14x176xf32>
    %62 = arith.mulf %61, %58 : vector<14x176xf32>
    %63 = arith.select %60, %58, %62 : vector<14x176xi1>, vector<14x176xf32>
    %c0_61 = arith.constant 0 : index
    %c0_62 = arith.constant 0 : index
    %c0_63 = arith.constant 0 : index
    %64 = vector.load %arg3[%c0_61, %c0_62, %c0_63] : memref<3x10x14xf32, #tpu.memory_space<vmem>>, vector<1x10x14xf32>
    %65 = vector.shape_cast %64 : vector<1x10x14xf32> to vector<10x14xf32>
    %cst_64 = arith.constant dense<0.000000e+00> : vector<10x176xf32>
    %66 = tpu.matmul %65, %63, %cst_64 {dimension_numbers = #tpu.dot_dimension_numbers<[1], [0], [0], [1], [0, 0, 1, 1], [], []>} : vector<10x14xf32>, vector<14x176xf32>, vector<10x176xf32> -> vector<10x176xf32>
    %c1_65 = arith.constant 1 : index
    %c0_66 = arith.constant 0 : index
    %c0_67 = arith.constant 0 : index
    %67 = vector.load %arg3[%c1_65, %c0_66, %c0_67] : memref<3x10x14xf32, #tpu.memory_space<vmem>>, vector<1x10x14xf32>
    %68 = vector.shape_cast %67 : vector<1x10x14xf32> to vector<10x14xf32>
    %cst_68 = arith.constant dense<0.000000e+00> : vector<10x176xf32>
    %69 = tpu.matmul %68, %63, %cst_68 {dimension_numbers = #tpu.dot_dimension_numbers<[1], [0], [0], [1], [0, 0, 1, 1], [], []>} : vector<10x14xf32>, vector<14x176xf32>, vector<10x176xf32> -> vector<10x176xf32>
    %c2_69 = arith.constant 2 : index
    %c0_70 = arith.constant 0 : index
    %c0_71 = arith.constant 0 : index
    %70 = vector.load %arg3[%c2_69, %c0_70, %c0_71] : memref<3x10x14xf32, #tpu.memory_space<vmem>>, vector<1x10x14xf32>
    %71 = vector.shape_cast %70 : vector<1x10x14xf32> to vector<10x14xf32>
    %cst_72 = arith.constant dense<0.000000e+00> : vector<10x176xf32>
    %72 = tpu.matmul %71, %63, %cst_72 {dimension_numbers = #tpu.dot_dimension_numbers<[1], [0], [0], [1], [0, 0, 1, 1], [], []>} : vector<10x14xf32>, vector<14x176xf32>, vector<10x176xf32> -> vector<10x176xf32>
    %c0_73 = arith.constant 0 : index
    %c0_74 = arith.constant 0 : index
    %c0_75 = arith.constant 0 : index
    %73 = vector.load %arg21[%c0_73, %c0_74, %c0_75] : memref<3x176x176xf32, #tpu.memory_space<vmem>>, vector<1x176x176xf32>
    %74 = vector.shape_cast %73 : vector<1x176x176xf32> to vector<176x176xf32>
    %cst_76 = arith.constant dense<0.000000e+00> : vector<10x176xf32>
    %75 = tpu.matmul %66, %74, %cst_76 {dimension_numbers = #tpu.dot_dimension_numbers<[1], [0], [0], [1], [0, 0, 1, 1], [], []>} : vector<10x176xf32>, vector<176x176xf32>, vector<10x176xf32> -> vector<10x176xf32>
    %c1_77 = arith.constant 1 : index
    %c0_78 = arith.constant 0 : index
    %c0_79 = arith.constant 0 : index
    %76 = vector.load %arg21[%c1_77, %c0_78, %c0_79] : memref<3x176x176xf32, #tpu.memory_space<vmem>>, vector<1x176x176xf32>
    %77 = vector.shape_cast %76 : vector<1x176x176xf32> to vector<176x176xf32>
    %cst_80 = arith.constant dense<0.000000e+00> : vector<10x176xf32>
    %78 = tpu.matmul %69, %77, %cst_80 {dimension_numbers = #tpu.dot_dimension_numbers<[1], [0], [0], [1], [0, 0, 1, 1], [], []>} : vector<10x176xf32>, vector<176x176xf32>, vector<10x176xf32> -> vector<10x176xf32>
    %79 = arith.addf %75, %78 : vector<10x176xf32>
    %c2_81 = arith.constant 2 : index
    %c0_82 = arith.constant 0 : index
    %c0_83 = arith.constant 0 : index
    %80 = vector.load %arg21[%c2_81, %c0_82, %c0_83] : memref<3x176x176xf32, #tpu.memory_space<vmem>>, vector<1x176x176xf32>
    %81 = vector.shape_cast %80 : vector<1x176x176xf32> to vector<176x176xf32>
    %cst_84 = arith.constant dense<0.000000e+00> : vector<10x176xf32>
    %82 = tpu.matmul %72, %81, %cst_84 {dimension_numbers = #tpu.dot_dimension_numbers<[1], [0], [0], [1], [0, 0, 1, 1], [], []>} : vector<10x176xf32>, vector<176x176xf32>, vector<10x176xf32> -> vector<10x176xf32>
    %83 = arith.addf %79, %82 : vector<10x176xf32>
    %c0_85 = arith.constant 0 : index
    %c0_86 = arith.constant 0 : index
    %84 = vector.load %arg22[%c0_85, %c0_86] : memref<1x176xf32, #tpu.memory_space<vmem>>, vector<1x176xf32>
    %85 = vector.broadcast %84 : vector<1x176xf32> to vector<10x176xf32>
    %86 = arith.addf %83, %85 : vector<10x176xf32>
    %cst_87 = arith.constant 0.000000e+00 : f32
    %87 = vector.broadcast %cst_87 : f32 to vector<10x176xf32>
    %88 = arith.cmpf oge, %86, %87 : vector<10x176xf32>
    %cst_88 = arith.constant 0.00999999977 : f32
    %89 = vector.broadcast %cst_88 : f32 to vector<10x176xf32>
    %90 = arith.mulf %89, %86 : vector<10x176xf32>
    %91 = arith.select %88, %86, %90 : vector<10x176xi1>, vector<10x176xf32>
    %c0_89 = arith.constant 0 : index
    %c0_90 = arith.constant 0 : index
    %c0_91 = arith.constant 0 : index
    %92 = vector.load %arg4[%c0_89, %c0_90, %c0_91] : memref<5x2x10xf32, #tpu.memory_space<vmem>>, vector<1x2x10xf32>
    %93 = vector.shape_cast %92 : vector<1x2x10xf32> to vector<2x10xf32>
    %cst_92 = arith.constant dense<0.000000e+00> : vector<2x176xf32>
    %94 = tpu.matmul %93, %91, %cst_92 {dimension_numbers = #tpu.dot_dimension_numbers<[1], [0], [0], [1], [0, 0, 1, 1], [], []>} : vector<2x10xf32>, vector<10x176xf32>, vector<2x176xf32> -> vector<2x176xf32>
    %c1_93 = arith.constant 1 : index
    %c0_94 = arith.constant 0 : index
    %c0_95 = arith.constant 0 : index
    %95 = vector.load %arg4[%c1_93, %c0_94, %c0_95] : memref<5x2x10xf32, #tpu.memory_space<vmem>>, vector<1x2x10xf32>
    %96 = vector.shape_cast %95 : vector<1x2x10xf32> to vector<2x10xf32>
    %cst_96 = arith.constant dense<0.000000e+00> : vector<2x176xf32>
    %97 = tpu.matmul %96, %91, %cst_96 {dimension_numbers = #tpu.dot_dimension_numbers<[1], [0], [0], [1], [0, 0, 1, 1], [], []>} : vector<2x10xf32>, vector<10x176xf32>, vector<2x176xf32> -> vector<2x176xf32>
    %c2_97 = arith.constant 2 : index
    %c0_98 = arith.constant 0 : index
    %c0_99 = arith.constant 0 : index
    %98 = vector.load %arg4[%c2_97, %c0_98, %c0_99] : memref<5x2x10xf32, #tpu.memory_space<vmem>>, vector<1x2x10xf32>
    %99 = vector.shape_cast %98 : vector<1x2x10xf32> to vector<2x10xf32>
    %cst_100 = arith.constant dense<0.000000e+00> : vector<2x176xf32>
    %100 = tpu.matmul %99, %91, %cst_100 {dimension_numbers = #tpu.dot_dimension_numbers<[1], [0], [0], [1], [0, 0, 1, 1], [], []>} : vector<2x10xf32>, vector<10x176xf32>, vector<2x176xf32> -> vector<2x176xf32>
    %c3_101 = arith.constant 3 : index
    %c0_102 = arith.constant 0 : index
    %c0_103 = arith.constant 0 : index
    %101 = vector.load %arg4[%c3_101, %c0_102, %c0_103] : memref<5x2x10xf32, #tpu.memory_space<vmem>>, vector<1x2x10xf32>
    %102 = vector.shape_cast %101 : vector<1x2x10xf32> to vector<2x10xf32>
    %cst_104 = arith.constant dense<0.000000e+00> : vector<2x176xf32>
    %103 = tpu.matmul %102, %91, %cst_104 {dimension_numbers = #tpu.dot_dimension_numbers<[1], [0], [0], [1], [0, 0, 1, 1], [], []>} : vector<2x10xf32>, vector<10x176xf32>, vector<2x176xf32> -> vector<2x176xf32>
    %c4 = arith.constant 4 : index
    %c0_105 = arith.constant 0 : index
    %c0_106 = arith.constant 0 : index
    %104 = vector.load %arg4[%c4, %c0_105, %c0_106] : memref<5x2x10xf32, #tpu.memory_space<vmem>>, vector<1x2x10xf32>
    %105 = vector.shape_cast %104 : vector<1x2x10xf32> to vector<2x10xf32>
    %cst_107 = arith.constant dense<0.000000e+00> : vector<2x176xf32>
    %106 = tpu.matmul %105, %91, %cst_107 {dimension_numbers = #tpu.dot_dimension_numbers<[1], [0], [0], [1], [0, 0, 1, 1], [], []>} : vector<2x10xf32>, vector<10x176xf32>, vector<2x176xf32> -> vector<2x176xf32>
    %c0_108 = arith.constant 0 : index
    %c0_109 = arith.constant 0 : index
    %c0_110 = arith.constant 0 : index
    %107 = vector.load %arg23[%c0_108, %c0_109, %c0_110] : memref<5x176x32xf32, #tpu.memory_space<vmem>>, vector<1x176x32xf32>
    %108 = vector.shape_cast %107 : vector<1x176x32xf32> to vector<176x32xf32>
    %cst_111 = arith.constant dense<0.000000e+00> : vector<2x32xf32>
    %109 = tpu.matmul %94, %108, %cst_111 {dimension_numbers = #tpu.dot_dimension_numbers<[1], [0], [0], [1], [0, 0, 1, 1], [], []>} : vector<2x176xf32>, vector<176x32xf32>, vector<2x32xf32> -> vector<2x32xf32>
    %c1_112 = arith.constant 1 : index
    %c0_113 = arith.constant 0 : index
    %c0_114 = arith.constant 0 : index
    %110 = vector.load %arg23[%c1_112, %c0_113, %c0_114] : memref<5x176x32xf32, #tpu.memory_space<vmem>>, vector<1x176x32xf32>
    %111 = vector.shape_cast %110 : vector<1x176x32xf32> to vector<176x32xf32>
    %cst_115 = arith.constant dense<0.000000e+00> : vector<2x32xf32>
    %112 = tpu.matmul %97, %111, %cst_115 {dimension_numbers = #tpu.dot_dimension_numbers<[1], [0], [0], [1], [0, 0, 1, 1], [], []>} : vector<2x176xf32>, vector<176x32xf32>, vector<2x32xf32> -> vector<2x32xf32>
    %113 = arith.addf %109, %112 : vector<2x32xf32>
    %c2_116 = arith.constant 2 : index
    %c0_117 = arith.constant 0 : index
    %c0_118 = arith.constant 0 : index
    %114 = vector.load %arg23[%c2_116, %c0_117, %c0_118] : memref<5x176x32xf32, #tpu.memory_space<vmem>>, vector<1x176x32xf32>
    %115 = vector.shape_cast %114 : vector<1x176x32xf32> to vector<176x32xf32>
    %cst_119 = arith.constant dense<0.000000e+00> : vector<2x32xf32>
    %116 = tpu.matmul %100, %115, %cst_119 {dimension_numbers = #tpu.dot_dimension_numbers<[1], [0], [0], [1], [0, 0, 1, 1], [], []>} : vector<2x176xf32>, vector<176x32xf32>, vector<2x32xf32> -> vector<2x32xf32>
    %117 = arith.addf %113, %116 : vector<2x32xf32>
    %c3_120 = arith.constant 3 : index
    %c0_121 = arith.constant 0 : index
    %c0_122 = arith.constant 0 : index
    %118 = vector.load %arg23[%c3_120, %c0_121, %c0_122] : memref<5x176x32xf32, #tpu.memory_space<vmem>>, vector<1x176x32xf32>
    %119 = vector.shape_cast %118 : vector<1x176x32xf32> to vector<176x32xf32>
    %cst_123 = arith.constant dense<0.000000e+00> : vector<2x32xf32>
    %120 = tpu.matmul %103, %119, %cst_123 {dimension_numbers = #tpu.dot_dimension_numbers<[1], [0], [0], [1], [0, 0, 1, 1], [], []>} : vector<2x176xf32>, vector<176x32xf32>, vector<2x32xf32> -> vector<2x32xf32>
    %121 = arith.addf %117, %120 : vector<2x32xf32>
    %c4_124 = arith.constant 4 : index
    %c0_125 = arith.constant 0 : index
    %c0_126 = arith.constant 0 : index
    %122 = vector.load %arg23[%c4_124, %c0_125, %c0_126] : memref<5x176x32xf32, #tpu.memory_space<vmem>>, vector<1x176x32xf32>
    %123 = vector.shape_cast %122 : vector<1x176x32xf32> to vector<176x32xf32>
    %cst_127 = arith.constant dense<0.000000e+00> : vector<2x32xf32>
    %124 = tpu.matmul %106, %123, %cst_127 {dimension_numbers = #tpu.dot_dimension_numbers<[1], [0], [0], [1], [0, 0, 1, 1], [], []>} : vector<2x176xf32>, vector<176x32xf32>, vector<2x32xf32> -> vector<2x32xf32>
    %125 = arith.addf %121, %124 : vector<2x32xf32>
    %c0_128 = arith.constant 0 : index
    %c0_129 = arith.constant 0 : index
    %126 = vector.load %arg24[%c0_128, %c0_129] : memref<1x32xf32, #tpu.memory_space<vmem>>, vector<1x32xf32>
    %127 = vector.broadcast %126 : vector<1x32xf32> to vector<2x32xf32>
    %128 = arith.addf %125, %127 : vector<2x32xf32>
    %c0_130 = arith.constant 0 : index
    %c0_131 = arith.constant 0 : index
    %c0_132 = arith.constant 0 : index
    %129 = vector.load %arg5[%c0_130, %c0_131, %c0_132] : memref<4x4x88xf32, #tpu.memory_space<vmem>>, vector<1x4x88xf32>
    %130 = vector.shape_cast %129 : vector<1x4x88xf32> to vector<4x88xf32>
    %cst_133 = arith.constant dense<0.000000e+00> : vector<30x88xf32>
    %131 = tpu.matmul %3, %130, %cst_133 {dimension_numbers = #tpu.dot_dimension_numbers<[1], [0], [0], [1], [0, 0, 1, 1], [], []>} : vector<30x4xf32>, vector<4x88xf32>, vector<30x88xf32> -> vector<30x88xf32>
    %c1_134 = arith.constant 1 : index
    %c0_135 = arith.constant 0 : index
    %c0_136 = arith.constant 0 : index
    %132 = vector.load %arg5[%c1_134, %c0_135, %c0_136] : memref<4x4x88xf32, #tpu.memory_space<vmem>>, vector<1x4x88xf32>
    %133 = vector.shape_cast %132 : vector<1x4x88xf32> to vector<4x88xf32>
    %cst_137 = arith.constant dense<0.000000e+00> : vector<30x88xf32>
    %134 = tpu.matmul %6, %133, %cst_137 {dimension_numbers = #tpu.dot_dimension_numbers<[1], [0], [0], [1], [0, 0, 1, 1], [], []>} : vector<30x4xf32>, vector<4x88xf32>, vector<30x88xf32> -> vector<30x88xf32>
    %135 = arith.addf %131, %134 : vector<30x88xf32>
    %c2_138 = arith.constant 2 : index
    %c0_139 = arith.constant 0 : index
    %c0_140 = arith.constant 0 : index
    %136 = vector.load %arg5[%c2_138, %c0_139, %c0_140] : memref<4x4x88xf32, #tpu.memory_space<vmem>>, vector<1x4x88xf32>
    %137 = vector.shape_cast %136 : vector<1x4x88xf32> to vector<4x88xf32>
    %cst_141 = arith.constant dense<0.000000e+00> : vector<30x88xf32>
    %138 = tpu.matmul %9, %137, %cst_141 {dimension_numbers = #tpu.dot_dimension_numbers<[1], [0], [0], [1], [0, 0, 1, 1], [], []>} : vector<30x4xf32>, vector<4x88xf32>, vector<30x88xf32> -> vector<30x88xf32>
    %139 = arith.addf %135, %138 : vector<30x88xf32>
    %c3_142 = arith.constant 3 : index
    %c0_143 = arith.constant 0 : index
    %c0_144 = arith.constant 0 : index
    %140 = vector.load %arg5[%c3_142, %c0_143, %c0_144] : memref<4x4x88xf32, #tpu.memory_space<vmem>>, vector<1x4x88xf32>
    %141 = vector.shape_cast %140 : vector<1x4x88xf32> to vector<4x88xf32>
    %cst_145 = arith.constant dense<0.000000e+00> : vector<30x88xf32>
    %142 = tpu.matmul %12, %141, %cst_145 {dimension_numbers = #tpu.dot_dimension_numbers<[1], [0], [0], [1], [0, 0, 1, 1], [], []>} : vector<30x4xf32>, vector<4x88xf32>, vector<30x88xf32> -> vector<30x88xf32>
    %143 = arith.addf %139, %142 : vector<30x88xf32>
    %c0_146 = arith.constant 0 : index
    %c0_147 = arith.constant 0 : index
    %144 = vector.load %arg6[%c0_146, %c0_147] : memref<1x88xf32, #tpu.memory_space<vmem>>, vector<1x88xf32>
    %145 = vector.broadcast %144 : vector<1x88xf32> to vector<30x88xf32>
    %146 = arith.addf %143, %145 : vector<30x88xf32>
    %cst_148 = arith.constant 0.000000e+00 : f32
    %147 = vector.broadcast %cst_148 : f32 to vector<30x88xf32>
    %148 = arith.cmpf oge, %146, %147 : vector<30x88xf32>
    %cst_149 = arith.constant 0.00999999977 : f32
    %149 = vector.broadcast %cst_149 : f32 to vector<30x88xf32>
    %150 = arith.mulf %149, %146 : vector<30x88xf32>
    %151 = arith.select %148, %146, %150 : vector<30x88xi1>, vector<30x88xf32>
    %c0_150 = arith.constant 0 : index
    %c0_151 = arith.constant 0 : index
    %c0_152 = arith.constant 0 : index
    %152 = vector.load %arg2[%c0_150, %c0_151, %c0_152] : memref<3x14x30xf32, #tpu.memory_space<vmem>>, vector<1x14x30xf32>
    %153 = vector.shape_cast %152 : vector<1x14x30xf32> to vector<14x30xf32>
    %cst_153 = arith.constant dense<0.000000e+00> : vector<14x88xf32>
    %154 = tpu.matmul %153, %151, %cst_153 {dimension_numbers = #tpu.dot_dimension_numbers<[1], [0], [0], [1], [0, 0, 1, 1], [], []>} : vector<14x30xf32>, vector<30x88xf32>, vector<14x88xf32> -> vector<14x88xf32>
    %c1_154 = arith.constant 1 : index
    %c0_155 = arith.constant 0 : index
    %c0_156 = arith.constant 0 : index
    %155 = vector.load %arg2[%c1_154, %c0_155, %c0_156] : memref<3x14x30xf32, #tpu.memory_space<vmem>>, vector<1x14x30xf32>
    %156 = vector.shape_cast %155 : vector<1x14x30xf32> to vector<14x30xf32>
    %cst_157 = arith.constant dense<0.000000e+00> : vector<14x88xf32>
    %157 = tpu.matmul %156, %151, %cst_157 {dimension_numbers = #tpu.dot_dimension_numbers<[1], [0], [0], [1], [0, 0, 1, 1], [], []>} : vector<14x30xf32>, vector<30x88xf32>, vector<14x88xf32> -> vector<14x88xf32>
    %c2_158 = arith.constant 2 : index
    %c0_159 = arith.constant 0 : index
    %c0_160 = arith.constant 0 : index
    %158 = vector.load %arg2[%c2_158, %c0_159, %c0_160] : memref<3x14x30xf32, #tpu.memory_space<vmem>>, vector<1x14x30xf32>
    %159 = vector.shape_cast %158 : vector<1x14x30xf32> to vector<14x30xf32>
    %cst_161 = arith.constant dense<0.000000e+00> : vector<14x88xf32>
    %160 = tpu.matmul %159, %151, %cst_161 {dimension_numbers = #tpu.dot_dimension_numbers<[1], [0], [0], [1], [0, 0, 1, 1], [], []>} : vector<14x30xf32>, vector<30x88xf32>, vector<14x88xf32> -> vector<14x88xf32>
    %c0_162 = arith.constant 0 : index
    %c0_163 = arith.constant 0 : index
    %c0_164 = arith.constant 0 : index
    %161 = vector.load %arg7[%c0_162, %c0_163, %c0_164] : memref<3x88x176xf32, #tpu.memory_space<vmem>>, vector<1x88x176xf32>
    %162 = vector.shape_cast %161 : vector<1x88x176xf32> to vector<88x176xf32>
    %cst_165 = arith.constant dense<0.000000e+00> : vector<14x176xf32>
    %163 = tpu.matmul %154, %162, %cst_165 {dimension_numbers = #tpu.dot_dimension_numbers<[1], [0], [0], [1], [0, 0, 1, 1], [], []>} : vector<14x88xf32>, vector<88x176xf32>, vector<14x176xf32> -> vector<14x176xf32>
    %c1_166 = arith.constant 1 : index
    %c0_167 = arith.constant 0 : index
    %c0_168 = arith.constant 0 : index
    %164 = vector.load %arg7[%c1_166, %c0_167, %c0_168] : memref<3x88x176xf32, #tpu.memory_space<vmem>>, vector<1x88x176xf32>
    %165 = vector.shape_cast %164 : vector<1x88x176xf32> to vector<88x176xf32>
    %cst_169 = arith.constant dense<0.000000e+00> : vector<14x176xf32>
    %166 = tpu.matmul %157, %165, %cst_169 {dimension_numbers = #tpu.dot_dimension_numbers<[1], [0], [0], [1], [0, 0, 1, 1], [], []>} : vector<14x88xf32>, vector<88x176xf32>, vector<14x176xf32> -> vector<14x176xf32>
    %167 = arith.addf %163, %166 : vector<14x176xf32>
    %c2_170 = arith.constant 2 : index
    %c0_171 = arith.constant 0 : index
    %c0_172 = arith.constant 0 : index
    %168 = vector.load %arg7[%c2_170, %c0_171, %c0_172] : memref<3x88x176xf32, #tpu.memory_space<vmem>>, vector<1x88x176xf32>
    %169 = vector.shape_cast %168 : vector<1x88x176xf32> to vector<88x176xf32>
    %cst_173 = arith.constant dense<0.000000e+00> : vector<14x176xf32>
    %170 = tpu.matmul %160, %169, %cst_173 {dimension_numbers = #tpu.dot_dimension_numbers<[1], [0], [0], [1], [0, 0, 1, 1], [], []>} : vector<14x88xf32>, vector<88x176xf32>, vector<14x176xf32> -> vector<14x176xf32>
    %171 = arith.addf %167, %170 : vector<14x176xf32>
    %c0_174 = arith.constant 0 : index
    %c0_175 = arith.constant 0 : index
    %172 = vector.load %arg8[%c0_174, %c0_175] : memref<1x176xf32, #tpu.memory_space<vmem>>, vector<1x176xf32>
    %173 = vector.broadcast %172 : vector<1x176xf32> to vector<14x176xf32>
    %174 = arith.addf %171, %173 : vector<14x176xf32>
    %cst_176 = arith.constant 0.000000e+00 : f32
    %175 = vector.broadcast %cst_176 : f32 to vector<14x176xf32>
    %176 = arith.cmpf oge, %174, %175 : vector<14x176xf32>
    %cst_177 = arith.constant 0.00999999977 : f32
    %177 = vector.broadcast %cst_177 : f32 to vector<14x176xf32>
    %178 = arith.mulf %177, %174 : vector<14x176xf32>
    %179 = arith.select %176, %174, %178 : vector<14x176xi1>, vector<14x176xf32>
    %c0_178 = arith.constant 0 : index
    %c0_179 = arith.constant 0 : index
    %c0_180 = arith.constant 0 : index
    %180 = vector.load %arg3[%c0_178, %c0_179, %c0_180] : memref<3x10x14xf32, #tpu.memory_space<vmem>>, vector<1x10x14xf32>
    %181 = vector.shape_cast %180 : vector<1x10x14xf32> to vector<10x14xf32>
    %cst_181 = arith.constant dense<0.000000e+00> : vector<10x176xf32>
    %182 = tpu.matmul %181, %179, %cst_181 {dimension_numbers = #tpu.dot_dimension_numbers<[1], [0], [0], [1], [0, 0, 1, 1], [], []>} : vector<10x14xf32>, vector<14x176xf32>, vector<10x176xf32> -> vector<10x176xf32>
    %c1_182 = arith.constant 1 : index
    %c0_183 = arith.constant 0 : index
    %c0_184 = arith.constant 0 : index
    %183 = vector.load %arg3[%c1_182, %c0_183, %c0_184] : memref<3x10x14xf32, #tpu.memory_space<vmem>>, vector<1x10x14xf32>
    %184 = vector.shape_cast %183 : vector<1x10x14xf32> to vector<10x14xf32>
    %cst_185 = arith.constant dense<0.000000e+00> : vector<10x176xf32>
    %185 = tpu.matmul %184, %179, %cst_185 {dimension_numbers = #tpu.dot_dimension_numbers<[1], [0], [0], [1], [0, 0, 1, 1], [], []>} : vector<10x14xf32>, vector<14x176xf32>, vector<10x176xf32> -> vector<10x176xf32>
    %c2_186 = arith.constant 2 : index
    %c0_187 = arith.constant 0 : index
    %c0_188 = arith.constant 0 : index
    %186 = vector.load %arg3[%c2_186, %c0_187, %c0_188] : memref<3x10x14xf32, #tpu.memory_space<vmem>>, vector<1x10x14xf32>
    %187 = vector.shape_cast %186 : vector<1x10x14xf32> to vector<10x14xf32>
    %cst_189 = arith.constant dense<0.000000e+00> : vector<10x176xf32>
    %188 = tpu.matmul %187, %179, %cst_189 {dimension_numbers = #tpu.dot_dimension_numbers<[1], [0], [0], [1], [0, 0, 1, 1], [], []>} : vector<10x14xf32>, vector<14x176xf32>, vector<10x176xf32> -> vector<10x176xf32>
    %c0_190 = arith.constant 0 : index
    %c0_191 = arith.constant 0 : index
    %c0_192 = arith.constant 0 : index
    %189 = vector.load %arg9[%c0_190, %c0_191, %c0_192] : memref<3x176x176xf32, #tpu.memory_space<vmem>>, vector<1x176x176xf32>
    %190 = vector.shape_cast %189 : vector<1x176x176xf32> to vector<176x176xf32>
    %cst_193 = arith.constant dense<0.000000e+00> : vector<10x176xf32>
    %191 = tpu.matmul %182, %190, %cst_193 {dimension_numbers = #tpu.dot_dimension_numbers<[1], [0], [0], [1], [0, 0, 1, 1], [], []>} : vector<10x176xf32>, vector<176x176xf32>, vector<10x176xf32> -> vector<10x176xf32>
    %c1_194 = arith.constant 1 : index
    %c0_195 = arith.constant 0 : index
    %c0_196 = arith.constant 0 : index
    %192 = vector.load %arg9[%c1_194, %c0_195, %c0_196] : memref<3x176x176xf32, #tpu.memory_space<vmem>>, vector<1x176x176xf32>
    %193 = vector.shape_cast %192 : vector<1x176x176xf32> to vector<176x176xf32>
    %cst_197 = arith.constant dense<0.000000e+00> : vector<10x176xf32>
    %194 = tpu.matmul %185, %193, %cst_197 {dimension_numbers = #tpu.dot_dimension_numbers<[1], [0], [0], [1], [0, 0, 1, 1], [], []>} : vector<10x176xf32>, vector<176x176xf32>, vector<10x176xf32> -> vector<10x176xf32>
    %195 = arith.addf %191, %194 : vector<10x176xf32>
    %c2_198 = arith.constant 2 : index
    %c0_199 = arith.constant 0 : index
    %c0_200 = arith.constant 0 : index
    %196 = vector.load %arg9[%c2_198, %c0_199, %c0_200] : memref<3x176x176xf32, #tpu.memory_space<vmem>>, vector<1x176x176xf32>
    %197 = vector.shape_cast %196 : vector<1x176x176xf32> to vector<176x176xf32>
    %cst_201 = arith.constant dense<0.000000e+00> : vector<10x176xf32>
    %198 = tpu.matmul %188, %197, %cst_201 {dimension_numbers = #tpu.dot_dimension_numbers<[1], [0], [0], [1], [0, 0, 1, 1], [], []>} : vector<10x176xf32>, vector<176x176xf32>, vector<10x176xf32> -> vector<10x176xf32>
    %199 = arith.addf %195, %198 : vector<10x176xf32>
    %c0_202 = arith.constant 0 : index
    %c0_203 = arith.constant 0 : index
    %200 = vector.load %arg10[%c0_202, %c0_203] : memref<1x176xf32, #tpu.memory_space<vmem>>, vector<1x176xf32>
    %201 = vector.broadcast %200 : vector<1x176xf32> to vector<10x176xf32>
    %202 = arith.addf %199, %201 : vector<10x176xf32>
    %cst_204 = arith.constant 0.000000e+00 : f32
    %203 = vector.broadcast %cst_204 : f32 to vector<10x176xf32>
    %204 = arith.cmpf oge, %202, %203 : vector<10x176xf32>
    %cst_205 = arith.constant 0.00999999977 : f32
    %205 = vector.broadcast %cst_205 : f32 to vector<10x176xf32>
    %206 = arith.mulf %205, %202 : vector<10x176xf32>
    %207 = arith.select %204, %202, %206 : vector<10x176xi1>, vector<10x176xf32>
    %c0_206 = arith.constant 0 : index
    %c0_207 = arith.constant 0 : index
    %c0_208 = arith.constant 0 : index
    %208 = vector.load %arg4[%c0_206, %c0_207, %c0_208] : memref<5x2x10xf32, #tpu.memory_space<vmem>>, vector<1x2x10xf32>
    %209 = vector.shape_cast %208 : vector<1x2x10xf32> to vector<2x10xf32>
    %cst_209 = arith.constant dense<0.000000e+00> : vector<2x176xf32>
    %210 = tpu.matmul %209, %207, %cst_209 {dimension_numbers = #tpu.dot_dimension_numbers<[1], [0], [0], [1], [0, 0, 1, 1], [], []>} : vector<2x10xf32>, vector<10x176xf32>, vector<2x176xf32> -> vector<2x176xf32>
    %c1_210 = arith.constant 1 : index
    %c0_211 = arith.constant 0 : index
    %c0_212 = arith.constant 0 : index
    %211 = vector.load %arg4[%c1_210, %c0_211, %c0_212] : memref<5x2x10xf32, #tpu.memory_space<vmem>>, vector<1x2x10xf32>
    %212 = vector.shape_cast %211 : vector<1x2x10xf32> to vector<2x10xf32>
    %cst_213 = arith.constant dense<0.000000e+00> : vector<2x176xf32>
    %213 = tpu.matmul %212, %207, %cst_213 {dimension_numbers = #tpu.dot_dimension_numbers<[1], [0], [0], [1], [0, 0, 1, 1], [], []>} : vector<2x10xf32>, vector<10x176xf32>, vector<2x176xf32> -> vector<2x176xf32>
    %c2_214 = arith.constant 2 : index
    %c0_215 = arith.constant 0 : index
    %c0_216 = arith.constant 0 : index
    %214 = vector.load %arg4[%c2_214, %c0_215, %c0_216] : memref<5x2x10xf32, #tpu.memory_space<vmem>>, vector<1x2x10xf32>
    %215 = vector.shape_cast %214 : vector<1x2x10xf32> to vector<2x10xf32>
    %cst_217 = arith.constant dense<0.000000e+00> : vector<2x176xf32>
    %216 = tpu.matmul %215, %207, %cst_217 {dimension_numbers = #tpu.dot_dimension_numbers<[1], [0], [0], [1], [0, 0, 1, 1], [], []>} : vector<2x10xf32>, vector<10x176xf32>, vector<2x176xf32> -> vector<2x176xf32>
    %c3_218 = arith.constant 3 : index
    %c0_219 = arith.constant 0 : index
    %c0_220 = arith.constant 0 : index
    %217 = vector.load %arg4[%c3_218, %c0_219, %c0_220] : memref<5x2x10xf32, #tpu.memory_space<vmem>>, vector<1x2x10xf32>
    %218 = vector.shape_cast %217 : vector<1x2x10xf32> to vector<2x10xf32>
    %cst_221 = arith.constant dense<0.000000e+00> : vector<2x176xf32>
    %219 = tpu.matmul %218, %207, %cst_221 {dimension_numbers = #tpu.dot_dimension_numbers<[1], [0], [0], [1], [0, 0, 1, 1], [], []>} : vector<2x10xf32>, vector<10x176xf32>, vector<2x176xf32> -> vector<2x176xf32>
    %c4_222 = arith.constant 4 : index
    %c0_223 = arith.constant 0 : index
    %c0_224 = arith.constant 0 : index
    %220 = vector.load %arg4[%c4_222, %c0_223, %c0_224] : memref<5x2x10xf32, #tpu.memory_space<vmem>>, vector<1x2x10xf32>
    %221 = vector.shape_cast %220 : vector<1x2x10xf32> to vector<2x10xf32>
    %cst_225 = arith.constant dense<0.000000e+00> : vector<2x176xf32>
    %222 = tpu.matmul %221, %207, %cst_225 {dimension_numbers = #tpu.dot_dimension_numbers<[1], [0], [0], [1], [0, 0, 1, 1], [], []>} : vector<2x10xf32>, vector<10x176xf32>, vector<2x176xf32> -> vector<2x176xf32>
    %c0_226 = arith.constant 0 : index
    %c0_227 = arith.constant 0 : index
    %c0_228 = arith.constant 0 : index
    %223 = vector.load %arg11[%c0_226, %c0_227, %c0_228] : memref<5x176x440xf32, #tpu.memory_space<vmem>>, vector<1x176x440xf32>
    %224 = vector.shape_cast %223 : vector<1x176x440xf32> to vector<176x440xf32>
    %cst_229 = arith.constant dense<0.000000e+00> : vector<2x440xf32>
    %225 = tpu.matmul %210, %224, %cst_229 {dimension_numbers = #tpu.dot_dimension_numbers<[1], [0], [0], [1], [0, 0, 1, 1], [], []>} : vector<2x176xf32>, vector<176x440xf32>, vector<2x440xf32> -> vector<2x440xf32>
    %c1_230 = arith.constant 1 : index
    %c0_231 = arith.constant 0 : index
    %c0_232 = arith.constant 0 : index
    %226 = vector.load %arg11[%c1_230, %c0_231, %c0_232] : memref<5x176x440xf32, #tpu.memory_space<vmem>>, vector<1x176x440xf32>
    %227 = vector.shape_cast %226 : vector<1x176x440xf32> to vector<176x440xf32>
    %cst_233 = arith.constant dense<0.000000e+00> : vector<2x440xf32>
    %228 = tpu.matmul %213, %227, %cst_233 {dimension_numbers = #tpu.dot_dimension_numbers<[1], [0], [0], [1], [0, 0, 1, 1], [], []>} : vector<2x176xf32>, vector<176x440xf32>, vector<2x440xf32> -> vector<2x440xf32>
    %229 = arith.addf %225, %228 : vector<2x440xf32>
    %c2_234 = arith.constant 2 : index
    %c0_235 = arith.constant 0 : index
    %c0_236 = arith.constant 0 : index
    %230 = vector.load %arg11[%c2_234, %c0_235, %c0_236] : memref<5x176x440xf32, #tpu.memory_space<vmem>>, vector<1x176x440xf32>
    %231 = vector.shape_cast %230 : vector<1x176x440xf32> to vector<176x440xf32>
    %cst_237 = arith.constant dense<0.000000e+00> : vector<2x440xf32>
    %232 = tpu.matmul %216, %231, %cst_237 {dimension_numbers = #tpu.dot_dimension_numbers<[1], [0], [0], [1], [0, 0, 1, 1], [], []>} : vector<2x176xf32>, vector<176x440xf32>, vector<2x440xf32> -> vector<2x440xf32>
    %233 = arith.addf %229, %232 : vector<2x440xf32>
    %c3_238 = arith.constant 3 : index
    %c0_239 = arith.constant 0 : index
    %c0_240 = arith.constant 0 : index
    %234 = vector.load %arg11[%c3_238, %c0_239, %c0_240] : memref<5x176x440xf32, #tpu.memory_space<vmem>>, vector<1x176x440xf32>
    %235 = vector.shape_cast %234 : vector<1x176x440xf32> to vector<176x440xf32>
    %cst_241 = arith.constant dense<0.000000e+00> : vector<2x440xf32>
    %236 = tpu.matmul %219, %235, %cst_241 {dimension_numbers = #tpu.dot_dimension_numbers<[1], [0], [0], [1], [0, 0, 1, 1], [], []>} : vector<2x176xf32>, vector<176x440xf32>, vector<2x440xf32> -> vector<2x440xf32>
    %237 = arith.addf %233, %236 : vector<2x440xf32>
    %c4_242 = arith.constant 4 : index
    %c0_243 = arith.constant 0 : index
    %c0_244 = arith.constant 0 : index
    %238 = vector.load %arg11[%c4_242, %c0_243, %c0_244] : memref<5x176x440xf32, #tpu.memory_space<vmem>>, vector<1x176x440xf32>
    %239 = vector.shape_cast %238 : vector<1x176x440xf32> to vector<176x440xf32>
    %cst_245 = arith.constant dense<0.000000e+00> : vector<2x440xf32>
    %240 = tpu.matmul %222, %239, %cst_245 {dimension_numbers = #tpu.dot_dimension_numbers<[1], [0], [0], [1], [0, 0, 1, 1], [], []>} : vector<2x176xf32>, vector<176x440xf32>, vector<2x440xf32> -> vector<2x440xf32>
    %241 = arith.addf %237, %240 : vector<2x440xf32>
    %c0_246 = arith.constant 0 : index
    %c0_247 = arith.constant 0 : index
    %242 = vector.load %arg12[%c0_246, %c0_247] : memref<1x440xf32, #tpu.memory_space<vmem>>, vector<1x440xf32>
    %243 = vector.broadcast %242 : vector<1x440xf32> to vector<2x440xf32>
    %244 = arith.addf %241, %243 : vector<2x440xf32>
    %cst_248 = arith.constant 0.000000e+00 : f32
    %245 = vector.broadcast %cst_248 : f32 to vector<2x440xf32>
    %246 = arith.maximumf %244, %245 : vector<2x440xf32>
    %c0_249 = arith.constant 0 : index
    %c0_250 = arith.constant 0 : index
    %247 = vector.load %arg13[%c0_249, %c0_250] : memref<440x32xf32, #tpu.memory_space<vmem>>, vector<440x32xf32>
    %cst_251 = arith.constant dense<0.000000e+00> : vector<2x32xf32>
    %248 = tpu.matmul %246, %247, %cst_251 {dimension_numbers = #tpu.dot_dimension_numbers<[1], [0], [0], [1], [0, 0, 1, 1], [], []>} : vector<2x440xf32>, vector<440x32xf32>, vector<2x32xf32> -> vector<2x32xf32>
    %c0_252 = arith.constant 0 : index
    %c0_253 = arith.constant 0 : index
    %249 = vector.load %arg14[%c0_252, %c0_253] : memref<1x32xf32, #tpu.memory_space<vmem>>, vector<1x32xf32>
    %250 = vector.broadcast %249 : vector<1x32xf32> to vector<2x32xf32>
    %251 = arith.addf %248, %250 : vector<2x32xf32>
    %cst_254 = arith.constant 0.000000e+00 : f32
    %252 = vector.broadcast %cst_254 : f32 to vector<2x32xf32>
    %253 = arith.maximumf %251, %252 : vector<2x32xf32>
    %c0_255 = arith.constant 0 : index
    %c0_256 = arith.constant 0 : index
    %254 = vector.load %arg15[%c0_255, %c0_256] : memref<32x32xf32, #tpu.memory_space<vmem>>, vector<32x32xf32>
    %cst_257 = arith.constant dense<0.000000e+00> : vector<2x32xf32>
    %255 = tpu.matmul %253, %254, %cst_257 {dimension_numbers = #tpu.dot_dimension_numbers<[1], [0], [0], [1], [0, 0, 1, 1], [], []>} : vector<2x32xf32>, vector<32x32xf32>, vector<2x32xf32> -> vector<2x32xf32>
    %c0_258 = arith.constant 0 : index
    %c0_259 = arith.constant 0 : index
    %256 = vector.load %arg16[%c0_258, %c0_259] : memref<1x32xf32, #tpu.memory_space<vmem>>, vector<1x32xf32>
    %257 = vector.broadcast %256 : vector<1x32xf32> to vector<2x32xf32>
    %258 = arith.addf %255, %257 : vector<2x32xf32>
    %259 = arith.subf %258, %128 : vector<2x32xf32>
    %cst_260 = arith.constant 9.99999997E-7 : f32
    %260 = vector.broadcast %cst_260 : f32 to vector<2x32xf32>
    %261 = arith.addf %259, %260 : vector<2x32xf32>
    %262 = arith.mulf %261, %261 : vector<2x32xf32>
    %cst_261 = arith.constant dense<0.000000e+00> : vector<2xf32>
    %263 = vector.multi_reduction <add>, %262, %cst_261 [1] : vector<2x32xf32> to vector<2xf32>
    %264 = vector.shape_cast %263 : vector<2xf32> to vector<2x1xf32>
    %265 = math.sqrt %264 : vector<2x1xf32>
    %c0_262 = arith.constant 0 : index
    %c0_263 = arith.constant 0 : index
    %266 = vector.load %arg25[%c0_262, %c0_263] : memref<2x1xf32, #tpu.memory_space<vmem>>, vector<2x1xf32>
    tpu.vector_store %arg25[%c0_262, %c0_263], %265 {strides = array<i32>} : memref<2x1xf32, #tpu.memory_space<vmem>>, vector<2x1xf32>,
    return
  }
}

</mosaic_0001>

<llo_original>
// kernel: rnd_forward.1
$region0: #{rnd_forward.1}
  #allocation0 [shape = 'u32[]', space=smem, size = 0x4, offset = 0x4, fixed_abs, tag = 'smem constant byte address 0x4 - core index']
  #allocation1 [shape = 'u32[144,128]{1,0:T(1,128)}', space=vmem, size = 0x12000, scoped, tag = 'internal scratch']
  %s0 = inlined_call_operand.vmem [shape: f32[64,4], index: 0, kind: input, shape index: {}]
  %s1 = inlined_call_operand.hbm [shape: f32[4,30,64], index: 1, kind: input, shape index: {}]
  %s2 = inlined_call_operand.hbm [shape: f32[3,14,30], index: 2, kind: input, shape index: {}]
  %s3 = inlined_call_operand.hbm [shape: f32[3,10,14], index: 3, kind: input, shape index: {}]
  %s4 = inlined_call_operand.hbm [shape: f32[5,2,10], index: 4, kind: input, shape index: {}]
  %s5 = inlined_call_operand.hbm [shape: f32[4,4,88], index: 5, kind: input, shape index: {}]
  %s6 = inlined_call_operand.hbm [shape: f32[1,88], index: 6, kind: input, shape index: {}]
  %s7 = inlined_call_operand.hbm [shape: f32[3,88,176], index: 7, kind: input, shape index: {}]
  %s8 = inlined_call_operand.hbm [shape: f32[1,176], index: 8, kind: input, shape index: {}]
  %s9 = inlined_call_operand.hbm [shape: f32[3,176,176], index: 9, kind: input, shape index: {}]
  %s10 = inlined_call_operand.hbm [shape: f32[1,176], index: 10, kind: input, shape index: {}]
  %s11 = inlined_call_operand.hbm [shape: f32[5,176,440], index: 11, kind: input, shape index: {}]
  %s12 = inlined_call_operand.hbm [shape: f32[1,440], index: 12, kind: input, shape index: {}]
  %s13 = inlined_call_operand.vmem [shape: f32[440,32], index: 13, kind: input, shape index: {}]
  %s14 = inlined_call_operand.hbm [shape: f32[1,32], index: 14, kind: input, shape index: {}]
  %s15 = inlined_call_operand.hbm [shape: f32[32,32], index: 15, kind: input, shape index: {}]
  %s16 = inlined_call_operand.hbm [shape: f32[1,32], index: 16, kind: input, shape index: {}]
  %s17 = inlined_call_operand.hbm [shape: f32[4,4,88], index: 17, kind: input, shape index: {}]
  %s18 = inlined_call_operand.hbm [shape: f32[1,88], index: 18, kind: input, shape index: {}]
  %s19 = inlined_call_operand.hbm [shape: f32[3,88,176], index: 19, kind: input, shape index: {}]
  %s20 = inlined_call_operand.hbm [shape: f32[1,176], index: 20, kind: input, shape index: {}]
  %s21 = inlined_call_operand.hbm [shape: f32[3,176,176], index: 21, kind: input, shape index: {}]
  %s22 = inlined_call_operand.hbm [shape: f32[1,176], index: 22, kind: input, shape index: {}]
  %s23 = inlined_call_operand.vmem [shape: f32[5,176,32], index: 23, kind: input, shape index: {}]
  %s24 = inlined_call_operand.hbm [shape: f32[1,32], index: 24, kind: input, shape index: {}]
  %s25 = inlined_call_operand.vmem [shape: f32[2,1], index: 25, kind: output, shape index: {}]
  %s26 = sld [smem:[#allocation0]]
  $region198: #{rnd_forward.1} parent=0
    _
  %s28 = ssub.s32 1, %s26
  %s29 = scalar_select 0, %s28, %s26
  $region1: #{rnd_forward.1} parent=0
    #allocation2 [shape = 'u8[65536]{0}', space=vmem, size = 0x10000, scoped, tag = 'input window, operand 1, single buffered']
    #allocation3 [shape = 's32[1]{0}', space=sflag, size = 0x4, scoped, tag = 'scoped memory for rnd_forward.1']
    #allocation4 [shape = 'u8[24576]{0}', space=vmem, size = 0x6000, scoped, tag = 'input window, operand 2, single buffered']
    #allocation5 [shape = 's32[1]{0}', space=sflag, size = 0x4, scoped, tag = 'scoped memory for rnd_forward.1']
    #allocation6 [shape = 'u8[24576]{0}', space=vmem, size = 0x6000, scoped, tag = 'input window, operand 3, single buffered']
    #allocation7 [shape = 'u8[5120]{0}', space=vmem, size = 0x1400, scoped, tag = 'input window, operand 4, single buffered']
    #allocation8 [shape = 's32[1]{0}', space=sflag, size = 0x4, scoped, tag = 'scoped memory for rnd_forward.1']
    #allocation9 [shape = 'u8[8192]{0}', space=vmem, size = 0x2000, scoped, tag = 'input window, operand 5, single buffered']
    #allocation10 [shape = 'u8[512]{0}', space=vmem, size = 0x400, scoped, tag = 'input window, operand 6, single buffered']
    #allocation11 [shape = 's32[1]{0}', space=sflag, size = 0x4, scoped, tag = 'scoped memory for rnd_forward.1']
    #allocation12 [shape = 'u8[270336]{0}', space=vmem, size = 0x42000, scoped, tag = 'input window, operand 7, single buffered']
    #allocation13 [shape = 'u8[1024]{0}', space=vmem, size = 0x400, scoped, tag = 'input window, operand 8, single buffered']
    #allocation14 [shape = 's32[1]{0}', space=sflag, size = 0x4, scoped, tag = 'scoped memory for rnd_forward.1']
    #allocation15 [shape = 'u8[540672]{0}', space=vmem, size = 0x84000, scoped, tag = 'input window, operand 9, single buffered']
    #allocation16 [shape = 'u8[1024]{0}', space=vmem, size = 0x400, scoped, tag = 'input window, operand 10, single buffered']
    #allocation17 [shape = 's32[1]{0}', space=sflag, size = 0x4, scoped, tag = 'scoped memory for rnd_forward.1']
    #allocation18 [shape = 'u8[1802240]{0}', space=vmem, size = 0x1b8000, scoped, tag = 'input window, operand 11, single buffered']
    #allocation19 [shape = 'u8[2048]{0}', space=vmem, size = 0x800, scoped, tag = 'input window, operand 12, single buffered']
    #allocation20 [shape = 's32[1]{0}', space=sflag, size = 0x4, scoped, tag = 'scoped memory for rnd_forward.1']
    #allocation21 [shape = 'u8[512]{0}', space=vmem, size = 0x400, scoped, tag = 'input window, operand 14, single buffered']
    #allocation22 [shape = 'u8[16384]{0}', space=vmem, size = 0x4000, scoped, tag = 'input window, operand 15, single buffered']
    #allocation23 [shape = 's32[1]{0}', space=sflag, size = 0x4, scoped, tag = 'scoped memory for rnd_forward.1']
    #allocation24 [shape = 'u8[512]{0}', space=vmem, size = 0x400, scoped, tag = 'input window, operand 16, single buffered']
    #allocation25 [shape = 'u8[8192]{0}', space=vmem, size = 0x2000, scoped, tag = 'input window, operand 17, single buffered']
    #allocation26 [shape = 's32[1]{0}', space=sflag, size = 0x4, scoped, tag = 'scoped memory for rnd_forward.1']
    #allocation27 [shape = 'u8[512]{0}', space=vmem, size = 0x400, scoped, tag = 'input window, operand 18, single buffered']
    #allocation28 [shape = 'u8[270336]{0}', space=vmem, size = 0x42000, scoped, tag = 'input window, operand 19, single buffered']
    #allocation29 [shape = 's32[1]{0}', space=sflag, size = 0x4, scoped, tag = 'scoped memory for rnd_forward.1']
    #allocation30 [shape = 'u8[1024]{0}', space=vmem, size = 0x400, scoped, tag = 'input window, operand 20, single buffered']
    #allocation31 [shape = 'u8[540672]{0}', space=vmem, size = 0x84000, scoped, tag = 'input window, operand 21, single buffered']
    #allocation32 [shape = 's32[1]{0}', space=sflag, size = 0x4, scoped, tag = 'scoped memory for rnd_forward.1']
    #allocation33 [shape = 'u8[1024]{0}', space=vmem, size = 0x400, scoped, tag = 'input window, operand 22, single buffered']
    #allocation34 [shape = 'u8[512]{0}', space=vmem, size = 0x400, scoped, tag = 'input window, operand 24, single buffered']
    #allocation35 [shape = 's32[1]{0}', space=sflag, size = 0x4, scoped, tag = 'scoped memory for rnd_forward.1']
    %30 = vsyncpa [#allocation3], 0
    %31 = vsyncpa [#allocation5], 0
    %32 = vsyncpa [#allocation8], 0
    %33 = vsyncpa [#allocation11], 0
    %34 = vsyncpa [#allocation14], 0
    %35 = vsyncpa [#allocation17], 0
    %36 = vsyncpa [#allocation20], 0
    %37 = vsyncpa [#allocation23], 0
    %38 = vsyncpa [#allocation26], 0
    %39 = vsyncpa [#allocation29], 0
    %40 = vsyncpa [#allocation32], 0
    %41 = vsyncpa [#allocation35], 0
    // Predicated region
    $region2: #{rnd_forward.1} parent=1 // pred_check
      _
    $region3: #{rnd_forward.1} parent=1 // pred_check_branch
      %43 = sbr.rel (0) target = $region5
    $region4: #{rnd_forward.1} parent=1 // pred_region
      _
    $region5: #{rnd_forward.1} parent=1 // pred_fallthru
      _
    // Predicated region
    $region6: #{rnd_forward.1} parent=1 // pred_check
      _
    $region7: #{rnd_forward.1} parent=1 // pred_check_branch
      %45 = sbr.rel (0) target = $region9
    $region8: #{rnd_forward.1} parent=1 // pred_region
      %s47 = ssub.s32 2048, 2048
      %48 = vsyncadd [#allocation3], %s47
      %s49 = sshll.u32 [#allocation2], 4
      %s50 = int_to_ptr.vmem [resolvable:$true] %s49
      %55 = dma.hbm_to_vmem [thread:$0]  %s1, 2048, %s50, [#allocation3], 128, 128, 8
    $region9: #{rnd_forward.1} parent=1 // pred_fallthru
      _
    // Predicated region
    $region10: #{rnd_forward.1} parent=1 // pred_check
      _
    $region11: #{rnd_forward.1} parent=1 // pred_check_branch
      %57 = sbr.rel (0) target = $region13
    $region12: #{rnd_forward.1} parent=1 // pred_region
      %s59 = ssub.s32 768, 768
      %60 = vsyncadd [#allocation5], %s59
      %s61 = sshll.u32 [#allocation4], 4
      %s62 = int_to_ptr.vmem [resolvable:$true] %s61
      %67 = dma.hbm_to_vmem [thread:$0]  %s2, 768, %s62, [#allocation5], 128, 128, 8
    $region13: #{rnd_forward.1} parent=1 // pred_fallthru
      _
    // Predicated region
    $region14: #{rnd_forward.1} parent=1 // pred_check
      _
    $region15: #{rnd_forward.1} parent=1 // pred_check_branch
      %69 = sbr.rel (0) target = $region17
    $region16: #{rnd_forward.1} parent=1 // pred_region
      %s71 = ssub.s32 768, 768
      %72 = vsyncadd [#allocation5], %s71
      %s73 = sshll.u32 [#allocation6], 4
      %s74 = int_to_ptr.vmem [resolvable:$true] %s73
      %79 = dma.hbm_to_vmem [thread:$0]  %s3, 768, %s74, [#allocation5], 128, 128, 8
    $region17: #{rnd_forward.1} parent=1 // pred_fallthru
      _
    // Predicated region
    $region18: #{rnd_forward.1} parent=1 // pred_check
      _
    $region19: #{rnd_forward.1} parent=1 // pred_check_branch
      %81 = sbr.rel (0) target = $region21
    $region20: #{rnd_forward.1} parent=1 // pred_region
      %s83 = ssub.s32 160, 160
      %84 = vsyncadd [#allocation8], %s83
      %s85 = sshll.u32 [#allocation7], 4
      %s86 = int_to_ptr.vmem [resolvable:$true] %s85
      %91 = dma.hbm_to_vmem [thread:$0]  %s4, 160, %s86, [#allocation8], 32, 32, 2
    $region21: #{rnd_forward.1} parent=1 // pred_fallthru
      _
    // Predicated region
    $region22: #{rnd_forward.1} parent=1 // pred_check
      _
    $region23: #{rnd_forward.1} parent=1 // pred_check_branch
      %93 = sbr.rel (0) target = $region25
    $region24: #{rnd_forward.1} parent=1 // pred_region
      %s95 = ssub.s32 256, 256
      %96 = vsyncadd [#allocation8], %s95
      %s97 = sshll.u32 [#allocation9], 4
      %s98 = int_to_ptr.vmem [resolvable:$true] %s97
      %103 = dma.hbm_to_vmem [thread:$0]  %s5, 256, %s98, [#allocation8], 64, 64, 4
    $region25: #{rnd_forward.1} parent=1 // pred_fallthru
      _
    // Predicated region
    $region26: #{rnd_forward.1} parent=1 // pred_check
      _
    $region27: #{rnd_forward.1} parent=1 // pred_check_branch
      %105 = sbr.rel (0) target = $region29
    $region28: #{rnd_forward.1} parent=1 // pred_region
      %s107 = ssub.s32 16, 16
      %108 = vsyncadd [#allocation11], %s107
      %s110 = sshll.u32 [#allocation10], 4
      %s111 = int_to_ptr.vmem [resolvable:$true] %s110
      %113 = dma.hbm_to_vmem [thread:$0]  %s6, 16, %s111, [#allocation11]
    $region29: #{rnd_forward.1} parent=1 // pred_fallthru
      _
    // Predicated region
    $region30: #{rnd_forward.1} parent=1 // pred_check
      _
    $region31: #{rnd_forward.1} parent=1 // pred_check_branch
      %115 = sbr.rel (0) target = $region33
    $region32: #{rnd_forward.1} parent=1 // pred_region
      %s117 = ssub.s32 8448, 8448
      %118 = vsyncadd [#allocation11], %s117
      %s119 = sshll.u32 [#allocation12], 4
      %s120 = int_to_ptr.vmem [resolvable:$true] %s119
      %125 = dma.hbm_to_vmem [thread:$0]  %s7, 8448, %s120, [#allocation11], 256, 256, 16
    $region33: #{rnd_forward.1} parent=1 // pred_fallthru
      _
    // Predicated region
    $region34: #{rnd_forward.1} parent=1 // pred_check
      _
    $region35: #{rnd_forward.1} parent=1 // pred_check_branch
      %127 = sbr.rel (0) target = $region37
    $region36: #{rnd_forward.1} parent=1 // pred_region
      %s129 = ssub.s32 32, 32
      %130 = vsyncadd [#allocation14], %s129
      %s132 = sshll.u32 [#allocation13], 4
      %s133 = int_to_ptr.vmem [resolvable:$true] %s132
      %135 = dma.hbm_to_vmem [thread:$0]  %s8, 32, %s133, [#allocation14]
    $region37: #{rnd_forward.1} parent=1 // pred_fallthru
      _
    // Predicated region
    $region38: #{rnd_forward.1} parent=1 // pred_check
      _
    $region39: #{rnd_forward.1} parent=1 // pred_check_branch
      %137 = sbr.rel (0) target = $region41
    $region40: #{rnd_forward.1} parent=1 // pred_region
      %s139 = ssub.s32 16896, 16896
      %140 = vsyncadd [#allocation14], %s139
      %s141 = sshll.u32 [#allocation15], 4
      %s142 = int_to_ptr.vmem [resolvable:$true] %s141
      %147 = dma.hbm_to_vmem [thread:$0]  %s9, 16896, %s142, [#allocation14], 256, 256, 16
    $region41: #{rnd_forward.1} parent=1 // pred_fallthru
      _
    // Predicated region
    $region42: #{rnd_forward.1} parent=1 // pred_check
      _
    $region43: #{rnd_forward.1} parent=1 // pred_check_branch
      %149 = sbr.rel (0) target = $region45
    $region44: #{rnd_forward.1} parent=1 // pred_region
      %s151 = ssub.s32 32, 32
      %152 = vsyncadd [#allocation17], %s151
      %s154 = sshll.u32 [#allocation16], 4
      %s155 = int_to_ptr.vmem [resolvable:$true] %s154
      %157 = dma.hbm_to_vmem [thread:$0]  %s10, 32, %s155, [#allocation17]
    $region45: #{rnd_forward.1} parent=1 // pred_fallthru
      _
    // Predicated region
    $region46: #{rnd_forward.1} parent=1 // pred_check
      _
    $region47: #{rnd_forward.1} parent=1 // pred_check_branch
      %159 = sbr.rel (0) target = $region49
    $region48: #{rnd_forward.1} parent=1 // pred_region
      %s161 = ssub.s32 56320, 56320
      %162 = vsyncadd [#allocation17], %s161
      %s163 = sshll.u32 [#allocation18], 4
      %s164 = int_to_ptr.vmem [resolvable:$true] %s163
      %169 = dma.hbm_to_vmem [thread:$0]  %s11, 56320, %s164, [#allocation17], 512, 512, 32
    $region49: #{rnd_forward.1} parent=1 // pred_fallthru
      _
    // Predicated region
    $region50: #{rnd_forward.1} parent=1 // pred_check
      _
    $region51: #{rnd_forward.1} parent=1 // pred_check_branch
      %171 = sbr.rel (0) target = $region53
    $region52: #{rnd_forward.1} parent=1 // pred_region
      %s173 = ssub.s32 64, 64
      %174 = vsyncadd [#allocation20], %s173
      %s176 = sshll.u32 [#allocation19], 4
      %s177 = int_to_ptr.vmem [resolvable:$true] %s176
      %179 = dma.hbm_to_vmem [thread:$0]  %s12, 64, %s177, [#allocation20]
    $region53: #{rnd_forward.1} parent=1 // pred_fallthru
      _
    // Predicated region
    $region54: #{rnd_forward.1} parent=1 // pred_check
      _
    $region55: #{rnd_forward.1} parent=1 // pred_check_branch
      %181 = sbr.rel (0) target = $region57
    $region56: #{rnd_forward.1} parent=1 // pred_region
      _
    $region57: #{rnd_forward.1} parent=1 // pred_fallthru
      _
    // Predicated region
    $region58: #{rnd_forward.1} parent=1 // pred_check
      _
    $region59: #{rnd_forward.1} parent=1 // pred_check_branch
      %183 = sbr.rel (0) target = $region61
    $region60: #{rnd_forward.1} parent=1 // pred_region
      %s185 = ssub.s32 16, 16
      %186 = vsyncadd [#allocation20], %s185
      %s188 = sshll.u32 [#allocation21], 4
      %s189 = int_to_ptr.vmem [resolvable:$true] %s188
      %191 = dma.hbm_to_vmem [thread:$0]  %s14, 16, %s189, [#allocation20]
    $region61: #{rnd_forward.1} parent=1 // pred_fallthru
      _
    // Predicated region
    $region62: #{rnd_forward.1} parent=1 // pred_check
      _
    $region63: #{rnd_forward.1} parent=1 // pred_check_branch
      %193 = sbr.rel (0) target = $region65
    $region64: #{rnd_forward.1} parent=1 // pred_region
      %s195 = ssub.s32 512, 512
      %196 = vsyncadd [#allocation23], %s195
      %s197 = sshll.u32 [#allocation22], 4
      %s198 = int_to_ptr.vmem [resolvable:$true] %s197
      %203 = dma.hbm_to_vmem [thread:$0]  %s15, 512, %s198, [#allocation23], 128, 128, 8
    $region65: #{rnd_forward.1} parent=1 // pred_fallthru
      _
    // Predicated region
    $region66: #{rnd_forward.1} parent=1 // pred_check
      _
    $region67: #{rnd_forward.1} parent=1 // pred_check_branch
      %205 = sbr.rel (0) target = $region69
    $region68: #{rnd_forward.1} parent=1 // pred_region
      %s207 = ssub.s32 16, 16
      %208 = vsyncadd [#allocation23], %s207
      %s210 = sshll.u32 [#allocation24], 4
      %s211 = int_to_ptr.vmem [resolvable:$true] %s210
      %213 = dma.hbm_to_vmem [thread:$0]  %s16, 16, %s211, [#allocation23]
    $region69: #{rnd_forward.1} parent=1 // pred_fallthru
      _
    // Predicated region
    $region70: #{rnd_forward.1} parent=1 // pred_check
      _
    $region71: #{rnd_forward.1} parent=1 // pred_check_branch
      %215 = sbr.rel (0) target = $region73
    $region72: #{rnd_forward.1} parent=1 // pred_region
      %s217 = ssub.s32 256, 256
      %218 = vsyncadd [#allocation26], %s217
      %s219 = sshll.u32 [#allocation25], 4
      %s220 = int_to_ptr.vmem [resolvable:$true] %s219
      %225 = dma.hbm_to_vmem [thread:$0]  %s17, 256, %s220, [#allocation26], 64, 64, 4
    $region73: #{rnd_forward.1} parent=1 // pred_fallthru
      _
    // Predicated region
    $region74: #{rnd_forward.1} parent=1 // pred_check
      _
    $region75: #{rnd_forward.1} parent=1 // pred_check_branch
      %227 = sbr.rel (0) target = $region77
    $region76: #{rnd_forward.1} parent=1 // pred_region
      %s229 = ssub.s32 16, 16
      %230 = vsyncadd [#allocation26], %s229
      %s232 = sshll.u32 [#allocation27], 4
      %s233 = int_to_ptr.vmem [resolvable:$true] %s232
      %235 = dma.hbm_to_vmem [thread:$0]  %s18, 16, %s233, [#allocation26]
    $region77: #{rnd_forward.1} parent=1 // pred_fallthru
      _
    // Predicated region
    $region78: #{rnd_forward.1} parent=1 // pred_check
      _
    $region79: #{rnd_forward.1} parent=1 // pred_check_branch
      %237 = sbr.rel (0) target = $region81
    $region80: #{rnd_forward.1} parent=1 // pred_region
      %s239 = ssub.s32 8448, 8448
      %240 = vsyncadd [#allocation29], %s239
      %s241 = sshll.u32 [#allocation28], 4
      %s242 = int_to_ptr.vmem [resolvable:$true] %s241
      %247 = dma.hbm_to_vmem [thread:$0]  %s19, 8448, %s242, [#allocation29], 256, 256, 16
    $region81: #{rnd_forward.1} parent=1 // pred_fallthru
      _
    // Predicated region
    $region82: #{rnd_forward.1} parent=1 // pred_check
      _
    $region83: #{rnd_forward.1} parent=1 // pred_check_branch
      %249 = sbr.rel (0) target = $region85
    $region84: #{rnd_forward.1} parent=1 // pred_region
      %s251 = ssub.s32 32, 32
      %252 = vsyncadd [#allocation29], %s251
      %s254 = sshll.u32 [#allocation30], 4
      %s255 = int_to_ptr.vmem [resolvable:$true] %s254
      %257 = dma.hbm_to_vmem [thread:$0]  %s20, 32, %s255, [#allocation29]
    $region85: #{rnd_forward.1} parent=1 // pred_fallthru
      _
    // Predicated region
    $region86: #{rnd_forward.1} parent=1 // pred_check
      _
    $region87: #{rnd_forward.1} parent=1 // pred_check_branch
      %259 = sbr.rel (0) target = $region89
    $region88: #{rnd_forward.1} parent=1 // pred_region
      %s261 = ssub.s32 16896, 16896
      %262 = vsyncadd [#allocation32], %s261
      %s263 = sshll.u32 [#allocation31], 4
      %s264 = int_to_ptr.vmem [resolvable:$true] %s263
      %269 = dma.hbm_to_vmem [thread:$0]  %s21, 16896, %s264, [#allocation32], 256, 256, 16
    $region89: #{rnd_forward.1} parent=1 // pred_fallthru
      _
    // Predicated region
    $region90: #{rnd_forward.1} parent=1 // pred_check
      _
    $region91: #{rnd_forward.1} parent=1 // pred_check_branch
      %271 = sbr.rel (0) target = $region93
    $region92: #{rnd_forward.1} parent=1 // pred_region
      %s273 = ssub.s32 32, 32
      %274 = vsyncadd [#allocation32], %s273
      %s276 = sshll.u32 [#allocation33], 4
      %s277 = int_to_ptr.vmem [resolvable:$true] %s276
      %279 = dma.hbm_to_vmem [thread:$0]  %s22, 32, %s277, [#allocation32]
    $region93: #{rnd_forward.1} parent=1 // pred_fallthru
      _
    // Predicated region
    $region94: #{rnd_forward.1} parent=1 // pred_check
      _
    $region95: #{rnd_forward.1} parent=1 // pred_check_branch
      %281 = sbr.rel (0) target = $region97
    $region96: #{rnd_forward.1} parent=1 // pred_region
      _
    $region97: #{rnd_forward.1} parent=1 // pred_fallthru
      _
    // Predicated region
    $region98: #{rnd_forward.1} parent=1 // pred_check
      _
    $region99: #{rnd_forward.1} parent=1 // pred_check_branch
      %283 = sbr.rel (0) target = $region101
    $region100: #{rnd_forward.1} parent=1 // pred_region
      %s285 = ssub.s32 16, 16
      %286 = vsyncadd [#allocation35], %s285
      %s288 = sshll.u32 [#allocation34], 4
      %s289 = int_to_ptr.vmem [resolvable:$true] %s288
      %291 = dma.hbm_to_vmem [thread:$0]  %s24, 16, %s289, [#allocation35]
    $region101: #{rnd_forward.1} parent=1 // pred_fallthru
      _
    // Predicated region
    $region102: #{rnd_forward.1} parent=1 // pred_check
      _
    $region103: #{rnd_forward.1} parent=1 // pred_check_branch
      %293 = sbr.rel (0) target = $region105
    $region104: #{rnd_forward.1} parent=1 // pred_region
      %294 = dma.done [#allocation3], 2048
    $region105: #{rnd_forward.1} parent=1 // pred_fallthru
      _
    // Predicated region
    $region106: #{rnd_forward.1} parent=1 // pred_check
      _
    $region107: #{rnd_forward.1} parent=1 // pred_check_branch
      %296 = sbr.rel (0) target = $region109
    $region108: #{rnd_forward.1} parent=1 // pred_region
      %297 = dma.done [#allocation5], 768
    $region109: #{rnd_forward.1} parent=1 // pred_fallthru
      _
    // Predicated region
    $region110: #{rnd_forward.1} parent=1 // pred_check
      _
    $region111: #{rnd_forward.1} parent=1 // pred_check_branch
      %299 = sbr.rel (0) target = $region113
    $region112: #{rnd_forward.1} parent=1 // pred_region
      %300 = dma.done [#allocation5], 768
    $region113: #{rnd_forward.1} parent=1 // pred_fallthru
      _
    // Predicated region
    $region114: #{rnd_forward.1} parent=1 // pred_check
      _
    $region115: #{rnd_forward.1} parent=1 // pred_check_branch
      %302 = sbr.rel (0) target = $region117
    $region116: #{rnd_forward.1} parent=1 // pred_region
      %303 = dma.done [#allocation8], 160
    $region117: #{rnd_forward.1} parent=1 // pred_fallthru
      _
    // Predicated region
    $region118: #{rnd_forward.1} parent=1 // pred_check
      _
    $region119: #{rnd_forward.1} parent=1 // pred_check_branch
      %305 = sbr.rel (0) target = $region121
    $region120: #{rnd_forward.1} parent=1 // pred_region
      %306 = dma.done [#allocation8], 256
    $region121: #{rnd_forward.1} parent=1 // pred_fallthru
      _
    // Predicated region
    $region122: #{rnd_forward.1} parent=1 // pred_check
      _
    $region123: #{rnd_forward.1} parent=1 // pred_check_branch
      %308 = sbr.rel (0) target = $region125
    $region124: #{rnd_forward.1} parent=1 // pred_region
      %309 = dma.done [#allocation11], 16
    $region125: #{rnd_forward.1} parent=1 // pred_fallthru
      _
    // Predicated region
    $region126: #{rnd_forward.1} parent=1 // pred_check
      _
    $region127: #{rnd_forward.1} parent=1 // pred_check_branch
      %311 = sbr.rel (0) target = $region129
    $region128: #{rnd_forward.1} parent=1 // pred_region
      %312 = dma.done [#allocation11], 8448
    $region129: #{rnd_forward.1} parent=1 // pred_fallthru
      _
    // Predicated region
    $region130: #{rnd_forward.1} parent=1 // pred_check
      _
    $region131: #{rnd_forward.1} parent=1 // pred_check_branch
      %314 = sbr.rel (0) target = $region133
    $region132: #{rnd_forward.1} parent=1 // pred_region
      %315 = dma.done [#allocation14], 32
    $region133: #{rnd_forward.1} parent=1 // pred_fallthru
      _
    // Predicated region
    $region134: #{rnd_forward.1} parent=1 // pred_check
      _
    $region135: #{rnd_forward.1} parent=1 // pred_check_branch
      %317 = sbr.rel (0) target = $region137
    $region136: #{rnd_forward.1} parent=1 // pred_region
      %318 = dma.done [#allocation14], 16896
    $region137: #{rnd_forward.1} parent=1 // pred_fallthru
      _
    // Predicated region
    $region138: #{rnd_forward.1} parent=1 // pred_check
      _
    $region139: #{rnd_forward.1} parent=1 // pred_check_branch
      %320 = sbr.rel (0) target = $region141
    $region140: #{rnd_forward.1} parent=1 // pred_region
      %321 = dma.done [#allocation17], 32
    $region141: #{rnd_forward.1} parent=1 // pred_fallthru
      _
    // Predicated region
    $region142: #{rnd_forward.1} parent=1 // pred_check
      _
    $region143: #{rnd_forward.1} parent=1 // pred_check_branch
      %323 = sbr.rel (0) target = $region145
    $region144: #{rnd_forward.1} parent=1 // pred_region
      %324 = dma.done [#allocation17], 56320
    $region145: #{rnd_forward.1} parent=1 // pred_fallthru
      _
    // Predicated region
    $region146: #{rnd_forward.1} parent=1 // pred_check
      _
    $region147: #{rnd_forward.1} parent=1 // pred_check_branch
      %326 = sbr.rel (0) target = $region149
    $region148: #{rnd_forward.1} parent=1 // pred_region
      %327 = dma.done [#allocation20], 64
    $region149: #{rnd_forward.1} parent=1 // pred_fallthru
      _
    // Predicated region
    $region150: #{rnd_forward.1} parent=1 // pred_check
      _
    $region151: #{rnd_forward.1} parent=1 // pred_check_branch
      %329 = sbr.rel (0) target = $region153
    $region152: #{rnd_forward.1} parent=1 // pred_region
      %330 = dma.done [#allocation20], 16
    $region153: #{rnd_forward.1} parent=1 // pred_fallthru
      _
    // Predicated region
    $region154: #{rnd_forward.1} parent=1 // pred_check
      _
    $region155: #{rnd_forward.1} parent=1 // pred_check_branch
      %332 = sbr.rel (0) target = $region157
    $region156: #{rnd_forward.1} parent=1 // pred_region
      %333 = dma.done [#allocation23], 512
    $region157: #{rnd_forward.1} parent=1 // pred_fallthru
      _
    // Predicated region
    $region158: #{rnd_forward.1} parent=1 // pred_check
      _
    $region159: #{rnd_forward.1} parent=1 // pred_check_branch
      %335 = sbr.rel (0) target = $region161
    $region160: #{rnd_forward.1} parent=1 // pred_region
      %336 = dma.done [#allocation23], 16
    $region161: #{rnd_forward.1} parent=1 // pred_fallthru
      _
    // Predicated region
    $region162: #{rnd_forward.1} parent=1 // pred_check
      _
    $region163: #{rnd_forward.1} parent=1 // pred_check_branch
      %338 = sbr.rel (0) target = $region165
    $region164: #{rnd_forward.1} parent=1 // pred_region
      %339 = dma.done [#allocation26], 256
    $region165: #{rnd_forward.1} parent=1 // pred_fallthru
      _
    // Predicated region
    $region166: #{rnd_forward.1} parent=1 // pred_check
      _
    $region167: #{rnd_forward.1} parent=1 // pred_check_branch
      %341 = sbr.rel (0) target = $region169
    $region168: #{rnd_forward.1} parent=1 // pred_region
      %342 = dma.done [#allocation26], 16
    $region169: #{rnd_forward.1} parent=1 // pred_fallthru
      _
    // Predicated region
    $region170: #{rnd_forward.1} parent=1 // pred_check
      _
    $region171: #{rnd_forward.1} parent=1 // pred_check_branch
      %344 = sbr.rel (0) target = $region173
    $region172: #{rnd_forward.1} parent=1 // pred_region
      %345 = dma.done [#allocation29], 8448
    $region173: #{rnd_forward.1} parent=1 // pred_fallthru
      _
    // Predicated region
    $region174: #{rnd_forward.1} parent=1 // pred_check
      _
    $region175: #{rnd_forward.1} parent=1 // pred_check_branch
      %347 = sbr.rel (0) target = $region177
    $region176: #{rnd_forward.1} parent=1 // pred_region
      %348 = dma.done [#allocation29], 32
    $region177: #{rnd_forward.1} parent=1 // pred_fallthru
      _
    // Predicated region
    $region178: #{rnd_forward.1} parent=1 // pred_check
      _
    $region179: #{rnd_forward.1} parent=1 // pred_check_branch
      %350 = sbr.rel (0) target = $region181
    $region180: #{rnd_forward.1} parent=1 // pred_region
      %351 = dma.done [#allocation32], 16896
    $region181: #{rnd_forward.1} parent=1 // pred_fallthru
      _
    // Predicated region
    $region182: #{rnd_forward.1} parent=1 // pred_check
      _
    $region183: #{rnd_forward.1} parent=1 // pred_check_branch
      %353 = sbr.rel (0) target = $region185
    $region184: #{rnd_forward.1} parent=1 // pred_region
      %354 = dma.done [#allocation32], 32
    $region185: #{rnd_forward.1} parent=1 // pred_fallthru
      _
    // Predicated region
    $region186: #{rnd_forward.1} parent=1 // pred_check
      _
    $region187: #{rnd_forward.1} parent=1 // pred_check_branch
      %356 = sbr.rel (0) target = $region189
    $region188: #{rnd_forward.1} parent=1 // pred_region
      %357 = dma.done [#allocation35], 16
    $region189: #{rnd_forward.1} parent=1 // pred_fallthru
      _
    %v358 = vld [vmem:[%s0] sm:$0xff]
    %v359 = vld [vmem:[%s0 + $0x8] sm:$0xff]
    %v360 = vld [vmem:[%s0 + $0x10] sm:$0xff]
    %v361 = vld [vmem:[%s0 + $0x18] sm:$0xff]
    %v362 = vld [vmem:[%s0 + $0x20] sm:$0xff]
    %v363 = vld [vmem:[%s0 + $0x28] sm:$0xff]
    %v364 = vld [vmem:[%s0 + $0x30] sm:$0xff]
    %v365 = vld [vmem:[%s0 + $0x38] sm:$0xff]
    %v366 = vld [vmem:[#allocation2] sm:$0xff]
    %v367 = vld [vmem:[#allocation2 + $0x8] sm:$0xff]
    %v368 = vld [vmem:[#allocation2 + $0x10] sm:$0xff]
    %v369 = vld [vmem:[#allocation2 + $0x18] sm:$0x3f]
    %vm370 = vcmask 523264
    %v372 = vsel %vm370, %v366, 0
    %v375 = vsel %vm370, %v367, 0
    %v378 = vsel %vm370, %v368, 0
    %v381 = vsel %vm370, %v369, 0
    %383 = vmatprep.subr.mxu0 0.0
    %384 = vmatpush1.msra.mxu0 0.0
    %385 = vmatprep.subr.mxu0 0.0
    %386 = vmatpush1.msra.mxu0 0.0
    %387 = vmatprep.subr.mxu0 0.0
    %388 = vmatpush1.msra.mxu0 0.0
    %389 = vmatprep.subr.mxu0 0.0
    %390 = vmatpush1.msra.mxu0 0.0
    %391 = vmatprep.subr.mxu0 0.0
    %392 = vmatpush1.msra.mxu0 0.0
    %393 = vmatprep.subr.mxu0 0.0
    %394 = vmatpush1.msra.mxu0 0.0
    %395 = vmatprep.subr.mxu0 0.0
    %396 = vmatpush1.msra.mxu0 0.0
    %397 = vmatprep.subr.mxu0 0.0
    %398 = vmatpush1.msra.mxu0 0.0
    %399 = vmatprep.subr.mxu0 0.0
    %400 = vmatpush1.msra.mxu0 %v365
    %401 = vmatprep.subr.mxu0 0.0
    %402 = vmatpush1.msra.mxu0 %v364
    %403 = vmatprep.subr.mxu0 0.0
    %404 = vmatpush1.msra.mxu0 %v363
    %405 = vmatprep.subr.mxu0 0.0
    %406 = vmatpush1.msra.mxu0 %v362
    %407 = vmatprep.subr.mxu0 0.0
    %408 = vmatpush1.msra.mxu0 %v361
    %409 = vmatprep.subr.mxu0 0.0
    %410 = vmatpush1.msra.mxu0 %v360
    %411 = vmatprep.subr.mxu0 0.0
    %412 = vmatpush1.msra.mxu0 %v359
    %413 = vmatprep.subr.mxu0 0.0
    %414 = vmatpush1.msra.mxu0 %v358
    %415 = vmatprep.subr.mxu0 0.0
    %416 = vmatpush2.msra.mxu0 0.0
    %417 = vmatprep.subr.mxu0 0.0
    %418 = vmatpush2.msra.mxu0 0.0
    %419 = vmatprep.subr.mxu0 0.0
    %420 = vmatpush2.msra.mxu0 0.0
    %421 = vmatprep.subr.mxu0 0.0
    %422 = vmatpush2.msra.mxu0 0.0
    %423 = vmatprep.subr.mxu0 0.0
    %424 = vmatpush2.msra.mxu0 0.0
    %425 = vmatprep.subr.mxu0 0.0
    %426 = vmatpush2.msra.mxu0 0.0
    %427 = vmatprep.subr.mxu0 0.0
    %428 = vmatpush2.msra.mxu0 0.0
    %429 = vmatprep.subr.mxu0 0.0
    %430 = vmatpush2.msra.mxu0 0.0
    %431 = vmatprep.subr.mxu0 0.0
    %432 = vmatpush2.msra.mxu0 0.0
    %433 = vmatprep.subr.mxu0 0.0
    %434 = vmatpush2.msra.mxu0 0.0
    %435 = vmatprep.subr.mxu0 0.0
    %436 = vmatpush2.msra.mxu0 0.0
    %437 = vmatprep.subr.mxu0 0.0
    %438 = vmatpush2.msra.mxu0 0.0
    %439 = vmatprep.subr.mxu0 0.0
    %440 = vmatpush2.msra.mxu0 0.0
    %441 = vmatprep.subr.mxu0 0.0
    %442 = vmatpush2.msra.mxu0 0.0
    %443 = vmatprep.subr.mxu0 0.0
    %444 = vmatpush2.msra.mxu0 0.0
    %445 = vmatprep.subr.mxu0 0.0
    %446 = vmatpush2.msra.mxu0 0.0
    %447 = vmatprep.mubr.f32.mxu0 0.0
    %448 = vmatmul.mubr.f32.gmra.mxu0 %v372
    %v449 = vpop.f32.mrf.mxu0
    %v450 = vadd.f32 0.0, %v449
    %v451 = vpop.f32.mrf.mxu0
    %452 = vmatprep.mubr.f32.mxu0 0.0
    %453 = vmatmul.mubr.f32.gmra.mxu0 %v375
    %v454 = vpop.f32.mrf.mxu0
    %v455 = vadd.f32 0.0, %v454
    %v456 = vpop.f32.mrf.mxu0
    %457 = vmatprep.mubr.f32.mxu0 0.0
    %458 = vmatmul.mubr.f32.gmra.mxu0 %v378
    %v459 = vpop.f32.mrf.mxu0
    %v460 = vadd.f32 0.0, %v459
    %v461 = vpop.f32.mrf.mxu0
    %462 = vmatprep.mubr.f32.mxu0 0.0
    %463 = vmatmul.mubr.f32.gmra.mxu0 %v381
    %v464 = vpop.f32.mrf.mxu0
    %v465 = vadd.f32 0.0, %v464
    %v466 = vpop.f32.mrf.mxu0
    %467 = vdwg.mxu0
    %s468 = scalar_lea.vmem [#allocation2], 32
    %v469 = vld [vmem:[%s468] sm:$0xff]
    %v470 = vld [vmem:[%s468 + $0x8] sm:$0xff]
    %v471 = vld [vmem:[%s468 + $0x10] sm:$0xff]
    %v472 = vld [vmem:[%s468 + $0x18] sm:$0x3f]
    %v474 = vsel %vm370, %v469, 0
    %v477 = vsel %vm370, %v470, 0
    %v480 = vsel %vm370, %v471, 0
    %v483 = vsel %vm370, %v472, 0
    %485 = vmatprep.subr.mxu0 0.0
    %486 = vmatpush1.msra.mxu0 0.0
    %487 = vmatprep.subr.mxu0 0.0
    %488 = vmatpush1.msra.mxu0 0.0
    %489 = vmatprep.subr.mxu0 0.0
    %490 = vmatpush1.msra.mxu0 0.0
    %491 = vmatprep.subr.mxu0 0.0
    %492 = vmatpush1.msra.mxu0 0.0
    %493 = vmatprep.subr.mxu0 0.0
    %494 = vmatpush1.msra.mxu0 0.0
    %495 = vmatprep.subr.mxu0 0.0
    %496 = vmatpush1.msra.mxu0 0.0
    %497 = vmatprep.subr.mxu0 0.0
    %498 = vmatpush1.msra.mxu0 0.0
    %499 = vmatprep.subr.mxu0 0.0
    %500 = vmatpush1.msra.mxu0 0.0
    %501 = vmatprep.subr.mxu0 0.0
    %502 = vmatpush1.msra.mxu0 %v365
    %503 = vmatprep.subr.mxu0 0.0
    %504 = vmatpush1.msra.mxu0 %v364
    %505 = vmatprep.subr.mxu0 0.0
    %506 = vmatpush1.msra.mxu0 %v363
    %507 = vmatprep.subr.mxu0 0.0
    %508 = vmatpush1.msra.mxu0 %v362
    %509 = vmatprep.subr.mxu0 0.0
    %510 = vmatpush1.msra.mxu0 %v361
    %511 = vmatprep.subr.mxu0 0.0
    %512 = vmatpush1.msra.mxu0 %v360
    %513 = vmatprep.subr.mxu0 0.0
    %514 = vmatpush1.msra.mxu0 %v359
    %515 = vmatprep.subr.mxu0 0.0
    %516 = vmatpush1.msra.mxu0 %v358
    %517 = vmatprep.subr.mxu0 0.0
    %518 = vmatpush2.msra.mxu0 0.0
    %519 = vmatprep.subr.mxu0 0.0
    %520 = vmatpush2.msra.mxu0 0.0
    %521 = vmatprep.subr.mxu0 0.0
    %522 = vmatpush2.msra.mxu0 0.0
    %523 = vmatprep.subr.mxu0 0.0
    %524 = vmatpush2.msra.mxu0 0.0
    %525 = vmatprep.subr.mxu0 0.0
    %526 = vmatpush2.msra.mxu0 0.0
    %527 = vmatprep.subr.mxu0 0.0
    %528 = vmatpush2.msra.mxu0 0.0
    %529 = vmatprep.subr.mxu0 0.0
    %530 = vmatpush2.msra.mxu0 0.0
    %531 = vmatprep.subr.mxu0 0.0
    %532 = vmatpush2.msra.mxu0 0.0
    %533 = vmatprep.subr.mxu0 0.0
    %534 = vmatpush2.msra.mxu0 0.0
    %535 = vmatprep.subr.mxu0 0.0
    %536 = vmatpush2.msra.mxu0 0.0
    %537 = vmatprep.subr.mxu0 0.0
    %538 = vmatpush2.msra.mxu0 0.0
    %539 = vmatprep.subr.mxu0 0.0
    %540 = vmatpush2.msra.mxu0 0.0
    %541 = vmatprep.subr.mxu0 0.0
    %542 = vmatpush2.msra.mxu0 0.0
    %543 = vmatprep.subr.mxu0 0.0
    %544 = vmatpush2.msra.mxu0 0.0
    %545 = vmatprep.subr.mxu0 0.0
    %546 = vmatpush2.msra.mxu0 0.0
    %547 = vmatprep.subr.mxu0 0.0
    %548 = vmatpush2.msra.mxu0 0.0
    %549 = vmatprep.mubr.f32.mxu0 0.0
    %550 = vmatmul.mubr.f32.gmra.mxu0 %v474
    %v551 = vpop.f32.mrf.mxu0
    %v552 = vadd.f32 0.0, %v551
    %v553 = vpop.f32.mrf.mxu0
    %554 = vmatprep.mubr.f32.mxu0 0.0
    %555 = vmatmul.mubr.f32.gmra.mxu0 %v477
    %v556 = vpop.f32.mrf.mxu0
    %v557 = vadd.f32 0.0, %v556
    %v558 = vpop.f32.mrf.mxu0
    %559 = vmatprep.mubr.f32.mxu0 0.0
    %560 = vmatmul.mubr.f32.gmra.mxu0 %v480
    %v561 = vpop.f32.mrf.mxu0
    %v562 = vadd.f32 0.0, %v561
    %v563 = vpop.f32.mrf.mxu0
    %564 = vmatprep.mubr.f32.mxu0 0.0
    %565 = vmatmul.mubr.f32.gmra.mxu0 %v483
    %v566 = vpop.f32.mrf.mxu0
    %v567 = vadd.f32 0.0, %v566
    %v568 = vpop.f32.mrf.mxu0
    %569 = vdwg.mxu0
    %s570 = scalar_lea.vmem [#allocation2], 64
    %v571 = vld [vmem:[%s570] sm:$0xff]
    %v572 = vld [vmem:[%s570 + $0x8] sm:$0xff]
    %v573 = vld [vmem:[%s570 + $0x10] sm:$0xff]
    %v574 = vld [vmem:[%s570 + $0x18] sm:$0x3f]
    %v576 = vsel %vm370, %v571, 0
    %v579 = vsel %vm370, %v572, 0
    %v582 = vsel %vm370, %v573, 0
    %v585 = vsel %vm370, %v574, 0
    %587 = vmatprep.subr.mxu0 0.0
    %588 = vmatpush1.msra.mxu0 0.0
    %589 = vmatprep.subr.mxu0 0.0
    %590 = vmatpush1.msra.mxu0 0.0
    %591 = vmatprep.subr.mxu0 0.0
    %592 = vmatpush1.msra.mxu0 0.0
    %593 = vmatprep.subr.mxu0 0.0
    %594 = vmatpush1.msra.mxu0 0.0
    %595 = vmatprep.subr.mxu0 0.0
    %596 = vmatpush1.msra.mxu0 0.0
    %597 = vmatprep.subr.mxu0 0.0
    %598 = vmatpush1.msra.mxu0 0.0
    %599 = vmatprep.subr.mxu0 0.0
    %600 = vmatpush1.msra.mxu0 0.0
    %601 = vmatprep.subr.mxu0 0.0
    %602 = vmatpush1.msra.mxu0 0.0
    %603 = vmatprep.subr.mxu0 0.0
    %604 = vmatpush1.msra.mxu0 %v365
    %605 = vmatprep.subr.mxu0 0.0
    %606 = vmatpush1.msra.mxu0 %v364
    %607 = vmatprep.subr.mxu0 0.0
    %608 = vmatpush1.msra.mxu0 %v363
    %609 = vmatprep.subr.mxu0 0.0
    %610 = vmatpush1.msra.mxu0 %v362
    %611 = vmatprep.subr.mxu0 0.0
    %612 = vmatpush1.msra.mxu0 %v361
    %613 = vmatprep.subr.mxu0 0.0
    %614 = vmatpush1.msra.mxu0 %v360
    %615 = vmatprep.subr.mxu0 0.0
    %616 = vmatpush1.msra.mxu0 %v359
    %617 = vmatprep.subr.mxu0 0.0
    %618 = vmatpush1.msra.mxu0 %v358
    %619 = vmatprep.subr.mxu0 0.0
    %620 = vmatpush2.msra.mxu0 0.0
    %621 = vmatprep.subr.mxu0 0.0
    %622 = vmatpush2.msra.mxu0 0.0
    %623 = vmatprep.subr.mxu0 0.0
    %624 = vmatpush2.msra.mxu0 0.0
    %625 = vmatprep.subr.mxu0 0.0
    %626 = vmatpush2.msra.mxu0 0.0
    %627 = vmatprep.subr.mxu0 0.0
    %628 = vmatpush2.msra.mxu0 0.0
    %629 = vmatprep.subr.mxu0 0.0
    %630 = vmatpush2.msra.mxu0 0.0
    %631 = vmatprep.subr.mxu0 0.0
    %632 = vmatpush2.msra.mxu0 0.0
    %633 = vmatprep.subr.mxu0 0.0
    %634 = vmatpush2.msra.mxu0 0.0
    %635 = vmatprep.subr.mxu0 0.0
    %636 = vmatpush2.msra.mxu0 0.0
    %637 = vmatprep.subr.mxu0 0.0
    %638 = vmatpush2.msra.mxu0 0.0
    %639 = vmatprep.subr.mxu0 0.0
    %640 = vmatpush2.msra.mxu0 0.0
    %641 = vmatprep.subr.mxu0 0.0
    %642 = vmatpush2.msra.mxu0 0.0
    %643 = vmatprep.subr.mxu0 0.0
    %644 = vmatpush2.msra.mxu0 0.0
    %645 = vmatprep.subr.mxu0 0.0
    %646 = vmatpush2.msra.mxu0 0.0
    %647 = vmatprep.subr.mxu0 0.0
    %648 = vmatpush2.msra.mxu0 0.0
    %649 = vmatprep.subr.mxu0 0.0
    %650 = vmatpush2.msra.mxu0 0.0
    %651 = vmatprep.mubr.f32.mxu0 0.0
    %652 = vmatmul.mubr.f32.gmra.mxu0 %v576
    %v653 = vpop.f32.mrf.mxu0
    %v654 = vadd.f32 0.0, %v653
    %v655 = vpop.f32.mrf.mxu0
    %656 = vmatprep.mubr.f32.mxu0 0.0
    %657 = vmatmul.mubr.f32.gmra.mxu0 %v579
    %v658 = vpop.f32.mrf.mxu0
    %v659 = vadd.f32 0.0, %v658
    %v660 = vpop.f32.mrf.mxu0
    %661 = vmatprep.mubr.f32.mxu0 0.0
    %662 = vmatmul.mubr.f32.gmra.mxu0 %v582
    %v663 = vpop.f32.mrf.mxu0
    %v664 = vadd.f32 0.0, %v663
    %v665 = vpop.f32.mrf.mxu0
    %666 = vmatprep.mubr.f32.mxu0 0.0
    %667 = vmatmul.mubr.f32.gmra.mxu0 %v585
    %v668 = vpop.f32.mrf.mxu0
    %v669 = vadd.f32 0.0, %v668
    %v670 = vpop.f32.mrf.mxu0
    %671 = vdwg.mxu0
    %s672 = scalar_lea.vmem [#allocation2], 96
    %v673 = vld [vmem:[%s672] sm:$0xff]
    %v674 = vld [vmem:[%s672 + $0x8] sm:$0xff]
    %v675 = vld [vmem:[%s672 + $0x10] sm:$0xff]
    %v676 = vld [vmem:[%s672 + $0x18] sm:$0x3f]
    %v678 = vsel %vm370, %v673, 0
    %v681 = vsel %vm370, %v674, 0
    %v684 = vsel %vm370, %v675, 0
    %v687 = vsel %vm370, %v676, 0
    %689 = vmatprep.subr.mxu0 0.0
    %690 = vmatpush1.msra.mxu0 0.0
    %691 = vmatprep.subr.mxu0 0.0
    %692 = vmatpush1.msra.mxu0 0.0
    %693 = vmatprep.subr.mxu0 0.0
    %694 = vmatpush1.msra.mxu0 0.0
    %695 = vmatprep.subr.mxu0 0.0
    %696 = vmatpush1.msra.mxu0 0.0
    %697 = vmatprep.subr.mxu0 0.0
    %698 = vmatpush1.msra.mxu0 0.0
    %699 = vmatprep.subr.mxu0 0.0
    %700 = vmatpush1.msra.mxu0 0.0
    %701 = vmatprep.subr.mxu0 0.0
    %702 = vmatpush1.msra.mxu0 0.0
    %703 = vmatprep.subr.mxu0 0.0
    %704 = vmatpush1.msra.mxu0 0.0
    %705 = vmatprep.subr.mxu0 0.0
    %706 = vmatpush1.msra.mxu0 %v365
    %707 = vmatprep.subr.mxu0 0.0
    %708 = vmatpush1.msra.mxu0 %v364
    %709 = vmatprep.subr.mxu0 0.0
    %710 = vmatpush1.msra.mxu0 %v363
    %711 = vmatprep.subr.mxu0 0.0
    %712 = vmatpush1.msra.mxu0 %v362
    %713 = vmatprep.subr.mxu0 0.0
    %714 = vmatpush1.msra.mxu0 %v361
    %715 = vmatprep.subr.mxu0 0.0
    %716 = vmatpush1.msra.mxu0 %v360
    %717 = vmatprep.subr.mxu0 0.0
    %718 = vmatpush1.msra.mxu0 %v359
    %719 = vmatprep.subr.mxu0 0.0
    %720 = vmatpush1.msra.mxu0 %v358
    %721 = vmatprep.subr.mxu0 0.0
    %722 = vmatpush2.msra.mxu0 0.0
    %723 = vmatprep.subr.mxu0 0.0
    %724 = vmatpush2.msra.mxu0 0.0
    %725 = vmatprep.subr.mxu0 0.0
    %726 = vmatpush2.msra.mxu0 0.0
    %727 = vmatprep.subr.mxu0 0.0
    %728 = vmatpush2.msra.mxu0 0.0
    %729 = vmatprep.subr.mxu0 0.0
    %730 = vmatpush2.msra.mxu0 0.0
    %731 = vmatprep.subr.mxu0 0.0
    %732 = vmatpush2.msra.mxu0 0.0
    %733 = vmatprep.subr.mxu0 0.0
    %734 = vmatpush2.msra.mxu0 0.0
    %735 = vmatprep.subr.mxu0 0.0
    %736 = vmatpush2.msra.mxu0 0.0
    %737 = vmatprep.subr.mxu0 0.0
    %738 = vmatpush2.msra.mxu0 0.0
    %739 = vmatprep.subr.mxu0 0.0
    %740 = vmatpush2.msra.mxu0 0.0
    %741 = vmatprep.subr.mxu0 0.0
    %742 = vmatpush2.msra.mxu0 0.0
    %743 = vmatprep.subr.mxu0 0.0
    %744 = vmatpush2.msra.mxu0 0.0
    %745 = vmatprep.subr.mxu0 0.0
    %746 = vmatpush2.msra.mxu0 0.0
    %747 = vmatprep.subr.mxu0 0.0
    %748 = vmatpush2.msra.mxu0 0.0
    %749 = vmatprep.subr.mxu0 0.0
    %750 = vmatpush2.msra.mxu0 0.0
    %751 = vmatprep.subr.mxu0 0.0
    %752 = vmatpush2.msra.mxu0 0.0
    %753 = vmatprep.mubr.f32.mxu0 0.0
    %754 = vmatmul.mubr.f32.gmra.mxu0 %v678
    %v755 = vpop.f32.mrf.mxu0
    %v756 = vadd.f32 0.0, %v755
    %v757 = vpop.f32.mrf.mxu0
    %758 = vmatprep.mubr.f32.mxu0 0.0
    %759 = vmatmul.mubr.f32.gmra.mxu0 %v681
    %v760 = vpop.f32.mrf.mxu0
    %v761 = vadd.f32 0.0, %v760
    %v762 = vpop.f32.mrf.mxu0
    %763 = vmatprep.mubr.f32.mxu0 0.0
    %764 = vmatmul.mubr.f32.gmra.mxu0 %v684
    %v765 = vpop.f32.mrf.mxu0
    %v766 = vadd.f32 0.0, %v765
    %v767 = vpop.f32.mrf.mxu0
    %768 = vmatprep.mubr.f32.mxu0 0.0
    %769 = vmatmul.mubr.f32.gmra.mxu0 %v687
    %v770 = vpop.f32.mrf.mxu0
    %v771 = vadd.f32 0.0, %v770
    %v772 = vpop.f32.mrf.mxu0
    %773 = vdwg.mxu0
    %v774 = vld [vmem:[#allocation25] sm:$0xf]
    %s775 = scalar_lea.vmem [#allocation25], 4
    %v776 = vld [vmem:[%s775] sm:$0xf]
    %vm777 = vcmask 31744
    %v779 = vsel %vm777, %v552, 0
    %v782 = vsel %vm777, %v557, 0
    %v785 = vsel %vm777, %v562, 0
    %v788 = vsel %vm777, %v567, 0
    %vm790 = vcmask 1043456
    %v792 = vsel %vm790, %v776, 0
    %794 = vmatprep.subr.mxu0 0.0
    %795 = vmatpush1.msra.mxu0 0.0
    %796 = vmatprep.subr.mxu0 0.0
    %797 = vmatpush1.msra.mxu0 0.0
    %798 = vmatprep.subr.mxu0 0.0
    %799 = vmatpush1.msra.mxu0 0.0
    %800 = vmatprep.subr.mxu0 0.0
    %801 = vmatpush1.msra.mxu0 0.0
    %802 = vmatprep.subr.mxu0 0.0
    %803 = vmatpush1.msra.mxu0 0.0
    %804 = vmatprep.subr.mxu0 0.0
    %805 = vmatpush1.msra.mxu0 0.0
    %806 = vmatprep.subr.mxu0 0.0
    %807 = vmatpush1.msra.mxu0 0.0
    %808 = vmatprep.subr.mxu0 0.0
    %809 = vmatpush1.msra.mxu0 0.0
    %810 = vmatprep.subr.mxu0 0.0
    %811 = vmatpush1.msra.mxu0 0.0
    %812 = vmatprep.subr.mxu0 0.0
    %813 = vmatpush1.msra.mxu0 0.0
    %814 = vmatprep.subr.mxu0 0.0
    %815 = vmatpush1.msra.mxu0 0.0
    %816 = vmatprep.subr.mxu0 0.0
    %817 = vmatpush1.msra.mxu0 0.0
    %818 = vmatprep.subr.mxu0 0.0
    %819 = vmatpush1.msra.mxu0 0.0
    %820 = vmatprep.subr.mxu0 0.0
    %821 = vmatpush1.msra.mxu0 0.0
    %822 = vmatprep.subr.mxu0 0.0
    %823 = vmatpush1.msra.mxu0 0.0
    %824 = vmatprep.subr.mxu0 0.0
    %825 = vmatpush1.msra.mxu0 %v792
    %826 = vmatprep.subr.mxu0 0.0
    %827 = vmatpush2.msra.mxu0 0.0
    %828 = vmatprep.subr.mxu0 0.0
    %829 = vmatpush2.msra.mxu0 0.0
    %830 = vmatprep.subr.mxu0 0.0
    %831 = vmatpush2.msra.mxu0 0.0
    %832 = vmatprep.subr.mxu0 0.0
    %833 = vmatpush2.msra.mxu0 0.0
    %834 = vmatprep.subr.mxu0 0.0
    %835 = vmatpush2.msra.mxu0 0.0
    %836 = vmatprep.subr.mxu0 0.0
    %837 = vmatpush2.msra.mxu0 0.0
    %838 = vmatprep.subr.mxu0 0.0
    %839 = vmatpush2.msra.mxu0 0.0
    %840 = vmatprep.subr.mxu0 0.0
    %841 = vmatpush2.msra.mxu0 0.0
    %842 = vmatprep.subr.mxu0 0.0
    %843 = vmatpush2.msra.mxu0 0.0
    %844 = vmatprep.subr.mxu0 0.0
    %845 = vmatpush2.msra.mxu0 0.0
    %846 = vmatprep.subr.mxu0 0.0
    %847 = vmatpush2.msra.mxu0 0.0
    %848 = vmatprep.subr.mxu0 0.0
    %849 = vmatpush2.msra.mxu0 0.0
    %850 = vmatprep.subr.mxu0 0.0
    %851 = vmatpush2.msra.mxu0 0.0
    %852 = vmatprep.subr.mxu0 0.0
    %853 = vmatpush2.msra.mxu0 0.0
    %854 = vmatprep.subr.mxu0 0.0
    %855 = vmatpush2.msra.mxu0 0.0
    %856 = vmatprep.subr.mxu0 0.0
    %857 = vmatpush2.msra.mxu0 0.0
    %858 = vmatprep.mubr.f32.mxu0 0.0
    %859 = vmatmul.mubr.f32.gmra.mxu0 %v779
    %v860 = vpop.f32.mrf.mxu0
    %v861 = vadd.f32 0.0, %v860
    %v862 = vpop.f32.mrf.mxu0
    %863 = vmatprep.mubr.f32.mxu0 0.0
    %864 = vmatmul.mubr.f32.gmra.mxu0 %v782
    %v865 = vpop.f32.mrf.mxu0
    %v866 = vadd.f32 0.0, %v865
    %v867 = vpop.f32.mrf.mxu0
    %868 = vmatprep.mubr.f32.mxu0 0.0
    %869 = vmatmul.mubr.f32.gmra.mxu0 %v785
    %v870 = vpop.f32.mrf.mxu0
    %v871 = vadd.f32 0.0, %v870
    %v872 = vpop.f32.mrf.mxu0
    %873 = vmatprep.mubr.f32.mxu0 0.0
    %874 = vmatmul.mubr.f32.gmra.mxu0 %v788
    %v875 = vpop.f32.mrf.mxu0
    %v876 = vadd.f32 0.0, %v875
    %v877 = vpop.f32.mrf.mxu0
    %878 = vdwg.mxu0
    %v880 = vsel %vm777, %v450, 0
    %v883 = vsel %vm777, %v455, 0
    %v886 = vsel %vm777, %v460, 0
    %v889 = vsel %vm777, %v465, 0
    %v892 = vsel %vm790, %v774, 0
    %894 = vmatprep.subr.mxu0 0.0
    %895 = vmatpush1.msra.mxu0 0.0
    %896 = vmatprep.subr.mxu0 0.0
    %897 = vmatpush1.msra.mxu0 0.0
    %898 = vmatprep.subr.mxu0 0.0
    %899 = vmatpush1.msra.mxu0 0.0
    %900 = vmatprep.subr.mxu0 0.0
    %901 = vmatpush1.msra.mxu0 0.0
    %902 = vmatprep.subr.mxu0 0.0
    %903 = vmatpush1.msra.mxu0 0.0
    %904 = vmatprep.subr.mxu0 0.0
    %905 = vmatpush1.msra.mxu0 0.0
    %906 = vmatprep.subr.mxu0 0.0
    %907 = vmatpush1.msra.mxu0 0.0
    %908 = vmatprep.subr.mxu0 0.0
    %909 = vmatpush1.msra.mxu0 0.0
    %910 = vmatprep.subr.mxu0 0.0
    %911 = vmatpush1.msra.mxu0 0.0
    %912 = vmatprep.subr.mxu0 0.0
    %913 = vmatpush1.msra.mxu0 0.0
    %914 = vmatprep.subr.mxu0 0.0
    %915 = vmatpush1.msra.mxu0 0.0
    %916 = vmatprep.subr.mxu0 0.0
    %917 = vmatpush1.msra.mxu0 0.0
    %918 = vmatprep.subr.mxu0 0.0
    %919 = vmatpush1.msra.mxu0 0.0
    %920 = vmatprep.subr.mxu0 0.0
    %921 = vmatpush1.msra.mxu0 0.0
    %922 = vmatprep.subr.mxu0 0.0
    %923 = vmatpush1.msra.mxu0 0.0
    %924 = vmatprep.subr.mxu0 0.0
    %925 = vmatpush1.msra.mxu0 %v892
    %926 = vmatprep.subr.mxu0 0.0
    %927 = vmatpush2.msra.mxu0 0.0
    %928 = vmatprep.subr.mxu0 0.0
    %929 = vmatpush2.msra.mxu0 0.0
    %930 = vmatprep.subr.mxu0 0.0
    %931 = vmatpush2.msra.mxu0 0.0
    %932 = vmatprep.subr.mxu0 0.0
    %933 = vmatpush2.msra.mxu0 0.0
    %934 = vmatprep.subr.mxu0 0.0
    %935 = vmatpush2.msra.mxu0 0.0
    %936 = vmatprep.subr.mxu0 0.0
    %937 = vmatpush2.msra.mxu0 0.0
    %938 = vmatprep.subr.mxu0 0.0
    %939 = vmatpush2.msra.mxu0 0.0
    %940 = vmatprep.subr.mxu0 0.0
    %941 = vmatpush2.msra.mxu0 0.0
    %942 = vmatprep.subr.mxu0 0.0
    %943 = vmatpush2.msra.mxu0 0.0
    %944 = vmatprep.subr.mxu0 0.0
    %945 = vmatpush2.msra.mxu0 0.0
    %946 = vmatprep.subr.mxu0 0.0
    %947 = vmatpush2.msra.mxu0 0.0
    %948 = vmatprep.subr.mxu0 0.0
    %949 = vmatpush2.msra.mxu0 0.0
    %950 = vmatprep.subr.mxu0 0.0
    %951 = vmatpush2.msra.mxu0 0.0
    %952 = vmatprep.subr.mxu0 0.0
    %953 = vmatpush2.msra.mxu0 0.0
    %954 = vmatprep.subr.mxu0 0.0
    %955 = vmatpush2.msra.mxu0 0.0
    %956 = vmatprep.subr.mxu0 0.0
    %957 = vmatpush2.msra.mxu0 0.0
    %958 = vmatprep.mubr.f32.mxu0 0.0
    %959 = vmatmul.mubr.f32.gmra.mxu0 %v880
    %v960 = vpop.f32.mrf.mxu0
    %v961 = vadd.f32 %v861, %v960
    %v962 = vpop.f32.mrf.mxu0
    %963 = vmatprep.mubr.f32.mxu0 0.0
    %964 = vmatmul.mubr.f32.gmra.mxu0 %v883
    %v965 = vpop.f32.mrf.mxu0
    %v966 = vadd.f32 %v866, %v965
    %v967 = vpop.f32.mrf.mxu0
    %968 = vmatprep.mubr.f32.mxu0 0.0
    %969 = vmatmul.mubr.f32.gmra.mxu0 %v886
    %v970 = vpop.f32.mrf.mxu0
    %v971 = vadd.f32 %v871, %v970
    %v972 = vpop.f32.mrf.mxu0
    %973 = vmatprep.mubr.f32.mxu0 0.0
    %974 = vmatmul.mubr.f32.gmra.mxu0 %v889
    %v975 = vpop.f32.mrf.mxu0
    %v976 = vadd.f32 %v876, %v975
    %v977 = vpop.f32.mrf.mxu0
    %978 = vdwg.mxu0
    %s979 = scalar_lea.vmem [#allocation25], 8
    %v980 = vld [vmem:[%s979] sm:$0xf]
    %v982 = vsel %vm777, %v654, 0
    %v985 = vsel %vm777, %v659, 0
    %v988 = vsel %vm777, %v664, 0
    %v991 = vsel %vm777, %v669, 0
    %v994 = vsel %vm790, %v980, 0
    %996 = vmatprep.subr.mxu0 0.0
    %997 = vmatpush1.msra.mxu0 0.0
    %998 = vmatprep.subr.mxu0 0.0
    %999 = vmatpush1.msra.mxu0 0.0
    %1000 = vmatprep.subr.mxu0 0.0
    %1001 = vmatpush1.msra.mxu0 0.0
    %1002 = vmatprep.subr.mxu0 0.0
    %1003 = vmatpush1.msra.mxu0 0.0
    %1004 = vmatprep.subr.mxu0 0.0
    %1005 = vmatpush1.msra.mxu0 0.0
    %1006 = vmatprep.subr.mxu0 0.0
    %1007 = vmatpush1.msra.mxu0 0.0
    %1008 = vmatprep.subr.mxu0 0.0
    %1009 = vmatpush1.msra.mxu0 0.0
    %1010 = vmatprep.subr.mxu0 0.0
    %1011 = vmatpush1.msra.mxu0 0.0
    %1012 = vmatprep.subr.mxu0 0.0
    %1013 = vmatpush1.msra.mxu0 0.0
    %1014 = vmatprep.subr.mxu0 0.0
    %1015 = vmatpush1.msra.mxu0 0.0
    %1016 = vmatprep.subr.mxu0 0.0
    %1017 = vmatpush1.msra.mxu0 0.0
    %1018 = vmatprep.subr.mxu0 0.0
    %1019 = vmatpush1.msra.mxu0 0.0
    %1020 = vmatprep.subr.mxu0 0.0
    %1021 = vmatpush1.msra.mxu0 0.0
    %1022 = vmatprep.subr.mxu0 0.0
    %1023 = vmatpush1.msra.mxu0 0.0
    %1024 = vmatprep.subr.mxu0 0.0
    %1025 = vmatpush1.msra.mxu0 0.0
    %1026 = vmatprep.subr.mxu0 0.0
    %1027 = vmatpush1.msra.mxu0 %v994
    %1028 = vmatprep.subr.mxu0 0.0
    %1029 = vmatpush2.msra.mxu0 0.0
    %1030 = vmatprep.subr.mxu0 0.0
    %1031 = vmatpush2.msra.mxu0 0.0
    %1032 = vmatprep.subr.mxu0 0.0
    %1033 = vmatpush2.msra.mxu0 0.0
    %1034 = vmatprep.subr.mxu0 0.0
    %1035 = vmatpush2.msra.mxu0 0.0
    %1036 = vmatprep.subr.mxu0 0.0
    %1037 = vmatpush2.msra.mxu0 0.0
    %1038 = vmatprep.subr.mxu0 0.0
    %1039 = vmatpush2.msra.mxu0 0.0
    %1040 = vmatprep.subr.mxu0 0.0
    %1041 = vmatpush2.msra.mxu0 0.0
    %1042 = vmatprep.subr.mxu0 0.0
    %1043 = vmatpush2.msra.mxu0 0.0
    %1044 = vmatprep.subr.mxu0 0.0
    %1045 = vmatpush2.msra.mxu0 0.0
    %1046 = vmatprep.subr.mxu0 0.0
    %1047 = vmatpush2.msra.mxu0 0.0
    %1048 = vmatprep.subr.mxu0 0.0
    %1049 = vmatpush2.msra.mxu0 0.0
    %1050 = vmatprep.subr.mxu0 0.0
    %1051 = vmatpush2.msra.mxu0 0.0
    %1052 = vmatprep.subr.mxu0 0.0
    %1053 = vmatpush2.msra.mxu0 0.0
    %1054 = vmatprep.subr.mxu0 0.0
    %1055 = vmatpush2.msra.mxu0 0.0
    %1056 = vmatprep.subr.mxu0 0.0
    %1057 = vmatpush2.msra.mxu0 0.0
    %1058 = vmatprep.subr.mxu0 0.0
    %1059 = vmatpush2.msra.mxu0 0.0
    %1060 = vmatprep.mubr.f32.mxu0 0.0
    %1061 = vmatmul.mubr.f32.gmra.mxu0 %v982
    %v1062 = vpop.f32.mrf.mxu0
    %v1063 = vadd.f32 0.0, %v1062
    %v1064 = vpop.f32.mrf.mxu0
    %1065 = vmatprep.mubr.f32.mxu0 0.0
    %1066 = vmatmul.mubr.f32.gmra.mxu0 %v985
    %v1067 = vpop.f32.mrf.mxu0
    %v1068 = vadd.f32 0.0, %v1067
    %v1069 = vpop.f32.mrf.mxu0
    %1070 = vmatprep.mubr.f32.mxu0 0.0
    %1071 = vmatmul.mubr.f32.gmra.mxu0 %v988
    %v1072 = vpop.f32.mrf.mxu0
    %v1073 = vadd.f32 0.0, %v1072
    %v1074 = vpop.f32.mrf.mxu0
    %1075 = vmatprep.mubr.f32.mxu0 0.0
    %1076 = vmatmul.mubr.f32.gmra.mxu0 %v991
    %v1077 = vpop.f32.mrf.mxu0
    %v1078 = vadd.f32 0.0, %v1077
    %v1079 = vpop.f32.mrf.mxu0
    %1080 = vdwg.mxu0
    %v1081 = vadd.f32 %v961, %v1063
    %v1082 = vadd.f32 %v966, %v1068
    %v1083 = vadd.f32 %v971, %v1073
    %v1084 = vadd.f32 %v976, %v1078
    %s1085 = scalar_lea.vmem [#allocation25], 12
    %v1086 = vld [vmem:[%s1085] sm:$0xf]
    %v1088 = vsel %vm777, %v756, 0
    %v1091 = vsel %vm777, %v761, 0
    %v1094 = vsel %vm777, %v766, 0
    %v1097 = vsel %vm777, %v771, 0
    %v1100 = vsel %vm790, %v1086, 0
    %1102 = vmatprep.subr.mxu0 0.0
    %1103 = vmatpush1.msra.mxu0 0.0
    %1104 = vmatprep.subr.mxu0 0.0
    %1105 = vmatpush1.msra.mxu0 0.0
    %1106 = vmatprep.subr.mxu0 0.0
    %1107 = vmatpush1.msra.mxu0 0.0
    %1108 = vmatprep.subr.mxu0 0.0
    %1109 = vmatpush1.msra.mxu0 0.0
    %1110 = vmatprep.subr.mxu0 0.0
    %1111 = vmatpush1.msra.mxu0 0.0
    %1112 = vmatprep.subr.mxu0 0.0
    %1113 = vmatpush1.msra.mxu0 0.0
    %1114 = vmatprep.subr.mxu0 0.0
    %1115 = vmatpush1.msra.mxu0 0.0
    %1116 = vmatprep.subr.mxu0 0.0
    %1117 = vmatpush1.msra.mxu0 0.0
    %1118 = vmatprep.subr.mxu0 0.0
    %1119 = vmatpush1.msra.mxu0 0.0
    %1120 = vmatprep.subr.mxu0 0.0
    %1121 = vmatpush1.msra.mxu0 0.0
    %1122 = vmatprep.subr.mxu0 0.0
    %1123 = vmatpush1.msra.mxu0 0.0
    %1124 = vmatprep.subr.mxu0 0.0
    %1125 = vmatpush1.msra.mxu0 0.0
    %1126 = vmatprep.subr.mxu0 0.0
    %1127 = vmatpush1.msra.mxu0 0.0
    %1128 = vmatprep.subr.mxu0 0.0
    %1129 = vmatpush1.msra.mxu0 0.0
    %1130 = vmatprep.subr.mxu0 0.0
    %1131 = vmatpush1.msra.mxu0 0.0
    %1132 = vmatprep.subr.mxu0 0.0
    %1133 = vmatpush1.msra.mxu0 %v1100
    %1134 = vmatprep.subr.mxu0 0.0
    %1135 = vmatpush2.msra.mxu0 0.0
    %1136 = vmatprep.subr.mxu0 0.0
    %1137 = vmatpush2.msra.mxu0 0.0
    %1138 = vmatprep.subr.mxu0 0.0
    %1139 = vmatpush2.msra.mxu0 0.0
    %1140 = vmatprep.subr.mxu0 0.0
    %1141 = vmatpush2.msra.mxu0 0.0
    %1142 = vmatprep.subr.mxu0 0.0
    %1143 = vmatpush2.msra.mxu0 0.0
    %1144 = vmatprep.subr.mxu0 0.0
    %1145 = vmatpush2.msra.mxu0 0.0
    %1146 = vmatprep.subr.mxu0 0.0
    %1147 = vmatpush2.msra.mxu0 0.0
    %1148 = vmatprep.subr.mxu0 0.0
    %1149 = vmatpush2.msra.mxu0 0.0
    %1150 = vmatprep.subr.mxu0 0.0
    %1151 = vmatpush2.msra.mxu0 0.0
    %1152 = vmatprep.subr.mxu0 0.0
    %1153 = vmatpush2.msra.mxu0 0.0
    %1154 = vmatprep.subr.mxu0 0.0
    %1155 = vmatpush2.msra.mxu0 0.0
    %1156 = vmatprep.subr.mxu0 0.0
    %1157 = vmatpush2.msra.mxu0 0.0
    %1158 = vmatprep.subr.mxu0 0.0
    %1159 = vmatpush2.msra.mxu0 0.0
    %1160 = vmatprep.subr.mxu0 0.0
    %1161 = vmatpush2.msra.mxu0 0.0
    %1162 = vmatprep.subr.mxu0 0.0
    %1163 = vmatpush2.msra.mxu0 0.0
    %1164 = vmatprep.subr.mxu0 0.0
    %1165 = vmatpush2.msra.mxu0 0.0
    %1166 = vmatprep.mubr.f32.mxu0 0.0
    %1167 = vmatmul.mubr.f32.gmra.mxu0 %v1088
    %v1168 = vpop.f32.mrf.mxu0
    %v1169 = vadd.f32 0.0, %v1168
    %v1170 = vpop.f32.mrf.mxu0
    %1171 = vmatprep.mubr.f32.mxu0 0.0
    %1172 = vmatmul.mubr.f32.gmra.mxu0 %v1091
    %v1173 = vpop.f32.mrf.mxu0
    %v1174 = vadd.f32 0.0, %v1173
    %v1175 = vpop.f32.mrf.mxu0
    %1176 = vmatprep.mubr.f32.mxu0 0.0
    %1177 = vmatmul.mubr.f32.gmra.mxu0 %v1094
    %v1178 = vpop.f32.mrf.mxu0
    %v1179 = vadd.f32 0.0, %v1178
    %v1180 = vpop.f32.mrf.mxu0
    %1181 = vmatprep.mubr.f32.mxu0 0.0
    %1182 = vmatmul.mubr.f32.gmra.mxu0 %v1097
    %v1183 = vpop.f32.mrf.mxu0
    %v1184 = vadd.f32 0.0, %v1183
    %v1185 = vpop.f32.mrf.mxu0
    %1186 = vdwg.mxu0
    %v1187 = vadd.f32 %v1081, %v1169
    %v1188 = vadd.f32 %v1082, %v1174
    %v1189 = vadd.f32 %v1083, %v1179
    %v1190 = vadd.f32 %v1084, %v1184
    %v1191 = vld [vmem:[#allocation27] sm:$0x1]
    %v1193 = vlaneseq
    %v1194 = vshrl.u32 %v1193, 7
    %v1195 = vsub.s32 0, %v1194
    %v1196 = vrot.slane %v1191, %v1195
    %v1198 = vadd.f32 %v1187, %v1196
    %v1199 = vadd.f32 %v1188, %v1196
    %v1200 = vadd.f32 %v1189, %v1196
    %v1201 = vadd.f32 %v1190, %v1196
    %vm1202 = vcmp.ge.f32.partialorder %v1198, 0.0
    %vm1203 = vcmp.ge.f32.partialorder %v1199, 0.0
    %vm1204 = vcmp.ge.f32.partialorder %v1200, 0.0
    %vm1205 = vcmp.ge.f32.partialorder %v1201, 0.0
    %v1206 = vmul.f32 %v1198, 0.01
    %v1207 = vmul.f32 %v1199, 0.01
    %v1208 = vmul.f32 %v1200, 0.01
    %v1209 = vmul.f32 %v1201, 0.01
    %v1210 = vsel %vm1202, %v1198, %v1206
    %v1211 = vsel %vm1203, %v1199, %v1207
    %v1212 = vsel %vm1204, %v1200, %v1208
    %v1213 = vsel %vm1205, %v1201, %v1209
    %v1214 = vld [vmem:[#allocation4] sm:$0xff]
    %v1215 = vld [vmem:[#allocation4 + $0x8] sm:$0x3f]
    %vm1216 = vcmask 244736
    %v1218 = vsel %vm1216, %v1214, 0
    %v1221 = vsel %vm1216, %v1215, 0
    %vm1223 = vcmask 1045504
    %v1225 = vsel %vm1223, %v1213, 0
    %1227 = vmatprep.subr.mxu0 0.0
    %1228 = vmatpush1.msra.mxu0 0.0
    %1229 = vmatprep.subr.mxu0 0.0
    %1230 = vmatpush1.msra.mxu0 0.0
    %1231 = vmatprep.subr.mxu0 0.0
    %1232 = vmatpush1.msra.mxu0 0.0
    %1233 = vmatprep.subr.mxu0 0.0
    %1234 = vmatpush1.msra.mxu0 0.0
    %1235 = vmatprep.subr.mxu0 0.0
    %1236 = vmatpush1.msra.mxu0 0.0
    %1237 = vmatprep.subr.mxu0 0.0
    %1238 = vmatpush1.msra.mxu0 0.0
    %1239 = vmatprep.subr.mxu0 0.0
    %1240 = vmatpush1.msra.mxu0 0.0
    %1241 = vmatprep.subr.mxu0 0.0
    %1242 = vmatpush1.msra.mxu0 0.0
    %1243 = vmatprep.subr.mxu0 0.0
    %1244 = vmatpush1.msra.mxu0 0.0
    %1245 = vmatprep.subr.mxu0 0.0
    %1246 = vmatpush1.msra.mxu0 0.0
    %1247 = vmatprep.subr.mxu0 0.0
    %1248 = vmatpush1.msra.mxu0 0.0
    %1249 = vmatprep.subr.mxu0 0.0
    %1250 = vmatpush1.msra.mxu0 0.0
    %1251 = vmatprep.subr.mxu0 0.0
    %1252 = vmatpush1.msra.mxu0 %v1225
    %1253 = vmatprep.subr.mxu0 0.0
    %1254 = vmatpush1.msra.mxu0 %v1212
    %1255 = vmatprep.subr.mxu0 0.0
    %1256 = vmatpush1.msra.mxu0 %v1211
    %1257 = vmatprep.subr.mxu0 0.0
    %1258 = vmatpush1.msra.mxu0 %v1210
    %1259 = vmatprep.subr.mxu0 0.0
    %1260 = vmatpush2.msra.mxu0 0.0
    %1261 = vmatprep.subr.mxu0 0.0
    %1262 = vmatpush2.msra.mxu0 0.0
    %1263 = vmatprep.subr.mxu0 0.0
    %1264 = vmatpush2.msra.mxu0 0.0
    %1265 = vmatprep.subr.mxu0 0.0
    %1266 = vmatpush2.msra.mxu0 0.0
    %1267 = vmatprep.subr.mxu0 0.0
    %1268 = vmatpush2.msra.mxu0 0.0
    %1269 = vmatprep.subr.mxu0 0.0
    %1270 = vmatpush2.msra.mxu0 0.0
    %1271 = vmatprep.subr.mxu0 0.0
    %1272 = vmatpush2.msra.mxu0 0.0
    %1273 = vmatprep.subr.mxu0 0.0
    %1274 = vmatpush2.msra.mxu0 0.0
    %1275 = vmatprep.subr.mxu0 0.0
    %1276 = vmatpush2.msra.mxu0 0.0
    %1277 = vmatprep.subr.mxu0 0.0
    %1278 = vmatpush2.msra.mxu0 0.0
    %1279 = vmatprep.subr.mxu0 0.0
    %1280 = vmatpush2.msra.mxu0 0.0
    %1281 = vmatprep.subr.mxu0 0.0
    %1282 = vmatpush2.msra.mxu0 0.0
    %1283 = vmatprep.subr.mxu0 0.0
    %1284 = vmatpush2.msra.mxu0 0.0
    %1285 = vmatprep.subr.mxu0 0.0
    %1286 = vmatpush2.msra.mxu0 0.0
    %1287 = vmatprep.subr.mxu0 0.0
    %1288 = vmatpush2.msra.mxu0 0.0
    %1289 = vmatprep.subr.mxu0 0.0
    %1290 = vmatpush2.msra.mxu0 0.0
    %1291 = vmatprep.mubr.f32.mxu0 0.0
    %1292 = vmatmul.mubr.f32.gmra.mxu0 %v1218
    %v1293 = vpop.f32.mrf.mxu0
    %v1294 = vadd.f32 0.0, %v1293
    %v1295 = vpop.f32.mrf.mxu0
    %1296 = vmatprep.mubr.f32.mxu0 0.0
    %1297 = vmatmul.mubr.f32.gmra.mxu0 %v1221
    %v1298 = vpop.f32.mrf.mxu0
    %v1299 = vadd.f32 0.0, %v1298
    %v1300 = vpop.f32.mrf.mxu0
    %1301 = vdwg.mxu0
    %s1302 = scalar_lea.vmem [#allocation4], 16
    %v1303 = vld [vmem:[%s1302] sm:$0xff]
    %v1304 = vld [vmem:[%s1302 + $0x8] sm:$0x3f]
    %v1306 = vsel %vm1216, %v1303, 0
    %v1309 = vsel %vm1216, %v1304, 0
    %1311 = vmatprep.subr.mxu0 0.0
    %1312 = vmatpush1.msra.mxu0 0.0
    %1313 = vmatprep.subr.mxu0 0.0
    %1314 = vmatpush1.msra.mxu0 0.0
    %1315 = vmatprep.subr.mxu0 0.0
    %1316 = vmatpush1.msra.mxu0 0.0
    %1317 = vmatprep.subr.mxu0 0.0
    %1318 = vmatpush1.msra.mxu0 0.0
    %1319 = vmatprep.subr.mxu0 0.0
    %1320 = vmatpush1.msra.mxu0 0.0
    %1321 = vmatprep.subr.mxu0 0.0
    %1322 = vmatpush1.msra.mxu0 0.0
    %1323 = vmatprep.subr.mxu0 0.0
    %1324 = vmatpush1.msra.mxu0 0.0
    %1325 = vmatprep.subr.mxu0 0.0
    %1326 = vmatpush1.msra.mxu0 0.0
    %1327 = vmatprep.subr.mxu0 0.0
    %1328 = vmatpush1.msra.mxu0 0.0
    %1329 = vmatprep.subr.mxu0 0.0
    %1330 = vmatpush1.msra.mxu0 0.0
    %1331 = vmatprep.subr.mxu0 0.0
    %1332 = vmatpush1.msra.mxu0 0.0
    %1333 = vmatprep.subr.mxu0 0.0
    %1334 = vmatpush1.msra.mxu0 0.0
    %1335 = vmatprep.subr.mxu0 0.0
    %1336 = vmatpush1.msra.mxu0 %v1225
    %1337 = vmatprep.subr.mxu0 0.0
    %1338 = vmatpush1.msra.mxu0 %v1212
    %1339 = vmatprep.subr.mxu0 0.0
    %1340 = vmatpush1.msra.mxu0 %v1211
    %1341 = vmatprep.subr.mxu0 0.0
    %1342 = vmatpush1.msra.mxu0 %v1210
    %1343 = vmatprep.subr.mxu0 0.0
    %1344 = vmatpush2.msra.mxu0 0.0
    %1345 = vmatprep.subr.mxu0 0.0
    %1346 = vmatpush2.msra.mxu0 0.0
    %1347 = vmatprep.subr.mxu0 0.0
    %1348 = vmatpush2.msra.mxu0 0.0
    %1349 = vmatprep.subr.mxu0 0.0
    %1350 = vmatpush2.msra.mxu0 0.0
    %1351 = vmatprep.subr.mxu0 0.0
    %1352 = vmatpush2.msra.mxu0 0.0
    %1353 = vmatprep.subr.mxu0 0.0
    %1354 = vmatpush2.msra.mxu0 0.0
    %1355 = vmatprep.subr.mxu0 0.0
    %1356 = vmatpush2.msra.mxu0 0.0
    %1357 = vmatprep.subr.mxu0 0.0
    %1358 = vmatpush2.msra.mxu0 0.0
    %1359 = vmatprep.subr.mxu0 0.0
    %1360 = vmatpush2.msra.mxu0 0.0
    %1361 = vmatprep.subr.mxu0 0.0
    %1362 = vmatpush2.msra.mxu0 0.0
    %1363 = vmatprep.subr.mxu0 0.0
    %1364 = vmatpush2.msra.mxu0 0.0
    %1365 = vmatprep.subr.mxu0 0.0
    %1366 = vmatpush2.msra.mxu0 0.0
    %1367 = vmatprep.subr.mxu0 0.0
    %1368 = vmatpush2.msra.mxu0 0.0
    %1369 = vmatprep.subr.mxu0 0.0
    %1370 = vmatpush2.msra.mxu0 0.0
    %1371 = vmatprep.subr.mxu0 0.0
    %1372 = vmatpush2.msra.mxu0 0.0
    %1373 = vmatprep.subr.mxu0 0.0
    %1374 = vmatpush2.msra.mxu0 0.0
    %1375 = vmatprep.mubr.f32.mxu0 0.0
    %1376 = vmatmul.mubr.f32.gmra.mxu0 %v1306
    %v1377 = vpop.f32.mrf.mxu0
    %v1378 = vadd.f32 0.0, %v1377
    %v1379 = vpop.f32.mrf.mxu0
    %1380 = vmatprep.mubr.f32.mxu0 0.0
    %1381 = vmatmul.mubr.f32.gmra.mxu0 %v1309
    %v1382 = vpop.f32.mrf.mxu0
    %v1383 = vadd.f32 0.0, %v1382
    %v1384 = vpop.f32.mrf.mxu0
    %1385 = vdwg.mxu0
    %s1386 = scalar_lea.vmem [#allocation4], 32
    %v1387 = vld [vmem:[%s1386] sm:$0xff]
    %v1388 = vld [vmem:[%s1386 + $0x8] sm:$0x3f]
    %v1390 = vsel %vm1216, %v1387, 0
    %v1393 = vsel %vm1216, %v1388, 0
    %1395 = vmatprep.subr.mxu0 0.0
    %1396 = vmatpush1.msra.mxu0 0.0
    %1397 = vmatprep.subr.mxu0 0.0
    %1398 = vmatpush1.msra.mxu0 0.0
    %1399 = vmatprep.subr.mxu0 0.0
    %1400 = vmatpush1.msra.mxu0 0.0
    %1401 = vmatprep.subr.mxu0 0.0
    %1402 = vmatpush1.msra.mxu0 0.0
    %1403 = vmatprep.subr.mxu0 0.0
    %1404 = vmatpush1.msra.mxu0 0.0
    %1405 = vmatprep.subr.mxu0 0.0
    %1406 = vmatpush1.msra.mxu0 0.0
    %1407 = vmatprep.subr.mxu0 0.0
    %1408 = vmatpush1.msra.mxu0 0.0
    %1409 = vmatprep.subr.mxu0 0.0
    %1410 = vmatpush1.msra.mxu0 0.0
    %1411 = vmatprep.subr.mxu0 0.0
    %1412 = vmatpush1.msra.mxu0 0.0
    %1413 = vmatprep.subr.mxu0 0.0
    %1414 = vmatpush1.msra.mxu0 0.0
    %1415 = vmatprep.subr.mxu0 0.0
    %1416 = vmatpush1.msra.mxu0 0.0
    %1417 = vmatprep.subr.mxu0 0.0
    %1418 = vmatpush1.msra.mxu0 0.0
    %1419 = vmatprep.subr.mxu0 0.0
    %1420 = vmatpush1.msra.mxu0 %v1225
    %1421 = vmatprep.subr.mxu0 0.0
    %1422 = vmatpush1.msra.mxu0 %v1212
    %1423 = vmatprep.subr.mxu0 0.0
    %1424 = vmatpush1.msra.mxu0 %v1211
    %1425 = vmatprep.subr.mxu0 0.0
    %1426 = vmatpush1.msra.mxu0 %v1210
    %1427 = vmatprep.subr.mxu0 0.0
    %1428 = vmatpush2.msra.mxu0 0.0
    %1429 = vmatprep.subr.mxu0 0.0
    %1430 = vmatpush2.msra.mxu0 0.0
    %1431 = vmatprep.subr.mxu0 0.0
    %1432 = vmatpush2.msra.mxu0 0.0
    %1433 = vmatprep.subr.mxu0 0.0
    %1434 = vmatpush2.msra.mxu0 0.0
    %1435 = vmatprep.subr.mxu0 0.0
    %1436 = vmatpush2.msra.mxu0 0.0
    %1437 = vmatprep.subr.mxu0 0.0
    %1438 = vmatpush2.msra.mxu0 0.0
    %1439 = vmatprep.subr.mxu0 0.0
    %1440 = vmatpush2.msra.mxu0 0.0
    %1441 = vmatprep.subr.mxu0 0.0
    %1442 = vmatpush2.msra.mxu0 0.0
    %1443 = vmatprep.subr.mxu0 0.0
    %1444 = vmatpush2.msra.mxu0 0.0
    %1445 = vmatprep.subr.mxu0 0.0
    %1446 = vmatpush2.msra.mxu0 0.0
    %1447 = vmatprep.subr.mxu0 0.0
    %1448 = vmatpush2.msra.mxu0 0.0
    %1449 = vmatprep.subr.mxu0 0.0
    %1450 = vmatpush2.msra.mxu0 0.0
    %1451 = vmatprep.subr.mxu0 0.0
    %1452 = vmatpush2.msra.mxu0 0.0
    %1453 = vmatprep.subr.mxu0 0.0
    %1454 = vmatpush2.msra.mxu0 0.0
    %1455 = vmatprep.subr.mxu0 0.0
    %1456 = vmatpush2.msra.mxu0 0.0
    %1457 = vmatprep.subr.mxu0 0.0
    %1458 = vmatpush2.msra.mxu0 0.0
    %1459 = vmatprep.mubr.f32.mxu0 0.0
    %1460 = vmatmul.mubr.f32.gmra.mxu0 %v1390
    %v1461 = vpop.f32.mrf.mxu0
    %v1462 = vadd.f32 0.0, %v1461
    %v1463 = vpop.f32.mrf.mxu0
    %1464 = vmatprep.mubr.f32.mxu0 0.0
    %1465 = vmatmul.mubr.f32.gmra.mxu0 %v1393
    %v1466 = vpop.f32.mrf.mxu0
    %v1467 = vadd.f32 0.0, %v1466
    %v1468 = vpop.f32.mrf.mxu0
    %1469 = vdwg.mxu0
    %v1470 = vld [vmem:[#allocation28] sm:$0xff]
    %v1471 = vld [vmem:[#allocation28 + $0x8] sm:$0xff]
    %v1472 = vld [vmem:[#allocation28 + $0x10] sm:$0xff]
    %v1473 = vld [vmem:[#allocation28 + $0x18] sm:$0xff]
    %v1474 = vld [vmem:[#allocation28 + $0x20] sm:$0xff]
    %v1475 = vld [vmem:[#allocation28 + $0x28] sm:$0xff]
    %v1476 = vld [vmem:[#allocation28 + $0x30] sm:$0xff]
    %v1477 = vld [vmem:[#allocation28 + $0x38] sm:$0xff]
    %v1478 = vld [vmem:[#allocation28 + $0x40] sm:$0xff]
    %v1479 = vld [vmem:[#allocation28 + $0x48] sm:$0xff]
    %v1480 = vld [vmem:[#allocation28 + $0x50] sm:$0xff]
    %v1481 = vld [vmem:[#allocation28 + $0x58] sm:$0xff]
    %v1482 = vld [vmem:[#allocation28 + $0x60] sm:$0xff]
    %v1483 = vld [vmem:[#allocation28 + $0x68] sm:$0xff]
    %v1484 = vld [vmem:[#allocation28 + $0x70] sm:$0xff]
    %v1485 = vld [vmem:[#allocation28 + $0x78] sm:$0xff]
    %v1486 = vld [vmem:[#allocation28 + $0x80] sm:$0xff]
    %v1487 = vld [vmem:[#allocation28 + $0x88] sm:$0xff]
    %v1488 = vld [vmem:[#allocation28 + $0x90] sm:$0xff]
    %v1489 = vld [vmem:[#allocation28 + $0x98] sm:$0xff]
    %v1490 = vld [vmem:[#allocation28 + $0xa0] sm:$0xff]
    %v1491 = vld [vmem:[#allocation28 + $0xa8] sm:$0xff]
    %s1492 = scalar_lea.vmem [#allocation28], 176
    %v1493 = vld [vmem:[%s1492] sm:$0xff]
    %v1494 = vld [vmem:[%s1492 + $0x8] sm:$0xff]
    %v1495 = vld [vmem:[%s1492 + $0x10] sm:$0xff]
    %v1496 = vld [vmem:[%s1492 + $0x18] sm:$0xff]
    %v1497 = vld [vmem:[%s1492 + $0x20] sm:$0xff]
    %v1498 = vld [vmem:[%s1492 + $0x28] sm:$0xff]
    %v1499 = vld [vmem:[%s1492 + $0x30] sm:$0xff]
    %v1500 = vld [vmem:[%s1492 + $0x38] sm:$0xff]
    %v1501 = vld [vmem:[%s1492 + $0x40] sm:$0xff]
    %v1502 = vld [vmem:[%s1492 + $0x48] sm:$0xff]
    %v1503 = vld [vmem:[%s1492 + $0x50] sm:$0xff]
    %v1504 = vld [vmem:[%s1492 + $0x58] sm:$0xff]
    %v1505 = vld [vmem:[%s1492 + $0x60] sm:$0xff]
    %v1506 = vld [vmem:[%s1492 + $0x68] sm:$0xff]
    %v1507 = vld [vmem:[%s1492 + $0x70] sm:$0xff]
    %v1508 = vld [vmem:[%s1492 + $0x78] sm:$0xff]
    %v1509 = vld [vmem:[%s1492 + $0x80] sm:$0xff]
    %v1510 = vld [vmem:[%s1492 + $0x88] sm:$0xff]
    %v1511 = vld [vmem:[%s1492 + $0x90] sm:$0xff]
    %v1512 = vld [vmem:[%s1492 + $0x98] sm:$0xff]
    %v1513 = vld [vmem:[%s1492 + $0xa0] sm:$0xff]
    %v1514 = vld [vmem:[%s1492 + $0xa8] sm:$0xff]
    %vm1515 = vcmask 719872
    %v1517 = vsel %vm1515, %v1378, 0
    %v1520 = vsel %vm1515, %v1383, 0
    %1522 = vmatprep.subr.mxu0 0.0
    %1523 = vmatpush1.msra.mxu0 0.0
    %1524 = vmatprep.subr.mxu0 0.0
    %1525 = vmatpush1.msra.mxu0 0.0
    %1526 = vmatprep.subr.mxu0 0.0
    %1527 = vmatpush1.msra.mxu0 0.0
    %1528 = vmatprep.subr.mxu0 0.0
    %1529 = vmatpush1.msra.mxu0 0.0
    %1530 = vmatprep.subr.mxu0 0.0
    %1531 = vmatpush1.msra.mxu0 0.0
    %1532 = vmatprep.subr.mxu0 %v1514
    %1533 = vmatpush1.msra.mxu0 %v1513
    %1534 = vmatprep.subr.mxu0 %v1512
    %1535 = vmatpush1.msra.mxu0 %v1511
    %1536 = vmatprep.subr.mxu0 %v1510
    %1537 = vmatpush1.msra.mxu0 %v1509
    %1538 = vmatprep.subr.mxu0 %v1508
    %1539 = vmatpush1.msra.mxu0 %v1507
    %1540 = vmatprep.subr.mxu0 %v1506
    %1541 = vmatpush1.msra.mxu0 %v1505
    %1542 = vmatprep.subr.mxu0 %v1504
    %1543 = vmatpush1.msra.mxu0 %v1503
    %1544 = vmatprep.subr.mxu0 %v1502
    %1545 = vmatpush1.msra.mxu0 %v1501
    %1546 = vmatprep.subr.mxu0 %v1500
    %1547 = vmatpush1.msra.mxu0 %v1499
    %1548 = vmatprep.subr.mxu0 %v1498
    %1549 = vmatpush1.msra.mxu0 %v1497
    %1550 = vmatprep.subr.mxu0 %v1496
    %1551 = vmatpush1.msra.mxu0 %v1495
    %1552 = vmatprep.subr.mxu0 %v1494
    %1553 = vmatpush1.msra.mxu0 %v1493
    %1554 = vmatprep.subr.mxu0 0.0
    %1555 = vmatpush2.msra.mxu0 0.0
    %1556 = vmatprep.subr.mxu0 0.0
    %1557 = vmatpush2.msra.mxu0 0.0
    %1558 = vmatprep.subr.mxu0 0.0
    %1559 = vmatpush2.msra.mxu0 0.0
    %1560 = vmatprep.subr.mxu0 0.0
    %1561 = vmatpush2.msra.mxu0 0.0
    %1562 = vmatprep.subr.mxu0 0.0
    %1563 = vmatpush2.msra.mxu0 0.0
    %1564 = vmatprep.subr.mxu0 0.0
    %1565 = vmatpush2.msra.mxu0 0.0
    %1566 = vmatprep.subr.mxu0 0.0
    %1567 = vmatpush2.msra.mxu0 0.0
    %1568 = vmatprep.subr.mxu0 0.0
    %1569 = vmatpush2.msra.mxu0 0.0
    %1570 = vmatprep.subr.mxu0 0.0
    %1571 = vmatpush2.msra.mxu0 0.0
    %1572 = vmatprep.subr.mxu0 0.0
    %1573 = vmatpush2.msra.mxu0 0.0
    %1574 = vmatprep.subr.mxu0 0.0
    %1575 = vmatpush2.msra.mxu0 0.0
    %1576 = vmatprep.subr.mxu0 0.0
    %1577 = vmatpush2.msra.mxu0 0.0
    %1578 = vmatprep.subr.mxu0 0.0
    %1579 = vmatpush2.msra.mxu0 0.0
    %1580 = vmatprep.subr.mxu0 0.0
    %1581 = vmatpush2.msra.mxu0 0.0
    %1582 = vmatprep.subr.mxu0 0.0
    %1583 = vmatpush2.msra.mxu0 0.0
    %1584 = vmatprep.subr.mxu0 0.0
    %1585 = vmatpush2.msra.mxu0 0.0
    %1586 = vmatprep.mubr.f32.mxu0 0.0
    %1587 = vmatmul.mubr.f32.gmra.mxu0 %v1517
    %v1588 = vpop.f32.mrf.mxu0
    %v1589 = vadd.f32 0.0, %v1588
    %v1590 = vpop.f32.mrf.mxu0
    %v1591 = vadd.f32 0.0, %v1590
    %1592 = vmatprep.mubr.f32.mxu0 0.0
    %1593 = vmatmul.mubr.f32.gmra.mxu0 %v1520
    %v1594 = vpop.f32.mrf.mxu0
    %v1595 = vadd.f32 0.0, %v1594
    %v1596 = vpop.f32.mrf.mxu0
    %v1597 = vadd.f32 0.0, %v1596
    %1598 = vdwg.mxu0
    %v1600 = vsel %vm1515, %v1294, 0
    %v1603 = vsel %vm1515, %v1299, 0
    %1605 = vmatprep.subr.mxu0 0.0
    %1606 = vmatpush1.msra.mxu0 0.0
    %1607 = vmatprep.subr.mxu0 0.0
    %1608 = vmatpush1.msra.mxu0 0.0
    %1609 = vmatprep.subr.mxu0 0.0
    %1610 = vmatpush1.msra.mxu0 0.0
    %1611 = vmatprep.subr.mxu0 0.0
    %1612 = vmatpush1.msra.mxu0 0.0
    %1613 = vmatprep.subr.mxu0 0.0
    %1614 = vmatpush1.msra.mxu0 0.0
    %1615 = vmatprep.subr.mxu0 %v1491
    %1616 = vmatpush1.msra.mxu0 %v1490
    %1617 = vmatprep.subr.mxu0 %v1489
    %1618 = vmatpush1.msra.mxu0 %v1488
    %1619 = vmatprep.subr.mxu0 %v1487
    %1620 = vmatpush1.msra.mxu0 %v1486
    %1621 = vmatprep.subr.mxu0 %v1485
    %1622 = vmatpush1.msra.mxu0 %v1484
    %1623 = vmatprep.subr.mxu0 %v1483
    %1624 = vmatpush1.msra.mxu0 %v1482
    %1625 = vmatprep.subr.mxu0 %v1481
    %1626 = vmatpush1.msra.mxu0 %v1480
    %1627 = vmatprep.subr.mxu0 %v1479
    %1628 = vmatpush1.msra.mxu0 %v1478
    %1629 = vmatprep.subr.mxu0 %v1477
    %1630 = vmatpush1.msra.mxu0 %v1476
    %1631 = vmatprep.subr.mxu0 %v1475
    %1632 = vmatpush1.msra.mxu0 %v1474
    %1633 = vmatprep.subr.mxu0 %v1473
    %1634 = vmatpush1.msra.mxu0 %v1472
    %1635 = vmatprep.subr.mxu0 %v1471
    %1636 = vmatpush1.msra.mxu0 %v1470
    %1637 = vmatprep.subr.mxu0 0.0
    %1638 = vmatpush2.msra.mxu0 0.0
    %1639 = vmatprep.subr.mxu0 0.0
    %1640 = vmatpush2.msra.mxu0 0.0
    %1641 = vmatprep.subr.mxu0 0.0
    %1642 = vmatpush2.msra.mxu0 0.0
    %1643 = vmatprep.subr.mxu0 0.0
    %1644 = vmatpush2.msra.mxu0 0.0
    %1645 = vmatprep.subr.mxu0 0.0
    %1646 = vmatpush2.msra.mxu0 0.0
    %1647 = vmatprep.subr.mxu0 0.0
    %1648 = vmatpush2.msra.mxu0 0.0
    %1649 = vmatprep.subr.mxu0 0.0
    %1650 = vmatpush2.msra.mxu0 0.0
    %1651 = vmatprep.subr.mxu0 0.0
    %1652 = vmatpush2.msra.mxu0 0.0
    %1653 = vmatprep.subr.mxu0 0.0
    %1654 = vmatpush2.msra.mxu0 0.0
    %1655 = vmatprep.subr.mxu0 0.0
    %1656 = vmatpush2.msra.mxu0 0.0
    %1657 = vmatprep.subr.mxu0 0.0
    %1658 = vmatpush2.msra.mxu0 0.0
    %1659 = vmatprep.subr.mxu0 0.0
    %1660 = vmatpush2.msra.mxu0 0.0
    %1661 = vmatprep.subr.mxu0 0.0
    %1662 = vmatpush2.msra.mxu0 0.0
    %1663 = vmatprep.subr.mxu0 0.0
    %1664 = vmatpush2.msra.mxu0 0.0
    %1665 = vmatprep.subr.mxu0 0.0
    %1666 = vmatpush2.msra.mxu0 0.0
    %1667 = vmatprep.subr.mxu0 0.0
    %1668 = vmatpush2.msra.mxu0 0.0
    %1669 = vmatprep.mubr.f32.mxu0 0.0
    %1670 = vmatmul.mubr.f32.gmra.mxu0 %v1600
    %v1671 = vpop.f32.mrf.mxu0
    %v1672 = vadd.f32 %v1589, %v1671
    %v1673 = vpop.f32.mrf.mxu0
    %v1674 = vadd.f32 %v1591, %v1673
    %1675 = vmatprep.mubr.f32.mxu0 0.0
    %1676 = vmatmul.mubr.f32.gmra.mxu0 %v1603
    %v1677 = vpop.f32.mrf.mxu0
    %v1678 = vadd.f32 %v1595, %v1677
    %v1679 = vpop.f32.mrf.mxu0
    %v1680 = vadd.f32 %v1597, %v1679
    %1681 = vdwg.mxu0
    %s1682 = scalar_lea.vmem [#allocation28], 352
    %v1683 = vld [vmem:[%s1682] sm:$0xff]
    %v1684 = vld [vmem:[%s1682 + $0x8] sm:$0xff]
    %v1685 = vld [vmem:[%s1682 + $0x10] sm:$0xff]
    %v1686 = vld [vmem:[%s1682 + $0x18] sm:$0xff]
    %v1687 = vld [vmem:[%s1682 + $0x20] sm:$0xff]
    %v1688 = vld [vmem:[%s1682 + $0x28] sm:$0xff]
    %v1689 = vld [vmem:[%s1682 + $0x30] sm:$0xff]
    %v1690 = vld [vmem:[%s1682 + $0x38] sm:$0xff]
    %v1691 = vld [vmem:[%s1682 + $0x40] sm:$0xff]
    %v1692 = vld [vmem:[%s1682 + $0x48] sm:$0xff]
    %v1693 = vld [vmem:[%s1682 + $0x50] sm:$0xff]
    %v1694 = vld [vmem:[%s1682 + $0x58] sm:$0xff]
    %v1695 = vld [vmem:[%s1682 + $0x60] sm:$0xff]
    %v1696 = vld [vmem:[%s1682 + $0x68] sm:$0xff]
    %v1697 = vld [vmem:[%s1682 + $0x70] sm:$0xff]
    %v1698 = vld [vmem:[%s1682 + $0x78] sm:$0xff]
    %v1699 = vld [vmem:[%s1682 + $0x80] sm:$0xff]
    %v1700 = vld [vmem:[%s1682 + $0x88] sm:$0xff]
    %v1701 = vld [vmem:[%s1682 + $0x90] sm:$0xff]
    %v1702 = vld [vmem:[%s1682 + $0x98] sm:$0xff]
    %v1703 = vld [vmem:[%s1682 + $0xa0] sm:$0xff]
    %v1704 = vld [vmem:[%s1682 + $0xa8] sm:$0xff]
    %v1706 = vsel %vm1515, %v1462, 0
    %v1709 = vsel %vm1515, %v1467, 0
    %1711 = vmatprep.subr.mxu0 0.0
    %1712 = vmatpush1.msra.mxu0 0.0
    %1713 = vmatprep.subr.mxu0 0.0
    %1714 = vmatpush1.msra.mxu0 0.0
    %1715 = vmatprep.subr.mxu0 0.0
    %1716 = vmatpush1.msra.mxu0 0.0
    %1717 = vmatprep.subr.mxu0 0.0
    %1718 = vmatpush1.msra.mxu0 0.0
    %1719 = vmatprep.subr.mxu0 0.0
    %1720 = vmatpush1.msra.mxu0 0.0
    %1721 = vmatprep.subr.mxu0 %v1704
    %1722 = vmatpush1.msra.mxu0 %v1703
    %1723 = vmatprep.subr.mxu0 %v1702
    %1724 = vmatpush1.msra.mxu0 %v1701
    %1725 = vmatprep.subr.mxu0 %v1700
    %1726 = vmatpush1.msra.mxu0 %v1699
    %1727 = vmatprep.subr.mxu0 %v1698
    %1728 = vmatpush1.msra.mxu0 %v1697
    %1729 = vmatprep.subr.mxu0 %v1696
    %1730 = vmatpush1.msra.mxu0 %v1695
    %1731 = vmatprep.subr.mxu0 %v1694
    %1732 = vmatpush1.msra.mxu0 %v1693
    %1733 = vmatprep.subr.mxu0 %v1692
    %1734 = vmatpush1.msra.mxu0 %v1691
    %1735 = vmatprep.subr.mxu0 %v1690
    %1736 = vmatpush1.msra.mxu0 %v1689
    %1737 = vmatprep.subr.mxu0 %v1688
    %1738 = vmatpush1.msra.mxu0 %v1687
    %1739 = vmatprep.subr.mxu0 %v1686
    %1740 = vmatpush1.msra.mxu0 %v1685
    %1741 = vmatprep.subr.mxu0 %v1684
    %1742 = vmatpush1.msra.mxu0 %v1683
    %1743 = vmatprep.subr.mxu0 0.0
    %1744 = vmatpush2.msra.mxu0 0.0
    %1745 = vmatprep.subr.mxu0 0.0
    %1746 = vmatpush2.msra.mxu0 0.0
    %1747 = vmatprep.subr.mxu0 0.0
    %1748 = vmatpush2.msra.mxu0 0.0
    %1749 = vmatprep.subr.mxu0 0.0
    %1750 = vmatpush2.msra.mxu0 0.0
    %1751 = vmatprep.subr.mxu0 0.0
    %1752 = vmatpush2.msra.mxu0 0.0
    %1753 = vmatprep.subr.mxu0 0.0
    %1754 = vmatpush2.msra.mxu0 0.0
    %1755 = vmatprep.subr.mxu0 0.0
    %1756 = vmatpush2.msra.mxu0 0.0
    %1757 = vmatprep.subr.mxu0 0.0
    %1758 = vmatpush2.msra.mxu0 0.0
    %1759 = vmatprep.subr.mxu0 0.0
    %1760 = vmatpush2.msra.mxu0 0.0
    %1761 = vmatprep.subr.mxu0 0.0
    %1762 = vmatpush2.msra.mxu0 0.0
    %1763 = vmatprep.subr.mxu0 0.0
    %1764 = vmatpush2.msra.mxu0 0.0
    %1765 = vmatprep.subr.mxu0 0.0
    %1766 = vmatpush2.msra.mxu0 0.0
    %1767 = vmatprep.subr.mxu0 0.0
    %1768 = vmatpush2.msra.mxu0 0.0
    %1769 = vmatprep.subr.mxu0 0.0
    %1770 = vmatpush2.msra.mxu0 0.0
    %1771 = vmatprep.subr.mxu0 0.0
    %1772 = vmatpush2.msra.mxu0 0.0
    %1773 = vmatprep.subr.mxu0 0.0
    %1774 = vmatpush2.msra.mxu0 0.0
    %1775 = vmatprep.mubr.f32.mxu0 0.0
    %1776 = vmatmul.mubr.f32.gmra.mxu0 %v1706
    %v1777 = vpop.f32.mrf.mxu0
    %v1778 = vadd.f32 0.0, %v1777
    %v1779 = vpop.f32.mrf.mxu0
    %v1780 = vadd.f32 0.0, %v1779
    %1781 = vmatprep.mubr.f32.mxu0 0.0
    %1782 = vmatmul.mubr.f32.gmra.mxu0 %v1709
    %v1783 = vpop.f32.mrf.mxu0
    %v1784 = vadd.f32 0.0, %v1783
    %v1785 = vpop.f32.mrf.mxu0
    %v1786 = vadd.f32 0.0, %v1785
    %1787 = vdwg.mxu0
    %v1788 = vadd.f32 %v1672, %v1778
    %v1789 = vadd.f32 %v1674, %v1780
    %v1790 = vadd.f32 %v1678, %v1784
    %v1791 = vadd.f32 %v1680, %v1786
    %v1792 = vld [vmem:[#allocation30] sm:$0x3]
    %v1794 = vlaneseq
    %v1795 = vshrl.u32 %v1794, 7
    %v1796 = vsub.s32 0, %v1795
    %v1797 = vrot.slane %v1792, %v1796
    %v1798 = vlaneseq
    %v1799 = vshrl.u32 %v1798, 7
    %v1800 = vsub.s32 1, %v1799
    %v1801 = vrot.slane %v1792, %v1800
    %v1804 = vadd.f32 %v1788, %v1797
    %v1805 = vadd.f32 %v1789, %v1801
    %v1806 = vadd.f32 %v1790, %v1797
    %v1807 = vadd.f32 %v1791, %v1801
    %vm1808 = vcmp.ge.f32.partialorder %v1804, 0.0
    %vm1809 = vcmp.ge.f32.partialorder %v1805, 0.0
    %vm1810 = vcmp.ge.f32.partialorder %v1806, 0.0
    %vm1811 = vcmp.ge.f32.partialorder %v1807, 0.0
    %v1812 = vmul.f32 %v1804, 0.01
    %v1813 = vmul.f32 %v1805, 0.01
    %v1814 = vmul.f32 %v1806, 0.01
    %v1815 = vmul.f32 %v1807, 0.01
    %v1816 = vsel %vm1808, %v1804, %v1812
    %v1817 = vsel %vm1809, %v1805, %v1813
    %v1818 = vsel %vm1810, %v1806, %v1814
    %v1819 = vsel %vm1811, %v1807, %v1815
    %v1820 = vld [vmem:[#allocation6] sm:$0xff]
    %v1821 = vld [vmem:[#allocation6 + $0x8] sm:$0x3]
    %vm1822 = vcmask 113664
    %v1824 = vsel %vm1822, %v1820, 0
    %v1827 = vsel %vm1822, %v1821, 0
    %v1830 = vsel %vm1223, %v1818, 0
    %v1833 = vsel %vm1223, %v1819, 0
    %1835 = vmatprep.subr.mxu0 0.0
    %1836 = vmatpush1.msra.mxu0 0.0
    %1837 = vmatprep.subr.mxu0 0.0
    %1838 = vmatpush1.msra.mxu0 0.0
    %1839 = vmatprep.subr.mxu0 0.0
    %1840 = vmatpush1.msra.mxu0 0.0
    %1841 = vmatprep.subr.mxu0 0.0
    %1842 = vmatpush1.msra.mxu0 0.0
    %1843 = vmatprep.subr.mxu0 0.0
    %1844 = vmatpush1.msra.mxu0 0.0
    %1845 = vmatprep.subr.mxu0 0.0
    %1846 = vmatpush1.msra.mxu0 0.0
    %1847 = vmatprep.subr.mxu0 0.0
    %1848 = vmatpush1.msra.mxu0 0.0
    %1849 = vmatprep.subr.mxu0 0.0
    %1850 = vmatpush1.msra.mxu0 0.0
    %1851 = vmatprep.subr.mxu0 0.0
    %1852 = vmatpush1.msra.mxu0 0.0
    %1853 = vmatprep.subr.mxu0 0.0
    %1854 = vmatpush1.msra.mxu0 0.0
    %1855 = vmatprep.subr.mxu0 0.0
    %1856 = vmatpush1.msra.mxu0 0.0
    %1857 = vmatprep.subr.mxu0 0.0
    %1858 = vmatpush1.msra.mxu0 0.0
    %1859 = vmatprep.subr.mxu0 0.0
    %1860 = vmatpush1.msra.mxu0 0.0
    %1861 = vmatprep.subr.mxu0 0.0
    %1862 = vmatpush1.msra.mxu0 0.0
    %1863 = vmatprep.subr.mxu0 %v1833
    %1864 = vmatpush1.msra.mxu0 %v1830
    %1865 = vmatprep.subr.mxu0 %v1817
    %1866 = vmatpush1.msra.mxu0 %v1816
    %1867 = vmatprep.subr.mxu0 0.0
    %1868 = vmatpush2.msra.mxu0 0.0
    %1869 = vmatprep.subr.mxu0 0.0
    %1870 = vmatpush2.msra.mxu0 0.0
    %1871 = vmatprep.subr.mxu0 0.0
    %1872 = vmatpush2.msra.mxu0 0.0
    %1873 = vmatprep.subr.mxu0 0.0
    %1874 = vmatpush2.msra.mxu0 0.0
    %1875 = vmatprep.subr.mxu0 0.0
    %1876 = vmatpush2.msra.mxu0 0.0
    %1877 = vmatprep.subr.mxu0 0.0
    %1878 = vmatpush2.msra.mxu0 0.0
    %1879 = vmatprep.subr.mxu0 0.0
    %1880 = vmatpush2.msra.mxu0 0.0
    %1881 = vmatprep.subr.mxu0 0.0
    %1882 = vmatpush2.msra.mxu0 0.0
    %1883 = vmatprep.subr.mxu0 0.0
    %1884 = vmatpush2.msra.mxu0 0.0
    %1885 = vmatprep.subr.mxu0 0.0
    %1886 = vmatpush2.msra.mxu0 0.0
    %1887 = vmatprep.subr.mxu0 0.0
    %1888 = vmatpush2.msra.mxu0 0.0
    %1889 = vmatprep.subr.mxu0 0.0
    %1890 = vmatpush2.msra.mxu0 0.0
    %1891 = vmatprep.subr.mxu0 0.0
    %1892 = vmatpush2.msra.mxu0 0.0
    %1893 = vmatprep.subr.mxu0 0.0
    %1894 = vmatpush2.msra.mxu0 0.0
    %1895 = vmatprep.subr.mxu0 0.0
    %1896 = vmatpush2.msra.mxu0 0.0
    %1897 = vmatprep.subr.mxu0 0.0
    %1898 = vmatpush2.msra.mxu0 0.0
    %1899 = vmatprep.mubr.f32.mxu0 0.0
    %1900 = vmatmul.mubr.f32.gmra.mxu0 %v1824
    %v1901 = vpop.f32.mrf.mxu0
    %v1902 = vadd.f32 0.0, %v1901
    %v1903 = vpop.f32.mrf.mxu0
    %v1904 = vadd.f32 0.0, %v1903
    %1905 = vmatprep.mubr.f32.mxu0 0.0
    %1906 = vmatmul.mubr.f32.gmra.mxu0 %v1827
    %v1907 = vpop.f32.mrf.mxu0
    %v1908 = vadd.f32 0.0, %v1907
    %v1909 = vpop.f32.mrf.mxu0
    %v1910 = vadd.f32 0.0, %v1909
    %1911 = vdwg.mxu0
    %s1912 = scalar_lea.vmem [#allocation6], 16
    %v1913 = vld [vmem:[%s1912] sm:$0xff]
    %v1914 = vld [vmem:[%s1912 + $0x8] sm:$0x3]
    %v1916 = vsel %vm1822, %v1913, 0
    %v1919 = vsel %vm1822, %v1914, 0
    %1921 = vmatprep.subr.mxu0 0.0
    %1922 = vmatpush1.msra.mxu0 0.0
    %1923 = vmatprep.subr.mxu0 0.0
    %1924 = vmatpush1.msra.mxu0 0.0
    %1925 = vmatprep.subr.mxu0 0.0
    %1926 = vmatpush1.msra.mxu0 0.0
    %1927 = vmatprep.subr.mxu0 0.0
    %1928 = vmatpush1.msra.mxu0 0.0
    %1929 = vmatprep.subr.mxu0 0.0
    %1930 = vmatpush1.msra.mxu0 0.0
    %1931 = vmatprep.subr.mxu0 0.0
    %1932 = vmatpush1.msra.mxu0 0.0
    %1933 = vmatprep.subr.mxu0 0.0
    %1934 = vmatpush1.msra.mxu0 0.0
    %1935 = vmatprep.subr.mxu0 0.0
    %1936 = vmatpush1.msra.mxu0 0.0
    %1937 = vmatprep.subr.mxu0 0.0
    %1938 = vmatpush1.msra.mxu0 0.0
    %1939 = vmatprep.subr.mxu0 0.0
    %1940 = vmatpush1.msra.mxu0 0.0
    %1941 = vmatprep.subr.mxu0 0.0
    %1942 = vmatpush1.msra.mxu0 0.0
    %1943 = vmatprep.subr.mxu0 0.0
    %1944 = vmatpush1.msra.mxu0 0.0
    %1945 = vmatprep.subr.mxu0 0.0
    %1946 = vmatpush1.msra.mxu0 0.0
    %1947 = vmatprep.subr.mxu0 0.0
    %1948 = vmatpush1.msra.mxu0 0.0
    %1949 = vmatprep.subr.mxu0 %v1833
    %1950 = vmatpush1.msra.mxu0 %v1830
    %1951 = vmatprep.subr.mxu0 %v1817
    %1952 = vmatpush1.msra.mxu0 %v1816
    %1953 = vmatprep.subr.mxu0 0.0
    %1954 = vmatpush2.msra.mxu0 0.0
    %1955 = vmatprep.subr.mxu0 0.0
    %1956 = vmatpush2.msra.mxu0 0.0
    %1957 = vmatprep.subr.mxu0 0.0
    %1958 = vmatpush2.msra.mxu0 0.0
    %1959 = vmatprep.subr.mxu0 0.0
    %1960 = vmatpush2.msra.mxu0 0.0
    %1961 = vmatprep.subr.mxu0 0.0
    %1962 = vmatpush2.msra.mxu0 0.0
    %1963 = vmatprep.subr.mxu0 0.0
    %1964 = vmatpush2.msra.mxu0 0.0
    %1965 = vmatprep.subr.mxu0 0.0
    %1966 = vmatpush2.msra.mxu0 0.0
    %1967 = vmatprep.subr.mxu0 0.0
    %1968 = vmatpush2.msra.mxu0 0.0
    %1969 = vmatprep.subr.mxu0 0.0
    %1970 = vmatpush2.msra.mxu0 0.0
    %1971 = vmatprep.subr.mxu0 0.0
    %1972 = vmatpush2.msra.mxu0 0.0
    %1973 = vmatprep.subr.mxu0 0.0
    %1974 = vmatpush2.msra.mxu0 0.0
    %1975 = vmatprep.subr.mxu0 0.0
    %1976 = vmatpush2.msra.mxu0 0.0
    %1977 = vmatprep.subr.mxu0 0.0
    %1978 = vmatpush2.msra.mxu0 0.0
    %1979 = vmatprep.subr.mxu0 0.0
    %1980 = vmatpush2.msra.mxu0 0.0
    %1981 = vmatprep.subr.mxu0 0.0
    %1982 = vmatpush2.msra.mxu0 0.0
    %1983 = vmatprep.subr.mxu0 0.0
    %1984 = vmatpush2.msra.mxu0 0.0
    %1985 = vmatprep.mubr.f32.mxu0 0.0
    %1986 = vmatmul.mubr.f32.gmra.mxu0 %v1916
    %v1987 = vpop.f32.mrf.mxu0
    %v1988 = vadd.f32 0.0, %v1987
    %v1989 = vpop.f32.mrf.mxu0
    %v1990 = vadd.f32 0.0, %v1989
    %1991 = vmatprep.mubr.f32.mxu0 0.0
    %1992 = vmatmul.mubr.f32.gmra.mxu0 %v1919
    %v1993 = vpop.f32.mrf.mxu0
    %v1994 = vadd.f32 0.0, %v1993
    %v1995 = vpop.f32.mrf.mxu0
    %v1996 = vadd.f32 0.0, %v1995
    %1997 = vdwg.mxu0
    %s1998 = scalar_lea.vmem [#allocation6], 32
    %v1999 = vld [vmem:[%s1998] sm:$0xff]
    %v2000 = vld [vmem:[%s1998 + $0x8] sm:$0x3]
    %v2002 = vsel %vm1822, %v1999, 0
    %v2005 = vsel %vm1822, %v2000, 0
    %2007 = vmatprep.subr.mxu0 0.0
    %2008 = vmatpush1.msra.mxu0 0.0
    %2009 = vmatprep.subr.mxu0 0.0
    %2010 = vmatpush1.msra.mxu0 0.0
    %2011 = vmatprep.subr.mxu0 0.0
    %2012 = vmatpush1.msra.mxu0 0.0
    %2013 = vmatprep.subr.mxu0 0.0
    %2014 = vmatpush1.msra.mxu0 0.0
    %2015 = vmatprep.subr.mxu0 0.0
    %2016 = vmatpush1.msra.mxu0 0.0
    %2017 = vmatprep.subr.mxu0 0.0
    %2018 = vmatpush1.msra.mxu0 0.0
    %2019 = vmatprep.subr.mxu0 0.0
    %2020 = vmatpush1.msra.mxu0 0.0
    %2021 = vmatprep.subr.mxu0 0.0
    %2022 = vmatpush1.msra.mxu0 0.0
    %2023 = vmatprep.subr.mxu0 0.0
    %2024 = vmatpush1.msra.mxu0 0.0
    %2025 = vmatprep.subr.mxu0 0.0
    %2026 = vmatpush1.msra.mxu0 0.0
    %2027 = vmatprep.subr.mxu0 0.0
    %2028 = vmatpush1.msra.mxu0 0.0
    %2029 = vmatprep.subr.mxu0 0.0
    %2030 = vmatpush1.msra.mxu0 0.0
    %2031 = vmatprep.subr.mxu0 0.0
    %2032 = vmatpush1.msra.mxu0 0.0
    %2033 = vmatprep.subr.mxu0 0.0
    %2034 = vmatpush1.msra.mxu0 0.0
    %2035 = vmatprep.subr.mxu0 %v1833
    %2036 = vmatpush1.msra.mxu0 %v1830
    %2037 = vmatprep.subr.mxu0 %v1817
    %2038 = vmatpush1.msra.mxu0 %v1816
    %2039 = vmatprep.subr.mxu0 0.0
    %2040 = vmatpush2.msra.mxu0 0.0
    %2041 = vmatprep.subr.mxu0 0.0
    %2042 = vmatpush2.msra.mxu0 0.0
    %2043 = vmatprep.subr.mxu0 0.0
    %2044 = vmatpush2.msra.mxu0 0.0
    %2045 = vmatprep.subr.mxu0 0.0
    %2046 = vmatpush2.msra.mxu0 0.0
    %2047 = vmatprep.subr.mxu0 0.0
    %2048 = vmatpush2.msra.mxu0 0.0
    %2049 = vmatprep.subr.mxu0 0.0
    %2050 = vmatpush2.msra.mxu0 0.0
    %2051 = vmatprep.subr.mxu0 0.0
    %2052 = vmatpush2.msra.mxu0 0.0
    %2053 = vmatprep.subr.mxu0 0.0
    %2054 = vmatpush2.msra.mxu0 0.0
    %2055 = vmatprep.subr.mxu0 0.0
    %2056 = vmatpush2.msra.mxu0 0.0
    %2057 = vmatprep.subr.mxu0 0.0
    %2058 = vmatpush2.msra.mxu0 0.0
    %2059 = vmatprep.subr.mxu0 0.0
    %2060 = vmatpush2.msra.mxu0 0.0
    %2061 = vmatprep.subr.mxu0 0.0
    %2062 = vmatpush2.msra.mxu0 0.0
    %2063 = vmatprep.subr.mxu0 0.0
    %2064 = vmatpush2.msra.mxu0 0.0
    %2065 = vmatprep.subr.mxu0 0.0
    %2066 = vmatpush2.msra.mxu0 0.0
    %2067 = vmatprep.subr.mxu0 0.0
    %2068 = vmatpush2.msra.mxu0 0.0
    %2069 = vmatprep.subr.mxu0 0.0
    %2070 = vmatpush2.msra.mxu0 0.0
    %2071 = vmatprep.mubr.f32.mxu0 0.0
    %2072 = vmatmul.mubr.f32.gmra.mxu0 %v2002
    %v2073 = vpop.f32.mrf.mxu0
    %v2074 = vadd.f32 0.0, %v2073
    %v2075 = vpop.f32.mrf.mxu0
    %v2076 = vadd.f32 0.0, %v2075
    %2077 = vmatprep.mubr.f32.mxu0 0.0
    %2078 = vmatmul.mubr.f32.gmra.mxu0 %v2005
    %v2079 = vpop.f32.mrf.mxu0
    %v2080 = vadd.f32 0.0, %v2079
    %v2081 = vpop.f32.mrf.mxu0
    %v2082 = vadd.f32 0.0, %v2081
    %2083 = vdwg.mxu0
    %v2084 = vld [vmem:[#allocation31] sm:$0xff]
    %v2085 = vld [vmem:[#allocation31 + $0x8] sm:$0xff]
    %v2086 = vld [vmem:[#allocation31 + $0x10] sm:$0xff]
    %v2087 = vld [vmem:[#allocation31 + $0x18] sm:$0xff]
    %v2088 = vld [vmem:[#allocation31 + $0x20] sm:$0xff]
    %v2089 = vld [vmem:[#allocation31 + $0x28] sm:$0xff]
    %v2090 = vld [vmem:[#allocation31 + $0x30] sm:$0xff]
    %v2091 = vld [vmem:[#allocation31 + $0x38] sm:$0xff]
    %v2092 = vld [vmem:[#allocation31 + $0x40] sm:$0xff]
    %v2093 = vld [vmem:[#allocation31 + $0x48] sm:$0xff]
    %v2094 = vld [vmem:[#allocation31 + $0x50] sm:$0xff]
    %v2095 = vld [vmem:[#allocation31 + $0x58] sm:$0xff]
    %v2096 = vld [vmem:[#allocation31 + $0x60] sm:$0xff]
    %v2097 = vld [vmem:[#allocation31 + $0x68] sm:$0xff]
    %v2098 = vld [vmem:[#allocation31 + $0x70] sm:$0xff]
    %v2099 = vld [vmem:[#allocation31 + $0x78] sm:$0xff]
    %v2100 = vld [vmem:[#allocation31 + $0x80] sm:$0xff]
    %v2101 = vld [vmem:[#allocation31 + $0x88] sm:$0xff]
    %v2102 = vld [vmem:[#allocation31 + $0x90] sm:$0xff]
    %v2103 = vld [vmem:[#allocation31 + $0x98] sm:$0xff]
    %v2104 = vld [vmem:[#allocation31 + $0xa0] sm:$0xff]
    %v2105 = vld [vmem:[#allocation31 + $0xa8] sm:$0xff]
    %v2106 = vld [vmem:[#allocation31 + $0xb0] sm:$0xff]
    %v2107 = vld [vmem:[#allocation31 + $0xb8] sm:$0xff]
    %v2108 = vld [vmem:[#allocation31 + $0xc0] sm:$0xff]
    %v2109 = vld [vmem:[#allocation31 + $0xc8] sm:$0xff]
    %v2110 = vld [vmem:[#allocation31 + $0xd0] sm:$0xff]
    %v2111 = vld [vmem:[#allocation31 + $0xd8] sm:$0xff]
    %v2112 = vld [vmem:[#allocation31 + $0xe0] sm:$0xff]
    %v2113 = vld [vmem:[#allocation31 + $0xe8] sm:$0xff]
    %v2114 = vld [vmem:[#allocation31 + $0xf0] sm:$0xff]
    %v2115 = vld [vmem:[#allocation31 + $0xf8] sm:$0xff]
    %v2116 = vld [vmem:[#allocation31 + $0x100] sm:$0xff]
    %v2117 = vld [vmem:[#allocation31 + $0x108] sm:$0xff]
    %v2118 = vld [vmem:[#allocation31 + $0x110] sm:$0xff]
    %v2119 = vld [vmem:[#allocation31 + $0x118] sm:$0xff]
    %v2120 = vld [vmem:[#allocation31 + $0x120] sm:$0xff]
    %v2121 = vld [vmem:[#allocation31 + $0x128] sm:$0xff]
    %v2122 = vld [vmem:[#allocation31 + $0x130] sm:$0xff]
    %v2123 = vld [vmem:[#allocation31 + $0x138] sm:$0xff]
    %v2124 = vld [vmem:[#allocation31 + $0x140] sm:$0xff]
    %v2125 = vld [vmem:[#allocation31 + $0x148] sm:$0xff]
    %v2126 = vld [vmem:[#allocation31 + $0x150] sm:$0xff]
    %v2127 = vld [vmem:[#allocation31 + $0x158] sm:$0xff]
    %s2128 = scalar_lea.vmem [#allocation31], 352
    %v2129 = vld [vmem:[%s2128] sm:$0xff]
    %v2130 = vld [vmem:[%s2128 + $0x8] sm:$0xff]
    %v2131 = vld [vmem:[%s2128 + $0x10] sm:$0xff]
    %v2132 = vld [vmem:[%s2128 + $0x18] sm:$0xff]
    %v2133 = vld [vmem:[%s2128 + $0x20] sm:$0xff]
    %v2134 = vld [vmem:[%s2128 + $0x28] sm:$0xff]
    %v2135 = vld [vmem:[%s2128 + $0x30] sm:$0xff]
    %v2136 = vld [vmem:[%s2128 + $0x38] sm:$0xff]
    %v2137 = vld [vmem:[%s2128 + $0x40] sm:$0xff]
    %v2138 = vld [vmem:[%s2128 + $0x48] sm:$0xff]
    %v2139 = vld [vmem:[%s2128 + $0x50] sm:$0xff]
    %v2140 = vld [vmem:[%s2128 + $0x58] sm:$0xff]
    %v2141 = vld [vmem:[%s2128 + $0x60] sm:$0xff]
    %v2142 = vld [vmem:[%s2128 + $0x68] sm:$0xff]
    %v2143 = vld [vmem:[%s2128 + $0x70] sm:$0xff]
    %v2144 = vld [vmem:[%s2128 + $0x78] sm:$0xff]
    %v2145 = vld [vmem:[%s2128 + $0x80] sm:$0xff]
    %v2146 = vld [vmem:[%s2128 + $0x88] sm:$0xff]
    %v2147 = vld [vmem:[%s2128 + $0x90] sm:$0xff]
    %v2148 = vld [vmem:[%s2128 + $0x98] sm:$0xff]
    %v2149 = vld [vmem:[%s2128 + $0xa0] sm:$0xff]
    %v2150 = vld [vmem:[%s2128 + $0xa8] sm:$0xff]
    %v2151 = vld [vmem:[%s2128 + $0xb0] sm:$0xff]
    %v2152 = vld [vmem:[%s2128 + $0xb8] sm:$0xff]
    %v2153 = vld [vmem:[%s2128 + $0xc0] sm:$0xff]
    %v2154 = vld [vmem:[%s2128 + $0xc8] sm:$0xff]
    %v2155 = vld [vmem:[%s2128 + $0xd0] sm:$0xff]
    %v2156 = vld [vmem:[%s2128 + $0xd8] sm:$0xff]
    %v2157 = vld [vmem:[%s2128 + $0xe0] sm:$0xff]
    %v2158 = vld [vmem:[%s2128 + $0xe8] sm:$0xff]
    %v2159 = vld [vmem:[%s2128 + $0xf0] sm:$0xff]
    %v2160 = vld [vmem:[%s2128 + $0xf8] sm:$0xff]
    %v2161 = vld [vmem:[%s2128 + $0x100] sm:$0xff]
    %v2162 = vld [vmem:[%s2128 + $0x108] sm:$0xff]
    %v2163 = vld [vmem:[%s2128 + $0x110] sm:$0xff]
    %v2164 = vld [vmem:[%s2128 + $0x118] sm:$0xff]
    %v2165 = vld [vmem:[%s2128 + $0x120] sm:$0xff]
    %v2166 = vld [vmem:[%s2128 + $0x128] sm:$0xff]
    %v2167 = vld [vmem:[%s2128 + $0x130] sm:$0xff]
    %v2168 = vld [vmem:[%s2128 + $0x138] sm:$0xff]
    %v2169 = vld [vmem:[%s2128 + $0x140] sm:$0xff]
    %v2170 = vld [vmem:[%s2128 + $0x148] sm:$0xff]
    %v2171 = vld [vmem:[%s2128 + $0x150] sm:$0xff]
    %v2172 = vld [vmem:[%s2128 + $0x158] sm:$0xff]
    %vm2173 = vcmask 392192
    %v2175 = vsel %vm2173, %v1990, 0
    %v2178 = vsel %vm2173, %v1996, 0
    %2180 = vmatprep.subr.mxu0 %v2160
    %2181 = vmatpush1.msra.mxu0 %v2159
    %2182 = vmatprep.subr.mxu0 %v2158
    %2183 = vmatpush1.msra.mxu0 %v2157
    %2184 = vmatprep.subr.mxu0 %v2156
    %2185 = vmatpush1.msra.mxu0 %v2155
    %2186 = vmatprep.subr.mxu0 %v2154
    %2187 = vmatpush1.msra.mxu0 %v2153
    %2188 = vmatprep.subr.mxu0 %v2152
    %2189 = vmatpush1.msra.mxu0 %v2151
    %2190 = vmatprep.subr.mxu0 %v2150
    %2191 = vmatpush1.msra.mxu0 %v2149
    %2192 = vmatprep.subr.mxu0 %v2148
    %2193 = vmatpush1.msra.mxu0 %v2147
    %2194 = vmatprep.subr.mxu0 %v2146
    %2195 = vmatpush1.msra.mxu0 %v2145
    %2196 = vmatprep.subr.mxu0 %v2144
    %2197 = vmatpush1.msra.mxu0 %v2143
    %2198 = vmatprep.subr.mxu0 %v2142
    %2199 = vmatpush1.msra.mxu0 %v2141
    %2200 = vmatprep.subr.mxu0 %v2140
    %2201 = vmatpush1.msra.mxu0 %v2139
    %2202 = vmatprep.subr.mxu0 %v2138
    %2203 = vmatpush1.msra.mxu0 %v2137
    %2204 = vmatprep.subr.mxu0 %v2136
    %2205 = vmatpush1.msra.mxu0 %v2135
    %2206 = vmatprep.subr.mxu0 %v2134
    %2207 = vmatpush1.msra.mxu0 %v2133
    %2208 = vmatprep.subr.mxu0 %v2132
    %2209 = vmatpush1.msra.mxu0 %v2131
    %2210 = vmatprep.subr.mxu0 %v2130
    %2211 = vmatpush1.msra.mxu0 %v2129
    %2212 = vmatprep.subr.mxu0 0.0
    %2213 = vmatpush2.msra.mxu0 0.0
    %2214 = vmatprep.subr.mxu0 0.0
    %2215 = vmatpush2.msra.mxu0 0.0
    %2216 = vmatprep.subr.mxu0 0.0
    %2217 = vmatpush2.msra.mxu0 0.0
    %2218 = vmatprep.subr.mxu0 0.0
    %2219 = vmatpush2.msra.mxu0 0.0
    %2220 = vmatprep.subr.mxu0 0.0
    %2221 = vmatpush2.msra.mxu0 0.0
    %2222 = vmatprep.subr.mxu0 0.0
    %2223 = vmatpush2.msra.mxu0 0.0
    %2224 = vmatprep.subr.mxu0 0.0
    %2225 = vmatpush2.msra.mxu0 0.0
    %2226 = vmatprep.subr.mxu0 0.0
    %2227 = vmatpush2.msra.mxu0 0.0
    %2228 = vmatprep.subr.mxu0 0.0
    %2229 = vmatpush2.msra.mxu0 0.0
    %2230 = vmatprep.subr.mxu0 0.0
    %2231 = vmatpush2.msra.mxu0 0.0
    %2232 = vmatprep.subr.mxu0 %v2172
    %2233 = vmatpush2.msra.mxu0 %v2171
    %2234 = vmatprep.subr.mxu0 %v2170
    %2235 = vmatpush2.msra.mxu0 %v2169
    %2236 = vmatprep.subr.mxu0 %v2168
    %2237 = vmatpush2.msra.mxu0 %v2167
    %2238 = vmatprep.subr.mxu0 %v2166
    %2239 = vmatpush2.msra.mxu0 %v2165
    %2240 = vmatprep.subr.mxu0 %v2164
    %2241 = vmatpush2.msra.mxu0 %v2163
    %2242 = vmatprep.subr.mxu0 %v2162
    %2243 = vmatpush2.msra.mxu0 %v2161
    %2244 = vmatprep.mubr.f32.mxu0 %v2175
    %2245 = vmatmul.mubr.f32.gmra.mxu0 %v1988
    %v2246 = vpop.f32.mrf.mxu0
    %v2247 = vadd.f32 0.0, %v2246
    %v2248 = vpop.f32.mrf.mxu0
    %v2249 = vadd.f32 0.0, %v2248
    %2250 = vmatprep.mubr.f32.mxu0 %v2178
    %2251 = vmatmul.mubr.f32.gmra.mxu0 %v1994
    %v2252 = vpop.f32.mrf.mxu0
    %v2253 = vadd.f32 0.0, %v2252
    %v2254 = vpop.f32.mrf.mxu0
    %v2255 = vadd.f32 0.0, %v2254
    %2256 = vdwg.mxu0
    %v2258 = vsel %vm2173, %v1904, 0
    %v2261 = vsel %vm2173, %v1910, 0
    %2263 = vmatprep.subr.mxu0 %v2115
    %2264 = vmatpush1.msra.mxu0 %v2114
    %2265 = vmatprep.subr.mxu0 %v2113
    %2266 = vmatpush1.msra.mxu0 %v2112
    %2267 = vmatprep.subr.mxu0 %v2111
    %2268 = vmatpush1.msra.mxu0 %v2110
    %2269 = vmatprep.subr.mxu0 %v2109
    %2270 = vmatpush1.msra.mxu0 %v2108
    %2271 = vmatprep.subr.mxu0 %v2107
    %2272 = vmatpush1.msra.mxu0 %v2106
    %2273 = vmatprep.subr.mxu0 %v2105
    %2274 = vmatpush1.msra.mxu0 %v2104
    %2275 = vmatprep.subr.mxu0 %v2103
    %2276 = vmatpush1.msra.mxu0 %v2102
    %2277 = vmatprep.subr.mxu0 %v2101
    %2278 = vmatpush1.msra.mxu0 %v2100
    %2279 = vmatprep.subr.mxu0 %v2099
    %2280 = vmatpush1.msra.mxu0 %v2098
    %2281 = vmatprep.subr.mxu0 %v2097
    %2282 = vmatpush1.msra.mxu0 %v2096
    %2283 = vmatprep.subr.mxu0 %v2095
    %2284 = vmatpush1.msra.mxu0 %v2094
    %2285 = vmatprep.subr.mxu0 %v2093
    %2286 = vmatpush1.msra.mxu0 %v2092
    %2287 = vmatprep.subr.mxu0 %v2091
    %2288 = vmatpush1.msra.mxu0 %v2090
    %2289 = vmatprep.subr.mxu0 %v2089
    %2290 = vmatpush1.msra.mxu0 %v2088
    %2291 = vmatprep.subr.mxu0 %v2087
    %2292 = vmatpush1.msra.mxu0 %v2086
    %2293 = vmatprep.subr.mxu0 %v2085
    %2294 = vmatpush1.msra.mxu0 %v2084
    %2295 = vmatprep.subr.mxu0 0.0
    %2296 = vmatpush2.msra.mxu0 0.0
    %2297 = vmatprep.subr.mxu0 0.0
    %2298 = vmatpush2.msra.mxu0 0.0
    %2299 = vmatprep.subr.mxu0 0.0
    %2300 = vmatpush2.msra.mxu0 0.0
    %2301 = vmatprep.subr.mxu0 0.0
    %2302 = vmatpush2.msra.mxu0 0.0
    %2303 = vmatprep.subr.mxu0 0.0
    %2304 = vmatpush2.msra.mxu0 0.0
    %2305 = vmatprep.subr.mxu0 0.0
    %2306 = vmatpush2.msra.mxu0 0.0
    %2307 = vmatprep.subr.mxu0 0.0
    %2308 = vmatpush2.msra.mxu0 0.0
    %2309 = vmatprep.subr.mxu0 0.0
    %2310 = vmatpush2.msra.mxu0 0.0
    %2311 = vmatprep.subr.mxu0 0.0
    %2312 = vmatpush2.msra.mxu0 0.0
    %2313 = vmatprep.subr.mxu0 0.0
    %2314 = vmatpush2.msra.mxu0 0.0
    %2315 = vmatprep.subr.mxu0 %v2127
    %2316 = vmatpush2.msra.mxu0 %v2126
    %2317 = vmatprep.subr.mxu0 %v2125
    %2318 = vmatpush2.msra.mxu0 %v2124
    %2319 = vmatprep.subr.mxu0 %v2123
    %2320 = vmatpush2.msra.mxu0 %v2122
    %2321 = vmatprep.subr.mxu0 %v2121
    %2322 = vmatpush2.msra.mxu0 %v2120
    %2323 = vmatprep.subr.mxu0 %v2119
    %2324 = vmatpush2.msra.mxu0 %v2118
    %2325 = vmatprep.subr.mxu0 %v2117
    %2326 = vmatpush2.msra.mxu0 %v2116
    %2327 = vmatprep.mubr.f32.mxu0 %v2258
    %2328 = vmatmul.mubr.f32.gmra.mxu0 %v1902
    %v2329 = vpop.f32.mrf.mxu0
    %v2330 = vadd.f32 %v2247, %v2329
    %v2331 = vpop.f32.mrf.mxu0
    %v2332 = vadd.f32 %v2249, %v2331
    %2333 = vmatprep.mubr.f32.mxu0 %v2261
    %2334 = vmatmul.mubr.f32.gmra.mxu0 %v1908
    %v2335 = vpop.f32.mrf.mxu0
    %v2336 = vadd.f32 %v2253, %v2335
    %v2337 = vpop.f32.mrf.mxu0
    %v2338 = vadd.f32 %v2255, %v2337
    %2339 = vdwg.mxu0
    %s2340 = scalar_lea.vmem [#allocation31], 704
    %v2341 = vld [vmem:[%s2340] sm:$0xff]
    %v2342 = vld [vmem:[%s2340 + $0x8] sm:$0xff]
    %v2343 = vld [vmem:[%s2340 + $0x10] sm:$0xff]
    %v2344 = vld [vmem:[%s2340 + $0x18] sm:$0xff]
    %v2345 = vld [vmem:[%s2340 + $0x20] sm:$0xff]
    %v2346 = vld [vmem:[%s2340 + $0x28] sm:$0xff]
    %v2347 = vld [vmem:[%s2340 + $0x30] sm:$0xff]
    %v2348 = vld [vmem:[%s2340 + $0x38] sm:$0xff]
    %v2349 = vld [vmem:[%s2340 + $0x40] sm:$0xff]
    %v2350 = vld [vmem:[%s2340 + $0x48] sm:$0xff]
    %v2351 = vld [vmem:[%s2340 + $0x50] sm:$0xff]
    %v2352 = vld [vmem:[%s2340 + $0x58] sm:$0xff]
    %v2353 = vld [vmem:[%s2340 + $0x60] sm:$0xff]
    %v2354 = vld [vmem:[%s2340 + $0x68] sm:$0xff]
    %v2355 = vld [vmem:[%s2340 + $0x70] sm:$0xff]
    %v2356 = vld [vmem:[%s2340 + $0x78] sm:$0xff]
    %v2357 = vld [vmem:[%s2340 + $0x80] sm:$0xff]
    %v2358 = vld [vmem:[%s2340 + $0x88] sm:$0xff]
    %v2359 = vld [vmem:[%s2340 + $0x90] sm:$0xff]
    %v2360 = vld [vmem:[%s2340 + $0x98] sm:$0xff]
    %v2361 = vld [vmem:[%s2340 + $0xa0] sm:$0xff]
    %v2362 = vld [vmem:[%s2340 + $0xa8] sm:$0xff]
    %v2363 = vld [vmem:[%s2340 + $0xb0] sm:$0xff]
    %v2364 = vld [vmem:[%s2340 + $0xb8] sm:$0xff]
    %v2365 = vld [vmem:[%s2340 + $0xc0] sm:$0xff]
    %v2366 = vld [vmem:[%s2340 + $0xc8] sm:$0xff]
    %v2367 = vld [vmem:[%s2340 + $0xd0] sm:$0xff]
    %v2368 = vld [vmem:[%s2340 + $0xd8] sm:$0xff]
    %v2369 = vld [vmem:[%s2340 + $0xe0] sm:$0xff]
    %v2370 = vld [vmem:[%s2340 + $0xe8] sm:$0xff]
    %v2371 = vld [vmem:[%s2340 + $0xf0] sm:$0xff]
    %v2372 = vld [vmem:[%s2340 + $0xf8] sm:$0xff]
    %v2373 = vld [vmem:[%s2340 + $0x100] sm:$0xff]
    %v2374 = vld [vmem:[%s2340 + $0x108] sm:$0xff]
    %v2375 = vld [vmem:[%s2340 + $0x110] sm:$0xff]
    %v2376 = vld [vmem:[%s2340 + $0x118] sm:$0xff]
    %v2377 = vld [vmem:[%s2340 + $0x120] sm:$0xff]
    %v2378 = vld [vmem:[%s2340 + $0x128] sm:$0xff]
    %v2379 = vld [vmem:[%s2340 + $0x130] sm:$0xff]
    %v2380 = vld [vmem:[%s2340 + $0x138] sm:$0xff]
    %v2381 = vld [vmem:[%s2340 + $0x140] sm:$0xff]
    %v2382 = vld [vmem:[%s2340 + $0x148] sm:$0xff]
    %v2383 = vld [vmem:[%s2340 + $0x150] sm:$0xff]
    %v2384 = vld [vmem:[%s2340 + $0x158] sm:$0xff]
    %v2386 = vsel %vm2173, %v2076, 0
    %v2389 = vsel %vm2173, %v2082, 0
    %2391 = vmatprep.subr.mxu0 %v2372
    %2392 = vmatpush1.msra.mxu0 %v2371
    %2393 = vmatprep.subr.mxu0 %v2370
    %2394 = vmatpush1.msra.mxu0 %v2369
    %2395 = vmatprep.subr.mxu0 %v2368
    %2396 = vmatpush1.msra.mxu0 %v2367
    %2397 = vmatprep.subr.mxu0 %v2366
    %2398 = vmatpush1.msra.mxu0 %v2365
    %2399 = vmatprep.subr.mxu0 %v2364
    %2400 = vmatpush1.msra.mxu0 %v2363
    %2401 = vmatprep.subr.mxu0 %v2362
    %2402 = vmatpush1.msra.mxu0 %v2361
    %2403 = vmatprep.subr.mxu0 %v2360
    %2404 = vmatpush1.msra.mxu0 %v2359
    %2405 = vmatprep.subr.mxu0 %v2358
    %2406 = vmatpush1.msra.mxu0 %v2357
    %2407 = vmatprep.subr.mxu0 %v2356
    %2408 = vmatpush1.msra.mxu0 %v2355
    %2409 = vmatprep.subr.mxu0 %v2354
    %2410 = vmatpush1.msra.mxu0 %v2353
    %2411 = vmatprep.subr.mxu0 %v2352
    %2412 = vmatpush1.msra.mxu0 %v2351
    %2413 = vmatprep.subr.mxu0 %v2350
    %2414 = vmatpush1.msra.mxu0 %v2349
    %2415 = vmatprep.subr.mxu0 %v2348
    %2416 = vmatpush1.msra.mxu0 %v2347
    %2417 = vmatprep.subr.mxu0 %v2346
    %2418 = vmatpush1.msra.mxu0 %v2345
    %2419 = vmatprep.subr.mxu0 %v2344
    %2420 = vmatpush1.msra.mxu0 %v2343
    %2421 = vmatprep.subr.mxu0 %v2342
    %2422 = vmatpush1.msra.mxu0 %v2341
    %2423 = vmatprep.subr.mxu0 0.0
    %2424 = vmatpush2.msra.mxu0 0.0
    %2425 = vmatprep.subr.mxu0 0.0
    %2426 = vmatpush2.msra.mxu0 0.0
    %2427 = vmatprep.subr.mxu0 0.0
    %2428 = vmatpush2.msra.mxu0 0.0
    %2429 = vmatprep.subr.mxu0 0.0
    %2430 = vmatpush2.msra.mxu0 0.0
    %2431 = vmatprep.subr.mxu0 0.0
    %2432 = vmatpush2.msra.mxu0 0.0
    %2433 = vmatprep.subr.mxu0 0.0
    %2434 = vmatpush2.msra.mxu0 0.0
    %2435 = vmatprep.subr.mxu0 0.0
    %2436 = vmatpush2.msra.mxu0 0.0
    %2437 = vmatprep.subr.mxu0 0.0
    %2438 = vmatpush2.msra.mxu0 0.0
    %2439 = vmatprep.subr.mxu0 0.0
    %2440 = vmatpush2.msra.mxu0 0.0
    %2441 = vmatprep.subr.mxu0 0.0
    %2442 = vmatpush2.msra.mxu0 0.0
    %2443 = vmatprep.subr.mxu0 %v2384
    %2444 = vmatpush2.msra.mxu0 %v2383
    %2445 = vmatprep.subr.mxu0 %v2382
    %2446 = vmatpush2.msra.mxu0 %v2381
    %2447 = vmatprep.subr.mxu0 %v2380
    %2448 = vmatpush2.msra.mxu0 %v2379
    %2449 = vmatprep.subr.mxu0 %v2378
    %2450 = vmatpush2.msra.mxu0 %v2377
    %2451 = vmatprep.subr.mxu0 %v2376
    %2452 = vmatpush2.msra.mxu0 %v2375
    %2453 = vmatprep.subr.mxu0 %v2374
    %2454 = vmatpush2.msra.mxu0 %v2373
    %2455 = vmatprep.mubr.f32.mxu0 %v2386
    %2456 = vmatmul.mubr.f32.gmra.mxu0 %v2074
    %v2457 = vpop.f32.mrf.mxu0
    %v2458 = vadd.f32 0.0, %v2457
    %v2459 = vpop.f32.mrf.mxu0
    %v2460 = vadd.f32 0.0, %v2459
    %2461 = vmatprep.mubr.f32.mxu0 %v2389
    %2462 = vmatmul.mubr.f32.gmra.mxu0 %v2080
    %v2463 = vpop.f32.mrf.mxu0
    %v2464 = vadd.f32 0.0, %v2463
    %v2465 = vpop.f32.mrf.mxu0
    %v2466 = vadd.f32 0.0, %v2465
    %2467 = vdwg.mxu0
    %v2468 = vadd.f32 %v2330, %v2458
    %v2469 = vadd.f32 %v2332, %v2460
    %v2470 = vadd.f32 %v2336, %v2464
    %v2471 = vadd.f32 %v2338, %v2466
    %v2472 = vld [vmem:[#allocation33] sm:$0x3]
    %v2474 = vlaneseq
    %v2475 = vshrl.u32 %v2474, 7
    %v2476 = vsub.s32 0, %v2475
    %v2477 = vrot.slane %v2472, %v2476
    %v2478 = vlaneseq
    %v2479 = vshrl.u32 %v2478, 7
    %v2480 = vsub.s32 1, %v2479
    %v2481 = vrot.slane %v2472, %v2480
    %v2484 = vadd.f32 %v2468, %v2477
    %v2485 = vadd.f32 %v2469, %v2481
    %v2486 = vadd.f32 %v2470, %v2477
    %v2487 = vadd.f32 %v2471, %v2481
    %vm2488 = vcmp.ge.f32.partialorder %v2484, 0.0
    %vm2489 = vcmp.ge.f32.partialorder %v2485, 0.0
    %vm2490 = vcmp.ge.f32.partialorder %v2486, 0.0
    %vm2491 = vcmp.ge.f32.partialorder %v2487, 0.0
    %v2492 = vmul.f32 %v2484, 0.01
    %v2493 = vmul.f32 %v2485, 0.01
    %v2494 = vmul.f32 %v2486, 0.01
    %v2495 = vmul.f32 %v2487, 0.01
    %v2496 = vsel %vm2488, %v2484, %v2492
    %v2497 = vsel %vm2489, %v2485, %v2493
    %v2498 = vsel %vm2490, %v2486, %v2494
    %v2499 = vsel %vm2491, %v2487, %v2495
    %v2500 = vld [vmem:[#allocation7] sm:$0x3]
    %vm2501 = vcmask 80896
    %v2503 = vsel %vm2501, %v2500, 0
    %vm2505 = vcmask 1041408
    %v2507 = vsel %vm2505, %v2498, 0
    %v2510 = vsel %vm2505, %v2499, 0
    %2512 = vmatprep.subr.mxu0 0.0
    %2513 = vmatpush1.msra.mxu0 0.0
    %2514 = vmatprep.subr.mxu0 0.0
    %2515 = vmatpush1.msra.mxu0 0.0
    %2516 = vmatprep.subr.mxu0 0.0
    %2517 = vmatpush1.msra.mxu0 0.0
    %2518 = vmatprep.subr.mxu0 0.0
    %2519 = vmatpush1.msra.mxu0 0.0
    %2520 = vmatprep.subr.mxu0 0.0
    %2521 = vmatpush1.msra.mxu0 0.0
    %2522 = vmatprep.subr.mxu0 0.0
    %2523 = vmatpush1.msra.mxu0 0.0
    %2524 = vmatprep.subr.mxu0 0.0
    %2525 = vmatpush1.msra.mxu0 0.0
    %2526 = vmatprep.subr.mxu0 0.0
    %2527 = vmatpush1.msra.mxu0 0.0
    %2528 = vmatprep.subr.mxu0 0.0
    %2529 = vmatpush1.msra.mxu0 0.0
    %2530 = vmatprep.subr.mxu0 0.0
    %2531 = vmatpush1.msra.mxu0 0.0
    %2532 = vmatprep.subr.mxu0 0.0
    %2533 = vmatpush1.msra.mxu0 0.0
    %2534 = vmatprep.subr.mxu0 0.0
    %2535 = vmatpush1.msra.mxu0 0.0
    %2536 = vmatprep.subr.mxu0 0.0
    %2537 = vmatpush1.msra.mxu0 0.0
    %2538 = vmatprep.subr.mxu0 0.0
    %2539 = vmatpush1.msra.mxu0 0.0
    %2540 = vmatprep.subr.mxu0 %v2510
    %2541 = vmatpush1.msra.mxu0 %v2507
    %2542 = vmatprep.subr.mxu0 %v2497
    %2543 = vmatpush1.msra.mxu0 %v2496
    %2544 = vmatprep.subr.mxu0 0.0
    %2545 = vmatpush2.msra.mxu0 0.0
    %2546 = vmatprep.subr.mxu0 0.0
    %2547 = vmatpush2.msra.mxu0 0.0
    %2548 = vmatprep.subr.mxu0 0.0
    %2549 = vmatpush2.msra.mxu0 0.0
    %2550 = vmatprep.subr.mxu0 0.0
    %2551 = vmatpush2.msra.mxu0 0.0
    %2552 = vmatprep.subr.mxu0 0.0
    %2553 = vmatpush2.msra.mxu0 0.0
    %2554 = vmatprep.subr.mxu0 0.0
    %2555 = vmatpush2.msra.mxu0 0.0
    %2556 = vmatprep.subr.mxu0 0.0
    %2557 = vmatpush2.msra.mxu0 0.0
    %2558 = vmatprep.subr.mxu0 0.0
    %2559 = vmatpush2.msra.mxu0 0.0
    %2560 = vmatprep.subr.mxu0 0.0
    %2561 = vmatpush2.msra.mxu0 0.0
    %2562 = vmatprep.subr.mxu0 0.0
    %2563 = vmatpush2.msra.mxu0 0.0
    %2564 = vmatprep.subr.mxu0 0.0
    %2565 = vmatpush2.msra.mxu0 0.0
    %2566 = vmatprep.subr.mxu0 0.0
    %2567 = vmatpush2.msra.mxu0 0.0
    %2568 = vmatprep.subr.mxu0 0.0
    %2569 = vmatpush2.msra.mxu0 0.0
    %2570 = vmatprep.subr.mxu0 0.0
    %2571 = vmatpush2.msra.mxu0 0.0
    %2572 = vmatprep.subr.mxu0 0.0
    %2573 = vmatpush2.msra.mxu0 0.0
    %2574 = vmatprep.subr.mxu0 0.0
    %2575 = vmatpush2.msra.mxu0 0.0
    %2576 = vmatprep.mubr.f32.mxu0 0.0
    %2577 = vmatmul.mubr.f32.gmra.mxu0 %v2503
    %v2578 = vpop.f32.mrf.mxu0
    %v2579 = vadd.f32 0.0, %v2578
    %v2580 = vpop.f32.mrf.mxu0
    %v2581 = vadd.f32 0.0, %v2580
    %2582 = vdwg.mxu0
    %s2583 = scalar_lea.vmem [#allocation7], 2
    %v2584 = vld [vmem:[%s2583] sm:$0x3]
    %v2586 = vsel %vm2501, %v2584, 0
    %2588 = vmatprep.subr.mxu0 0.0
    %2589 = vmatpush1.msra.mxu0 0.0
    %2590 = vmatprep.subr.mxu0 0.0
    %2591 = vmatpush1.msra.mxu0 0.0
    %2592 = vmatprep.subr.mxu0 0.0
    %2593 = vmatpush1.msra.mxu0 0.0
    %2594 = vmatprep.subr.mxu0 0.0
    %2595 = vmatpush1.msra.mxu0 0.0
    %2596 = vmatprep.subr.mxu0 0.0
    %2597 = vmatpush1.msra.mxu0 0.0
    %2598 = vmatprep.subr.mxu0 0.0
    %2599 = vmatpush1.msra.mxu0 0.0
    %2600 = vmatprep.subr.mxu0 0.0
    %2601 = vmatpush1.msra.mxu0 0.0
    %2602 = vmatprep.subr.mxu0 0.0
    %2603 = vmatpush1.msra.mxu0 0.0
    %2604 = vmatprep.subr.mxu0 0.0
    %2605 = vmatpush1.msra.mxu0 0.0
    %2606 = vmatprep.subr.mxu0 0.0
    %2607 = vmatpush1.msra.mxu0 0.0
    %2608 = vmatprep.subr.mxu0 0.0
    %2609 = vmatpush1.msra.mxu0 0.0
    %2610 = vmatprep.subr.mxu0 0.0
    %2611 = vmatpush1.msra.mxu0 0.0
    %2612 = vmatprep.subr.mxu0 0.0
    %2613 = vmatpush1.msra.mxu0 0.0
    %2614 = vmatprep.subr.mxu0 0.0
    %2615 = vmatpush1.msra.mxu0 0.0
    %2616 = vmatprep.subr.mxu0 %v2510
    %2617 = vmatpush1.msra.mxu0 %v2507
    %2618 = vmatprep.subr.mxu0 %v2497
    %2619 = vmatpush1.msra.mxu0 %v2496
    %2620 = vmatprep.subr.mxu0 0.0
    %2621 = vmatpush2.msra.mxu0 0.0
    %2622 = vmatprep.subr.mxu0 0.0
    %2623 = vmatpush2.msra.mxu0 0.0
    %2624 = vmatprep.subr.mxu0 0.0
    %2625 = vmatpush2.msra.mxu0 0.0
    %2626 = vmatprep.subr.mxu0 0.0
    %2627 = vmatpush2.msra.mxu0 0.0
    %2628 = vmatprep.subr.mxu0 0.0
    %2629 = vmatpush2.msra.mxu0 0.0
    %2630 = vmatprep.subr.mxu0 0.0
    %2631 = vmatpush2.msra.mxu0 0.0
    %2632 = vmatprep.subr.mxu0 0.0
    %2633 = vmatpush2.msra.mxu0 0.0
    %2634 = vmatprep.subr.mxu0 0.0
    %2635 = vmatpush2.msra.mxu0 0.0
    %2636 = vmatprep.subr.mxu0 0.0
    %2637 = vmatpush2.msra.mxu0 0.0
    %2638 = vmatprep.subr.mxu0 0.0
    %2639 = vmatpush2.msra.mxu0 0.0
    %2640 = vmatprep.subr.mxu0 0.0
    %2641 = vmatpush2.msra.mxu0 0.0
    %2642 = vmatprep.subr.mxu0 0.0
    %2643 = vmatpush2.msra.mxu0 0.0
    %2644 = vmatprep.subr.mxu0 0.0
    %2645 = vmatpush2.msra.mxu0 0.0
    %2646 = vmatprep.subr.mxu0 0.0
    %2647 = vmatpush2.msra.mxu0 0.0
    %2648 = vmatprep.subr.mxu0 0.0
    %2649 = vmatpush2.msra.mxu0 0.0
    %2650 = vmatprep.subr.mxu0 0.0
    %2651 = vmatpush2.msra.mxu0 0.0
    %2652 = vmatprep.mubr.f32.mxu0 0.0
    %2653 = vmatmul.mubr.f32.gmra.mxu0 %v2586
    %v2654 = vpop.f32.mrf.mxu0
    %v2655 = vadd.f32 0.0, %v2654
    %v2656 = vpop.f32.mrf.mxu0
    %v2657 = vadd.f32 0.0, %v2656
    %2658 = vdwg.mxu0
    %s2659 = scalar_lea.vmem [#allocation7], 4
    %v2660 = vld [vmem:[%s2659] sm:$0x3]
    %v2662 = vsel %vm2501, %v2660, 0
    %2664 = vmatprep.subr.mxu0 0.0
    %2665 = vmatpush1.msra.mxu0 0.0
    %2666 = vmatprep.subr.mxu0 0.0
    %2667 = vmatpush1.msra.mxu0 0.0
    %2668 = vmatprep.subr.mxu0 0.0
    %2669 = vmatpush1.msra.mxu0 0.0
    %2670 = vmatprep.subr.mxu0 0.0
    %2671 = vmatpush1.msra.mxu0 0.0
    %2672 = vmatprep.subr.mxu0 0.0
    %2673 = vmatpush1.msra.mxu0 0.0
    %2674 = vmatprep.subr.mxu0 0.0
    %2675 = vmatpush1.msra.mxu0 0.0
    %2676 = vmatprep.subr.mxu0 0.0
    %2677 = vmatpush1.msra.mxu0 0.0
    %2678 = vmatprep.subr.mxu0 0.0
    %2679 = vmatpush1.msra.mxu0 0.0
    %2680 = vmatprep.subr.mxu0 0.0
    %2681 = vmatpush1.msra.mxu0 0.0
    %2682 = vmatprep.subr.mxu0 0.0
    %2683 = vmatpush1.msra.mxu0 0.0
    %2684 = vmatprep.subr.mxu0 0.0
    %2685 = vmatpush1.msra.mxu0 0.0
    %2686 = vmatprep.subr.mxu0 0.0
    %2687 = vmatpush1.msra.mxu0 0.0
    %2688 = vmatprep.subr.mxu0 0.0
    %2689 = vmatpush1.msra.mxu0 0.0
    %2690 = vmatprep.subr.mxu0 0.0
    %2691 = vmatpush1.msra.mxu0 0.0
    %2692 = vmatprep.subr.mxu0 %v2510
    %2693 = vmatpush1.msra.mxu0 %v2507
    %2694 = vmatprep.subr.mxu0 %v2497
    %2695 = vmatpush1.msra.mxu0 %v2496
    %2696 = vmatprep.subr.mxu0 0.0
    %2697 = vmatpush2.msra.mxu0 0.0
    %2698 = vmatprep.subr.mxu0 0.0
    %2699 = vmatpush2.msra.mxu0 0.0
    %2700 = vmatprep.subr.mxu0 0.0
    %2701 = vmatpush2.msra.mxu0 0.0
    %2702 = vmatprep.subr.mxu0 0.0
    %2703 = vmatpush2.msra.mxu0 0.0
    %2704 = vmatprep.subr.mxu0 0.0
    %2705 = vmatpush2.msra.mxu0 0.0
    %2706 = vmatprep.subr.mxu0 0.0
    %2707 = vmatpush2.msra.mxu0 0.0
    %2708 = vmatprep.subr.mxu0 0.0
    %2709 = vmatpush2.msra.mxu0 0.0
    %2710 = vmatprep.subr.mxu0 0.0
    %2711 = vmatpush2.msra.mxu0 0.0
    %2712 = vmatprep.subr.mxu0 0.0
    %2713 = vmatpush2.msra.mxu0 0.0
    %2714 = vmatprep.subr.mxu0 0.0
    %2715 = vmatpush2.msra.mxu0 0.0
    %2716 = vmatprep.subr.mxu0 0.0
    %2717 = vmatpush2.msra.mxu0 0.0
    %2718 = vmatprep.subr.mxu0 0.0
    %2719 = vmatpush2.msra.mxu0 0.0
    %2720 = vmatprep.subr.mxu0 0.0
    %2721 = vmatpush2.msra.mxu0 0.0
    %2722 = vmatprep.subr.mxu0 0.0
    %2723 = vmatpush2.msra.mxu0 0.0
    %2724 = vmatprep.subr.mxu0 0.0
    %2725 = vmatpush2.msra.mxu0 0.0
    %2726 = vmatprep.subr.mxu0 0.0
    %2727 = vmatpush2.msra.mxu0 0.0
    %2728 = vmatprep.mubr.f32.mxu0 0.0
    %2729 = vmatmul.mubr.f32.gmra.mxu0 %v2662
    %v2730 = vpop.f32.mrf.mxu0
    %v2731 = vadd.f32 0.0, %v2730
    %v2732 = vpop.f32.mrf.mxu0
    %v2733 = vadd.f32 0.0, %v2732
    %2734 = vdwg.mxu0
    %s2735 = scalar_lea.vmem [#allocation7], 6
    %v2736 = vld [vmem:[%s2735] sm:$0x3]
    %v2738 = vsel %vm2501, %v2736, 0
    %2740 = vmatprep.subr.mxu0 0.0
    %2741 = vmatpush1.msra.mxu0 0.0
    %2742 = vmatprep.subr.mxu0 0.0
    %2743 = vmatpush1.msra.mxu0 0.0
    %2744 = vmatprep.subr.mxu0 0.0
    %2745 = vmatpush1.msra.mxu0 0.0
    %2746 = vmatprep.subr.mxu0 0.0
    %2747 = vmatpush1.msra.mxu0 0.0
    %2748 = vmatprep.subr.mxu0 0.0
    %2749 = vmatpush1.msra.mxu0 0.0
    %2750 = vmatprep.subr.mxu0 0.0
    %2751 = vmatpush1.msra.mxu0 0.0
    %2752 = vmatprep.subr.mxu0 0.0
    %2753 = vmatpush1.msra.mxu0 0.0
    %2754 = vmatprep.subr.mxu0 0.0
    %2755 = vmatpush1.msra.mxu0 0.0
    %2756 = vmatprep.subr.mxu0 0.0
    %2757 = vmatpush1.msra.mxu0 0.0
    %2758 = vmatprep.subr.mxu0 0.0
    %2759 = vmatpush1.msra.mxu0 0.0
    %2760 = vmatprep.subr.mxu0 0.0
    %2761 = vmatpush1.msra.mxu0 0.0
    %2762 = vmatprep.subr.mxu0 0.0
    %2763 = vmatpush1.msra.mxu0 0.0
    %2764 = vmatprep.subr.mxu0 0.0
    %2765 = vmatpush1.msra.mxu0 0.0
    %2766 = vmatprep.subr.mxu0 0.0
    %2767 = vmatpush1.msra.mxu0 0.0
    %2768 = vmatprep.subr.mxu0 %v2510
    %2769 = vmatpush1.msra.mxu0 %v2507
    %2770 = vmatprep.subr.mxu0 %v2497
    %2771 = vmatpush1.msra.mxu0 %v2496
    %2772 = vmatprep.subr.mxu0 0.0
    %2773 = vmatpush2.msra.mxu0 0.0
    %2774 = vmatprep.subr.mxu0 0.0
    %2775 = vmatpush2.msra.mxu0 0.0
    %2776 = vmatprep.subr.mxu0 0.0
    %2777 = vmatpush2.msra.mxu0 0.0
    %2778 = vmatprep.subr.mxu0 0.0
    %2779 = vmatpush2.msra.mxu0 0.0
    %2780 = vmatprep.subr.mxu0 0.0
    %2781 = vmatpush2.msra.mxu0 0.0
    %2782 = vmatprep.subr.mxu0 0.0
    %2783 = vmatpush2.msra.mxu0 0.0
    %2784 = vmatprep.subr.mxu0 0.0
    %2785 = vmatpush2.msra.mxu0 0.0
    %2786 = vmatprep.subr.mxu0 0.0
    %2787 = vmatpush2.msra.mxu0 0.0
    %2788 = vmatprep.subr.mxu0 0.0
    %2789 = vmatpush2.msra.mxu0 0.0
    %2790 = vmatprep.subr.mxu0 0.0
    %2791 = vmatpush2.msra.mxu0 0.0
    %2792 = vmatprep.subr.mxu0 0.0
    %2793 = vmatpush2.msra.mxu0 0.0
    %2794 = vmatprep.subr.mxu0 0.0
    %2795 = vmatpush2.msra.mxu0 0.0
    %2796 = vmatprep.subr.mxu0 0.0
    %2797 = vmatpush2.msra.mxu0 0.0
    %2798 = vmatprep.subr.mxu0 0.0
    %2799 = vmatpush2.msra.mxu0 0.0
    %2800 = vmatprep.subr.mxu0 0.0
    %2801 = vmatpush2.msra.mxu0 0.0
    %2802 = vmatprep.subr.mxu0 0.0
    %2803 = vmatpush2.msra.mxu0 0.0
    %2804 = vmatprep.mubr.f32.mxu0 0.0
    %2805 = vmatmul.mubr.f32.gmra.mxu0 %v2738
    %v2806 = vpop.f32.mrf.mxu0
    %v2807 = vadd.f32 0.0, %v2806
    %v2808 = vpop.f32.mrf.mxu0
    %v2809 = vadd.f32 0.0, %v2808
    %2810 = vdwg.mxu0
    %s2811 = scalar_lea.vmem [#allocation7], 8
    %v2812 = vld [vmem:[%s2811] sm:$0x3]
    %v2814 = vsel %vm2501, %v2812, 0
    %2816 = vmatprep.subr.mxu0 0.0
    %2817 = vmatpush1.msra.mxu0 0.0
    %2818 = vmatprep.subr.mxu0 0.0
    %2819 = vmatpush1.msra.mxu0 0.0
    %2820 = vmatprep.subr.mxu0 0.0
    %2821 = vmatpush1.msra.mxu0 0.0
    %2822 = vmatprep.subr.mxu0 0.0
    %2823 = vmatpush1.msra.mxu0 0.0
    %2824 = vmatprep.subr.mxu0 0.0
    %2825 = vmatpush1.msra.mxu0 0.0
    %2826 = vmatprep.subr.mxu0 0.0
    %2827 = vmatpush1.msra.mxu0 0.0
    %2828 = vmatprep.subr.mxu0 0.0
    %2829 = vmatpush1.msra.mxu0 0.0
    %2830 = vmatprep.subr.mxu0 0.0
    %2831 = vmatpush1.msra.mxu0 0.0
    %2832 = vmatprep.subr.mxu0 0.0
    %2833 = vmatpush1.msra.mxu0 0.0
    %2834 = vmatprep.subr.mxu0 0.0
    %2835 = vmatpush1.msra.mxu0 0.0
    %2836 = vmatprep.subr.mxu0 0.0
    %2837 = vmatpush1.msra.mxu0 0.0
    %2838 = vmatprep.subr.mxu0 0.0
    %2839 = vmatpush1.msra.mxu0 0.0
    %2840 = vmatprep.subr.mxu0 0.0
    %2841 = vmatpush1.msra.mxu0 0.0
    %2842 = vmatprep.subr.mxu0 0.0
    %2843 = vmatpush1.msra.mxu0 0.0
    %2844 = vmatprep.subr.mxu0 %v2510
    %2845 = vmatpush1.msra.mxu0 %v2507
    %2846 = vmatprep.subr.mxu0 %v2497
    %2847 = vmatpush1.msra.mxu0 %v2496
    %2848 = vmatprep.subr.mxu0 0.0
    %2849 = vmatpush2.msra.mxu0 0.0
    %2850 = vmatprep.subr.mxu0 0.0
    %2851 = vmatpush2.msra.mxu0 0.0
    %2852 = vmatprep.subr.mxu0 0.0
    %2853 = vmatpush2.msra.mxu0 0.0
    %2854 = vmatprep.subr.mxu0 0.0
    %2855 = vmatpush2.msra.mxu0 0.0
    %2856 = vmatprep.subr.mxu0 0.0
    %2857 = vmatpush2.msra.mxu0 0.0
    %2858 = vmatprep.subr.mxu0 0.0
    %2859 = vmatpush2.msra.mxu0 0.0
    %2860 = vmatprep.subr.mxu0 0.0
    %2861 = vmatpush2.msra.mxu0 0.0
    %2862 = vmatprep.subr.mxu0 0.0
    %2863 = vmatpush2.msra.mxu0 0.0
    %2864 = vmatprep.subr.mxu0 0.0
    %2865 = vmatpush2.msra.mxu0 0.0
    %2866 = vmatprep.subr.mxu0 0.0
    %2867 = vmatpush2.msra.mxu0 0.0
    %2868 = vmatprep.subr.mxu0 0.0
    %2869 = vmatpush2.msra.mxu0 0.0
    %2870 = vmatprep.subr.mxu0 0.0
    %2871 = vmatpush2.msra.mxu0 0.0
    %2872 = vmatprep.subr.mxu0 0.0
    %2873 = vmatpush2.msra.mxu0 0.0
    %2874 = vmatprep.subr.mxu0 0.0
    %2875 = vmatpush2.msra.mxu0 0.0
    %2876 = vmatprep.subr.mxu0 0.0
    %2877 = vmatpush2.msra.mxu0 0.0
    %2878 = vmatprep.subr.mxu0 0.0
    %2879 = vmatpush2.msra.mxu0 0.0
    %2880 = vmatprep.mubr.f32.mxu0 0.0
    %2881 = vmatmul.mubr.f32.gmra.mxu0 %v2814
    %v2882 = vpop.f32.mrf.mxu0
    %v2883 = vadd.f32 0.0, %v2882
    %v2884 = vpop.f32.mrf.mxu0
    %v2885 = vadd.f32 0.0, %v2884
    %2886 = vdwg.mxu0
    %v2887 = vld [vmem:[%s23] sm:$0xff]
    %v2888 = vld [vmem:[%s23 + $0x8] sm:$0xff]
    %v2889 = vld [vmem:[%s23 + $0x10] sm:$0xff]
    %v2890 = vld [vmem:[%s23 + $0x18] sm:$0xff]
    %v2891 = vld [vmem:[%s23 + $0x20] sm:$0xff]
    %v2892 = vld [vmem:[%s23 + $0x28] sm:$0xff]
    %v2893 = vld [vmem:[%s23 + $0x30] sm:$0xff]
    %v2894 = vld [vmem:[%s23 + $0x38] sm:$0xff]
    %v2895 = vld [vmem:[%s23 + $0x40] sm:$0xff]
    %v2896 = vld [vmem:[%s23 + $0x48] sm:$0xff]
    %v2897 = vld [vmem:[%s23 + $0x50] sm:$0xff]
    %v2898 = vld [vmem:[%s23 + $0x58] sm:$0xff]
    %v2899 = vld [vmem:[%s23 + $0x60] sm:$0xff]
    %v2900 = vld [vmem:[%s23 + $0x68] sm:$0xff]
    %v2901 = vld [vmem:[%s23 + $0x70] sm:$0xff]
    %v2902 = vld [vmem:[%s23 + $0x78] sm:$0xff]
    %v2903 = vld [vmem:[%s23 + $0x80] sm:$0xff]
    %v2904 = vld [vmem:[%s23 + $0x88] sm:$0xff]
    %v2905 = vld [vmem:[%s23 + $0x90] sm:$0xff]
    %v2906 = vld [vmem:[%s23 + $0x98] sm:$0xff]
    %v2907 = vld [vmem:[%s23 + $0xa0] sm:$0xff]
    %v2908 = vld [vmem:[%s23 + $0xa8] sm:$0xff]
    %s2909 = scalar_lea.vmem %s23, 176
    %v2910 = vld [vmem:[%s2909] sm:$0xff]
    %v2911 = vld [vmem:[%s2909 + $0x8] sm:$0xff]
    %v2912 = vld [vmem:[%s2909 + $0x10] sm:$0xff]
    %v2913 = vld [vmem:[%s2909 + $0x18] sm:$0xff]
    %v2914 = vld [vmem:[%s2909 + $0x20] sm:$0xff]
    %v2915 = vld [vmem:[%s2909 + $0x28] sm:$0xff]
    %v2916 = vld [vmem:[%s2909 + $0x30] sm:$0xff]
    %v2917 = vld [vmem:[%s2909 + $0x38] sm:$0xff]
    %v2918 = vld [vmem:[%s2909 + $0x40] sm:$0xff]
    %v2919 = vld [vmem:[%s2909 + $0x48] sm:$0xff]
    %v2920 = vld [vmem:[%s2909 + $0x50] sm:$0xff]
    %v2921 = vld [vmem:[%s2909 + $0x58] sm:$0xff]
    %v2922 = vld [vmem:[%s2909 + $0x60] sm:$0xff]
    %v2923 = vld [vmem:[%s2909 + $0x68] sm:$0xff]
    %v2924 = vld [vmem:[%s2909 + $0x70] sm:$0xff]
    %v2925 = vld [vmem:[%s2909 + $0x78] sm:$0xff]
    %v2926 = vld [vmem:[%s2909 + $0x80] sm:$0xff]
    %v2927 = vld [vmem:[%s2909 + $0x88] sm:$0xff]
    %v2928 = vld [vmem:[%s2909 + $0x90] sm:$0xff]
    %v2929 = vld [vmem:[%s2909 + $0x98] sm:$0xff]
    %v2930 = vld [vmem:[%s2909 + $0xa0] sm:$0xff]
    %v2931 = vld [vmem:[%s2909 + $0xa8] sm:$0xff]
    %v2933 = vsel %vm2173, %v2657, 0
    %2935 = vmatprep.subr.mxu0 0.0
    %2936 = vmatpush1.msra.mxu0 %v2925
    %2937 = vmatprep.subr.mxu0 0.0
    %2938 = vmatpush1.msra.mxu0 %v2924
    %2939 = vmatprep.subr.mxu0 0.0
    %2940 = vmatpush1.msra.mxu0 %v2923
    %2941 = vmatprep.subr.mxu0 0.0
    %2942 = vmatpush1.msra.mxu0 %v2922
    %2943 = vmatprep.subr.mxu0 0.0
    %2944 = vmatpush1.msra.mxu0 %v2921
    %2945 = vmatprep.subr.mxu0 0.0
    %2946 = vmatpush1.msra.mxu0 %v2920
    %2947 = vmatprep.subr.mxu0 0.0
    %2948 = vmatpush1.msra.mxu0 %v2919
    %2949 = vmatprep.subr.mxu0 0.0
    %2950 = vmatpush1.msra.mxu0 %v2918
    %2951 = vmatprep.subr.mxu0 0.0
    %2952 = vmatpush1.msra.mxu0 %v2917
    %2953 = vmatprep.subr.mxu0 0.0
    %2954 = vmatpush1.msra.mxu0 %v2916
    %2955 = vmatprep.subr.mxu0 0.0
    %2956 = vmatpush1.msra.mxu0 %v2915
    %2957 = vmatprep.subr.mxu0 0.0
    %2958 = vmatpush1.msra.mxu0 %v2914
    %2959 = vmatprep.subr.mxu0 0.0
    %2960 = vmatpush1.msra.mxu0 %v2913
    %2961 = vmatprep.subr.mxu0 0.0
    %2962 = vmatpush1.msra.mxu0 %v2912
    %2963 = vmatprep.subr.mxu0 0.0
    %2964 = vmatpush1.msra.mxu0 %v2911
    %2965 = vmatprep.subr.mxu0 0.0
    %2966 = vmatpush1.msra.mxu0 %v2910
    %2967 = vmatprep.subr.mxu0 0.0
    %2968 = vmatpush2.msra.mxu0 0.0
    %2969 = vmatprep.subr.mxu0 0.0
    %2970 = vmatpush2.msra.mxu0 0.0
    %2971 = vmatprep.subr.mxu0 0.0
    %2972 = vmatpush2.msra.mxu0 0.0
    %2973 = vmatprep.subr.mxu0 0.0
    %2974 = vmatpush2.msra.mxu0 0.0
    %2975 = vmatprep.subr.mxu0 0.0
    %2976 = vmatpush2.msra.mxu0 0.0
    %2977 = vmatprep.subr.mxu0 0.0
    %2978 = vmatpush2.msra.mxu0 0.0
    %2979 = vmatprep.subr.mxu0 0.0
    %2980 = vmatpush2.msra.mxu0 0.0
    %2981 = vmatprep.subr.mxu0 0.0
    %2982 = vmatpush2.msra.mxu0 0.0
    %2983 = vmatprep.subr.mxu0 0.0
    %2984 = vmatpush2.msra.mxu0 0.0
    %2985 = vmatprep.subr.mxu0 0.0
    %2986 = vmatpush2.msra.mxu0 0.0
    %2987 = vmatprep.subr.mxu0 0.0
    %2988 = vmatpush2.msra.mxu0 %v2931
    %2989 = vmatprep.subr.mxu0 0.0
    %2990 = vmatpush2.msra.mxu0 %v2930
    %2991 = vmatprep.subr.mxu0 0.0
    %2992 = vmatpush2.msra.mxu0 %v2929
    %2993 = vmatprep.subr.mxu0 0.0
    %2994 = vmatpush2.msra.mxu0 %v2928
    %2995 = vmatprep.subr.mxu0 0.0
    %2996 = vmatpush2.msra.mxu0 %v2927
    %2997 = vmatprep.subr.mxu0 0.0
    %2998 = vmatpush2.msra.mxu0 %v2926
    %2999 = vmatprep.mubr.f32.mxu0 %v2933
    %3000 = vmatmul.mubr.f32.gmra.mxu0 %v2655
    %v3001 = vpop.f32.mrf.mxu0
    %v3002 = vadd.f32 0.0, %v3001
    %v3003 = vpop.f32.mrf.mxu0
    %3004 = vdwg.mxu0
    %v3006 = vsel %vm2173, %v2581, 0
    %3008 = vmatprep.subr.mxu0 0.0
    %3009 = vmatpush1.msra.mxu0 %v2902
    %3010 = vmatprep.subr.mxu0 0.0
    %3011 = vmatpush1.msra.mxu0 %v2901
    %3012 = vmatprep.subr.mxu0 0.0
    %3013 = vmatpush1.msra.mxu0 %v2900
    %3014 = vmatprep.subr.mxu0 0.0
    %3015 = vmatpush1.msra.mxu0 %v2899
    %3016 = vmatprep.subr.mxu0 0.0
    %3017 = vmatpush1.msra.mxu0 %v2898
    %3018 = vmatprep.subr.mxu0 0.0
    %3019 = vmatpush1.msra.mxu0 %v2897
    %3020 = vmatprep.subr.mxu0 0.0
    %3021 = vmatpush1.msra.mxu0 %v2896
    %3022 = vmatprep.subr.mxu0 0.0
    %3023 = vmatpush1.msra.mxu0 %v2895
    %3024 = vmatprep.subr.mxu0 0.0
    %3025 = vmatpush1.msra.mxu0 %v2894
    %3026 = vmatprep.subr.mxu0 0.0
    %3027 = vmatpush1.msra.mxu0 %v2893
    %3028 = vmatprep.subr.mxu0 0.0
    %3029 = vmatpush1.msra.mxu0 %v2892
    %3030 = vmatprep.subr.mxu0 0.0
    %3031 = vmatpush1.msra.mxu0 %v2891
    %3032 = vmatprep.subr.mxu0 0.0
    %3033 = vmatpush1.msra.mxu0 %v2890
    %3034 = vmatprep.subr.mxu0 0.0
    %3035 = vmatpush1.msra.mxu0 %v2889
    %3036 = vmatprep.subr.mxu0 0.0
    %3037 = vmatpush1.msra.mxu0 %v2888
    %3038 = vmatprep.subr.mxu0 0.0
    %3039 = vmatpush1.msra.mxu0 %v2887
    %3040 = vmatprep.subr.mxu0 0.0
    %3041 = vmatpush2.msra.mxu0 0.0
    %3042 = vmatprep.subr.mxu0 0.0
    %3043 = vmatpush2.msra.mxu0 0.0
    %3044 = vmatprep.subr.mxu0 0.0
    %3045 = vmatpush2.msra.mxu0 0.0
    %3046 = vmatprep.subr.mxu0 0.0
    %3047 = vmatpush2.msra.mxu0 0.0
    %3048 = vmatprep.subr.mxu0 0.0
    %3049 = vmatpush2.msra.mxu0 0.0
    %3050 = vmatprep.subr.mxu0 0.0
    %3051 = vmatpush2.msra.mxu0 0.0
    %3052 = vmatprep.subr.mxu0 0.0
    %3053 = vmatpush2.msra.mxu0 0.0
    %3054 = vmatprep.subr.mxu0 0.0
    %3055 = vmatpush2.msra.mxu0 0.0
    %3056 = vmatprep.subr.mxu0 0.0
    %3057 = vmatpush2.msra.mxu0 0.0
    %3058 = vmatprep.subr.mxu0 0.0
    %3059 = vmatpush2.msra.mxu0 0.0
    %3060 = vmatprep.subr.mxu0 0.0
    %3061 = vmatpush2.msra.mxu0 %v2908
    %3062 = vmatprep.subr.mxu0 0.0
    %3063 = vmatpush2.msra.mxu0 %v2907
    %3064 = vmatprep.subr.mxu0 0.0
    %3065 = vmatpush2.msra.mxu0 %v2906
    %3066 = vmatprep.subr.mxu0 0.0
    %3067 = vmatpush2.msra.mxu0 %v2905
    %3068 = vmatprep.subr.mxu0 0.0
    %3069 = vmatpush2.msra.mxu0 %v2904
    %3070 = vmatprep.subr.mxu0 0.0
    %3071 = vmatpush2.msra.mxu0 %v2903
    %3072 = vmatprep.mubr.f32.mxu0 %v3006
    %3073 = vmatmul.mubr.f32.gmra.mxu0 %v2579
    %v3074 = vpop.f32.mrf.mxu0
    %v3075 = vadd.f32 %v3002, %v3074
    %v3076 = vpop.f32.mrf.mxu0
    %3077 = vdwg.mxu0
    %s3078 = scalar_lea.vmem %s23, 352
    %v3079 = vld [vmem:[%s3078] sm:$0xff]
    %v3080 = vld [vmem:[%s3078 + $0x8] sm:$0xff]
    %v3081 = vld [vmem:[%s3078 + $0x10] sm:$0xff]
    %v3082 = vld [vmem:[%s3078 + $0x18] sm:$0xff]
    %v3083 = vld [vmem:[%s3078 + $0x20] sm:$0xff]
    %v3084 = vld [vmem:[%s3078 + $0x28] sm:$0xff]
    %v3085 = vld [vmem:[%s3078 + $0x30] sm:$0xff]
    %v3086 = vld [vmem:[%s3078 + $0x38] sm:$0xff]
    %v3087 = vld [vmem:[%s3078 + $0x40] sm:$0xff]
    %v3088 = vld [vmem:[%s3078 + $0x48] sm:$0xff]
    %v3089 = vld [vmem:[%s3078 + $0x50] sm:$0xff]
    %v3090 = vld [vmem:[%s3078 + $0x58] sm:$0xff]
    %v3091 = vld [vmem:[%s3078 + $0x60] sm:$0xff]
    %v3092 = vld [vmem:[%s3078 + $0x68] sm:$0xff]
    %v3093 = vld [vmem:[%s3078 + $0x70] sm:$0xff]
    %v3094 = vld [vmem:[%s3078 + $0x78] sm:$0xff]
    %v3095 = vld [vmem:[%s3078 + $0x80] sm:$0xff]
    %v3096 = vld [vmem:[%s3078 + $0x88] sm:$0xff]
    %v3097 = vld [vmem:[%s3078 + $0x90] sm:$0xff]
    %v3098 = vld [vmem:[%s3078 + $0x98] sm:$0xff]
    %v3099 = vld [vmem:[%s3078 + $0xa0] sm:$0xff]
    %v3100 = vld [vmem:[%s3078 + $0xa8] sm:$0xff]
    %v3102 = vsel %vm2173, %v2733, 0
    %3104 = vmatprep.subr.mxu0 0.0
    %3105 = vmatpush1.msra.mxu0 %v3094
    %3106 = vmatprep.subr.mxu0 0.0
    %3107 = vmatpush1.msra.mxu0 %v3093
    %3108 = vmatprep.subr.mxu0 0.0
    %3109 = vmatpush1.msra.mxu0 %v3092
    %3110 = vmatprep.subr.mxu0 0.0
    %3111 = vmatpush1.msra.mxu0 %v3091
    %3112 = vmatprep.subr.mxu0 0.0
    %3113 = vmatpush1.msra.mxu0 %v3090
    %3114 = vmatprep.subr.mxu0 0.0
    %3115 = vmatpush1.msra.mxu0 %v3089
    %3116 = vmatprep.subr.mxu0 0.0
    %3117 = vmatpush1.msra.mxu0 %v3088
    %3118 = vmatprep.subr.mxu0 0.0
    %3119 = vmatpush1.msra.mxu0 %v3087
    %3120 = vmatprep.subr.mxu0 0.0
    %3121 = vmatpush1.msra.mxu0 %v3086
    %3122 = vmatprep.subr.mxu0 0.0
    %3123 = vmatpush1.msra.mxu0 %v3085
    %3124 = vmatprep.subr.mxu0 0.0
    %3125 = vmatpush1.msra.mxu0 %v3084
    %3126 = vmatprep.subr.mxu0 0.0
    %3127 = vmatpush1.msra.mxu0 %v3083
    %3128 = vmatprep.subr.mxu0 0.0
    %3129 = vmatpush1.msra.mxu0 %v3082
    %3130 = vmatprep.subr.mxu0 0.0
    %3131 = vmatpush1.msra.mxu0 %v3081
    %3132 = vmatprep.subr.mxu0 0.0
    %3133 = vmatpush1.msra.mxu0 %v3080
    %3134 = vmatprep.subr.mxu0 0.0
    %3135 = vmatpush1.msra.mxu0 %v3079
    %3136 = vmatprep.subr.mxu0 0.0
    %3137 = vmatpush2.msra.mxu0 0.0
    %3138 = vmatprep.subr.mxu0 0.0
    %3139 = vmatpush2.msra.mxu0 0.0
    %3140 = vmatprep.subr.mxu0 0.0
    %3141 = vmatpush2.msra.mxu0 0.0
    %3142 = vmatprep.subr.mxu0 0.0
    %3143 = vmatpush2.msra.mxu0 0.0
    %3144 = vmatprep.subr.mxu0 0.0
    %3145 = vmatpush2.msra.mxu0 0.0
    %3146 = vmatprep.subr.mxu0 0.0
    %3147 = vmatpush2.msra.mxu0 0.0
    %3148 = vmatprep.subr.mxu0 0.0
    %3149 = vmatpush2.msra.mxu0 0.0
    %3150 = vmatprep.subr.mxu0 0.0
    %3151 = vmatpush2.msra.mxu0 0.0
    %3152 = vmatprep.subr.mxu0 0.0
    %3153 = vmatpush2.msra.mxu0 0.0
    %3154 = vmatprep.subr.mxu0 0.0
    %3155 = vmatpush2.msra.mxu0 0.0
    %3156 = vmatprep.subr.mxu0 0.0
    %3157 = vmatpush2.msra.mxu0 %v3100
    %3158 = vmatprep.subr.mxu0 0.0
    %3159 = vmatpush2.msra.mxu0 %v3099
    %3160 = vmatprep.subr.mxu0 0.0
    %3161 = vmatpush2.msra.mxu0 %v3098
    %3162 = vmatprep.subr.mxu0 0.0
    %3163 = vmatpush2.msra.mxu0 %v3097
    %3164 = vmatprep.subr.mxu0 0.0
    %3165 = vmatpush2.msra.mxu0 %v3096
    %3166 = vmatprep.subr.mxu0 0.0
    %3167 = vmatpush2.msra.mxu0 %v3095
    %3168 = vmatprep.mubr.f32.mxu0 %v3102
    %3169 = vmatmul.mubr.f32.gmra.mxu0 %v2731
    %v3170 = vpop.f32.mrf.mxu0
    %v3171 = vadd.f32 0.0, %v3170
    %v3172 = vpop.f32.mrf.mxu0
    %3173 = vdwg.mxu0
    %v3174 = vadd.f32 %v3075, %v3171
    %s3175 = scalar_lea.vmem %s23, 528
    %v3176 = vld [vmem:[%s3175] sm:$0xff]
    %v3177 = vld [vmem:[%s3175 + $0x8] sm:$0xff]
    %v3178 = vld [vmem:[%s3175 + $0x10] sm:$0xff]
    %v3179 = vld [vmem:[%s3175 + $0x18] sm:$0xff]
    %v3180 = vld [vmem:[%s3175 + $0x20] sm:$0xff]
    %v3181 = vld [vmem:[%s3175 + $0x28] sm:$0xff]
    %v3182 = vld [vmem:[%s3175 + $0x30] sm:$0xff]
    %v3183 = vld [vmem:[%s3175 + $0x38] sm:$0xff]
    %v3184 = vld [vmem:[%s3175 + $0x40] sm:$0xff]
    %v3185 = vld [vmem:[%s3175 + $0x48] sm:$0xff]
    %v3186 = vld [vmem:[%s3175 + $0x50] sm:$0xff]
    %v3187 = vld [vmem:[%s3175 + $0x58] sm:$0xff]
    %v3188 = vld [vmem:[%s3175 + $0x60] sm:$0xff]
    %v3189 = vld [vmem:[%s3175 + $0x68] sm:$0xff]
    %v3190 = vld [vmem:[%s3175 + $0x70] sm:$0xff]
    %v3191 = vld [vmem:[%s3175 + $0x78] sm:$0xff]
    %v3192 = vld [vmem:[%s3175 + $0x80] sm:$0xff]
    %v3193 = vld [vmem:[%s3175 + $0x88] sm:$0xff]
    %v3194 = vld [vmem:[%s3175 + $0x90] sm:$0xff]
    %v3195 = vld [vmem:[%s3175 + $0x98] sm:$0xff]
    %v3196 = vld [vmem:[%s3175 + $0xa0] sm:$0xff]
    %v3197 = vld [vmem:[%s3175 + $0xa8] sm:$0xff]
    %v3199 = vsel %vm2173, %v2809, 0
    %3201 = vmatprep.subr.mxu0 0.0
    %3202 = vmatpush1.msra.mxu0 %v3191
    %3203 = vmatprep.subr.mxu0 0.0
    %3204 = vmatpush1.msra.mxu0 %v3190
    %3205 = vmatprep.subr.mxu0 0.0
    %3206 = vmatpush1.msra.mxu0 %v3189
    %3207 = vmatprep.subr.mxu0 0.0
    %3208 = vmatpush1.msra.mxu0 %v3188
    %3209 = vmatprep.subr.mxu0 0.0
    %3210 = vmatpush1.msra.mxu0 %v3187
    %3211 = vmatprep.subr.mxu0 0.0
    %3212 = vmatpush1.msra.mxu0 %v3186
    %3213 = vmatprep.subr.mxu0 0.0
    %3214 = vmatpush1.msra.mxu0 %v3185
    %3215 = vmatprep.subr.mxu0 0.0
    %3216 = vmatpush1.msra.mxu0 %v3184
    %3217 = vmatprep.subr.mxu0 0.0
    %3218 = vmatpush1.msra.mxu0 %v3183
    %3219 = vmatprep.subr.mxu0 0.0
    %3220 = vmatpush1.msra.mxu0 %v3182
    %3221 = vmatprep.subr.mxu0 0.0
    %3222 = vmatpush1.msra.mxu0 %v3181
    %3223 = vmatprep.subr.mxu0 0.0
    %3224 = vmatpush1.msra.mxu0 %v3180
    %3225 = vmatprep.subr.mxu0 0.0
    %3226 = vmatpush1.msra.mxu0 %v3179
    %3227 = vmatprep.subr.mxu0 0.0
    %3228 = vmatpush1.msra.mxu0 %v3178
    %3229 = vmatprep.subr.mxu0 0.0
    %3230 = vmatpush1.msra.mxu0 %v3177
    %3231 = vmatprep.subr.mxu0 0.0
    %3232 = vmatpush1.msra.mxu0 %v3176
    %3233 = vmatprep.subr.mxu0 0.0
    %3234 = vmatpush2.msra.mxu0 0.0
    %3235 = vmatprep.subr.mxu0 0.0
    %3236 = vmatpush2.msra.mxu0 0.0
    %3237 = vmatprep.subr.mxu0 0.0
    %3238 = vmatpush2.msra.mxu0 0.0
    %3239 = vmatprep.subr.mxu0 0.0
    %3240 = vmatpush2.msra.mxu0 0.0
    %3241 = vmatprep.subr.mxu0 0.0
    %3242 = vmatpush2.msra.mxu0 0.0
    %3243 = vmatprep.subr.mxu0 0.0
    %3244 = vmatpush2.msra.mxu0 0.0
    %3245 = vmatprep.subr.mxu0 0.0
    %3246 = vmatpush2.msra.mxu0 0.0
    %3247 = vmatprep.subr.mxu0 0.0
    %3248 = vmatpush2.msra.mxu0 0.0
    %3249 = vmatprep.subr.mxu0 0.0
    %3250 = vmatpush2.msra.mxu0 0.0
    %3251 = vmatprep.subr.mxu0 0.0
    %3252 = vmatpush2.msra.mxu0 0.0
    %3253 = vmatprep.subr.mxu0 0.0
    %3254 = vmatpush2.msra.mxu0 %v3197
    %3255 = vmatprep.subr.mxu0 0.0
    %3256 = vmatpush2.msra.mxu0 %v3196
    %3257 = vmatprep.subr.mxu0 0.0
    %3258 = vmatpush2.msra.mxu0 %v3195
    %3259 = vmatprep.subr.mxu0 0.0
    %3260 = vmatpush2.msra.mxu0 %v3194
    %3261 = vmatprep.subr.mxu0 0.0
    %3262 = vmatpush2.msra.mxu0 %v3193
    %3263 = vmatprep.subr.mxu0 0.0
    %3264 = vmatpush2.msra.mxu0 %v3192
    %3265 = vmatprep.mubr.f32.mxu0 %v3199
    %3266 = vmatmul.mubr.f32.gmra.mxu0 %v2807
    %v3267 = vpop.f32.mrf.mxu0
    %v3268 = vadd.f32 0.0, %v3267
    %v3269 = vpop.f32.mrf.mxu0
    %3270 = vdwg.mxu0
    %v3271 = vadd.f32 %v3174, %v3268
    %s3272 = scalar_lea.vmem %s23, 704
    %v3273 = vld [vmem:[%s3272] sm:$0xff]
    %v3274 = vld [vmem:[%s3272 + $0x8] sm:$0xff]
    %v3275 = vld [vmem:[%s3272 + $0x10] sm:$0xff]
    %v3276 = vld [vmem:[%s3272 + $0x18] sm:$0xff]
    %v3277 = vld [vmem:[%s3272 + $0x20] sm:$0xff]
    %v3278 = vld [vmem:[%s3272 + $0x28] sm:$0xff]
    %v3279 = vld [vmem:[%s3272 + $0x30] sm:$0xff]
    %v3280 = vld [vmem:[%s3272 + $0x38] sm:$0xff]
    %v3281 = vld [vmem:[%s3272 + $0x40] sm:$0xff]
    %v3282 = vld [vmem:[%s3272 + $0x48] sm:$0xff]
    %v3283 = vld [vmem:[%s3272 + $0x50] sm:$0xff]
    %v3284 = vld [vmem:[%s3272 + $0x58] sm:$0xff]
    %v3285 = vld [vmem:[%s3272 + $0x60] sm:$0xff]
    %v3286 = vld [vmem:[%s3272 + $0x68] sm:$0xff]
    %v3287 = vld [vmem:[%s3272 + $0x70] sm:$0xff]
    %v3288 = vld [vmem:[%s3272 + $0x78] sm:$0xff]
    %v3289 = vld [vmem:[%s3272 + $0x80] sm:$0xff]
    %v3290 = vld [vmem:[%s3272 + $0x88] sm:$0xff]
    %v3291 = vld [vmem:[%s3272 + $0x90] sm:$0xff]
    %v3292 = vld [vmem:[%s3272 + $0x98] sm:$0xff]
    %v3293 = vld [vmem:[%s3272 + $0xa0] sm:$0xff]
    %v3294 = vld [vmem:[%s3272 + $0xa8] sm:$0xff]
    %v3296 = vsel %vm2173, %v2885, 0
    %3298 = vmatprep.subr.mxu0 0.0
    %3299 = vmatpush1.msra.mxu0 %v3288
    %3300 = vmatprep.subr.mxu0 0.0
    %3301 = vmatpush1.msra.mxu0 %v3287
    %3302 = vmatprep.subr.mxu0 0.0
    %3303 = vmatpush1.msra.mxu0 %v3286
    %3304 = vmatprep.subr.mxu0 0.0
    %3305 = vmatpush1.msra.mxu0 %v3285
    %3306 = vmatprep.subr.mxu0 0.0
    %3307 = vmatpush1.msra.mxu0 %v3284
    %3308 = vmatprep.subr.mxu0 0.0
    %3309 = vmatpush1.msra.mxu0 %v3283
    %3310 = vmatprep.subr.mxu0 0.0
    %3311 = vmatpush1.msra.mxu0 %v3282
    %3312 = vmatprep.subr.mxu0 0.0
    %3313 = vmatpush1.msra.mxu0 %v3281
    %3314 = vmatprep.subr.mxu0 0.0
    %3315 = vmatpush1.msra.mxu0 %v3280
    %3316 = vmatprep.subr.mxu0 0.0
    %3317 = vmatpush1.msra.mxu0 %v3279
    %3318 = vmatprep.subr.mxu0 0.0
    %3319 = vmatpush1.msra.mxu0 %v3278
    %3320 = vmatprep.subr.mxu0 0.0
    %3321 = vmatpush1.msra.mxu0 %v3277
    %3322 = vmatprep.subr.mxu0 0.0
    %3323 = vmatpush1.msra.mxu0 %v3276
    %3324 = vmatprep.subr.mxu0 0.0
    %3325 = vmatpush1.msra.mxu0 %v3275
    %3326 = vmatprep.subr.mxu0 0.0
    %3327 = vmatpush1.msra.mxu0 %v3274
    %3328 = vmatprep.subr.mxu0 0.0
    %3329 = vmatpush1.msra.mxu0 %v3273
    %3330 = vmatprep.subr.mxu0 0.0
    %3331 = vmatpush2.msra.mxu0 0.0
    %3332 = vmatprep.subr.mxu0 0.0
    %3333 = vmatpush2.msra.mxu0 0.0
    %3334 = vmatprep.subr.mxu0 0.0
    %3335 = vmatpush2.msra.mxu0 0.0
    %3336 = vmatprep.subr.mxu0 0.0
    %3337 = vmatpush2.msra.mxu0 0.0
    %3338 = vmatprep.subr.mxu0 0.0
    %3339 = vmatpush2.msra.mxu0 0.0
    %3340 = vmatprep.subr.mxu0 0.0
    %3341 = vmatpush2.msra.mxu0 0.0
    %3342 = vmatprep.subr.mxu0 0.0
    %3343 = vmatpush2.msra.mxu0 0.0
    %3344 = vmatprep.subr.mxu0 0.0
    %3345 = vmatpush2.msra.mxu0 0.0
    %3346 = vmatprep.subr.mxu0 0.0
    %3347 = vmatpush2.msra.mxu0 0.0
    %3348 = vmatprep.subr.mxu0 0.0
    %3349 = vmatpush2.msra.mxu0 0.0
    %3350 = vmatprep.subr.mxu0 0.0
    %3351 = vmatpush2.msra.mxu0 %v3294
    %3352 = vmatprep.subr.mxu0 0.0
    %3353 = vmatpush2.msra.mxu0 %v3293
    %3354 = vmatprep.subr.mxu0 0.0
    %3355 = vmatpush2.msra.mxu0 %v3292
    %3356 = vmatprep.subr.mxu0 0.0
    %3357 = vmatpush2.msra.mxu0 %v3291
    %3358 = vmatprep.subr.mxu0 0.0
    %3359 = vmatpush2.msra.mxu0 %v3290
    %3360 = vmatprep.subr.mxu0 0.0
    %3361 = vmatpush2.msra.mxu0 %v3289
    %3362 = vmatprep.mubr.f32.mxu0 %v3296
    %3363 = vmatmul.mubr.f32.gmra.mxu0 %v2883
    %v3364 = vpop.f32.mrf.mxu0
    %v3365 = vadd.f32 0.0, %v3364
    %v3366 = vpop.f32.mrf.mxu0
    %3367 = vdwg.mxu0
    %v3368 = vadd.f32 %v3271, %v3365
    %v3369 = vld [vmem:[#allocation34] sm:$0x1]
    %v3371 = vlaneseq
    %v3372 = vshrl.u32 %v3371, 7
    %v3373 = vsub.s32 0, %v3372
    %v3374 = vrot.slane %v3369, %v3373
    %v3376 = vadd.f32 %v3368, %v3374
    %v3377 = vld [vmem:[#allocation9] sm:$0xf]
    %s3378 = scalar_lea.vmem [#allocation9], 4
    %v3379 = vld [vmem:[%s3378] sm:$0xf]
    %v3381 = vsel %vm790, %v3379, 0
    %3383 = vmatprep.subr.mxu0 0.0
    %3384 = vmatpush1.msra.mxu0 0.0
    %3385 = vmatprep.subr.mxu0 0.0
    %3386 = vmatpush1.msra.mxu0 0.0
    %3387 = vmatprep.subr.mxu0 0.0
    %3388 = vmatpush1.msra.mxu0 0.0
    %3389 = vmatprep.subr.mxu0 0.0
    %3390 = vmatpush1.msra.mxu0 0.0
    %3391 = vmatprep.subr.mxu0 0.0
    %3392 = vmatpush1.msra.mxu0 0.0
    %3393 = vmatprep.subr.mxu0 0.0
    %3394 = vmatpush1.msra.mxu0 0.0
    %3395 = vmatprep.subr.mxu0 0.0
    %3396 = vmatpush1.msra.mxu0 0.0
    %3397 = vmatprep.subr.mxu0 0.0
    %3398 = vmatpush1.msra.mxu0 0.0
    %3399 = vmatprep.subr.mxu0 0.0
    %3400 = vmatpush1.msra.mxu0 0.0
    %3401 = vmatprep.subr.mxu0 0.0
    %3402 = vmatpush1.msra.mxu0 0.0
    %3403 = vmatprep.subr.mxu0 0.0
    %3404 = vmatpush1.msra.mxu0 0.0
    %3405 = vmatprep.subr.mxu0 0.0
    %3406 = vmatpush1.msra.mxu0 0.0
    %3407 = vmatprep.subr.mxu0 0.0
    %3408 = vmatpush1.msra.mxu0 0.0
    %3409 = vmatprep.subr.mxu0 0.0
    %3410 = vmatpush1.msra.mxu0 0.0
    %3411 = vmatprep.subr.mxu0 0.0
    %3412 = vmatpush1.msra.mxu0 0.0
    %3413 = vmatprep.subr.mxu0 0.0
    %3414 = vmatpush1.msra.mxu0 %v3381
    %3415 = vmatprep.subr.mxu0 0.0
    %3416 = vmatpush2.msra.mxu0 0.0
    %3417 = vmatprep.subr.mxu0 0.0
    %3418 = vmatpush2.msra.mxu0 0.0
    %3419 = vmatprep.subr.mxu0 0.0
    %3420 = vmatpush2.msra.mxu0 0.0
    %3421 = vmatprep.subr.mxu0 0.0
    %3422 = vmatpush2.msra.mxu0 0.0
    %3423 = vmatprep.subr.mxu0 0.0
    %3424 = vmatpush2.msra.mxu0 0.0
    %3425 = vmatprep.subr.mxu0 0.0
    %3426 = vmatpush2.msra.mxu0 0.0
    %3427 = vmatprep.subr.mxu0 0.0
    %3428 = vmatpush2.msra.mxu0 0.0
    %3429 = vmatprep.subr.mxu0 0.0
    %3430 = vmatpush2.msra.mxu0 0.0
    %3431 = vmatprep.subr.mxu0 0.0
    %3432 = vmatpush2.msra.mxu0 0.0
    %3433 = vmatprep.subr.mxu0 0.0
    %3434 = vmatpush2.msra.mxu0 0.0
    %3435 = vmatprep.subr.mxu0 0.0
    %3436 = vmatpush2.msra.mxu0 0.0
    %3437 = vmatprep.subr.mxu0 0.0
    %3438 = vmatpush2.msra.mxu0 0.0
    %3439 = vmatprep.subr.mxu0 0.0
    %3440 = vmatpush2.msra.mxu0 0.0
    %3441 = vmatprep.subr.mxu0 0.0
    %3442 = vmatpush2.msra.mxu0 0.0
    %3443 = vmatprep.subr.mxu0 0.0
    %3444 = vmatpush2.msra.mxu0 0.0
    %3445 = vmatprep.subr.mxu0 0.0
    %3446 = vmatpush2.msra.mxu0 0.0
    %3447 = vmatprep.mubr.f32.mxu0 0.0
    %3448 = vmatmul.mubr.f32.gmra.mxu0 %v779
    %v3449 = vpop.f32.mrf.mxu0
    %v3450 = vadd.f32 0.0, %v3449
    %v3451 = vpop.f32.mrf.mxu0
    %3452 = vmatprep.mubr.f32.mxu0 0.0
    %3453 = vmatmul.mubr.f32.gmra.mxu0 %v782
    %v3454 = vpop.f32.mrf.mxu0
    %v3455 = vadd.f32 0.0, %v3454
    %v3456 = vpop.f32.mrf.mxu0
    %3457 = vmatprep.mubr.f32.mxu0 0.0
    %3458 = vmatmul.mubr.f32.gmra.mxu0 %v785
    %v3459 = vpop.f32.mrf.mxu0
    %v3460 = vadd.f32 0.0, %v3459
    %v3461 = vpop.f32.mrf.mxu0
    %3462 = vmatprep.mubr.f32.mxu0 0.0
    %3463 = vmatmul.mubr.f32.gmra.mxu0 %v788
    %v3464 = vpop.f32.mrf.mxu0
    %v3465 = vadd.f32 0.0, %v3464
    %v3466 = vpop.f32.mrf.mxu0
    %3467 = vdwg.mxu0
    %v3469 = vsel %vm790, %v3377, 0
    %3471 = vmatprep.subr.mxu0 0.0
    %3472 = vmatpush1.msra.mxu0 0.0
    %3473 = vmatprep.subr.mxu0 0.0
    %3474 = vmatpush1.msra.mxu0 0.0
    %3475 = vmatprep.subr.mxu0 0.0
    %3476 = vmatpush1.msra.mxu0 0.0
    %3477 = vmatprep.subr.mxu0 0.0
    %3478 = vmatpush1.msra.mxu0 0.0
    %3479 = vmatprep.subr.mxu0 0.0
    %3480 = vmatpush1.msra.mxu0 0.0
    %3481 = vmatprep.subr.mxu0 0.0
    %3482 = vmatpush1.msra.mxu0 0.0
    %3483 = vmatprep.subr.mxu0 0.0
    %3484 = vmatpush1.msra.mxu0 0.0
    %3485 = vmatprep.subr.mxu0 0.0
    %3486 = vmatpush1.msra.mxu0 0.0
    %3487 = vmatprep.subr.mxu0 0.0
    %3488 = vmatpush1.msra.mxu0 0.0
    %3489 = vmatprep.subr.mxu0 0.0
    %3490 = vmatpush1.msra.mxu0 0.0
    %3491 = vmatprep.subr.mxu0 0.0
    %3492 = vmatpush1.msra.mxu0 0.0
    %3493 = vmatprep.subr.mxu0 0.0
    %3494 = vmatpush1.msra.mxu0 0.0
    %3495 = vmatprep.subr.mxu0 0.0
    %3496 = vmatpush1.msra.mxu0 0.0
    %3497 = vmatprep.subr.mxu0 0.0
    %3498 = vmatpush1.msra.mxu0 0.0
    %3499 = vmatprep.subr.mxu0 0.0
    %3500 = vmatpush1.msra.mxu0 0.0
    %3501 = vmatprep.subr.mxu0 0.0
    %3502 = vmatpush1.msra.mxu0 %v3469
    %3503 = vmatprep.subr.mxu0 0.0
    %3504 = vmatpush2.msra.mxu0 0.0
    %3505 = vmatprep.subr.mxu0 0.0
    %3506 = vmatpush2.msra.mxu0 0.0
    %3507 = vmatprep.subr.mxu0 0.0
    %3508 = vmatpush2.msra.mxu0 0.0
    %3509 = vmatprep.subr.mxu0 0.0
    %3510 = vmatpush2.msra.mxu0 0.0
    %3511 = vmatprep.subr.mxu0 0.0
    %3512 = vmatpush2.msra.mxu0 0.0
    %3513 = vmatprep.subr.mxu0 0.0
    %3514 = vmatpush2.msra.mxu0 0.0
    %3515 = vmatprep.subr.mxu0 0.0
    %3516 = vmatpush2.msra.mxu0 0.0
    %3517 = vmatprep.subr.mxu0 0.0
    %3518 = vmatpush2.msra.mxu0 0.0
    %3519 = vmatprep.subr.mxu0 0.0
    %3520 = vmatpush2.msra.mxu0 0.0
    %3521 = vmatprep.subr.mxu0 0.0
    %3522 = vmatpush2.msra.mxu0 0.0
    %3523 = vmatprep.subr.mxu0 0.0
    %3524 = vmatpush2.msra.mxu0 0.0
    %3525 = vmatprep.subr.mxu0 0.0
    %3526 = vmatpush2.msra.mxu0 0.0
    %3527 = vmatprep.subr.mxu0 0.0
    %3528 = vmatpush2.msra.mxu0 0.0
    %3529 = vmatprep.subr.mxu0 0.0
    %3530 = vmatpush2.msra.mxu0 0.0
    %3531 = vmatprep.subr.mxu0 0.0
    %3532 = vmatpush2.msra.mxu0 0.0
    %3533 = vmatprep.subr.mxu0 0.0
    %3534 = vmatpush2.msra.mxu0 0.0
    %3535 = vmatprep.mubr.f32.mxu0 0.0
    %3536 = vmatmul.mubr.f32.gmra.mxu0 %v880
    %v3537 = vpop.f32.mrf.mxu0
    %v3538 = vadd.f32 %v3450, %v3537
    %v3539 = vpop.f32.mrf.mxu0
    %3540 = vmatprep.mubr.f32.mxu0 0.0
    %3541 = vmatmul.mubr.f32.gmra.mxu0 %v883
    %v3542 = vpop.f32.mrf.mxu0
    %v3543 = vadd.f32 %v3455, %v3542
    %v3544 = vpop.f32.mrf.mxu0
    %3545 = vmatprep.mubr.f32.mxu0 0.0
    %3546 = vmatmul.mubr.f32.gmra.mxu0 %v886
    %v3547 = vpop.f32.mrf.mxu0
    %v3548 = vadd.f32 %v3460, %v3547
    %v3549 = vpop.f32.mrf.mxu0
    %3550 = vmatprep.mubr.f32.mxu0 0.0
    %3551 = vmatmul.mubr.f32.gmra.mxu0 %v889
    %v3552 = vpop.f32.mrf.mxu0
    %v3553 = vadd.f32 %v3465, %v3552
    %v3554 = vpop.f32.mrf.mxu0
    %3555 = vdwg.mxu0
    %s3556 = scalar_lea.vmem [#allocation9], 8
    %v3557 = vld [vmem:[%s3556] sm:$0xf]
    %v3559 = vsel %vm790, %v3557, 0
    %3561 = vmatprep.subr.mxu0 0.0
    %3562 = vmatpush1.msra.mxu0 0.0
    %3563 = vmatprep.subr.mxu0 0.0
    %3564 = vmatpush1.msra.mxu0 0.0
    %3565 = vmatprep.subr.mxu0 0.0
    %3566 = vmatpush1.msra.mxu0 0.0
    %3567 = vmatprep.subr.mxu0 0.0
    %3568 = vmatpush1.msra.mxu0 0.0
    %3569 = vmatprep.subr.mxu0 0.0
    %3570 = vmatpush1.msra.mxu0 0.0
    %3571 = vmatprep.subr.mxu0 0.0
    %3572 = vmatpush1.msra.mxu0 0.0
    %3573 = vmatprep.subr.mxu0 0.0
    %3574 = vmatpush1.msra.mxu0 0.0
    %3575 = vmatprep.subr.mxu0 0.0
    %3576 = vmatpush1.msra.mxu0 0.0
    %3577 = vmatprep.subr.mxu0 0.0
    %3578 = vmatpush1.msra.mxu0 0.0
    %3579 = vmatprep.subr.mxu0 0.0
    %3580 = vmatpush1.msra.mxu0 0.0
    %3581 = vmatprep.subr.mxu0 0.0
    %3582 = vmatpush1.msra.mxu0 0.0
    %3583 = vmatprep.subr.mxu0 0.0
    %3584 = vmatpush1.msra.mxu0 0.0
    %3585 = vmatprep.subr.mxu0 0.0
    %3586 = vmatpush1.msra.mxu0 0.0
    %3587 = vmatprep.subr.mxu0 0.0
    %3588 = vmatpush1.msra.mxu0 0.0
    %3589 = vmatprep.subr.mxu0 0.0
    %3590 = vmatpush1.msra.mxu0 0.0
    %3591 = vmatprep.subr.mxu0 0.0
    %3592 = vmatpush1.msra.mxu0 %v3559
    %3593 = vmatprep.subr.mxu0 0.0
    %3594 = vmatpush2.msra.mxu0 0.0
    %3595 = vmatprep.subr.mxu0 0.0
    %3596 = vmatpush2.msra.mxu0 0.0
    %3597 = vmatprep.subr.mxu0 0.0
    %3598 = vmatpush2.msra.mxu0 0.0
    %3599 = vmatprep.subr.mxu0 0.0
    %3600 = vmatpush2.msra.mxu0 0.0
    %3601 = vmatprep.subr.mxu0 0.0
    %3602 = vmatpush2.msra.mxu0 0.0
    %3603 = vmatprep.subr.mxu0 0.0
    %3604 = vmatpush2.msra.mxu0 0.0
    %3605 = vmatprep.subr.mxu0 0.0
    %3606 = vmatpush2.msra.mxu0 0.0
    %3607 = vmatprep.subr.mxu0 0.0
    %3608 = vmatpush2.msra.mxu0 0.0
    %3609 = vmatprep.subr.mxu0 0.0
    %3610 = vmatpush2.msra.mxu0 0.0
    %3611 = vmatprep.subr.mxu0 0.0
    %3612 = vmatpush2.msra.mxu0 0.0
    %3613 = vmatprep.subr.mxu0 0.0
    %3614 = vmatpush2.msra.mxu0 0.0
    %3615 = vmatprep.subr.mxu0 0.0
    %3616 = vmatpush2.msra.mxu0 0.0
    %3617 = vmatprep.subr.mxu0 0.0
    %3618 = vmatpush2.msra.mxu0 0.0
    %3619 = vmatprep.subr.mxu0 0.0
    %3620 = vmatpush2.msra.mxu0 0.0
    %3621 = vmatprep.subr.mxu0 0.0
    %3622 = vmatpush2.msra.mxu0 0.0
    %3623 = vmatprep.subr.mxu0 0.0
    %3624 = vmatpush2.msra.mxu0 0.0
    %3625 = vmatprep.mubr.f32.mxu0 0.0
    %3626 = vmatmul.mubr.f32.gmra.mxu0 %v982
    %v3627 = vpop.f32.mrf.mxu0
    %v3628 = vadd.f32 0.0, %v3627
    %v3629 = vpop.f32.mrf.mxu0
    %3630 = vmatprep.mubr.f32.mxu0 0.0
    %3631 = vmatmul.mubr.f32.gmra.mxu0 %v985
    %v3632 = vpop.f32.mrf.mxu0
    %v3633 = vadd.f32 0.0, %v3632
    %v3634 = vpop.f32.mrf.mxu0
    %3635 = vmatprep.mubr.f32.mxu0 0.0
    %3636 = vmatmul.mubr.f32.gmra.mxu0 %v988
    %v3637 = vpop.f32.mrf.mxu0
    %v3638 = vadd.f32 0.0, %v3637
    %v3639 = vpop.f32.mrf.mxu0
    %3640 = vmatprep.mubr.f32.mxu0 0.0
    %3641 = vmatmul.mubr.f32.gmra.mxu0 %v991
    %v3642 = vpop.f32.mrf.mxu0
    %v3643 = vadd.f32 0.0, %v3642
    %v3644 = vpop.f32.mrf.mxu0
    %3645 = vdwg.mxu0
    %v3646 = vadd.f32 %v3538, %v3628
    %v3647 = vadd.f32 %v3543, %v3633
    %v3648 = vadd.f32 %v3548, %v3638
    %v3649 = vadd.f32 %v3553, %v3643
    %s3650 = scalar_lea.vmem [#allocation9], 12
    %v3651 = vld [vmem:[%s3650] sm:$0xf]
    %v3653 = vsel %vm790, %v3651, 0
    %3655 = vmatprep.subr.mxu0 0.0
    %3656 = vmatpush1.msra.mxu0 0.0
    %3657 = vmatprep.subr.mxu0 0.0
    %3658 = vmatpush1.msra.mxu0 0.0
    %3659 = vmatprep.subr.mxu0 0.0
    %3660 = vmatpush1.msra.mxu0 0.0
    %3661 = vmatprep.subr.mxu0 0.0
    %3662 = vmatpush1.msra.mxu0 0.0
    %3663 = vmatprep.subr.mxu0 0.0
    %3664 = vmatpush1.msra.mxu0 0.0
    %3665 = vmatprep.subr.mxu0 0.0
    %3666 = vmatpush1.msra.mxu0 0.0
    %3667 = vmatprep.subr.mxu0 0.0
    %3668 = vmatpush1.msra.mxu0 0.0
    %3669 = vmatprep.subr.mxu0 0.0
    %3670 = vmatpush1.msra.mxu0 0.0
    %3671 = vmatprep.subr.mxu0 0.0
    %3672 = vmatpush1.msra.mxu0 0.0
    %3673 = vmatprep.subr.mxu0 0.0
    %3674 = vmatpush1.msra.mxu0 0.0
    %3675 = vmatprep.subr.mxu0 0.0
    %3676 = vmatpush1.msra.mxu0 0.0
    %3677 = vmatprep.subr.mxu0 0.0
    %3678 = vmatpush1.msra.mxu0 0.0
    %3679 = vmatprep.subr.mxu0 0.0
    %3680 = vmatpush1.msra.mxu0 0.0
    %3681 = vmatprep.subr.mxu0 0.0
    %3682 = vmatpush1.msra.mxu0 0.0
    %3683 = vmatprep.subr.mxu0 0.0
    %3684 = vmatpush1.msra.mxu0 0.0
    %3685 = vmatprep.subr.mxu0 0.0
    %3686 = vmatpush1.msra.mxu0 %v3653
    %3687 = vmatprep.subr.mxu0 0.0
    %3688 = vmatpush2.msra.mxu0 0.0
    %3689 = vmatprep.subr.mxu0 0.0
    %3690 = vmatpush2.msra.mxu0 0.0
    %3691 = vmatprep.subr.mxu0 0.0
    %3692 = vmatpush2.msra.mxu0 0.0
    %3693 = vmatprep.subr.mxu0 0.0
    %3694 = vmatpush2.msra.mxu0 0.0
    %3695 = vmatprep.subr.mxu0 0.0
    %3696 = vmatpush2.msra.mxu0 0.0
    %3697 = vmatprep.subr.mxu0 0.0
    %3698 = vmatpush2.msra.mxu0 0.0
    %3699 = vmatprep.subr.mxu0 0.0
    %3700 = vmatpush2.msra.mxu0 0.0
    %3701 = vmatprep.subr.mxu0 0.0
    %3702 = vmatpush2.msra.mxu0 0.0
    %3703 = vmatprep.subr.mxu0 0.0
    %3704 = vmatpush2.msra.mxu0 0.0
    %3705 = vmatprep.subr.mxu0 0.0
    %3706 = vmatpush2.msra.mxu0 0.0
    %3707 = vmatprep.subr.mxu0 0.0
    %3708 = vmatpush2.msra.mxu0 0.0
    %3709 = vmatprep.subr.mxu0 0.0
    %3710 = vmatpush2.msra.mxu0 0.0
    %3711 = vmatprep.subr.mxu0 0.0
    %3712 = vmatpush2.msra.mxu0 0.0
    %3713 = vmatprep.subr.mxu0 0.0
    %3714 = vmatpush2.msra.mxu0 0.0
    %3715 = vmatprep.subr.mxu0 0.0
    %3716 = vmatpush2.msra.mxu0 0.0
    %3717 = vmatprep.subr.mxu0 0.0
    %3718 = vmatpush2.msra.mxu0 0.0
    %3719 = vmatprep.mubr.f32.mxu0 0.0
    %3720 = vmatmul.mubr.f32.gmra.mxu0 %v1088
    %v3721 = vpop.f32.mrf.mxu0
    %v3722 = vadd.f32 0.0, %v3721
    %v3723 = vpop.f32.mrf.mxu0
    %3724 = vmatprep.mubr.f32.mxu0 0.0
    %3725 = vmatmul.mubr.f32.gmra.mxu0 %v1091
    %v3726 = vpop.f32.mrf.mxu0
    %v3727 = vadd.f32 0.0, %v3726
    %v3728 = vpop.f32.mrf.mxu0
    %3729 = vmatprep.mubr.f32.mxu0 0.0
    %3730 = vmatmul.mubr.f32.gmra.mxu0 %v1094
    %v3731 = vpop.f32.mrf.mxu0
    %v3732 = vadd.f32 0.0, %v3731
    %v3733 = vpop.f32.mrf.mxu0
    %3734 = vmatprep.mubr.f32.mxu0 0.0
    %3735 = vmatmul.mubr.f32.gmra.mxu0 %v1097
    %v3736 = vpop.f32.mrf.mxu0
    %v3737 = vadd.f32 0.0, %v3736
    %v3738 = vpop.f32.mrf.mxu0
    %3739 = vdwg.mxu0
    %v3740 = vadd.f32 %v3646, %v3722
    %v3741 = vadd.f32 %v3647, %v3727
    %v3742 = vadd.f32 %v3648, %v3732
    %v3743 = vadd.f32 %v3649, %v3737
    %v3744 = vld [vmem:[#allocation10] sm:$0x1]
    %v3746 = vlaneseq
    %v3747 = vshrl.u32 %v3746, 7
    %v3748 = vsub.s32 0, %v3747
    %v3749 = vrot.slane %v3744, %v3748
    %v3751 = vadd.f32 %v3740, %v3749
    %v3752 = vadd.f32 %v3741, %v3749
    %v3753 = vadd.f32 %v3742, %v3749
    %v3754 = vadd.f32 %v3743, %v3749
    %vm3755 = vcmp.ge.f32.partialorder %v3751, 0.0
    %vm3756 = vcmp.ge.f32.partialorder %v3752, 0.0
    %vm3757 = vcmp.ge.f32.partialorder %v3753, 0.0
    %vm3758 = vcmp.ge.f32.partialorder %v3754, 0.0
    %v3759 = vmul.f32 %v3751, 0.01
    %v3760 = vmul.f32 %v3752, 0.01
    %v3761 = vmul.f32 %v3753, 0.01
    %v3762 = vmul.f32 %v3754, 0.01
    %v3763 = vsel %vm3755, %v3751, %v3759
    %v3764 = vsel %vm3756, %v3752, %v3760
    %v3765 = vsel %vm3757, %v3753, %v3761
    %v3766 = vsel %vm3758, %v3754, %v3762
    %v3768 = vsel %vm1223, %v3766, 0
    %3770 = vmatprep.subr.mxu0 0.0
    %3771 = vmatpush1.msra.mxu0 0.0
    %3772 = vmatprep.subr.mxu0 0.0
    %3773 = vmatpush1.msra.mxu0 0.0
    %3774 = vmatprep.subr.mxu0 0.0
    %3775 = vmatpush1.msra.mxu0 0.0
    %3776 = vmatprep.subr.mxu0 0.0
    %3777 = vmatpush1.msra.mxu0 0.0
    %3778 = vmatprep.subr.mxu0 0.0
    %3779 = vmatpush1.msra.mxu0 0.0
    %3780 = vmatprep.subr.mxu0 0.0
    %3781 = vmatpush1.msra.mxu0 0.0
    %3782 = vmatprep.subr.mxu0 0.0
    %3783 = vmatpush1.msra.mxu0 0.0
    %3784 = vmatprep.subr.mxu0 0.0
    %3785 = vmatpush1.msra.mxu0 0.0
    %3786 = vmatprep.subr.mxu0 0.0
    %3787 = vmatpush1.msra.mxu0 0.0
    %3788 = vmatprep.subr.mxu0 0.0
    %3789 = vmatpush1.msra.mxu0 0.0
    %3790 = vmatprep.subr.mxu0 0.0
    %3791 = vmatpush1.msra.mxu0 0.0
    %3792 = vmatprep.subr.mxu0 0.0
    %3793 = vmatpush1.msra.mxu0 0.0
    %3794 = vmatprep.subr.mxu0 0.0
    %3795 = vmatpush1.msra.mxu0 %v3768
    %3796 = vmatprep.subr.mxu0 0.0
    %3797 = vmatpush1.msra.mxu0 %v3765
    %3798 = vmatprep.subr.mxu0 0.0
    %3799 = vmatpush1.msra.mxu0 %v3764
    %3800 = vmatprep.subr.mxu0 0.0
    %3801 = vmatpush1.msra.mxu0 %v3763
    %3802 = vmatprep.subr.mxu0 0.0
    %3803 = vmatpush2.msra.mxu0 0.0
    %3804 = vmatprep.subr.mxu0 0.0
    %3805 = vmatpush2.msra.mxu0 0.0
    %3806 = vmatprep.subr.mxu0 0.0
    %3807 = vmatpush2.msra.mxu0 0.0
    %3808 = vmatprep.subr.mxu0 0.0
    %3809 = vmatpush2.msra.mxu0 0.0
    %3810 = vmatprep.subr.mxu0 0.0
    %3811 = vmatpush2.msra.mxu0 0.0
    %3812 = vmatprep.subr.mxu0 0.0
    %3813 = vmatpush2.msra.mxu0 0.0
    %3814 = vmatprep.subr.mxu0 0.0
    %3815 = vmatpush2.msra.mxu0 0.0
    %3816 = vmatprep.subr.mxu0 0.0
    %3817 = vmatpush2.msra.mxu0 0.0
    %3818 = vmatprep.subr.mxu0 0.0
    %3819 = vmatpush2.msra.mxu0 0.0
    %3820 = vmatprep.subr.mxu0 0.0
    %3821 = vmatpush2.msra.mxu0 0.0
    %3822 = vmatprep.subr.mxu0 0.0
    %3823 = vmatpush2.msra.mxu0 0.0
    %3824 = vmatprep.subr.mxu0 0.0
    %3825 = vmatpush2.msra.mxu0 0.0
    %3826 = vmatprep.subr.mxu0 0.0
    %3827 = vmatpush2.msra.mxu0 0.0
    %3828 = vmatprep.subr.mxu0 0.0
    %3829 = vmatpush2.msra.mxu0 0.0
    %3830 = vmatprep.subr.mxu0 0.0
    %3831 = vmatpush2.msra.mxu0 0.0
    %3832 = vmatprep.subr.mxu0 0.0
    %3833 = vmatpush2.msra.mxu0 0.0
    %3834 = vmatprep.mubr.f32.mxu0 0.0
    %3835 = vmatmul.mubr.f32.gmra.mxu0 %v1218
    %v3836 = vpop.f32.mrf.mxu0
    %v3837 = vadd.f32 0.0, %v3836
    %v3838 = vpop.f32.mrf.mxu0
    %3839 = vmatprep.mubr.f32.mxu0 0.0
    %3840 = vmatmul.mubr.f32.gmra.mxu0 %v1221
    %v3841 = vpop.f32.mrf.mxu0
    %v3842 = vadd.f32 0.0, %v3841
    %v3843 = vpop.f32.mrf.mxu0
    %3844 = vdwg.mxu0
    %3845 = vmatprep.subr.mxu0 0.0
    %3846 = vmatpush1.msra.mxu0 0.0
    %3847 = vmatprep.subr.mxu0 0.0
    %3848 = vmatpush1.msra.mxu0 0.0
    %3849 = vmatprep.subr.mxu0 0.0
    %3850 = vmatpush1.msra.mxu0 0.0
    %3851 = vmatprep.subr.mxu0 0.0
    %3852 = vmatpush1.msra.mxu0 0.0
    %3853 = vmatprep.subr.mxu0 0.0
    %3854 = vmatpush1.msra.mxu0 0.0
    %3855 = vmatprep.subr.mxu0 0.0
    %3856 = vmatpush1.msra.mxu0 0.0
    %3857 = vmatprep.subr.mxu0 0.0
    %3858 = vmatpush1.msra.mxu0 0.0
    %3859 = vmatprep.subr.mxu0 0.0
    %3860 = vmatpush1.msra.mxu0 0.0
    %3861 = vmatprep.subr.mxu0 0.0
    %3862 = vmatpush1.msra.mxu0 0.0
    %3863 = vmatprep.subr.mxu0 0.0
    %3864 = vmatpush1.msra.mxu0 0.0
    %3865 = vmatprep.subr.mxu0 0.0
    %3866 = vmatpush1.msra.mxu0 0.0
    %3867 = vmatprep.subr.mxu0 0.0
    %3868 = vmatpush1.msra.mxu0 0.0
    %3869 = vmatprep.subr.mxu0 0.0
    %3870 = vmatpush1.msra.mxu0 %v3768
    %3871 = vmatprep.subr.mxu0 0.0
    %3872 = vmatpush1.msra.mxu0 %v3765
    %3873 = vmatprep.subr.mxu0 0.0
    %3874 = vmatpush1.msra.mxu0 %v3764
    %3875 = vmatprep.subr.mxu0 0.0
    %3876 = vmatpush1.msra.mxu0 %v3763
    %3877 = vmatprep.subr.mxu0 0.0
    %3878 = vmatpush2.msra.mxu0 0.0
    %3879 = vmatprep.subr.mxu0 0.0
    %3880 = vmatpush2.msra.mxu0 0.0
    %3881 = vmatprep.subr.mxu0 0.0
    %3882 = vmatpush2.msra.mxu0 0.0
    %3883 = vmatprep.subr.mxu0 0.0
    %3884 = vmatpush2.msra.mxu0 0.0
    %3885 = vmatprep.subr.mxu0 0.0
    %3886 = vmatpush2.msra.mxu0 0.0
    %3887 = vmatprep.subr.mxu0 0.0
    %3888 = vmatpush2.msra.mxu0 0.0
    %3889 = vmatprep.subr.mxu0 0.0
    %3890 = vmatpush2.msra.mxu0 0.0
    %3891 = vmatprep.subr.mxu0 0.0
    %3892 = vmatpush2.msra.mxu0 0.0
    %3893 = vmatprep.subr.mxu0 0.0
    %3894 = vmatpush2.msra.mxu0 0.0
    %3895 = vmatprep.subr.mxu0 0.0
    %3896 = vmatpush2.msra.mxu0 0.0
    %3897 = vmatprep.subr.mxu0 0.0
    %3898 = vmatpush2.msra.mxu0 0.0
    %3899 = vmatprep.subr.mxu0 0.0
    %3900 = vmatpush2.msra.mxu0 0.0
    %3901 = vmatprep.subr.mxu0 0.0
    %3902 = vmatpush2.msra.mxu0 0.0
    %3903 = vmatprep.subr.mxu0 0.0
    %3904 = vmatpush2.msra.mxu0 0.0
    %3905 = vmatprep.subr.mxu0 0.0
    %3906 = vmatpush2.msra.mxu0 0.0
    %3907 = vmatprep.subr.mxu0 0.0
    %3908 = vmatpush2.msra.mxu0 0.0
    %3909 = vmatprep.mubr.f32.mxu0 0.0
    %3910 = vmatmul.mubr.f32.gmra.mxu0 %v1306
    %v3911 = vpop.f32.mrf.mxu0
    %v3912 = vadd.f32 0.0, %v3911
    %v3913 = vpop.f32.mrf.mxu0
    %3914 = vmatprep.mubr.f32.mxu0 0.0
    %3915 = vmatmul.mubr.f32.gmra.mxu0 %v1309
    %v3916 = vpop.f32.mrf.mxu0
    %v3917 = vadd.f32 0.0, %v3916
    %v3918 = vpop.f32.mrf.mxu0
    %3919 = vdwg.mxu0
    %3920 = vmatprep.subr.mxu0 0.0
    %3921 = vmatpush1.msra.mxu0 0.0
    %3922 = vmatprep.subr.mxu0 0.0
    %3923 = vmatpush1.msra.mxu0 0.0
    %3924 = vmatprep.subr.mxu0 0.0
    %3925 = vmatpush1.msra.mxu0 0.0
    %3926 = vmatprep.subr.mxu0 0.0
    %3927 = vmatpush1.msra.mxu0 0.0
    %3928 = vmatprep.subr.mxu0 0.0
    %3929 = vmatpush1.msra.mxu0 0.0
    %3930 = vmatprep.subr.mxu0 0.0
    %3931 = vmatpush1.msra.mxu0 0.0
    %3932 = vmatprep.subr.mxu0 0.0
    %3933 = vmatpush1.msra.mxu0 0.0
    %3934 = vmatprep.subr.mxu0 0.0
    %3935 = vmatpush1.msra.mxu0 0.0
    %3936 = vmatprep.subr.mxu0 0.0
    %3937 = vmatpush1.msra.mxu0 0.0
    %3938 = vmatprep.subr.mxu0 0.0
    %3939 = vmatpush1.msra.mxu0 0.0
    %3940 = vmatprep.subr.mxu0 0.0
    %3941 = vmatpush1.msra.mxu0 0.0
    %3942 = vmatprep.subr.mxu0 0.0
    %3943 = vmatpush1.msra.mxu0 0.0
    %3944 = vmatprep.subr.mxu0 0.0
    %3945 = vmatpush1.msra.mxu0 %v3768
    %3946 = vmatprep.subr.mxu0 0.0
    %3947 = vmatpush1.msra.mxu0 %v3765
    %3948 = vmatprep.subr.mxu0 0.0
    %3949 = vmatpush1.msra.mxu0 %v3764
    %3950 = vmatprep.subr.mxu0 0.0
    %3951 = vmatpush1.msra.mxu0 %v3763
    %3952 = vmatprep.subr.mxu0 0.0
    %3953 = vmatpush2.msra.mxu0 0.0
    %3954 = vmatprep.subr.mxu0 0.0
    %3955 = vmatpush2.msra.mxu0 0.0
    %3956 = vmatprep.subr.mxu0 0.0
    %3957 = vmatpush2.msra.mxu0 0.0
    %3958 = vmatprep.subr.mxu0 0.0
    %3959 = vmatpush2.msra.mxu0 0.0
    %3960 = vmatprep.subr.mxu0 0.0
    %3961 = vmatpush2.msra.mxu0 0.0
    %3962 = vmatprep.subr.mxu0 0.0
    %3963 = vmatpush2.msra.mxu0 0.0
    %3964 = vmatprep.subr.mxu0 0.0
    %3965 = vmatpush2.msra.mxu0 0.0
    %3966 = vmatprep.subr.mxu0 0.0
    %3967 = vmatpush2.msra.mxu0 0.0
    %3968 = vmatprep.subr.mxu0 0.0
    %3969 = vmatpush2.msra.mxu0 0.0
    %3970 = vmatprep.subr.mxu0 0.0
    %3971 = vmatpush2.msra.mxu0 0.0
    %3972 = vmatprep.subr.mxu0 0.0
    %3973 = vmatpush2.msra.mxu0 0.0
    %3974 = vmatprep.subr.mxu0 0.0
    %3975 = vmatpush2.msra.mxu0 0.0
    %3976 = vmatprep.subr.mxu0 0.0
    %3977 = vmatpush2.msra.mxu0 0.0
    %3978 = vmatprep.subr.mxu0 0.0
    %3979 = vmatpush2.msra.mxu0 0.0
    %3980 = vmatprep.subr.mxu0 0.0
    %3981 = vmatpush2.msra.mxu0 0.0
    %3982 = vmatprep.subr.mxu0 0.0
    %3983 = vmatpush2.msra.mxu0 0.0
    %3984 = vmatprep.mubr.f32.mxu0 0.0
    %3985 = vmatmul.mubr.f32.gmra.mxu0 %v1390
    %v3986 = vpop.f32.mrf.mxu0
    %v3987 = vadd.f32 0.0, %v3986
    %v3988 = vpop.f32.mrf.mxu0
    %3989 = vmatprep.mubr.f32.mxu0 0.0
    %3990 = vmatmul.mubr.f32.gmra.mxu0 %v1393
    %v3991 = vpop.f32.mrf.mxu0
    %v3992 = vadd.f32 0.0, %v3991
    %v3993 = vpop.f32.mrf.mxu0
    %3994 = vdwg.mxu0
    %v3995 = vld [vmem:[#allocation12] sm:$0xff]
    %v3996 = vld [vmem:[#allocation12 + $0x8] sm:$0xff]
    %v3997 = vld [vmem:[#allocation12 + $0x10] sm:$0xff]
    %v3998 = vld [vmem:[#allocation12 + $0x18] sm:$0xff]
    %v3999 = vld [vmem:[#allocation12 + $0x20] sm:$0xff]
    %v4000 = vld [vmem:[#allocation12 + $0x28] sm:$0xff]
    %v4001 = vld [vmem:[#allocation12 + $0x30] sm:$0xff]
    %v4002 = vld [vmem:[#allocation12 + $0x38] sm:$0xff]
    %v4003 = vld [vmem:[#allocation12 + $0x40] sm:$0xff]
    %v4004 = vld [vmem:[#allocation12 + $0x48] sm:$0xff]
    %v4005 = vld [vmem:[#allocation12 + $0x50] sm:$0xff]
    %v4006 = vld [vmem:[#allocation12 + $0x58] sm:$0xff]
    %v4007 = vld [vmem:[#allocation12 + $0x60] sm:$0xff]
    %v4008 = vld [vmem:[#allocation12 + $0x68] sm:$0xff]
    %v4009 = vld [vmem:[#allocation12 + $0x70] sm:$0xff]
    %v4010 = vld [vmem:[#allocation12 + $0x78] sm:$0xff]
    %v4011 = vld [vmem:[#allocation12 + $0x80] sm:$0xff]
    %v4012 = vld [vmem:[#allocation12 + $0x88] sm:$0xff]
    %v4013 = vld [vmem:[#allocation12 + $0x90] sm:$0xff]
    %v4014 = vld [vmem:[#allocation12 + $0x98] sm:$0xff]
    %v4015 = vld [vmem:[#allocation12 + $0xa0] sm:$0xff]
    %v4016 = vld [vmem:[#allocation12 + $0xa8] sm:$0xff]
    %s4017 = scalar_lea.vmem [#allocation12], 176
    %v4018 = vld [vmem:[%s4017] sm:$0xff]
    %v4019 = vld [vmem:[%s4017 + $0x8] sm:$0xff]
    %v4020 = vld [vmem:[%s4017 + $0x10] sm:$0xff]
    %v4021 = vld [vmem:[%s4017 + $0x18] sm:$0xff]
    %v4022 = vld [vmem:[%s4017 + $0x20] sm:$0xff]
    %v4023 = vld [vmem:[%s4017 + $0x28] sm:$0xff]
    %v4024 = vld [vmem:[%s4017 + $0x30] sm:$0xff]
    %v4025 = vld [vmem:[%s4017 + $0x38] sm:$0xff]
    %v4026 = vld [vmem:[%s4017 + $0x40] sm:$0xff]
    %v4027 = vld [vmem:[%s4017 + $0x48] sm:$0xff]
    %v4028 = vld [vmem:[%s4017 + $0x50] sm:$0xff]
    %v4029 = vld [vmem:[%s4017 + $0x58] sm:$0xff]
    %v4030 = vld [vmem:[%s4017 + $0x60] sm:$0xff]
    %v4031 = vld [vmem:[%s4017 + $0x68] sm:$0xff]
    %v4032 = vld [vmem:[%s4017 + $0x70] sm:$0xff]
    %v4033 = vld [vmem:[%s4017 + $0x78] sm:$0xff]
    %v4034 = vld [vmem:[%s4017 + $0x80] sm:$0xff]
    %v4035 = vld [vmem:[%s4017 + $0x88] sm:$0xff]
    %v4036 = vld [vmem:[%s4017 + $0x90] sm:$0xff]
    %v4037 = vld [vmem:[%s4017 + $0x98] sm:$0xff]
    %v4038 = vld [vmem:[%s4017 + $0xa0] sm:$0xff]
    %v4039 = vld [vmem:[%s4017 + $0xa8] sm:$0xff]
    %v4041 = vsel %vm1515, %v3912, 0
    %v4044 = vsel %vm1515, %v3917, 0
    %4046 = vmatprep.subr.mxu0 0.0
    %4047 = vmatpush1.msra.mxu0 0.0
    %4048 = vmatprep.subr.mxu0 0.0
    %4049 = vmatpush1.msra.mxu0 0.0
    %4050 = vmatprep.subr.mxu0 0.0
    %4051 = vmatpush1.msra.mxu0 0.0
    %4052 = vmatprep.subr.mxu0 0.0
    %4053 = vmatpush1.msra.mxu0 0.0
    %4054 = vmatprep.subr.mxu0 0.0
    %4055 = vmatpush1.msra.mxu0 0.0
    %4056 = vmatprep.subr.mxu0 %v4039
    %4057 = vmatpush1.msra.mxu0 %v4038
    %4058 = vmatprep.subr.mxu0 %v4037
    %4059 = vmatpush1.msra.mxu0 %v4036
    %4060 = vmatprep.subr.mxu0 %v4035
    %4061 = vmatpush1.msra.mxu0 %v4034
    %4062 = vmatprep.subr.mxu0 %v4033
    %4063 = vmatpush1.msra.mxu0 %v4032
    %4064 = vmatprep.subr.mxu0 %v4031
    %4065 = vmatpush1.msra.mxu0 %v4030
    %4066 = vmatprep.subr.mxu0 %v4029
    %4067 = vmatpush1.msra.mxu0 %v4028
    %4068 = vmatprep.subr.mxu0 %v4027
    %4069 = vmatpush1.msra.mxu0 %v4026
    %4070 = vmatprep.subr.mxu0 %v4025
    %4071 = vmatpush1.msra.mxu0 %v4024
    %4072 = vmatprep.subr.mxu0 %v4023
    %4073 = vmatpush1.msra.mxu0 %v4022
    %4074 = vmatprep.subr.mxu0 %v4021
    %4075 = vmatpush1.msra.mxu0 %v4020
    %4076 = vmatprep.subr.mxu0 %v4019
    %4077 = vmatpush1.msra.mxu0 %v4018
    %4078 = vmatprep.subr.mxu0 0.0
    %4079 = vmatpush2.msra.mxu0 0.0
    %4080 = vmatprep.subr.mxu0 0.0
    %4081 = vmatpush2.msra.mxu0 0.0
    %4082 = vmatprep.subr.mxu0 0.0
    %4083 = vmatpush2.msra.mxu0 0.0
    %4084 = vmatprep.subr.mxu0 0.0
    %4085 = vmatpush2.msra.mxu0 0.0
    %4086 = vmatprep.subr.mxu0 0.0
    %4087 = vmatpush2.msra.mxu0 0.0
    %4088 = vmatprep.subr.mxu0 0.0
    %4089 = vmatpush2.msra.mxu0 0.0
    %4090 = vmatprep.subr.mxu0 0.0
    %4091 = vmatpush2.msra.mxu0 0.0
    %4092 = vmatprep.subr.mxu0 0.0
    %4093 = vmatpush2.msra.mxu0 0.0
    %4094 = vmatprep.subr.mxu0 0.0
    %4095 = vmatpush2.msra.mxu0 0.0
    %4096 = vmatprep.subr.mxu0 0.0
    %4097 = vmatpush2.msra.mxu0 0.0
    %4098 = vmatprep.subr.mxu0 0.0
    %4099 = vmatpush2.msra.mxu0 0.0
    %4100 = vmatprep.subr.mxu0 0.0
    %4101 = vmatpush2.msra.mxu0 0.0
    %4102 = vmatprep.subr.mxu0 0.0
    %4103 = vmatpush2.msra.mxu0 0.0
    %4104 = vmatprep.subr.mxu0 0.0
    %4105 = vmatpush2.msra.mxu0 0.0
    %4106 = vmatprep.subr.mxu0 0.0
    %4107 = vmatpush2.msra.mxu0 0.0
    %4108 = vmatprep.subr.mxu0 0.0
    %4109 = vmatpush2.msra.mxu0 0.0
    %4110 = vmatprep.mubr.f32.mxu0 0.0
    %4111 = vmatmul.mubr.f32.gmra.mxu0 %v4041
    %v4112 = vpop.f32.mrf.mxu0
    %v4113 = vadd.f32 0.0, %v4112
    %v4114 = vpop.f32.mrf.mxu0
    %v4115 = vadd.f32 0.0, %v4114
    %4116 = vmatprep.mubr.f32.mxu0 0.0
    %4117 = vmatmul.mubr.f32.gmra.mxu0 %v4044
    %v4118 = vpop.f32.mrf.mxu0
    %v4119 = vadd.f32 0.0, %v4118
    %v4120 = vpop.f32.mrf.mxu0
    %v4121 = vadd.f32 0.0, %v4120
    %4122 = vdwg.mxu0
    %v4124 = vsel %vm1515, %v3837, 0
    %v4127 = vsel %vm1515, %v3842, 0
    %4129 = vmatprep.subr.mxu0 0.0
    %4130 = vmatpush1.msra.mxu0 0.0
    %4131 = vmatprep.subr.mxu0 0.0
    %4132 = vmatpush1.msra.mxu0 0.0
    %4133 = vmatprep.subr.mxu0 0.0
    %4134 = vmatpush1.msra.mxu0 0.0
    %4135 = vmatprep.subr.mxu0 0.0
    %4136 = vmatpush1.msra.mxu0 0.0
    %4137 = vmatprep.subr.mxu0 0.0
    %4138 = vmatpush1.msra.mxu0 0.0
    %4139 = vmatprep.subr.mxu0 %v4016
    %4140 = vmatpush1.msra.mxu0 %v4015
    %4141 = vmatprep.subr.mxu0 %v4014
    %4142 = vmatpush1.msra.mxu0 %v4013
    %4143 = vmatprep.subr.mxu0 %v4012
    %4144 = vmatpush1.msra.mxu0 %v4011
    %4145 = vmatprep.subr.mxu0 %v4010
    %4146 = vmatpush1.msra.mxu0 %v4009
    %4147 = vmatprep.subr.mxu0 %v4008
    %4148 = vmatpush1.msra.mxu0 %v4007
    %4149 = vmatprep.subr.mxu0 %v4006
    %4150 = vmatpush1.msra.mxu0 %v4005
    %4151 = vmatprep.subr.mxu0 %v4004
    %4152 = vmatpush1.msra.mxu0 %v4003
    %4153 = vmatprep.subr.mxu0 %v4002
    %4154 = vmatpush1.msra.mxu0 %v4001
    %4155 = vmatprep.subr.mxu0 %v4000
    %4156 = vmatpush1.msra.mxu0 %v3999
    %4157 = vmatprep.subr.mxu0 %v3998
    %4158 = vmatpush1.msra.mxu0 %v3997
    %4159 = vmatprep.subr.mxu0 %v3996
    %4160 = vmatpush1.msra.mxu0 %v3995
    %4161 = vmatprep.subr.mxu0 0.0
    %4162 = vmatpush2.msra.mxu0 0.0
    %4163 = vmatprep.subr.mxu0 0.0
    %4164 = vmatpush2.msra.mxu0 0.0
    %4165 = vmatprep.subr.mxu0 0.0
    %4166 = vmatpush2.msra.mxu0 0.0
    %4167 = vmatprep.subr.mxu0 0.0
    %4168 = vmatpush2.msra.mxu0 0.0
    %4169 = vmatprep.subr.mxu0 0.0
    %4170 = vmatpush2.msra.mxu0 0.0
    %4171 = vmatprep.subr.mxu0 0.0
    %4172 = vmatpush2.msra.mxu0 0.0
    %4173 = vmatprep.subr.mxu0 0.0
    %4174 = vmatpush2.msra.mxu0 0.0
    %4175 = vmatprep.subr.mxu0 0.0
    %4176 = vmatpush2.msra.mxu0 0.0
    %4177 = vmatprep.subr.mxu0 0.0
    %4178 = vmatpush2.msra.mxu0 0.0
    %4179 = vmatprep.subr.mxu0 0.0
    %4180 = vmatpush2.msra.mxu0 0.0
    %4181 = vmatprep.subr.mxu0 0.0
    %4182 = vmatpush2.msra.mxu0 0.0
    %4183 = vmatprep.subr.mxu0 0.0
    %4184 = vmatpush2.msra.mxu0 0.0
    %4185 = vmatprep.subr.mxu0 0.0
    %4186 = vmatpush2.msra.mxu0 0.0
    %4187 = vmatprep.subr.mxu0 0.0
    %4188 = vmatpush2.msra.mxu0 0.0
    %4189 = vmatprep.subr.mxu0 0.0
    %4190 = vmatpush2.msra.mxu0 0.0
    %4191 = vmatprep.subr.mxu0 0.0
    %4192 = vmatpush2.msra.mxu0 0.0
    %4193 = vmatprep.mubr.f32.mxu0 0.0
    %4194 = vmatmul.mubr.f32.gmra.mxu0 %v4124
    %v4195 = vpop.f32.mrf.mxu0
    %v4196 = vadd.f32 %v4113, %v4195
    %v4197 = vpop.f32.mrf.mxu0
    %v4198 = vadd.f32 %v4115, %v4197
    %4199 = vmatprep.mubr.f32.mxu0 0.0
    %4200 = vmatmul.mubr.f32.gmra.mxu0 %v4127
    %v4201 = vpop.f32.mrf.mxu0
    %v4202 = vadd.f32 %v4119, %v4201
    %v4203 = vpop.f32.mrf.mxu0
    %v4204 = vadd.f32 %v4121, %v4203
    %4205 = vdwg.mxu0
    %s4206 = scalar_lea.vmem [#allocation12], 352
    %v4207 = vld [vmem:[%s4206] sm:$0xff]
    %v4208 = vld [vmem:[%s4206 + $0x8] sm:$0xff]
    %v4209 = vld [vmem:[%s4206 + $0x10] sm:$0xff]
    %v4210 = vld [vmem:[%s4206 + $0x18] sm:$0xff]
    %v4211 = vld [vmem:[%s4206 + $0x20] sm:$0xff]
    %v4212 = vld [vmem:[%s4206 + $0x28] sm:$0xff]
    %v4213 = vld [vmem:[%s4206 + $0x30] sm:$0xff]
    %v4214 = vld [vmem:[%s4206 + $0x38] sm:$0xff]
    %v4215 = vld [vmem:[%s4206 + $0x40] sm:$0xff]
    %v4216 = vld [vmem:[%s4206 + $0x48] sm:$0xff]
    %v4217 = vld [vmem:[%s4206 + $0x50] sm:$0xff]
    %v4218 = vld [vmem:[%s4206 + $0x58] sm:$0xff]
    %v4219 = vld [vmem:[%s4206 + $0x60] sm:$0xff]
    %v4220 = vld [vmem:[%s4206 + $0x68] sm:$0xff]
    %v4221 = vld [vmem:[%s4206 + $0x70] sm:$0xff]
    %v4222 = vld [vmem:[%s4206 + $0x78] sm:$0xff]
    %v4223 = vld [vmem:[%s4206 + $0x80] sm:$0xff]
    %v4224 = vld [vmem:[%s4206 + $0x88] sm:$0xff]
    %v4225 = vld [vmem:[%s4206 + $0x90] sm:$0xff]
    %v4226 = vld [vmem:[%s4206 + $0x98] sm:$0xff]
    %v4227 = vld [vmem:[%s4206 + $0xa0] sm:$0xff]
    %v4228 = vld [vmem:[%s4206 + $0xa8] sm:$0xff]
    %v4230 = vsel %vm1515, %v3987, 0
    %v4233 = vsel %vm1515, %v3992, 0
    %4235 = vmatprep.subr.mxu0 0.0
    %4236 = vmatpush1.msra.mxu0 0.0
    %4237 = vmatprep.subr.mxu0 0.0
    %4238 = vmatpush1.msra.mxu0 0.0
    %4239 = vmatprep.subr.mxu0 0.0
    %4240 = vmatpush1.msra.mxu0 0.0
    %4241 = vmatprep.subr.mxu0 0.0
    %4242 = vmatpush1.msra.mxu0 0.0
    %4243 = vmatprep.subr.mxu0 0.0
    %4244 = vmatpush1.msra.mxu0 0.0
    %4245 = vmatprep.subr.mxu0 %v4228
    %4246 = vmatpush1.msra.mxu0 %v4227
    %4247 = vmatprep.subr.mxu0 %v4226
    %4248 = vmatpush1.msra.mxu0 %v4225
    %4249 = vmatprep.subr.mxu0 %v4224
    %4250 = vmatpush1.msra.mxu0 %v4223
    %4251 = vmatprep.subr.mxu0 %v4222
    %4252 = vmatpush1.msra.mxu0 %v4221
    %4253 = vmatprep.subr.mxu0 %v4220
    %4254 = vmatpush1.msra.mxu0 %v4219
    %4255 = vmatprep.subr.mxu0 %v4218
    %4256 = vmatpush1.msra.mxu0 %v4217
    %4257 = vmatprep.subr.mxu0 %v4216
    %4258 = vmatpush1.msra.mxu0 %v4215
    %4259 = vmatprep.subr.mxu0 %v4214
    %4260 = vmatpush1.msra.mxu0 %v4213
    %4261 = vmatprep.subr.mxu0 %v4212
    %4262 = vmatpush1.msra.mxu0 %v4211
    %4263 = vmatprep.subr.mxu0 %v4210
    %4264 = vmatpush1.msra.mxu0 %v4209
    %4265 = vmatprep.subr.mxu0 %v4208
    %4266 = vmatpush1.msra.mxu0 %v4207
    %4267 = vmatprep.subr.mxu0 0.0
    %4268 = vmatpush2.msra.mxu0 0.0
    %4269 = vmatprep.subr.mxu0 0.0
    %4270 = vmatpush2.msra.mxu0 0.0
    %4271 = vmatprep.subr.mxu0 0.0
    %4272 = vmatpush2.msra.mxu0 0.0
    %4273 = vmatprep.subr.mxu0 0.0
    %4274 = vmatpush2.msra.mxu0 0.0
    %4275 = vmatprep.subr.mxu0 0.0
    %4276 = vmatpush2.msra.mxu0 0.0
    %4277 = vmatprep.subr.mxu0 0.0
    %4278 = vmatpush2.msra.mxu0 0.0
    %4279 = vmatprep.subr.mxu0 0.0
    %4280 = vmatpush2.msra.mxu0 0.0
    %4281 = vmatprep.subr.mxu0 0.0
    %4282 = vmatpush2.msra.mxu0 0.0
    %4283 = vmatprep.subr.mxu0 0.0
    %4284 = vmatpush2.msra.mxu0 0.0
    %4285 = vmatprep.subr.mxu0 0.0
    %4286 = vmatpush2.msra.mxu0 0.0
    %4287 = vmatprep.subr.mxu0 0.0
    %4288 = vmatpush2.msra.mxu0 0.0
    %4289 = vmatprep.subr.mxu0 0.0
    %4290 = vmatpush2.msra.mxu0 0.0
    %4291 = vmatprep.subr.mxu0 0.0
    %4292 = vmatpush2.msra.mxu0 0.0
    %4293 = vmatprep.subr.mxu0 0.0
    %4294 = vmatpush2.msra.mxu0 0.0
    %4295 = vmatprep.subr.mxu0 0.0
    %4296 = vmatpush2.msra.mxu0 0.0
    %4297 = vmatprep.subr.mxu0 0.0
    %4298 = vmatpush2.msra.mxu0 0.0
    %4299 = vmatprep.mubr.f32.mxu0 0.0
    %4300 = vmatmul.mubr.f32.gmra.mxu0 %v4230
    %v4301 = vpop.f32.mrf.mxu0
    %v4302 = vadd.f32 0.0, %v4301
    %v4303 = vpop.f32.mrf.mxu0
    %v4304 = vadd.f32 0.0, %v4303
    %4305 = vmatprep.mubr.f32.mxu0 0.0
    %4306 = vmatmul.mubr.f32.gmra.mxu0 %v4233
    %v4307 = vpop.f32.mrf.mxu0
    %v4308 = vadd.f32 0.0, %v4307
    %v4309 = vpop.f32.mrf.mxu0
    %v4310 = vadd.f32 0.0, %v4309
    %4311 = vdwg.mxu0
    %v4312 = vadd.f32 %v4196, %v4302
    %v4313 = vadd.f32 %v4198, %v4304
    %v4314 = vadd.f32 %v4202, %v4308
    %v4315 = vadd.f32 %v4204, %v4310
    %v4316 = vld [vmem:[#allocation13] sm:$0x3]
    %v4318 = vlaneseq
    %v4319 = vshrl.u32 %v4318, 7
    %v4320 = vsub.s32 0, %v4319
    %v4321 = vrot.slane %v4316, %v4320
    %v4322 = vlaneseq
    %v4323 = vshrl.u32 %v4322, 7
    %v4324 = vsub.s32 1, %v4323
    %v4325 = vrot.slane %v4316, %v4324
    %v4328 = vadd.f32 %v4312, %v4321
    %v4329 = vadd.f32 %v4313, %v4325
    %v4330 = vadd.f32 %v4314, %v4321
    %v4331 = vadd.f32 %v4315, %v4325
    %vm4332 = vcmp.ge.f32.partialorder %v4328, 0.0
    %vm4333 = vcmp.ge.f32.partialorder %v4329, 0.0
    %vm4334 = vcmp.ge.f32.partialorder %v4330, 0.0
    %vm4335 = vcmp.ge.f32.partialorder %v4331, 0.0
    %v4336 = vmul.f32 %v4328, 0.01
    %v4337 = vmul.f32 %v4329, 0.01
    %v4338 = vmul.f32 %v4330, 0.01
    %v4339 = vmul.f32 %v4331, 0.01
    %v4340 = vsel %vm4332, %v4328, %v4336
    %v4341 = vsel %vm4333, %v4329, %v4337
    %v4342 = vsel %vm4334, %v4330, %v4338
    %v4343 = vsel %vm4335, %v4331, %v4339
    %v4345 = vsel %vm1223, %v4342, 0
    %v4348 = vsel %vm1223, %v4343, 0
    %4350 = vmatprep.subr.mxu0 0.0
    %4351 = vmatpush1.msra.mxu0 0.0
    %4352 = vmatprep.subr.mxu0 0.0
    %4353 = vmatpush1.msra.mxu0 0.0
    %4354 = vmatprep.subr.mxu0 0.0
    %4355 = vmatpush1.msra.mxu0 0.0
    %4356 = vmatprep.subr.mxu0 0.0
    %4357 = vmatpush1.msra.mxu0 0.0
    %4358 = vmatprep.subr.mxu0 0.0
    %4359 = vmatpush1.msra.mxu0 0.0
    %4360 = vmatprep.subr.mxu0 0.0
    %4361 = vmatpush1.msra.mxu0 0.0
    %4362 = vmatprep.subr.mxu0 0.0
    %4363 = vmatpush1.msra.mxu0 0.0
    %4364 = vmatprep.subr.mxu0 0.0
    %4365 = vmatpush1.msra.mxu0 0.0
    %4366 = vmatprep.subr.mxu0 0.0
    %4367 = vmatpush1.msra.mxu0 0.0
    %4368 = vmatprep.subr.mxu0 0.0
    %4369 = vmatpush1.msra.mxu0 0.0
    %4370 = vmatprep.subr.mxu0 0.0
    %4371 = vmatpush1.msra.mxu0 0.0
    %4372 = vmatprep.subr.mxu0 0.0
    %4373 = vmatpush1.msra.mxu0 0.0
    %4374 = vmatprep.subr.mxu0 0.0
    %4375 = vmatpush1.msra.mxu0 0.0
    %4376 = vmatprep.subr.mxu0 0.0
    %4377 = vmatpush1.msra.mxu0 0.0
    %4378 = vmatprep.subr.mxu0 %v4348
    %4379 = vmatpush1.msra.mxu0 %v4345
    %4380 = vmatprep.subr.mxu0 %v4341
    %4381 = vmatpush1.msra.mxu0 %v4340
    %4382 = vmatprep.subr.mxu0 0.0
    %4383 = vmatpush2.msra.mxu0 0.0
    %4384 = vmatprep.subr.mxu0 0.0
    %4385 = vmatpush2.msra.mxu0 0.0
    %4386 = vmatprep.subr.mxu0 0.0
    %4387 = vmatpush2.msra.mxu0 0.0
    %4388 = vmatprep.subr.mxu0 0.0
    %4389 = vmatpush2.msra.mxu0 0.0
    %4390 = vmatprep.subr.mxu0 0.0
    %4391 = vmatpush2.msra.mxu0 0.0
    %4392 = vmatprep.subr.mxu0 0.0
    %4393 = vmatpush2.msra.mxu0 0.0
    %4394 = vmatprep.subr.mxu0 0.0
    %4395 = vmatpush2.msra.mxu0 0.0
    %4396 = vmatprep.subr.mxu0 0.0
    %4397 = vmatpush2.msra.mxu0 0.0
    %4398 = vmatprep.subr.mxu0 0.0
    %4399 = vmatpush2.msra.mxu0 0.0
    %4400 = vmatprep.subr.mxu0 0.0
    %4401 = vmatpush2.msra.mxu0 0.0
    %4402 = vmatprep.subr.mxu0 0.0
    %4403 = vmatpush2.msra.mxu0 0.0
    %4404 = vmatprep.subr.mxu0 0.0
    %4405 = vmatpush2.msra.mxu0 0.0
    %4406 = vmatprep.subr.mxu0 0.0
    %4407 = vmatpush2.msra.mxu0 0.0
    %4408 = vmatprep.subr.mxu0 0.0
    %4409 = vmatpush2.msra.mxu0 0.0
    %4410 = vmatprep.subr.mxu0 0.0
    %4411 = vmatpush2.msra.mxu0 0.0
    %4412 = vmatprep.subr.mxu0 0.0
    %4413 = vmatpush2.msra.mxu0 0.0
    %4414 = vmatprep.mubr.f32.mxu0 0.0
    %4415 = vmatmul.mubr.f32.gmra.mxu0 %v1824
    %v4416 = vpop.f32.mrf.mxu0
    %v4417 = vadd.f32 0.0, %v4416
    %v4418 = vpop.f32.mrf.mxu0
    %v4419 = vadd.f32 0.0, %v4418
    %4420 = vmatprep.mubr.f32.mxu0 0.0
    %4421 = vmatmul.mubr.f32.gmra.mxu0 %v1827
    %v4422 = vpop.f32.mrf.mxu0
    %v4423 = vadd.f32 0.0, %v4422
    %v4424 = vpop.f32.mrf.mxu0
    %v4425 = vadd.f32 0.0, %v4424
    %4426 = vdwg.mxu0
    %4427 = vmatprep.subr.mxu0 0.0
    %4428 = vmatpush1.msra.mxu0 0.0
    %4429 = vmatprep.subr.mxu0 0.0
    %4430 = vmatpush1.msra.mxu0 0.0
    %4431 = vmatprep.subr.mxu0 0.0
    %4432 = vmatpush1.msra.mxu0 0.0
    %4433 = vmatprep.subr.mxu0 0.0
    %4434 = vmatpush1.msra.mxu0 0.0
    %4435 = vmatprep.subr.mxu0 0.0
    %4436 = vmatpush1.msra.mxu0 0.0
    %4437 = vmatprep.subr.mxu0 0.0
    %4438 = vmatpush1.msra.mxu0 0.0
    %4439 = vmatprep.subr.mxu0 0.0
    %4440 = vmatpush1.msra.mxu0 0.0
    %4441 = vmatprep.subr.mxu0 0.0
    %4442 = vmatpush1.msra.mxu0 0.0
    %4443 = vmatprep.subr.mxu0 0.0
    %4444 = vmatpush1.msra.mxu0 0.0
    %4445 = vmatprep.subr.mxu0 0.0
    %4446 = vmatpush1.msra.mxu0 0.0
    %4447 = vmatprep.subr.mxu0 0.0
    %4448 = vmatpush1.msra.mxu0 0.0
    %4449 = vmatprep.subr.mxu0 0.0
    %4450 = vmatpush1.msra.mxu0 0.0
    %4451 = vmatprep.subr.mxu0 0.0
    %4452 = vmatpush1.msra.mxu0 0.0
    %4453 = vmatprep.subr.mxu0 0.0
    %4454 = vmatpush1.msra.mxu0 0.0
    %4455 = vmatprep.subr.mxu0 %v4348
    %4456 = vmatpush1.msra.mxu0 %v4345
    %4457 = vmatprep.subr.mxu0 %v4341
    %4458 = vmatpush1.msra.mxu0 %v4340
    %4459 = vmatprep.subr.mxu0 0.0
    %4460 = vmatpush2.msra.mxu0 0.0
    %4461 = vmatprep.subr.mxu0 0.0
    %4462 = vmatpush2.msra.mxu0 0.0
    %4463 = vmatprep.subr.mxu0 0.0
    %4464 = vmatpush2.msra.mxu0 0.0
    %4465 = vmatprep.subr.mxu0 0.0
    %4466 = vmatpush2.msra.mxu0 0.0
    %4467 = vmatprep.subr.mxu0 0.0
    %4468 = vmatpush2.msra.mxu0 0.0
    %4469 = vmatprep.subr.mxu0 0.0
    %4470 = vmatpush2.msra.mxu0 0.0
    %4471 = vmatprep.subr.mxu0 0.0
    %4472 = vmatpush2.msra.mxu0 0.0
    %4473 = vmatprep.subr.mxu0 0.0
    %4474 = vmatpush2.msra.mxu0 0.0
    %4475 = vmatprep.subr.mxu0 0.0
    %4476 = vmatpush2.msra.mxu0 0.0
    %4477 = vmatprep.subr.mxu0 0.0
    %4478 = vmatpush2.msra.mxu0 0.0
    %4479 = vmatprep.subr.mxu0 0.0
    %4480 = vmatpush2.msra.mxu0 0.0
    %4481 = vmatprep.subr.mxu0 0.0
    %4482 = vmatpush2.msra.mxu0 0.0
    %4483 = vmatprep.subr.mxu0 0.0
    %4484 = vmatpush2.msra.mxu0 0.0
    %4485 = vmatprep.subr.mxu0 0.0
    %4486 = vmatpush2.msra.mxu0 0.0
    %4487 = vmatprep.subr.mxu0 0.0
    %4488 = vmatpush2.msra.mxu0 0.0
    %4489 = vmatprep.subr.mxu0 0.0
    %4490 = vmatpush2.msra.mxu0 0.0
    %4491 = vmatprep.mubr.f32.mxu0 0.0
    %4492 = vmatmul.mubr.f32.gmra.mxu0 %v1916
    %v4493 = vpop.f32.mrf.mxu0
    %v4494 = vadd.f32 0.0, %v4493
    %v4495 = vpop.f32.mrf.mxu0
    %v4496 = vadd.f32 0.0, %v4495
    %4497 = vmatprep.mubr.f32.mxu0 0.0
    %4498 = vmatmul.mubr.f32.gmra.mxu0 %v1919
    %v4499 = vpop.f32.mrf.mxu0
    %v4500 = vadd.f32 0.0, %v4499
    %v4501 = vpop.f32.mrf.mxu0
    %v4502 = vadd.f32 0.0, %v4501
    %4503 = vdwg.mxu0
    %4504 = vmatprep.subr.mxu0 0.0
    %4505 = vmatpush1.msra.mxu0 0.0
    %4506 = vmatprep.subr.mxu0 0.0
    %4507 = vmatpush1.msra.mxu0 0.0
    %4508 = vmatprep.subr.mxu0 0.0
    %4509 = vmatpush1.msra.mxu0 0.0
    %4510 = vmatprep.subr.mxu0 0.0
    %4511 = vmatpush1.msra.mxu0 0.0
    %4512 = vmatprep.subr.mxu0 0.0
    %4513 = vmatpush1.msra.mxu0 0.0
    %4514 = vmatprep.subr.mxu0 0.0
    %4515 = vmatpush1.msra.mxu0 0.0
    %4516 = vmatprep.subr.mxu0 0.0
    %4517 = vmatpush1.msra.mxu0 0.0
    %4518 = vmatprep.subr.mxu0 0.0
    %4519 = vmatpush1.msra.mxu0 0.0
    %4520 = vmatprep.subr.mxu0 0.0
    %4521 = vmatpush1.msra.mxu0 0.0
    %4522 = vmatprep.subr.mxu0 0.0
    %4523 = vmatpush1.msra.mxu0 0.0
    %4524 = vmatprep.subr.mxu0 0.0
    %4525 = vmatpush1.msra.mxu0 0.0
    %4526 = vmatprep.subr.mxu0 0.0
    %4527 = vmatpush1.msra.mxu0 0.0
    %4528 = vmatprep.subr.mxu0 0.0
    %4529 = vmatpush1.msra.mxu0 0.0
    %4530 = vmatprep.subr.mxu0 0.0
    %4531 = vmatpush1.msra.mxu0 0.0
    %4532 = vmatprep.subr.mxu0 %v4348
    %4533 = vmatpush1.msra.mxu0 %v4345
    %4534 = vmatprep.subr.mxu0 %v4341
    %4535 = vmatpush1.msra.mxu0 %v4340
    %4536 = vmatprep.subr.mxu0 0.0
    %4537 = vmatpush2.msra.mxu0 0.0
    %4538 = vmatprep.subr.mxu0 0.0
    %4539 = vmatpush2.msra.mxu0 0.0
    %4540 = vmatprep.subr.mxu0 0.0
    %4541 = vmatpush2.msra.mxu0 0.0
    %4542 = vmatprep.subr.mxu0 0.0
    %4543 = vmatpush2.msra.mxu0 0.0
    %4544 = vmatprep.subr.mxu0 0.0
    %4545 = vmatpush2.msra.mxu0 0.0
    %4546 = vmatprep.subr.mxu0 0.0
    %4547 = vmatpush2.msra.mxu0 0.0
    %4548 = vmatprep.subr.mxu0 0.0
    %4549 = vmatpush2.msra.mxu0 0.0
    %4550 = vmatprep.subr.mxu0 0.0
    %4551 = vmatpush2.msra.mxu0 0.0
    %4552 = vmatprep.subr.mxu0 0.0
    %4553 = vmatpush2.msra.mxu0 0.0
    %4554 = vmatprep.subr.mxu0 0.0
    %4555 = vmatpush2.msra.mxu0 0.0
    %4556 = vmatprep.subr.mxu0 0.0
    %4557 = vmatpush2.msra.mxu0 0.0
    %4558 = vmatprep.subr.mxu0 0.0
    %4559 = vmatpush2.msra.mxu0 0.0
    %4560 = vmatprep.subr.mxu0 0.0
    %4561 = vmatpush2.msra.mxu0 0.0
    %4562 = vmatprep.subr.mxu0 0.0
    %4563 = vmatpush2.msra.mxu0 0.0
    %4564 = vmatprep.subr.mxu0 0.0
    %4565 = vmatpush2.msra.mxu0 0.0
    %4566 = vmatprep.subr.mxu0 0.0
    %4567 = vmatpush2.msra.mxu0 0.0
    %4568 = vmatprep.mubr.f32.mxu0 0.0
    %4569 = vmatmul.mubr.f32.gmra.mxu0 %v2002
    %v4570 = vpop.f32.mrf.mxu0
    %v4571 = vadd.f32 0.0, %v4570
    %v4572 = vpop.f32.mrf.mxu0
    %v4573 = vadd.f32 0.0, %v4572
    %4574 = vmatprep.mubr.f32.mxu0 0.0
    %4575 = vmatmul.mubr.f32.gmra.mxu0 %v2005
    %v4576 = vpop.f32.mrf.mxu0
    %v4577 = vadd.f32 0.0, %v4576
    %v4578 = vpop.f32.mrf.mxu0
    %v4579 = vadd.f32 0.0, %v4578
    %4580 = vdwg.mxu0
    %v4581 = vld [vmem:[#allocation15] sm:$0xff]
    %v4582 = vld [vmem:[#allocation15 + $0x8] sm:$0xff]
    %v4583 = vld [vmem:[#allocation15 + $0x10] sm:$0xff]
    %v4584 = vld [vmem:[#allocation15 + $0x18] sm:$0xff]
    %v4585 = vld [vmem:[#allocation15 + $0x20] sm:$0xff]
    %v4586 = vld [vmem:[#allocation15 + $0x28] sm:$0xff]
    %v4587 = vld [vmem:[#allocation15 + $0x30] sm:$0xff]
    %v4588 = vld [vmem:[#allocation15 + $0x38] sm:$0xff]
    %v4589 = vld [vmem:[#allocation15 + $0x40] sm:$0xff]
    %v4590 = vld [vmem:[#allocation15 + $0x48] sm:$0xff]
    %v4591 = vld [vmem:[#allocation15 + $0x50] sm:$0xff]
    %v4592 = vld [vmem:[#allocation15 + $0x58] sm:$0xff]
    %v4593 = vld [vmem:[#allocation15 + $0x60] sm:$0xff]
    %v4594 = vld [vmem:[#allocation15 + $0x68] sm:$0xff]
    %v4595 = vld [vmem:[#allocation15 + $0x70] sm:$0xff]
    %v4596 = vld [vmem:[#allocation15 + $0x78] sm:$0xff]
    %v4597 = vld [vmem:[#allocation15 + $0x80] sm:$0xff]
    %v4598 = vld [vmem:[#allocation15 + $0x88] sm:$0xff]
    %v4599 = vld [vmem:[#allocation15 + $0x90] sm:$0xff]
    %v4600 = vld [vmem:[#allocation15 + $0x98] sm:$0xff]
    %v4601 = vld [vmem:[#allocation15 + $0xa0] sm:$0xff]
    %v4602 = vld [vmem:[#allocation15 + $0xa8] sm:$0xff]
    %v4603 = vld [vmem:[#allocation15 + $0xb0] sm:$0xff]
    %v4604 = vld [vmem:[#allocation15 + $0xb8] sm:$0xff]
    %v4605 = vld [vmem:[#allocation15 + $0xc0] sm:$0xff]
    %v4606 = vld [vmem:[#allocation15 + $0xc8] sm:$0xff]
    %v4607 = vld [vmem:[#allocation15 + $0xd0] sm:$0xff]
    %v4608 = vld [vmem:[#allocation15 + $0xd8] sm:$0xff]
    %v4609 = vld [vmem:[#allocation15 + $0xe0] sm:$0xff]
    %v4610 = vld [vmem:[#allocation15 + $0xe8] sm:$0xff]
    %v4611 = vld [vmem:[#allocation15 + $0xf0] sm:$0xff]
    %v4612 = vld [vmem:[#allocation15 + $0xf8] sm:$0xff]
    %v4613 = vld [vmem:[#allocation15 + $0x100] sm:$0xff]
    %v4614 = vld [vmem:[#allocation15 + $0x108] sm:$0xff]
    %v4615 = vld [vmem:[#allocation15 + $0x110] sm:$0xff]
    %v4616 = vld [vmem:[#allocation15 + $0x118] sm:$0xff]
    %v4617 = vld [vmem:[#allocation15 + $0x120] sm:$0xff]
    %v4618 = vld [vmem:[#allocation15 + $0x128] sm:$0xff]
    %v4619 = vld [vmem:[#allocation15 + $0x130] sm:$0xff]
    %v4620 = vld [vmem:[#allocation15 + $0x138] sm:$0xff]
    %v4621 = vld [vmem:[#allocation15 + $0x140] sm:$0xff]
    %v4622 = vld [vmem:[#allocation15 + $0x148] sm:$0xff]
    %v4623 = vld [vmem:[#allocation15 + $0x150] sm:$0xff]
    %v4624 = vld [vmem:[#allocation15 + $0x158] sm:$0xff]
    %s4625 = scalar_lea.vmem [#allocation15], 352
    %v4626 = vld [vmem:[%s4625] sm:$0xff]
    %v4627 = vld [vmem:[%s4625 + $0x8] sm:$0xff]
    %v4628 = vld [vmem:[%s4625 + $0x10] sm:$0xff]
    %v4629 = vld [vmem:[%s4625 + $0x18] sm:$0xff]
    %v4630 = vld [vmem:[%s4625 + $0x20] sm:$0xff]
    %v4631 = vld [vmem:[%s4625 + $0x28] sm:$0xff]
    %v4632 = vld [vmem:[%s4625 + $0x30] sm:$0xff]
    %v4633 = vld [vmem:[%s4625 + $0x38] sm:$0xff]
    %v4634 = vld [vmem:[%s4625 + $0x40] sm:$0xff]
    %v4635 = vld [vmem:[%s4625 + $0x48] sm:$0xff]
    %v4636 = vld [vmem:[%s4625 + $0x50] sm:$0xff]
    %v4637 = vld [vmem:[%s4625 + $0x58] sm:$0xff]
    %v4638 = vld [vmem:[%s4625 + $0x60] sm:$0xff]
    %v4639 = vld [vmem:[%s4625 + $0x68] sm:$0xff]
    %v4640 = vld [vmem:[%s4625 + $0x70] sm:$0xff]
    %v4641 = vld [vmem:[%s4625 + $0x78] sm:$0xff]
    %v4642 = vld [vmem:[%s4625 + $0x80] sm:$0xff]
    %v4643 = vld [vmem:[%s4625 + $0x88] sm:$0xff]
    %v4644 = vld [vmem:[%s4625 + $0x90] sm:$0xff]
    %v4645 = vld [vmem:[%s4625 + $0x98] sm:$0xff]
    %v4646 = vld [vmem:[%s4625 + $0xa0] sm:$0xff]
    %v4647 = vld [vmem:[%s4625 + $0xa8] sm:$0xff]
    %v4648 = vld [vmem:[%s4625 + $0xb0] sm:$0xff]
    %v4649 = vld [vmem:[%s4625 + $0xb8] sm:$0xff]
    %v4650 = vld [vmem:[%s4625 + $0xc0] sm:$0xff]
    %v4651 = vld [vmem:[%s4625 + $0xc8] sm:$0xff]
    %v4652 = vld [vmem:[%s4625 + $0xd0] sm:$0xff]
    %v4653 = vld [vmem:[%s4625 + $0xd8] sm:$0xff]
    %v4654 = vld [vmem:[%s4625 + $0xe0] sm:$0xff]
    %v4655 = vld [vmem:[%s4625 + $0xe8] sm:$0xff]
    %v4656 = vld [vmem:[%s4625 + $0xf0] sm:$0xff]
    %v4657 = vld [vmem:[%s4625 + $0xf8] sm:$0xff]
    %v4658 = vld [vmem:[%s4625 + $0x100] sm:$0xff]
    %v4659 = vld [vmem:[%s4625 + $0x108] sm:$0xff]
    %v4660 = vld [vmem:[%s4625 + $0x110] sm:$0xff]
    %v4661 = vld [vmem:[%s4625 + $0x118] sm:$0xff]
    %v4662 = vld [vmem:[%s4625 + $0x120] sm:$0xff]
    %v4663 = vld [vmem:[%s4625 + $0x128] sm:$0xff]
    %v4664 = vld [vmem:[%s4625 + $0x130] sm:$0xff]
    %v4665 = vld [vmem:[%s4625 + $0x138] sm:$0xff]
    %v4666 = vld [vmem:[%s4625 + $0x140] sm:$0xff]
    %v4667 = vld [vmem:[%s4625 + $0x148] sm:$0xff]
    %v4668 = vld [vmem:[%s4625 + $0x150] sm:$0xff]
    %v4669 = vld [vmem:[%s4625 + $0x158] sm:$0xff]
    %v4671 = vsel %vm2173, %v4496, 0
    %v4674 = vsel %vm2173, %v4502, 0
    %4676 = vmatprep.subr.mxu0 %v4657
    %4677 = vmatpush1.msra.mxu0 %v4656
    %4678 = vmatprep.subr.mxu0 %v4655
    %4679 = vmatpush1.msra.mxu0 %v4654
    %4680 = vmatprep.subr.mxu0 %v4653
    %4681 = vmatpush1.msra.mxu0 %v4652
    %4682 = vmatprep.subr.mxu0 %v4651
    %4683 = vmatpush1.msra.mxu0 %v4650
    %4684 = vmatprep.subr.mxu0 %v4649
    %4685 = vmatpush1.msra.mxu0 %v4648
    %4686 = vmatprep.subr.mxu0 %v4647
    %4687 = vmatpush1.msra.mxu0 %v4646
    %4688 = vmatprep.subr.mxu0 %v4645
    %4689 = vmatpush1.msra.mxu0 %v4644
    %4690 = vmatprep.subr.mxu0 %v4643
    %4691 = vmatpush1.msra.mxu0 %v4642
    %4692 = vmatprep.subr.mxu0 %v4641
    %4693 = vmatpush1.msra.mxu0 %v4640
    %4694 = vmatprep.subr.mxu0 %v4639
    %4695 = vmatpush1.msra.mxu0 %v4638
    %4696 = vmatprep.subr.mxu0 %v4637
    %4697 = vmatpush1.msra.mxu0 %v4636
    %4698 = vmatprep.subr.mxu0 %v4635
    %4699 = vmatpush1.msra.mxu0 %v4634
    %4700 = vmatprep.subr.mxu0 %v4633
    %4701 = vmatpush1.msra.mxu0 %v4632
    %4702 = vmatprep.subr.mxu0 %v4631
    %4703 = vmatpush1.msra.mxu0 %v4630
    %4704 = vmatprep.subr.mxu0 %v4629
    %4705 = vmatpush1.msra.mxu0 %v4628
    %4706 = vmatprep.subr.mxu0 %v4627
    %4707 = vmatpush1.msra.mxu0 %v4626
    %4708 = vmatprep.subr.mxu0 0.0
    %4709 = vmatpush2.msra.mxu0 0.0
    %4710 = vmatprep.subr.mxu0 0.0
    %4711 = vmatpush2.msra.mxu0 0.0
    %4712 = vmatprep.subr.mxu0 0.0
    %4713 = vmatpush2.msra.mxu0 0.0
    %4714 = vmatprep.subr.mxu0 0.0
    %4715 = vmatpush2.msra.mxu0 0.0
    %4716 = vmatprep.subr.mxu0 0.0
    %4717 = vmatpush2.msra.mxu0 0.0
    %4718 = vmatprep.subr.mxu0 0.0
    %4719 = vmatpush2.msra.mxu0 0.0
    %4720 = vmatprep.subr.mxu0 0.0
    %4721 = vmatpush2.msra.mxu0 0.0
    %4722 = vmatprep.subr.mxu0 0.0
    %4723 = vmatpush2.msra.mxu0 0.0
    %4724 = vmatprep.subr.mxu0 0.0
    %4725 = vmatpush2.msra.mxu0 0.0
    %4726 = vmatprep.subr.mxu0 0.0
    %4727 = vmatpush2.msra.mxu0 0.0
    %4728 = vmatprep.subr.mxu0 %v4669
    %4729 = vmatpush2.msra.mxu0 %v4668
    %4730 = vmatprep.subr.mxu0 %v4667
    %4731 = vmatpush2.msra.mxu0 %v4666
    %4732 = vmatprep.subr.mxu0 %v4665
    %4733 = vmatpush2.msra.mxu0 %v4664
    %4734 = vmatprep.subr.mxu0 %v4663
    %4735 = vmatpush2.msra.mxu0 %v4662
    %4736 = vmatprep.subr.mxu0 %v4661
    %4737 = vmatpush2.msra.mxu0 %v4660
    %4738 = vmatprep.subr.mxu0 %v4659
    %4739 = vmatpush2.msra.mxu0 %v4658
    %4740 = vmatprep.mubr.f32.mxu0 %v4671
    %4741 = vmatmul.mubr.f32.gmra.mxu0 %v4494
    %v4742 = vpop.f32.mrf.mxu0
    %v4743 = vadd.f32 0.0, %v4742
    %v4744 = vpop.f32.mrf.mxu0
    %v4745 = vadd.f32 0.0, %v4744
    %4746 = vmatprep.mubr.f32.mxu0 %v4674
    %4747 = vmatmul.mubr.f32.gmra.mxu0 %v4500
    %v4748 = vpop.f32.mrf.mxu0
    %v4749 = vadd.f32 0.0, %v4748
    %v4750 = vpop.f32.mrf.mxu0
    %v4751 = vadd.f32 0.0, %v4750
    %4752 = vdwg.mxu0
    %v4754 = vsel %vm2173, %v4419, 0
    %v4757 = vsel %vm2173, %v4425, 0
    %4759 = vmatprep.subr.mxu0 %v4612
    %4760 = vmatpush1.msra.mxu0 %v4611
    %4761 = vmatprep.subr.mxu0 %v4610
    %4762 = vmatpush1.msra.mxu0 %v4609
    %4763 = vmatprep.subr.mxu0 %v4608
    %4764 = vmatpush1.msra.mxu0 %v4607
    %4765 = vmatprep.subr.mxu0 %v4606
    %4766 = vmatpush1.msra.mxu0 %v4605
    %4767 = vmatprep.subr.mxu0 %v4604
    %4768 = vmatpush1.msra.mxu0 %v4603
    %4769 = vmatprep.subr.mxu0 %v4602
    %4770 = vmatpush1.msra.mxu0 %v4601
    %4771 = vmatprep.subr.mxu0 %v4600
    %4772 = vmatpush1.msra.mxu0 %v4599
    %4773 = vmatprep.subr.mxu0 %v4598
    %4774 = vmatpush1.msra.mxu0 %v4597
    %4775 = vmatprep.subr.mxu0 %v4596
    %4776 = vmatpush1.msra.mxu0 %v4595
    %4777 = vmatprep.subr.mxu0 %v4594
    %4778 = vmatpush1.msra.mxu0 %v4593
    %4779 = vmatprep.subr.mxu0 %v4592
    %4780 = vmatpush1.msra.mxu0 %v4591
    %4781 = vmatprep.subr.mxu0 %v4590
    %4782 = vmatpush1.msra.mxu0 %v4589
    %4783 = vmatprep.subr.mxu0 %v4588
    %4784 = vmatpush1.msra.mxu0 %v4587
    %4785 = vmatprep.subr.mxu0 %v4586
    %4786 = vmatpush1.msra.mxu0 %v4585
    %4787 = vmatprep.subr.mxu0 %v4584
    %4788 = vmatpush1.msra.mxu0 %v4583
    %4789 = vmatprep.subr.mxu0 %v4582
    %4790 = vmatpush1.msra.mxu0 %v4581
    %4791 = vmatprep.subr.mxu0 0.0
    %4792 = vmatpush2.msra.mxu0 0.0
    %4793 = vmatprep.subr.mxu0 0.0
    %4794 = vmatpush2.msra.mxu0 0.0
    %4795 = vmatprep.subr.mxu0 0.0
    %4796 = vmatpush2.msra.mxu0 0.0
    %4797 = vmatprep.subr.mxu0 0.0
    %4798 = vmatpush2.msra.mxu0 0.0
    %4799 = vmatprep.subr.mxu0 0.0
    %4800 = vmatpush2.msra.mxu0 0.0
    %4801 = vmatprep.subr.mxu0 0.0
    %4802 = vmatpush2.msra.mxu0 0.0
    %4803 = vmatprep.subr.mxu0 0.0
    %4804 = vmatpush2.msra.mxu0 0.0
    %4805 = vmatprep.subr.mxu0 0.0
    %4806 = vmatpush2.msra.mxu0 0.0
    %4807 = vmatprep.subr.mxu0 0.0
    %4808 = vmatpush2.msra.mxu0 0.0
    %4809 = vmatprep.subr.mxu0 0.0
    %4810 = vmatpush2.msra.mxu0 0.0
    %4811 = vmatprep.subr.mxu0 %v4624
    %4812 = vmatpush2.msra.mxu0 %v4623
    %4813 = vmatprep.subr.mxu0 %v4622
    %4814 = vmatpush2.msra.mxu0 %v4621
    %4815 = vmatprep.subr.mxu0 %v4620
    %4816 = vmatpush2.msra.mxu0 %v4619
    %4817 = vmatprep.subr.mxu0 %v4618
    %4818 = vmatpush2.msra.mxu0 %v4617
    %4819 = vmatprep.subr.mxu0 %v4616
    %4820 = vmatpush2.msra.mxu0 %v4615
    %4821 = vmatprep.subr.mxu0 %v4614
    %4822 = vmatpush2.msra.mxu0 %v4613
    %4823 = vmatprep.mubr.f32.mxu0 %v4754
    %4824 = vmatmul.mubr.f32.gmra.mxu0 %v4417
    %v4825 = vpop.f32.mrf.mxu0
    %v4826 = vadd.f32 %v4743, %v4825
    %v4827 = vpop.f32.mrf.mxu0
    %v4828 = vadd.f32 %v4745, %v4827
    %4829 = vmatprep.mubr.f32.mxu0 %v4757
    %4830 = vmatmul.mubr.f32.gmra.mxu0 %v4423
    %v4831 = vpop.f32.mrf.mxu0
    %v4832 = vadd.f32 %v4749, %v4831
    %v4833 = vpop.f32.mrf.mxu0
    %v4834 = vadd.f32 %v4751, %v4833
    %4835 = vdwg.mxu0
    %s4836 = scalar_lea.vmem [#allocation15], 704
    %v4837 = vld [vmem:[%s4836] sm:$0xff]
    %v4838 = vld [vmem:[%s4836 + $0x8] sm:$0xff]
    %v4839 = vld [vmem:[%s4836 + $0x10] sm:$0xff]
    %v4840 = vld [vmem:[%s4836 + $0x18] sm:$0xff]
    %v4841 = vld [vmem:[%s4836 + $0x20] sm:$0xff]
    %v4842 = vld [vmem:[%s4836 + $0x28] sm:$0xff]
    %v4843 = vld [vmem:[%s4836 + $0x30] sm:$0xff]
    %v4844 = vld [vmem:[%s4836 + $0x38] sm:$0xff]
    %v4845 = vld [vmem:[%s4836 + $0x40] sm:$0xff]
    %v4846 = vld [vmem:[%s4836 + $0x48] sm:$0xff]
    %v4847 = vld [vmem:[%s4836 + $0x50] sm:$0xff]
    %v4848 = vld [vmem:[%s4836 + $0x58] sm:$0xff]
    %v4849 = vld [vmem:[%s4836 + $0x60] sm:$0xff]
    %v4850 = vld [vmem:[%s4836 + $0x68] sm:$0xff]
    %v4851 = vld [vmem:[%s4836 + $0x70] sm:$0xff]
    %v4852 = vld [vmem:[%s4836 + $0x78] sm:$0xff]
    %v4853 = vld [vmem:[%s4836 + $0x80] sm:$0xff]
    %v4854 = vld [vmem:[%s4836 + $0x88] sm:$0xff]
    %v4855 = vld [vmem:[%s4836 + $0x90] sm:$0xff]
    %v4856 = vld [vmem:[%s4836 + $0x98] sm:$0xff]
    %v4857 = vld [vmem:[%s4836 + $0xa0] sm:$0xff]
    %v4858 = vld [vmem:[%s4836 + $0xa8] sm:$0xff]
    %v4859 = vld [vmem:[%s4836 + $0xb0] sm:$0xff]
    %v4860 = vld [vmem:[%s4836 + $0xb8] sm:$0xff]
    %v4861 = vld [vmem:[%s4836 + $0xc0] sm:$0xff]
    %v4862 = vld [vmem:[%s4836 + $0xc8] sm:$0xff]
    %v4863 = vld [vmem:[%s4836 + $0xd0] sm:$0xff]
    %v4864 = vld [vmem:[%s4836 + $0xd8] sm:$0xff]
    %v4865 = vld [vmem:[%s4836 + $0xe0] sm:$0xff]
    %v4866 = vld [vmem:[%s4836 + $0xe8] sm:$0xff]
    %v4867 = vld [vmem:[%s4836 + $0xf0] sm:$0xff]
    %v4868 = vld [vmem:[%s4836 + $0xf8] sm:$0xff]
    %v4869 = vld [vmem:[%s4836 + $0x100] sm:$0xff]
    %v4870 = vld [vmem:[%s4836 + $0x108] sm:$0xff]
    %v4871 = vld [vmem:[%s4836 + $0x110] sm:$0xff]
    %v4872 = vld [vmem:[%s4836 + $0x118] sm:$0xff]
    %v4873 = vld [vmem:[%s4836 + $0x120] sm:$0xff]
    %v4874 = vld [vmem:[%s4836 + $0x128] sm:$0xff]
    %v4875 = vld [vmem:[%s4836 + $0x130] sm:$0xff]
    %v4876 = vld [vmem:[%s4836 + $0x138] sm:$0xff]
    %v4877 = vld [vmem:[%s4836 + $0x140] sm:$0xff]
    %v4878 = vld [vmem:[%s4836 + $0x148] sm:$0xff]
    %v4879 = vld [vmem:[%s4836 + $0x150] sm:$0xff]
    %v4880 = vld [vmem:[%s4836 + $0x158] sm:$0xff]
    %v4882 = vsel %vm2173, %v4573, 0
    %v4885 = vsel %vm2173, %v4579, 0
    %4887 = vmatprep.subr.mxu0 %v4868
    %4888 = vmatpush1.msra.mxu0 %v4867
    %4889 = vmatprep.subr.mxu0 %v4866
    %4890 = vmatpush1.msra.mxu0 %v4865
    %4891 = vmatprep.subr.mxu0 %v4864
    %4892 = vmatpush1.msra.mxu0 %v4863
    %4893 = vmatprep.subr.mxu0 %v4862
    %4894 = vmatpush1.msra.mxu0 %v4861
    %4895 = vmatprep.subr.mxu0 %v4860
    %4896 = vmatpush1.msra.mxu0 %v4859
    %4897 = vmatprep.subr.mxu0 %v4858
    %4898 = vmatpush1.msra.mxu0 %v4857
    %4899 = vmatprep.subr.mxu0 %v4856
    %4900 = vmatpush1.msra.mxu0 %v4855
    %4901 = vmatprep.subr.mxu0 %v4854
    %4902 = vmatpush1.msra.mxu0 %v4853
    %4903 = vmatprep.subr.mxu0 %v4852
    %4904 = vmatpush1.msra.mxu0 %v4851
    %4905 = vmatprep.subr.mxu0 %v4850
    %4906 = vmatpush1.msra.mxu0 %v4849
    %4907 = vmatprep.subr.mxu0 %v4848
    %4908 = vmatpush1.msra.mxu0 %v4847
    %4909 = vmatprep.subr.mxu0 %v4846
    %4910 = vmatpush1.msra.mxu0 %v4845
    %4911 = vmatprep.subr.mxu0 %v4844
    %4912 = vmatpush1.msra.mxu0 %v4843
    %4913 = vmatprep.subr.mxu0 %v4842
    %4914 = vmatpush1.msra.mxu0 %v4841
    %4915 = vmatprep.subr.mxu0 %v4840
    %4916 = vmatpush1.msra.mxu0 %v4839
    %4917 = vmatprep.subr.mxu0 %v4838
    %4918 = vmatpush1.msra.mxu0 %v4837
    %4919 = vmatprep.subr.mxu0 0.0
    %4920 = vmatpush2.msra.mxu0 0.0
    %4921 = vmatprep.subr.mxu0 0.0
    %4922 = vmatpush2.msra.mxu0 0.0
    %4923 = vmatprep.subr.mxu0 0.0
    %4924 = vmatpush2.msra.mxu0 0.0
    %4925 = vmatprep.subr.mxu0 0.0
    %4926 = vmatpush2.msra.mxu0 0.0
    %4927 = vmatprep.subr.mxu0 0.0
    %4928 = vmatpush2.msra.mxu0 0.0
    %4929 = vmatprep.subr.mxu0 0.0
    %4930 = vmatpush2.msra.mxu0 0.0
    %4931 = vmatprep.subr.mxu0 0.0
    %4932 = vmatpush2.msra.mxu0 0.0
    %4933 = vmatprep.subr.mxu0 0.0
    %4934 = vmatpush2.msra.mxu0 0.0
    %4935 = vmatprep.subr.mxu0 0.0
    %4936 = vmatpush2.msra.mxu0 0.0
    %4937 = vmatprep.subr.mxu0 0.0
    %4938 = vmatpush2.msra.mxu0 0.0
    %4939 = vmatprep.subr.mxu0 %v4880
    %4940 = vmatpush2.msra.mxu0 %v4879
    %4941 = vmatprep.subr.mxu0 %v4878
    %4942 = vmatpush2.msra.mxu0 %v4877
    %4943 = vmatprep.subr.mxu0 %v4876
    %4944 = vmatpush2.msra.mxu0 %v4875
    %4945 = vmatprep.subr.mxu0 %v4874
    %4946 = vmatpush2.msra.mxu0 %v4873
    %4947 = vmatprep.subr.mxu0 %v4872
    %4948 = vmatpush2.msra.mxu0 %v4871
    %4949 = vmatprep.subr.mxu0 %v4870
    %4950 = vmatpush2.msra.mxu0 %v4869
    %4951 = vmatprep.mubr.f32.mxu0 %v4882
    %4952 = vmatmul.mubr.f32.gmra.mxu0 %v4571
    %v4953 = vpop.f32.mrf.mxu0
    %v4954 = vadd.f32 0.0, %v4953
    %v4955 = vpop.f32.mrf.mxu0
    %v4956 = vadd.f32 0.0, %v4955
    %4957 = vmatprep.mubr.f32.mxu0 %v4885
    %4958 = vmatmul.mubr.f32.gmra.mxu0 %v4577
    %v4959 = vpop.f32.mrf.mxu0
    %v4960 = vadd.f32 0.0, %v4959
    %v4961 = vpop.f32.mrf.mxu0
    %v4962 = vadd.f32 0.0, %v4961
    %4963 = vdwg.mxu0
    %v4964 = vadd.f32 %v4826, %v4954
    %v4965 = vadd.f32 %v4828, %v4956
    %v4966 = vadd.f32 %v4832, %v4960
    %v4967 = vadd.f32 %v4834, %v4962
    %v4968 = vld [vmem:[#allocation16] sm:$0x3]
    %v4970 = vlaneseq
    %v4971 = vshrl.u32 %v4970, 7
    %v4972 = vsub.s32 0, %v4971
    %v4973 = vrot.slane %v4968, %v4972
    %v4974 = vlaneseq
    %v4975 = vshrl.u32 %v4974, 7
    %v4976 = vsub.s32 1, %v4975
    %v4977 = vrot.slane %v4968, %v4976
    %v4980 = vadd.f32 %v4964, %v4973
    %v4981 = vadd.f32 %v4965, %v4977
    %v4982 = vadd.f32 %v4966, %v4973
    %v4983 = vadd.f32 %v4967, %v4977
    %vm4984 = vcmp.ge.f32.partialorder %v4980, 0.0
    %vm4985 = vcmp.ge.f32.partialorder %v4981, 0.0
    %vm4986 = vcmp.ge.f32.partialorder %v4982, 0.0
    %vm4987 = vcmp.ge.f32.partialorder %v4983, 0.0
    %v4988 = vmul.f32 %v4980, 0.01
    %v4989 = vmul.f32 %v4981, 0.01
    %v4990 = vmul.f32 %v4982, 0.01
    %v4991 = vmul.f32 %v4983, 0.01
    %v4992 = vsel %vm4984, %v4980, %v4988
    %v4993 = vsel %vm4985, %v4981, %v4989
    %v4994 = vsel %vm4986, %v4982, %v4990
    %v4995 = vsel %vm4987, %v4983, %v4991
    %v4997 = vsel %vm2505, %v4994, 0
    %v5000 = vsel %vm2505, %v4995, 0
    %5002 = vmatprep.subr.mxu0 0.0
    %5003 = vmatpush1.msra.mxu0 0.0
    %5004 = vmatprep.subr.mxu0 0.0
    %5005 = vmatpush1.msra.mxu0 0.0
    %5006 = vmatprep.subr.mxu0 0.0
    %5007 = vmatpush1.msra.mxu0 0.0
    %5008 = vmatprep.subr.mxu0 0.0
    %5009 = vmatpush1.msra.mxu0 0.0
    %5010 = vmatprep.subr.mxu0 0.0
    %5011 = vmatpush1.msra.mxu0 0.0
    %5012 = vmatprep.subr.mxu0 0.0
    %5013 = vmatpush1.msra.mxu0 0.0
    %5014 = vmatprep.subr.mxu0 0.0
    %5015 = vmatpush1.msra.mxu0 0.0
    %5016 = vmatprep.subr.mxu0 0.0
    %5017 = vmatpush1.msra.mxu0 0.0
    %5018 = vmatprep.subr.mxu0 0.0
    %5019 = vmatpush1.msra.mxu0 0.0
    %5020 = vmatprep.subr.mxu0 0.0
    %5021 = vmatpush1.msra.mxu0 0.0
    %5022 = vmatprep.subr.mxu0 0.0
    %5023 = vmatpush1.msra.mxu0 0.0
    %5024 = vmatprep.subr.mxu0 0.0
    %5025 = vmatpush1.msra.mxu0 0.0
    %5026 = vmatprep.subr.mxu0 0.0
    %5027 = vmatpush1.msra.mxu0 0.0
    %5028 = vmatprep.subr.mxu0 0.0
    %5029 = vmatpush1.msra.mxu0 0.0
    %5030 = vmatprep.subr.mxu0 %v5000
    %5031 = vmatpush1.msra.mxu0 %v4997
    %5032 = vmatprep.subr.mxu0 %v4993
    %5033 = vmatpush1.msra.mxu0 %v4992
    %5034 = vmatprep.subr.mxu0 0.0
    %5035 = vmatpush2.msra.mxu0 0.0
    %5036 = vmatprep.subr.mxu0 0.0
    %5037 = vmatpush2.msra.mxu0 0.0
    %5038 = vmatprep.subr.mxu0 0.0
    %5039 = vmatpush2.msra.mxu0 0.0
    %5040 = vmatprep.subr.mxu0 0.0
    %5041 = vmatpush2.msra.mxu0 0.0
    %5042 = vmatprep.subr.mxu0 0.0
    %5043 = vmatpush2.msra.mxu0 0.0
    %5044 = vmatprep.subr.mxu0 0.0
    %5045 = vmatpush2.msra.mxu0 0.0
    %5046 = vmatprep.subr.mxu0 0.0
    %5047 = vmatpush2.msra.mxu0 0.0
    %5048 = vmatprep.subr.mxu0 0.0
    %5049 = vmatpush2.msra.mxu0 0.0
    %5050 = vmatprep.subr.mxu0 0.0
    %5051 = vmatpush2.msra.mxu0 0.0
    %5052 = vmatprep.subr.mxu0 0.0
    %5053 = vmatpush2.msra.mxu0 0.0
    %5054 = vmatprep.subr.mxu0 0.0
    %5055 = vmatpush2.msra.mxu0 0.0
    %5056 = vmatprep.subr.mxu0 0.0
    %5057 = vmatpush2.msra.mxu0 0.0
    %5058 = vmatprep.subr.mxu0 0.0
    %5059 = vmatpush2.msra.mxu0 0.0
    %5060 = vmatprep.subr.mxu0 0.0
    %5061 = vmatpush2.msra.mxu0 0.0
    %5062 = vmatprep.subr.mxu0 0.0
    %5063 = vmatpush2.msra.mxu0 0.0
    %5064 = vmatprep.subr.mxu0 0.0
    %5065 = vmatpush2.msra.mxu0 0.0
    %5066 = vmatprep.mubr.f32.mxu0 0.0
    %5067 = vmatmul.mubr.f32.gmra.mxu0 %v2503
    %v5068 = vpop.f32.mrf.mxu0
    %v5069 = vadd.f32 0.0, %v5068
    %v5070 = vpop.f32.mrf.mxu0
    %v5071 = vadd.f32 0.0, %v5070
    %5072 = vdwg.mxu0
    %5073 = vmatprep.subr.mxu0 0.0
    %5074 = vmatpush1.msra.mxu0 0.0
    %5075 = vmatprep.subr.mxu0 0.0
    %5076 = vmatpush1.msra.mxu0 0.0
    %5077 = vmatprep.subr.mxu0 0.0
    %5078 = vmatpush1.msra.mxu0 0.0
    %5079 = vmatprep.subr.mxu0 0.0
    %5080 = vmatpush1.msra.mxu0 0.0
    %5081 = vmatprep.subr.mxu0 0.0
    %5082 = vmatpush1.msra.mxu0 0.0
    %5083 = vmatprep.subr.mxu0 0.0
    %5084 = vmatpush1.msra.mxu0 0.0
    %5085 = vmatprep.subr.mxu0 0.0
    %5086 = vmatpush1.msra.mxu0 0.0
    %5087 = vmatprep.subr.mxu0 0.0
    %5088 = vmatpush1.msra.mxu0 0.0
    %5089 = vmatprep.subr.mxu0 0.0
    %5090 = vmatpush1.msra.mxu0 0.0
    %5091 = vmatprep.subr.mxu0 0.0
    %5092 = vmatpush1.msra.mxu0 0.0
    %5093 = vmatprep.subr.mxu0 0.0
    %5094 = vmatpush1.msra.mxu0 0.0
    %5095 = vmatprep.subr.mxu0 0.0
    %5096 = vmatpush1.msra.mxu0 0.0
    %5097 = vmatprep.subr.mxu0 0.0
    %5098 = vmatpush1.msra.mxu0 0.0
    %5099 = vmatprep.subr.mxu0 0.0
    %5100 = vmatpush1.msra.mxu0 0.0
    %5101 = vmatprep.subr.mxu0 %v5000
    %5102 = vmatpush1.msra.mxu0 %v4997
    %5103 = vmatprep.subr.mxu0 %v4993
    %5104 = vmatpush1.msra.mxu0 %v4992
    %5105 = vmatprep.subr.mxu0 0.0
    %5106 = vmatpush2.msra.mxu0 0.0
    %5107 = vmatprep.subr.mxu0 0.0
    %5108 = vmatpush2.msra.mxu0 0.0
    %5109 = vmatprep.subr.mxu0 0.0
    %5110 = vmatpush2.msra.mxu0 0.0
    %5111 = vmatprep.subr.mxu0 0.0
    %5112 = vmatpush2.msra.mxu0 0.0
    %5113 = vmatprep.subr.mxu0 0.0
    %5114 = vmatpush2.msra.mxu0 0.0
    %5115 = vmatprep.subr.mxu0 0.0
    %5116 = vmatpush2.msra.mxu0 0.0
    %5117 = vmatprep.subr.mxu0 0.0
    %5118 = vmatpush2.msra.mxu0 0.0
    %5119 = vmatprep.subr.mxu0 0.0
    %5120 = vmatpush2.msra.mxu0 0.0
    %5121 = vmatprep.subr.mxu0 0.0
    %5122 = vmatpush2.msra.mxu0 0.0
    %5123 = vmatprep.subr.mxu0 0.0
    %5124 = vmatpush2.msra.mxu0 0.0
    %5125 = vmatprep.subr.mxu0 0.0
    %5126 = vmatpush2.msra.mxu0 0.0
    %5127 = vmatprep.subr.mxu0 0.0
    %5128 = vmatpush2.msra.mxu0 0.0
    %5129 = vmatprep.subr.mxu0 0.0
    %5130 = vmatpush2.msra.mxu0 0.0
    %5131 = vmatprep.subr.mxu0 0.0
    %5132 = vmatpush2.msra.mxu0 0.0
    %5133 = vmatprep.subr.mxu0 0.0
    %5134 = vmatpush2.msra.mxu0 0.0
    %5135 = vmatprep.subr.mxu0 0.0
    %5136 = vmatpush2.msra.mxu0 0.0
    %5137 = vmatprep.mubr.f32.mxu0 0.0
    %5138 = vmatmul.mubr.f32.gmra.mxu0 %v2586
    %v5139 = vpop.f32.mrf.mxu0
    %v5140 = vadd.f32 0.0, %v5139
    %v5141 = vpop.f32.mrf.mxu0
    %v5142 = vadd.f32 0.0, %v5141
    %5143 = vdwg.mxu0
    %5144 = vmatprep.subr.mxu0 0.0
    %5145 = vmatpush1.msra.mxu0 0.0
    %5146 = vmatprep.subr.mxu0 0.0
    %5147 = vmatpush1.msra.mxu0 0.0
    %5148 = vmatprep.subr.mxu0 0.0
    %5149 = vmatpush1.msra.mxu0 0.0
    %5150 = vmatprep.subr.mxu0 0.0
    %5151 = vmatpush1.msra.mxu0 0.0
    %5152 = vmatprep.subr.mxu0 0.0
    %5153 = vmatpush1.msra.mxu0 0.0
    %5154 = vmatprep.subr.mxu0 0.0
    %5155 = vmatpush1.msra.mxu0 0.0
    %5156 = vmatprep.subr.mxu0 0.0
    %5157 = vmatpush1.msra.mxu0 0.0
    %5158 = vmatprep.subr.mxu0 0.0
    %5159 = vmatpush1.msra.mxu0 0.0
    %5160 = vmatprep.subr.mxu0 0.0
    %5161 = vmatpush1.msra.mxu0 0.0
    %5162 = vmatprep.subr.mxu0 0.0
    %5163 = vmatpush1.msra.mxu0 0.0
    %5164 = vmatprep.subr.mxu0 0.0
    %5165 = vmatpush1.msra.mxu0 0.0
    %5166 = vmatprep.subr.mxu0 0.0
    %5167 = vmatpush1.msra.mxu0 0.0
    %5168 = vmatprep.subr.mxu0 0.0
    %5169 = vmatpush1.msra.mxu0 0.0
    %5170 = vmatprep.subr.mxu0 0.0
    %5171 = vmatpush1.msra.mxu0 0.0
    %5172 = vmatprep.subr.mxu0 %v5000
    %5173 = vmatpush1.msra.mxu0 %v4997
    %5174 = vmatprep.subr.mxu0 %v4993
    %5175 = vmatpush1.msra.mxu0 %v4992
    %5176 = vmatprep.subr.mxu0 0.0
    %5177 = vmatpush2.msra.mxu0 0.0
    %5178 = vmatprep.subr.mxu0 0.0
    %5179 = vmatpush2.msra.mxu0 0.0
    %5180 = vmatprep.subr.mxu0 0.0
    %5181 = vmatpush2.msra.mxu0 0.0
    %5182 = vmatprep.subr.mxu0 0.0
    %5183 = vmatpush2.msra.mxu0 0.0
    %5184 = vmatprep.subr.mxu0 0.0
    %5185 = vmatpush2.msra.mxu0 0.0
    %5186 = vmatprep.subr.mxu0 0.0
    %5187 = vmatpush2.msra.mxu0 0.0
    %5188 = vmatprep.subr.mxu0 0.0
    %5189 = vmatpush2.msra.mxu0 0.0
    %5190 = vmatprep.subr.mxu0 0.0
    %5191 = vmatpush2.msra.mxu0 0.0
    %5192 = vmatprep.subr.mxu0 0.0
    %5193 = vmatpush2.msra.mxu0 0.0
    %5194 = vmatprep.subr.mxu0 0.0
    %5195 = vmatpush2.msra.mxu0 0.0
    %5196 = vmatprep.subr.mxu0 0.0
    %5197 = vmatpush2.msra.mxu0 0.0
    %5198 = vmatprep.subr.mxu0 0.0
    %5199 = vmatpush2.msra.mxu0 0.0
    %5200 = vmatprep.subr.mxu0 0.0
    %5201 = vmatpush2.msra.mxu0 0.0
    %5202 = vmatprep.subr.mxu0 0.0
    %5203 = vmatpush2.msra.mxu0 0.0
    %5204 = vmatprep.subr.mxu0 0.0
    %5205 = vmatpush2.msra.mxu0 0.0
    %5206 = vmatprep.subr.mxu0 0.0
    %5207 = vmatpush2.msra.mxu0 0.0
    %5208 = vmatprep.mubr.f32.mxu0 0.0
    %5209 = vmatmul.mubr.f32.gmra.mxu0 %v2662
    %v5210 = vpop.f32.mrf.mxu0
    %v5211 = vadd.f32 0.0, %v5210
    %v5212 = vpop.f32.mrf.mxu0
    %v5213 = vadd.f32 0.0, %v5212
    %5214 = vdwg.mxu0
    %5215 = vmatprep.subr.mxu0 0.0
    %5216 = vmatpush1.msra.mxu0 0.0
    %5217 = vmatprep.subr.mxu0 0.0
    %5218 = vmatpush1.msra.mxu0 0.0
    %5219 = vmatprep.subr.mxu0 0.0
    %5220 = vmatpush1.msra.mxu0 0.0
    %5221 = vmatprep.subr.mxu0 0.0
    %5222 = vmatpush1.msra.mxu0 0.0
    %5223 = vmatprep.subr.mxu0 0.0
    %5224 = vmatpush1.msra.mxu0 0.0
    %5225 = vmatprep.subr.mxu0 0.0
    %5226 = vmatpush1.msra.mxu0 0.0
    %5227 = vmatprep.subr.mxu0 0.0
    %5228 = vmatpush1.msra.mxu0 0.0
    %5229 = vmatprep.subr.mxu0 0.0
    %5230 = vmatpush1.msra.mxu0 0.0
    %5231 = vmatprep.subr.mxu0 0.0
    %5232 = vmatpush1.msra.mxu0 0.0
    %5233 = vmatprep.subr.mxu0 0.0
    %5234 = vmatpush1.msra.mxu0 0.0
    %5235 = vmatprep.subr.mxu0 0.0
    %5236 = vmatpush1.msra.mxu0 0.0
    %5237 = vmatprep.subr.mxu0 0.0
    %5238 = vmatpush1.msra.mxu0 0.0
    %5239 = vmatprep.subr.mxu0 0.0
    %5240 = vmatpush1.msra.mxu0 0.0
    %5241 = vmatprep.subr.mxu0 0.0
    %5242 = vmatpush1.msra.mxu0 0.0
    %5243 = vmatprep.subr.mxu0 %v5000
    %5244 = vmatpush1.msra.mxu0 %v4997
    %5245 = vmatprep.subr.mxu0 %v4993
    %5246 = vmatpush1.msra.mxu0 %v4992
    %5247 = vmatprep.subr.mxu0 0.0
    %5248 = vmatpush2.msra.mxu0 0.0
    %5249 = vmatprep.subr.mxu0 0.0
    %5250 = vmatpush2.msra.mxu0 0.0
    %5251 = vmatprep.subr.mxu0 0.0
    %5252 = vmatpush2.msra.mxu0 0.0
    %5253 = vmatprep.subr.mxu0 0.0
    %5254 = vmatpush2.msra.mxu0 0.0
    %5255 = vmatprep.subr.mxu0 0.0
    %5256 = vmatpush2.msra.mxu0 0.0
    %5257 = vmatprep.subr.mxu0 0.0
    %5258 = vmatpush2.msra.mxu0 0.0
    %5259 = vmatprep.subr.mxu0 0.0
    %5260 = vmatpush2.msra.mxu0 0.0
    %5261 = vmatprep.subr.mxu0 0.0
    %5262 = vmatpush2.msra.mxu0 0.0
    %5263 = vmatprep.subr.mxu0 0.0
    %5264 = vmatpush2.msra.mxu0 0.0
    %5265 = vmatprep.subr.mxu0 0.0
    %5266 = vmatpush2.msra.mxu0 0.0
    %5267 = vmatprep.subr.mxu0 0.0
    %5268 = vmatpush2.msra.mxu0 0.0
    %5269 = vmatprep.subr.mxu0 0.0
    %5270 = vmatpush2.msra.mxu0 0.0
    %5271 = vmatprep.subr.mxu0 0.0
    %5272 = vmatpush2.msra.mxu0 0.0
    %5273 = vmatprep.subr.mxu0 0.0
    %5274 = vmatpush2.msra.mxu0 0.0
    %5275 = vmatprep.subr.mxu0 0.0
    %5276 = vmatpush2.msra.mxu0 0.0
    %5277 = vmatprep.subr.mxu0 0.0
    %5278 = vmatpush2.msra.mxu0 0.0
    %5279 = vmatprep.mubr.f32.mxu0 0.0
    %5280 = vmatmul.mubr.f32.gmra.mxu0 %v2738
    %v5281 = vpop.f32.mrf.mxu0
    %v5282 = vadd.f32 0.0, %v5281
    %v5283 = vpop.f32.mrf.mxu0
    %v5284 = vadd.f32 0.0, %v5283
    %5285 = vdwg.mxu0
    %5286 = vmatprep.subr.mxu0 0.0
    %5287 = vmatpush1.msra.mxu0 0.0
    %5288 = vmatprep.subr.mxu0 0.0
    %5289 = vmatpush1.msra.mxu0 0.0
    %5290 = vmatprep.subr.mxu0 0.0
    %5291 = vmatpush1.msra.mxu0 0.0
    %5292 = vmatprep.subr.mxu0 0.0
    %5293 = vmatpush1.msra.mxu0 0.0
    %5294 = vmatprep.subr.mxu0 0.0
    %5295 = vmatpush1.msra.mxu0 0.0
    %5296 = vmatprep.subr.mxu0 0.0
    %5297 = vmatpush1.msra.mxu0 0.0
    %5298 = vmatprep.subr.mxu0 0.0
    %5299 = vmatpush1.msra.mxu0 0.0
    %5300 = vmatprep.subr.mxu0 0.0
    %5301 = vmatpush1.msra.mxu0 0.0
    %5302 = vmatprep.subr.mxu0 0.0
    %5303 = vmatpush1.msra.mxu0 0.0
    %5304 = vmatprep.subr.mxu0 0.0
    %5305 = vmatpush1.msra.mxu0 0.0
    %5306 = vmatprep.subr.mxu0 0.0
    %5307 = vmatpush1.msra.mxu0 0.0
    %5308 = vmatprep.subr.mxu0 0.0
    %5309 = vmatpush1.msra.mxu0 0.0
    %5310 = vmatprep.subr.mxu0 0.0
    %5311 = vmatpush1.msra.mxu0 0.0
    %5312 = vmatprep.subr.mxu0 0.0
    %5313 = vmatpush1.msra.mxu0 0.0
    %5314 = vmatprep.subr.mxu0 %v5000
    %5315 = vmatpush1.msra.mxu0 %v4997
    %5316 = vmatprep.subr.mxu0 %v4993
    %5317 = vmatpush1.msra.mxu0 %v4992
    %5318 = vmatprep.subr.mxu0 0.0
    %5319 = vmatpush2.msra.mxu0 0.0
    %5320 = vmatprep.subr.mxu0 0.0
    %5321 = vmatpush2.msra.mxu0 0.0
    %5322 = vmatprep.subr.mxu0 0.0
    %5323 = vmatpush2.msra.mxu0 0.0
    %5324 = vmatprep.subr.mxu0 0.0
    %5325 = vmatpush2.msra.mxu0 0.0
    %5326 = vmatprep.subr.mxu0 0.0
    %5327 = vmatpush2.msra.mxu0 0.0
    %5328 = vmatprep.subr.mxu0 0.0
    %5329 = vmatpush2.msra.mxu0 0.0
    %5330 = vmatprep.subr.mxu0 0.0
    %5331 = vmatpush2.msra.mxu0 0.0
    %5332 = vmatprep.subr.mxu0 0.0
    %5333 = vmatpush2.msra.mxu0 0.0
    %5334 = vmatprep.subr.mxu0 0.0
    %5335 = vmatpush2.msra.mxu0 0.0
    %5336 = vmatprep.subr.mxu0 0.0
    %5337 = vmatpush2.msra.mxu0 0.0
    %5338 = vmatprep.subr.mxu0 0.0
    %5339 = vmatpush2.msra.mxu0 0.0
    %5340 = vmatprep.subr.mxu0 0.0
    %5341 = vmatpush2.msra.mxu0 0.0
    %5342 = vmatprep.subr.mxu0 0.0
    %5343 = vmatpush2.msra.mxu0 0.0
    %5344 = vmatprep.subr.mxu0 0.0
    %5345 = vmatpush2.msra.mxu0 0.0
    %5346 = vmatprep.subr.mxu0 0.0
    %5347 = vmatpush2.msra.mxu0 0.0
    %5348 = vmatprep.subr.mxu0 0.0
    %5349 = vmatpush2.msra.mxu0 0.0
    %5350 = vmatprep.mubr.f32.mxu0 0.0
    %5351 = vmatmul.mubr.f32.gmra.mxu0 %v2814
    %v5352 = vpop.f32.mrf.mxu0
    %v5353 = vadd.f32 0.0, %v5352
    %v5354 = vpop.f32.mrf.mxu0
    %v5355 = vadd.f32 0.0, %v5354
    %5356 = vdwg.mxu0
    %v5357 = vld [vmem:[#allocation18] sm:$0xff]
    %v5358 = vld [vmem:[#allocation18 + $0x8] sm:$0xff]
    %v5359 = vld [vmem:[#allocation18 + $0x10] sm:$0xff]
    %v5360 = vld [vmem:[#allocation18 + $0x18] sm:$0xff]
    %v5361 = vld [vmem:[#allocation18 + $0x20] sm:$0xff]
    %v5362 = vld [vmem:[#allocation18 + $0x28] sm:$0xff]
    %v5363 = vld [vmem:[#allocation18 + $0x30] sm:$0xff]
    %v5364 = vld [vmem:[#allocation18 + $0x38] sm:$0xff]
    %v5365 = vld [vmem:[#allocation18 + $0x40] sm:$0xff]
    %v5366 = vld [vmem:[#allocation18 + $0x48] sm:$0xff]
    %v5367 = vld [vmem:[#allocation18 + $0x50] sm:$0xff]
    %v5368 = vld [vmem:[#allocation18 + $0x58] sm:$0xff]
    %v5369 = vld [vmem:[#allocation18 + $0x60] sm:$0xff]
    %v5370 = vld [vmem:[#allocation18 + $0x68] sm:$0xff]
    %v5371 = vld [vmem:[#allocation18 + $0x70] sm:$0xff]
    %v5372 = vld [vmem:[#allocation18 + $0x78] sm:$0xff]
    %v5373 = vld [vmem:[#allocation18 + $0x80] sm:$0xff]
    %v5374 = vld [vmem:[#allocation18 + $0x88] sm:$0xff]
    %v5375 = vld [vmem:[#allocation18 + $0x90] sm:$0xff]
    %v5376 = vld [vmem:[#allocation18 + $0x98] sm:$0xff]
    %v5377 = vld [vmem:[#allocation18 + $0xa0] sm:$0xff]
    %v5378 = vld [vmem:[#allocation18 + $0xa8] sm:$0xff]
    %v5379 = vld [vmem:[#allocation18 + $0xb0] sm:$0xff]
    %v5380 = vld [vmem:[#allocation18 + $0xb8] sm:$0xff]
    %v5381 = vld [vmem:[#allocation18 + $0xc0] sm:$0xff]
    %v5382 = vld [vmem:[#allocation18 + $0xc8] sm:$0xff]
    %v5383 = vld [vmem:[#allocation18 + $0xd0] sm:$0xff]
    %v5384 = vld [vmem:[#allocation18 + $0xd8] sm:$0xff]
    %v5385 = vld [vmem:[#allocation18 + $0xe0] sm:$0xff]
    %v5386 = vld [vmem:[#allocation18 + $0xe8] sm:$0xff]
    %v5387 = vld [vmem:[#allocation18 + $0xf0] sm:$0xff]
    %v5388 = vld [vmem:[#allocation18 + $0xf8] sm:$0xff]
    %v5389 = vld [vmem:[#allocation18 + $0x100] sm:$0xff]
    %v5390 = vld [vmem:[#allocation18 + $0x108] sm:$0xff]
    %v5391 = vld [vmem:[#allocation18 + $0x110] sm:$0xff]
    %v5392 = vld [vmem:[#allocation18 + $0x118] sm:$0xff]
    %v5393 = vld [vmem:[#allocation18 + $0x120] sm:$0xff]
    %v5394 = vld [vmem:[#allocation18 + $0x128] sm:$0xff]
    %v5395 = vld [vmem:[#allocation18 + $0x130] sm:$0xff]
    %v5396 = vld [vmem:[#allocation18 + $0x138] sm:$0xff]
    %v5397 = vld [vmem:[#allocation18 + $0x140] sm:$0xff]
    %v5398 = vld [vmem:[#allocation18 + $0x148] sm:$0xff]
    %v5399 = vld [vmem:[#allocation18 + $0x150] sm:$0xff]
    %v5400 = vld [vmem:[#allocation18 + $0x158] sm:$0xff]
    %v5401 = vld [vmem:[#allocation18 + $0x160] sm:$0xff]
    %v5402 = vld [vmem:[#allocation18 + $0x168] sm:$0xff]
    %v5403 = vld [vmem:[#allocation18 + $0x170] sm:$0xff]
    %v5404 = vld [vmem:[#allocation18 + $0x178] sm:$0xff]
    %v5405 = vld [vmem:[#allocation18 + $0x180] sm:$0xff]
    %v5406 = vld [vmem:[#allocation18 + $0x188] sm:$0xff]
    %v5407 = vld [vmem:[#allocation18 + $0x190] sm:$0xff]
    %v5408 = vld [vmem:[#allocation18 + $0x198] sm:$0xff]
    %v5409 = vld [vmem:[#allocation18 + $0x1a0] sm:$0xff]
    %v5410 = vld [vmem:[#allocation18 + $0x1a8] sm:$0xff]
    %v5411 = vld [vmem:[#allocation18 + $0x1b0] sm:$0xff]
    %v5412 = vld [vmem:[#allocation18 + $0x1b8] sm:$0xff]
    %v5413 = vld [vmem:[#allocation18 + $0x1c0] sm:$0xff]
    %v5414 = vld [vmem:[#allocation18 + $0x1c8] sm:$0xff]
    %v5415 = vld [vmem:[#allocation18 + $0x1d0] sm:$0xff]
    %v5416 = vld [vmem:[#allocation18 + $0x1d8] sm:$0xff]
    %v5417 = vld [vmem:[#allocation18 + $0x1e0] sm:$0xff]
    %v5418 = vld [vmem:[#allocation18 + $0x1e8] sm:$0xff]
    %v5419 = vld [vmem:[#allocation18 + $0x1f0] sm:$0xff]
    %v5420 = vld [vmem:[#allocation18 + $0x1f8] sm:$0xff]
    %v5421 = vld [vmem:[#allocation18 + $0x200] sm:$0xff]
    %v5422 = vld [vmem:[#allocation18 + $0x208] sm:$0xff]
    %v5423 = vld [vmem:[#allocation18 + $0x210] sm:$0xff]
    %v5424 = vld [vmem:[#allocation18 + $0x218] sm:$0xff]
    %v5425 = vld [vmem:[#allocation18 + $0x220] sm:$0xff]
    %v5426 = vld [vmem:[#allocation18 + $0x228] sm:$0xff]
    %v5427 = vld [vmem:[#allocation18 + $0x230] sm:$0xff]
    %v5428 = vld [vmem:[#allocation18 + $0x238] sm:$0xff]
    %v5429 = vld [vmem:[#allocation18 + $0x240] sm:$0xff]
    %v5430 = vld [vmem:[#allocation18 + $0x248] sm:$0xff]
    %v5431 = vld [vmem:[#allocation18 + $0x250] sm:$0xff]
    %v5432 = vld [vmem:[#allocation18 + $0x258] sm:$0xff]
    %v5433 = vld [vmem:[#allocation18 + $0x260] sm:$0xff]
    %v5434 = vld [vmem:[#allocation18 + $0x268] sm:$0xff]
    %v5435 = vld [vmem:[#allocation18 + $0x270] sm:$0xff]
    %v5436 = vld [vmem:[#allocation18 + $0x278] sm:$0xff]
    %v5437 = vld [vmem:[#allocation18 + $0x280] sm:$0xff]
    %v5438 = vld [vmem:[#allocation18 + $0x288] sm:$0xff]
    %v5439 = vld [vmem:[#allocation18 + $0x290] sm:$0xff]
    %v5440 = vld [vmem:[#allocation18 + $0x298] sm:$0xff]
    %v5441 = vld [vmem:[#allocation18 + $0x2a0] sm:$0xff]
    %v5442 = vld [vmem:[#allocation18 + $0x2a8] sm:$0xff]
    %v5443 = vld [vmem:[#allocation18 + $0x2b0] sm:$0xff]
    %v5444 = vld [vmem:[#allocation18 + $0x2b8] sm:$0xff]
    %s5445 = scalar_lea.vmem [#allocation18], 704
    %v5446 = vld [vmem:[%s5445] sm:$0xff]
    %v5447 = vld [vmem:[%s5445 + $0x8] sm:$0xff]
    %v5448 = vld [vmem:[%s5445 + $0x10] sm:$0xff]
    %v5449 = vld [vmem:[%s5445 + $0x18] sm:$0xff]
    %v5450 = vld [vmem:[%s5445 + $0x20] sm:$0xff]
    %v5451 = vld [vmem:[%s5445 + $0x28] sm:$0xff]
    %v5452 = vld [vmem:[%s5445 + $0x30] sm:$0xff]
    %v5453 = vld [vmem:[%s5445 + $0x38] sm:$0xff]
    %v5454 = vld [vmem:[%s5445 + $0x40] sm:$0xff]
    %v5455 = vld [vmem:[%s5445 + $0x48] sm:$0xff]
    %v5456 = vld [vmem:[%s5445 + $0x50] sm:$0xff]
    %v5457 = vld [vmem:[%s5445 + $0x58] sm:$0xff]
    %v5458 = vld [vmem:[%s5445 + $0x60] sm:$0xff]
    %v5459 = vld [vmem:[%s5445 + $0x68] sm:$0xff]
    %v5460 = vld [vmem:[%s5445 + $0x70] sm:$0xff]
    %v5461 = vld [vmem:[%s5445 + $0x78] sm:$0xff]
    %v5462 = vld [vmem:[%s5445 + $0x80] sm:$0xff]
    %v5463 = vld [vmem:[%s5445 + $0x88] sm:$0xff]
    %v5464 = vld [vmem:[%s5445 + $0x90] sm:$0xff]
    %v5465 = vld [vmem:[%s5445 + $0x98] sm:$0xff]
    %v5466 = vld [vmem:[%s5445 + $0xa0] sm:$0xff]
    %v5467 = vld [vmem:[%s5445 + $0xa8] sm:$0xff]
    %v5468 = vld [vmem:[%s5445 + $0xb0] sm:$0xff]
    %v5469 = vld [vmem:[%s5445 + $0xb8] sm:$0xff]
    %v5470 = vld [vmem:[%s5445 + $0xc0] sm:$0xff]
    %v5471 = vld [vmem:[%s5445 + $0xc8] sm:$0xff]
    %v5472 = vld [vmem:[%s5445 + $0xd0] sm:$0xff]
    %v5473 = vld [vmem:[%s5445 + $0xd8] sm:$0xff]
    %v5474 = vld [vmem:[%s5445 + $0xe0] sm:$0xff]
    %v5475 = vld [vmem:[%s5445 + $0xe8] sm:$0xff]
    %v5476 = vld [vmem:[%s5445 + $0xf0] sm:$0xff]
    %v5477 = vld [vmem:[%s5445 + $0xf8] sm:$0xff]
    %v5478 = vld [vmem:[%s5445 + $0x100] sm:$0xff]
    %v5479 = vld [vmem:[%s5445 + $0x108] sm:$0xff]
    %v5480 = vld [vmem:[%s5445 + $0x110] sm:$0xff]
    %v5481 = vld [vmem:[%s5445 + $0x118] sm:$0xff]
    %v5482 = vld [vmem:[%s5445 + $0x120] sm:$0xff]
    %v5483 = vld [vmem:[%s5445 + $0x128] sm:$0xff]
    %v5484 = vld [vmem:[%s5445 + $0x130] sm:$0xff]
    %v5485 = vld [vmem:[%s5445 + $0x138] sm:$0xff]
    %v5486 = vld [vmem:[%s5445 + $0x140] sm:$0xff]
    %v5487 = vld [vmem:[%s5445 + $0x148] sm:$0xff]
    %v5488 = vld [vmem:[%s5445 + $0x150] sm:$0xff]
    %v5489 = vld [vmem:[%s5445 + $0x158] sm:$0xff]
    %v5490 = vld [vmem:[%s5445 + $0x160] sm:$0xff]
    %v5491 = vld [vmem:[%s5445 + $0x168] sm:$0xff]
    %v5492 = vld [vmem:[%s5445 + $0x170] sm:$0xff]
    %v5493 = vld [vmem:[%s5445 + $0x178] sm:$0xff]
    %v5494 = vld [vmem:[%s5445 + $0x180] sm:$0xff]
    %v5495 = vld [vmem:[%s5445 + $0x188] sm:$0xff]
    %v5496 = vld [vmem:[%s5445 + $0x190] sm:$0xff]
    %v5497 = vld [vmem:[%s5445 + $0x198] sm:$0xff]
    %v5498 = vld [vmem:[%s5445 + $0x1a0] sm:$0xff]
    %v5499 = vld [vmem:[%s5445 + $0x1a8] sm:$0xff]
    %v5500 = vld [vmem:[%s5445 + $0x1b0] sm:$0xff]
    %v5501 = vld [vmem:[%s5445 + $0x1b8] sm:$0xff]
    %v5502 = vld [vmem:[%s5445 + $0x1c0] sm:$0xff]
    %v5503 = vld [vmem:[%s5445 + $0x1c8] sm:$0xff]
    %v5504 = vld [vmem:[%s5445 + $0x1d0] sm:$0xff]
    %v5505 = vld [vmem:[%s5445 + $0x1d8] sm:$0xff]
    %v5506 = vld [vmem:[%s5445 + $0x1e0] sm:$0xff]
    %v5507 = vld [vmem:[%s5445 + $0x1e8] sm:$0xff]
    %v5508 = vld [vmem:[%s5445 + $0x1f0] sm:$0xff]
    %v5509 = vld [vmem:[%s5445 + $0x1f8] sm:$0xff]
    %v5510 = vld [vmem:[%s5445 + $0x200] sm:$0xff]
    %v5511 = vld [vmem:[%s5445 + $0x208] sm:$0xff]
    %v5512 = vld [vmem:[%s5445 + $0x210] sm:$0xff]
    %v5513 = vld [vmem:[%s5445 + $0x218] sm:$0xff]
    %v5514 = vld [vmem:[%s5445 + $0x220] sm:$0xff]
    %v5515 = vld [vmem:[%s5445 + $0x228] sm:$0xff]
    %v5516 = vld [vmem:[%s5445 + $0x230] sm:$0xff]
    %v5517 = vld [vmem:[%s5445 + $0x238] sm:$0xff]
    %v5518 = vld [vmem:[%s5445 + $0x240] sm:$0xff]
    %v5519 = vld [vmem:[%s5445 + $0x248] sm:$0xff]
    %v5520 = vld [vmem:[%s5445 + $0x250] sm:$0xff]
    %v5521 = vld [vmem:[%s5445 + $0x258] sm:$0xff]
    %v5522 = vld [vmem:[%s5445 + $0x260] sm:$0xff]
    %v5523 = vld [vmem:[%s5445 + $0x268] sm:$0xff]
    %v5524 = vld [vmem:[%s5445 + $0x270] sm:$0xff]
    %v5525 = vld [vmem:[%s5445 + $0x278] sm:$0xff]
    %v5526 = vld [vmem:[%s5445 + $0x280] sm:$0xff]
    %v5527 = vld [vmem:[%s5445 + $0x288] sm:$0xff]
    %v5528 = vld [vmem:[%s5445 + $0x290] sm:$0xff]
    %v5529 = vld [vmem:[%s5445 + $0x298] sm:$0xff]
    %v5530 = vld [vmem:[%s5445 + $0x2a0] sm:$0xff]
    %v5531 = vld [vmem:[%s5445 + $0x2a8] sm:$0xff]
    %v5532 = vld [vmem:[%s5445 + $0x2b0] sm:$0xff]
    %v5533 = vld [vmem:[%s5445 + $0x2b8] sm:$0xff]
    %v5535 = vsel %vm2173, %v5142, 0
    %5537 = vmatprep.subr.mxu0 %v5507
    %5538 = vmatpush1.msra.mxu0 %v5506
    %5539 = vmatprep.subr.mxu0 %v5503
    %5540 = vmatpush1.msra.mxu0 %v5502
    %5541 = vmatprep.subr.mxu0 %v5499
    %5542 = vmatpush1.msra.mxu0 %v5498
    %5543 = vmatprep.subr.mxu0 %v5495
    %5544 = vmatpush1.msra.mxu0 %v5494
    %5545 = vmatprep.subr.mxu0 %v5491
    %5546 = vmatpush1.msra.mxu0 %v5490
    %5547 = vmatprep.subr.mxu0 %v5487
    %5548 = vmatpush1.msra.mxu0 %v5486
    %5549 = vmatprep.subr.mxu0 %v5483
    %5550 = vmatpush1.msra.mxu0 %v5482
    %5551 = vmatprep.subr.mxu0 %v5479
    %5552 = vmatpush1.msra.mxu0 %v5478
    %5553 = vmatprep.subr.mxu0 %v5475
    %5554 = vmatpush1.msra.mxu0 %v5474
    %5555 = vmatprep.subr.mxu0 %v5471
    %5556 = vmatpush1.msra.mxu0 %v5470
    %5557 = vmatprep.subr.mxu0 %v5467
    %5558 = vmatpush1.msra.mxu0 %v5466
    %5559 = vmatprep.subr.mxu0 %v5463
    %5560 = vmatpush1.msra.mxu0 %v5462
    %5561 = vmatprep.subr.mxu0 %v5459
    %5562 = vmatpush1.msra.mxu0 %v5458
    %5563 = vmatprep.subr.mxu0 %v5455
    %5564 = vmatpush1.msra.mxu0 %v5454
    %5565 = vmatprep.subr.mxu0 %v5451
    %5566 = vmatpush1.msra.mxu0 %v5450
    %5567 = vmatprep.subr.mxu0 %v5447
    %5568 = vmatpush1.msra.mxu0 %v5446
    %5569 = vmatprep.subr.mxu0 0.0
    %5570 = vmatpush2.msra.mxu0 0.0
    %5571 = vmatprep.subr.mxu0 0.0
    %5572 = vmatpush2.msra.mxu0 0.0
    %5573 = vmatprep.subr.mxu0 0.0
    %5574 = vmatpush2.msra.mxu0 0.0
    %5575 = vmatprep.subr.mxu0 0.0
    %5576 = vmatpush2.msra.mxu0 0.0
    %5577 = vmatprep.subr.mxu0 0.0
    %5578 = vmatpush2.msra.mxu0 0.0
    %5579 = vmatprep.subr.mxu0 0.0
    %5580 = vmatpush2.msra.mxu0 0.0
    %5581 = vmatprep.subr.mxu0 0.0
    %5582 = vmatpush2.msra.mxu0 0.0
    %5583 = vmatprep.subr.mxu0 0.0
    %5584 = vmatpush2.msra.mxu0 0.0
    %5585 = vmatprep.subr.mxu0 0.0
    %5586 = vmatpush2.msra.mxu0 0.0
    %5587 = vmatprep.subr.mxu0 0.0
    %5588 = vmatpush2.msra.mxu0 0.0
    %5589 = vmatprep.subr.mxu0 %v5531
    %5590 = vmatpush2.msra.mxu0 %v5530
    %5591 = vmatprep.subr.mxu0 %v5527
    %5592 = vmatpush2.msra.mxu0 %v5526
    %5593 = vmatprep.subr.mxu0 %v5523
    %5594 = vmatpush2.msra.mxu0 %v5522
    %5595 = vmatprep.subr.mxu0 %v5519
    %5596 = vmatpush2.msra.mxu0 %v5518
    %5597 = vmatprep.subr.mxu0 %v5515
    %5598 = vmatpush2.msra.mxu0 %v5514
    %5599 = vmatprep.subr.mxu0 %v5511
    %5600 = vmatpush2.msra.mxu0 %v5510
    %5601 = vmatprep.mubr.f32.mxu0 %v5535
    %5602 = vmatmul.mubr.f32.gmra.mxu0 %v5140
    %v5603 = vpop.f32.mrf.mxu0
    %v5604 = vadd.f32 0.0, %v5603
    %v5605 = vpop.f32.mrf.mxu0
    %v5606 = vadd.f32 0.0, %v5605
    %5607 = vdwg.mxu0
    %5608 = vmatprep.subr.mxu0 %v5509
    %5609 = vmatpush1.msra.mxu0 %v5508
    %5610 = vmatprep.subr.mxu0 %v5505
    %5611 = vmatpush1.msra.mxu0 %v5504
    %5612 = vmatprep.subr.mxu0 %v5501
    %5613 = vmatpush1.msra.mxu0 %v5500
    %5614 = vmatprep.subr.mxu0 %v5497
    %5615 = vmatpush1.msra.mxu0 %v5496
    %5616 = vmatprep.subr.mxu0 %v5493
    %5617 = vmatpush1.msra.mxu0 %v5492
    %5618 = vmatprep.subr.mxu0 %v5489
    %5619 = vmatpush1.msra.mxu0 %v5488
    %5620 = vmatprep.subr.mxu0 %v5485
    %5621 = vmatpush1.msra.mxu0 %v5484
    %5622 = vmatprep.subr.mxu0 %v5481
    %5623 = vmatpush1.msra.mxu0 %v5480
    %5624 = vmatprep.subr.mxu0 %v5477
    %5625 = vmatpush1.msra.mxu0 %v5476
    %5626 = vmatprep.subr.mxu0 %v5473
    %5627 = vmatpush1.msra.mxu0 %v5472
    %5628 = vmatprep.subr.mxu0 %v5469
    %5629 = vmatpush1.msra.mxu0 %v5468
    %5630 = vmatprep.subr.mxu0 %v5465
    %5631 = vmatpush1.msra.mxu0 %v5464
    %5632 = vmatprep.subr.mxu0 %v5461
    %5633 = vmatpush1.msra.mxu0 %v5460
    %5634 = vmatprep.subr.mxu0 %v5457
    %5635 = vmatpush1.msra.mxu0 %v5456
    %5636 = vmatprep.subr.mxu0 %v5453
    %5637 = vmatpush1.msra.mxu0 %v5452
    %5638 = vmatprep.subr.mxu0 %v5449
    %5639 = vmatpush1.msra.mxu0 %v5448
    %5640 = vmatprep.subr.mxu0 0.0
    %5641 = vmatpush2.msra.mxu0 0.0
    %5642 = vmatprep.subr.mxu0 0.0
    %5643 = vmatpush2.msra.mxu0 0.0
    %5644 = vmatprep.subr.mxu0 0.0
    %5645 = vmatpush2.msra.mxu0 0.0
    %5646 = vmatprep.subr.mxu0 0.0
    %5647 = vmatpush2.msra.mxu0 0.0
    %5648 = vmatprep.subr.mxu0 0.0
    %5649 = vmatpush2.msra.mxu0 0.0
    %5650 = vmatprep.subr.mxu0 0.0
    %5651 = vmatpush2.msra.mxu0 0.0
    %5652 = vmatprep.subr.mxu0 0.0
    %5653 = vmatpush2.msra.mxu0 0.0
    %5654 = vmatprep.subr.mxu0 0.0
    %5655 = vmatpush2.msra.mxu0 0.0
    %5656 = vmatprep.subr.mxu0 0.0
    %5657 = vmatpush2.msra.mxu0 0.0
    %5658 = vmatprep.subr.mxu0 0.0
    %5659 = vmatpush2.msra.mxu0 0.0
    %5660 = vmatprep.subr.mxu0 %v5533
    %5661 = vmatpush2.msra.mxu0 %v5532
    %5662 = vmatprep.subr.mxu0 %v5529
    %5663 = vmatpush2.msra.mxu0 %v5528
    %5664 = vmatprep.subr.mxu0 %v5525
    %5665 = vmatpush2.msra.mxu0 %v5524
    %5666 = vmatprep.subr.mxu0 %v5521
    %5667 = vmatpush2.msra.mxu0 %v5520
    %5668 = vmatprep.subr.mxu0 %v5517
    %5669 = vmatpush2.msra.mxu0 %v5516
    %5670 = vmatprep.subr.mxu0 %v5513
    %5671 = vmatpush2.msra.mxu0 %v5512
    %5672 = vmatprep.mubr.f32.mxu0 %v5535
    %5673 = vmatmul.mubr.f32.gmra.mxu0 %v5140
    %v5674 = vpop.f32.mrf.mxu0
    %v5675 = vadd.f32 0.0, %v5674
    %v5676 = vpop.f32.mrf.mxu0
    %v5677 = vadd.f32 0.0, %v5676
    %5678 = vdwg.mxu0
    %v5680 = vsel %vm2173, %v5071, 0
    %5682 = vmatprep.subr.mxu0 %v5418
    %5683 = vmatpush1.msra.mxu0 %v5417
    %5684 = vmatprep.subr.mxu0 %v5414
    %5685 = vmatpush1.msra.mxu0 %v5413
    %5686 = vmatprep.subr.mxu0 %v5410
    %5687 = vmatpush1.msra.mxu0 %v5409
    %5688 = vmatprep.subr.mxu0 %v5406
    %5689 = vmatpush1.msra.mxu0 %v5405
    %5690 = vmatprep.subr.mxu0 %v5402
    %5691 = vmatpush1.msra.mxu0 %v5401
    %5692 = vmatprep.subr.mxu0 %v5398
    %5693 = vmatpush1.msra.mxu0 %v5397
    %5694 = vmatprep.subr.mxu0 %v5394
    %5695 = vmatpush1.msra.mxu0 %v5393
    %5696 = vmatprep.subr.mxu0 %v5390
    %5697 = vmatpush1.msra.mxu0 %v5389
    %5698 = vmatprep.subr.mxu0 %v5386
    %5699 = vmatpush1.msra.mxu0 %v5385
    %5700 = vmatprep.subr.mxu0 %v5382
    %5701 = vmatpush1.msra.mxu0 %v5381
    %5702 = vmatprep.subr.mxu0 %v5378
    %5703 = vmatpush1.msra.mxu0 %v5377
    %5704 = vmatprep.subr.mxu0 %v5374
    %5705 = vmatpush1.msra.mxu0 %v5373
    %5706 = vmatprep.subr.mxu0 %v5370
    %5707 = vmatpush1.msra.mxu0 %v5369
    %5708 = vmatprep.subr.mxu0 %v5366
    %5709 = vmatpush1.msra.mxu0 %v5365
    %5710 = vmatprep.subr.mxu0 %v5362
    %5711 = vmatpush1.msra.mxu0 %v5361
    %5712 = vmatprep.subr.mxu0 %v5358
    %5713 = vmatpush1.msra.mxu0 %v5357
    %5714 = vmatprep.subr.mxu0 0.0
    %5715 = vmatpush2.msra.mxu0 0.0
    %5716 = vmatprep.subr.mxu0 0.0
    %5717 = vmatpush2.msra.mxu0 0.0
    %5718 = vmatprep.subr.mxu0 0.0
    %5719 = vmatpush2.msra.mxu0 0.0
    %5720 = vmatprep.subr.mxu0 0.0
    %5721 = vmatpush2.msra.mxu0 0.0
    %5722 = vmatprep.subr.mxu0 0.0
    %5723 = vmatpush2.msra.mxu0 0.0
    %5724 = vmatprep.subr.mxu0 0.0
    %5725 = vmatpush2.msra.mxu0 0.0
    %5726 = vmatprep.subr.mxu0 0.0
    %5727 = vmatpush2.msra.mxu0 0.0
    %5728 = vmatprep.subr.mxu0 0.0
    %5729 = vmatpush2.msra.mxu0 0.0
    %5730 = vmatprep.subr.mxu0 0.0
    %5731 = vmatpush2.msra.mxu0 0.0
    %5732 = vmatprep.subr.mxu0 0.0
    %5733 = vmatpush2.msra.mxu0 0.0
    %5734 = vmatprep.subr.mxu0 %v5442
    %5735 = vmatpush2.msra.mxu0 %v5441
    %5736 = vmatprep.subr.mxu0 %v5438
    %5737 = vmatpush2.msra.mxu0 %v5437
    %5738 = vmatprep.subr.mxu0 %v5434
    %5739 = vmatpush2.msra.mxu0 %v5433
    %5740 = vmatprep.subr.mxu0 %v5430
    %5741 = vmatpush2.msra.mxu0 %v5429
    %5742 = vmatprep.subr.mxu0 %v5426
    %5743 = vmatpush2.msra.mxu0 %v5425
    %5744 = vmatprep.subr.mxu0 %v5422
    %5745 = vmatpush2.msra.mxu0 %v5421
    %5746 = vmatprep.mubr.f32.mxu0 %v5680
    %5747 = vmatmul.mubr.f32.gmra.mxu0 %v5069
    %v5748 = vpop.f32.mrf.mxu0
    %v5749 = vadd.f32 %v5604, %v5748
    %v5750 = vpop.f32.mrf.mxu0
    %v5751 = vadd.f32 %v5606, %v5750
    %5752 = vdwg.mxu0
    %5753 = vmatprep.subr.mxu0 %v5420
    %5754 = vmatpush1.msra.mxu0 %v5419
    %5755 = vmatprep.subr.mxu0 %v5416
    %5756 = vmatpush1.msra.mxu0 %v5415
    %5757 = vmatprep.subr.mxu0 %v5412
    %5758 = vmatpush1.msra.mxu0 %v5411
    %5759 = vmatprep.subr.mxu0 %v5408
    %5760 = vmatpush1.msra.mxu0 %v5407
    %5761 = vmatprep.subr.mxu0 %v5404
    %5762 = vmatpush1.msra.mxu0 %v5403
    %5763 = vmatprep.subr.mxu0 %v5400
    %5764 = vmatpush1.msra.mxu0 %v5399
    %5765 = vmatprep.subr.mxu0 %v5396
    %5766 = vmatpush1.msra.mxu0 %v5395
    %5767 = vmatprep.subr.mxu0 %v5392
    %5768 = vmatpush1.msra.mxu0 %v5391
    %5769 = vmatprep.subr.mxu0 %v5388
    %5770 = vmatpush1.msra.mxu0 %v5387
    %5771 = vmatprep.subr.mxu0 %v5384
    %5772 = vmatpush1.msra.mxu0 %v5383
    %5773 = vmatprep.subr.mxu0 %v5380
    %5774 = vmatpush1.msra.mxu0 %v5379
    %5775 = vmatprep.subr.mxu0 %v5376
    %5776 = vmatpush1.msra.mxu0 %v5375
    %5777 = vmatprep.subr.mxu0 %v5372
    %5778 = vmatpush1.msra.mxu0 %v5371
    %5779 = vmatprep.subr.mxu0 %v5368
    %5780 = vmatpush1.msra.mxu0 %v5367
    %5781 = vmatprep.subr.mxu0 %v5364
    %5782 = vmatpush1.msra.mxu0 %v5363
    %5783 = vmatprep.subr.mxu0 %v5360
    %5784 = vmatpush1.msra.mxu0 %v5359
    %5785 = vmatprep.subr.mxu0 0.0
    %5786 = vmatpush2.msra.mxu0 0.0
    %5787 = vmatprep.subr.mxu0 0.0
    %5788 = vmatpush2.msra.mxu0 0.0
    %5789 = vmatprep.subr.mxu0 0.0
    %5790 = vmatpush2.msra.mxu0 0.0
    %5791 = vmatprep.subr.mxu0 0.0
    %5792 = vmatpush2.msra.mxu0 0.0
    %5793 = vmatprep.subr.mxu0 0.0
    %5794 = vmatpush2.msra.mxu0 0.0
    %5795 = vmatprep.subr.mxu0 0.0
    %5796 = vmatpush2.msra.mxu0 0.0
    %5797 = vmatprep.subr.mxu0 0.0
    %5798 = vmatpush2.msra.mxu0 0.0
    %5799 = vmatprep.subr.mxu0 0.0
    %5800 = vmatpush2.msra.mxu0 0.0
    %5801 = vmatprep.subr.mxu0 0.0
    %5802 = vmatpush2.msra.mxu0 0.0
    %5803 = vmatprep.subr.mxu0 0.0
    %5804 = vmatpush2.msra.mxu0 0.0
    %5805 = vmatprep.subr.mxu0 %v5444
    %5806 = vmatpush2.msra.mxu0 %v5443
    %5807 = vmatprep.subr.mxu0 %v5440
    %5808 = vmatpush2.msra.mxu0 %v5439
    %5809 = vmatprep.subr.mxu0 %v5436
    %5810 = vmatpush2.msra.mxu0 %v5435
    %5811 = vmatprep.subr.mxu0 %v5432
    %5812 = vmatpush2.msra.mxu0 %v5431
    %5813 = vmatprep.subr.mxu0 %v5428
    %5814 = vmatpush2.msra.mxu0 %v5427
    %5815 = vmatprep.subr.mxu0 %v5424
    %5816 = vmatpush2.msra.mxu0 %v5423
    %5817 = vmatprep.mubr.f32.mxu0 %v5680
    %5818 = vmatmul.mubr.f32.gmra.mxu0 %v5069
    %v5819 = vpop.f32.mrf.mxu0
    %v5820 = vadd.f32 %v5675, %v5819
    %v5821 = vpop.f32.mrf.mxu0
    %v5822 = vadd.f32 %v5677, %v5821
    %5823 = vdwg.mxu0
    %s5824 = scalar_lea.vmem [#allocation18], 1408
    %v5825 = vld [vmem:[%s5824] sm:$0xff]
    %v5826 = vld [vmem:[%s5824 + $0x8] sm:$0xff]
    %v5827 = vld [vmem:[%s5824 + $0x10] sm:$0xff]
    %v5828 = vld [vmem:[%s5824 + $0x18] sm:$0xff]
    %v5829 = vld [vmem:[%s5824 + $0x20] sm:$0xff]
    %v5830 = vld [vmem:[%s5824 + $0x28] sm:$0xff]
    %v5831 = vld [vmem:[%s5824 + $0x30] sm:$0xff]
    %v5832 = vld [vmem:[%s5824 + $0x38] sm:$0xff]
    %v5833 = vld [vmem:[%s5824 + $0x40] sm:$0xff]
    %v5834 = vld [vmem:[%s5824 + $0x48] sm:$0xff]
    %v5835 = vld [vmem:[%s5824 + $0x50] sm:$0xff]
    %v5836 = vld [vmem:[%s5824 + $0x58] sm:$0xff]
    %v5837 = vld [vmem:[%s5824 + $0x60] sm:$0xff]
    %v5838 = vld [vmem:[%s5824 + $0x68] sm:$0xff]
    %v5839 = vld [vmem:[%s5824 + $0x70] sm:$0xff]
    %v5840 = vld [vmem:[%s5824 + $0x78] sm:$0xff]
    %v5841 = vld [vmem:[%s5824 + $0x80] sm:$0xff]
    %v5842 = vld [vmem:[%s5824 + $0x88] sm:$0xff]
    %v5843 = vld [vmem:[%s5824 + $0x90] sm:$0xff]
    %v5844 = vld [vmem:[%s5824 + $0x98] sm:$0xff]
    %v5845 = vld [vmem:[%s5824 + $0xa0] sm:$0xff]
    %v5846 = vld [vmem:[%s5824 + $0xa8] sm:$0xff]
    %v5847 = vld [vmem:[%s5824 + $0xb0] sm:$0xff]
    %v5848 = vld [vmem:[%s5824 + $0xb8] sm:$0xff]
    %v5849 = vld [vmem:[%s5824 + $0xc0] sm:$0xff]
    %v5850 = vld [vmem:[%s5824 + $0xc8] sm:$0xff]
    %v5851 = vld [vmem:[%s5824 + $0xd0] sm:$0xff]
    %v5852 = vld [vmem:[%s5824 + $0xd8] sm:$0xff]
    %v5853 = vld [vmem:[%s5824 + $0xe0] sm:$0xff]
    %v5854 = vld [vmem:[%s5824 + $0xe8] sm:$0xff]
    %v5855 = vld [vmem:[%s5824 + $0xf0] sm:$0xff]
    %v5856 = vld [vmem:[%s5824 + $0xf8] sm:$0xff]
    %v5857 = vld [vmem:[%s5824 + $0x100] sm:$0xff]
    %v5858 = vld [vmem:[%s5824 + $0x108] sm:$0xff]
    %v5859 = vld [vmem:[%s5824 + $0x110] sm:$0xff]
    %v5860 = vld [vmem:[%s5824 + $0x118] sm:$0xff]
    %v5861 = vld [vmem:[%s5824 + $0x120] sm:$0xff]
    %v5862 = vld [vmem:[%s5824 + $0x128] sm:$0xff]
    %v5863 = vld [vmem:[%s5824 + $0x130] sm:$0xff]
    %v5864 = vld [vmem:[%s5824 + $0x138] sm:$0xff]
    %v5865 = vld [vmem:[%s5824 + $0x140] sm:$0xff]
    %v5866 = vld [vmem:[%s5824 + $0x148] sm:$0xff]
    %v5867 = vld [vmem:[%s5824 + $0x150] sm:$0xff]
    %v5868 = vld [vmem:[%s5824 + $0x158] sm:$0xff]
    %v5869 = vld [vmem:[%s5824 + $0x160] sm:$0xff]
    %v5870 = vld [vmem:[%s5824 + $0x168] sm:$0xff]
    %v5871 = vld [vmem:[%s5824 + $0x170] sm:$0xff]
    %v5872 = vld [vmem:[%s5824 + $0x178] sm:$0xff]
    %v5873 = vld [vmem:[%s5824 + $0x180] sm:$0xff]
    %v5874 = vld [vmem:[%s5824 + $0x188] sm:$0xff]
    %v5875 = vld [vmem:[%s5824 + $0x190] sm:$0xff]
    %v5876 = vld [vmem:[%s5824 + $0x198] sm:$0xff]
    %v5877 = vld [vmem:[%s5824 + $0x1a0] sm:$0xff]
    %v5878 = vld [vmem:[%s5824 + $0x1a8] sm:$0xff]
    %v5879 = vld [vmem:[%s5824 + $0x1b0] sm:$0xff]
    %v5880 = vld [vmem:[%s5824 + $0x1b8] sm:$0xff]
    %v5881 = vld [vmem:[%s5824 + $0x1c0] sm:$0xff]
    %v5882 = vld [vmem:[%s5824 + $0x1c8] sm:$0xff]
    %v5883 = vld [vmem:[%s5824 + $0x1d0] sm:$0xff]
    %v5884 = vld [vmem:[%s5824 + $0x1d8] sm:$0xff]
    %v5885 = vld [vmem:[%s5824 + $0x1e0] sm:$0xff]
    %v5886 = vld [vmem:[%s5824 + $0x1e8] sm:$0xff]
    %v5887 = vld [vmem:[%s5824 + $0x1f0] sm:$0xff]
    %v5888 = vld [vmem:[%s5824 + $0x1f8] sm:$0xff]
    %v5889 = vld [vmem:[%s5824 + $0x200] sm:$0xff]
    %v5890 = vld [vmem:[%s5824 + $0x208] sm:$0xff]
    %v5891 = vld [vmem:[%s5824 + $0x210] sm:$0xff]
    %v5892 = vld [vmem:[%s5824 + $0x218] sm:$0xff]
    %v5893 = vld [vmem:[%s5824 + $0x220] sm:$0xff]
    %v5894 = vld [vmem:[%s5824 + $0x228] sm:$0xff]
    %v5895 = vld [vmem:[%s5824 + $0x230] sm:$0xff]
    %v5896 = vld [vmem:[%s5824 + $0x238] sm:$0xff]
    %v5897 = vld [vmem:[%s5824 + $0x240] sm:$0xff]
    %v5898 = vld [vmem:[%s5824 + $0x248] sm:$0xff]
    %v5899 = vld [vmem:[%s5824 + $0x250] sm:$0xff]
    %v5900 = vld [vmem:[%s5824 + $0x258] sm:$0xff]
    %v5901 = vld [vmem:[%s5824 + $0x260] sm:$0xff]
    %v5902 = vld [vmem:[%s5824 + $0x268] sm:$0xff]
    %v5903 = vld [vmem:[%s5824 + $0x270] sm:$0xff]
    %v5904 = vld [vmem:[%s5824 + $0x278] sm:$0xff]
    %v5905 = vld [vmem:[%s5824 + $0x280] sm:$0xff]
    %v5906 = vld [vmem:[%s5824 + $0x288] sm:$0xff]
    %v5907 = vld [vmem:[%s5824 + $0x290] sm:$0xff]
    %v5908 = vld [vmem:[%s5824 + $0x298] sm:$0xff]
    %v5909 = vld [vmem:[%s5824 + $0x2a0] sm:$0xff]
    %v5910 = vld [vmem:[%s5824 + $0x2a8] sm:$0xff]
    %v5911 = vld [vmem:[%s5824 + $0x2b0] sm:$0xff]
    %v5912 = vld [vmem:[%s5824 + $0x2b8] sm:$0xff]
    %v5914 = vsel %vm2173, %v5213, 0
    %5916 = vmatprep.subr.mxu0 %v5886
    %5917 = vmatpush1.msra.mxu0 %v5885
    %5918 = vmatprep.subr.mxu0 %v5882
    %5919 = vmatpush1.msra.mxu0 %v5881
    %5920 = vmatprep.subr.mxu0 %v5878
    %5921 = vmatpush1.msra.mxu0 %v5877
    %5922 = vmatprep.subr.mxu0 %v5874
    %5923 = vmatpush1.msra.mxu0 %v5873
    %5924 = vmatprep.subr.mxu0 %v5870
    %5925 = vmatpush1.msra.mxu0 %v5869
    %5926 = vmatprep.subr.mxu0 %v5866
    %5927 = vmatpush1.msra.mxu0 %v5865
    %5928 = vmatprep.subr.mxu0 %v5862
    %5929 = vmatpush1.msra.mxu0 %v5861
    %5930 = vmatprep.subr.mxu0 %v5858
    %5931 = vmatpush1.msra.mxu0 %v5857
    %5932 = vmatprep.subr.mxu0 %v5854
    %5933 = vmatpush1.msra.mxu0 %v5853
    %5934 = vmatprep.subr.mxu0 %v5850
    %5935 = vmatpush1.msra.mxu0 %v5849
    %5936 = vmatprep.subr.mxu0 %v5846
    %5937 = vmatpush1.msra.mxu0 %v5845
    %5938 = vmatprep.subr.mxu0 %v5842
    %5939 = vmatpush1.msra.mxu0 %v5841
    %5940 = vmatprep.subr.mxu0 %v5838
    %5941 = vmatpush1.msra.mxu0 %v5837
    %5942 = vmatprep.subr.mxu0 %v5834
    %5943 = vmatpush1.msra.mxu0 %v5833
    %5944 = vmatprep.subr.mxu0 %v5830
    %5945 = vmatpush1.msra.mxu0 %v5829
    %5946 = vmatprep.subr.mxu0 %v5826
    %5947 = vmatpush1.msra.mxu0 %v5825
    %5948 = vmatprep.subr.mxu0 0.0
    %5949 = vmatpush2.msra.mxu0 0.0
    %5950 = vmatprep.subr.mxu0 0.0
    %5951 = vmatpush2.msra.mxu0 0.0
    %5952 = vmatprep.subr.mxu0 0.0
    %5953 = vmatpush2.msra.mxu0 0.0
    %5954 = vmatprep.subr.mxu0 0.0
    %5955 = vmatpush2.msra.mxu0 0.0
    %5956 = vmatprep.subr.mxu0 0.0
    %5957 = vmatpush2.msra.mxu0 0.0
    %5958 = vmatprep.subr.mxu0 0.0
    %5959 = vmatpush2.msra.mxu0 0.0
    %5960 = vmatprep.subr.mxu0 0.0
    %5961 = vmatpush2.msra.mxu0 0.0
    %5962 = vmatprep.subr.mxu0 0.0
    %5963 = vmatpush2.msra.mxu0 0.0
    %5964 = vmatprep.subr.mxu0 0.0
    %5965 = vmatpush2.msra.mxu0 0.0
    %5966 = vmatprep.subr.mxu0 0.0
    %5967 = vmatpush2.msra.mxu0 0.0
    %5968 = vmatprep.subr.mxu0 %v5910
    %5969 = vmatpush2.msra.mxu0 %v5909
    %5970 = vmatprep.subr.mxu0 %v5906
    %5971 = vmatpush2.msra.mxu0 %v5905
    %5972 = vmatprep.subr.mxu0 %v5902
    %5973 = vmatpush2.msra.mxu0 %v5901
    %5974 = vmatprep.subr.mxu0 %v5898
    %5975 = vmatpush2.msra.mxu0 %v5897
    %5976 = vmatprep.subr.mxu0 %v5894
    %5977 = vmatpush2.msra.mxu0 %v5893
    %5978 = vmatprep.subr.mxu0 %v5890
    %5979 = vmatpush2.msra.mxu0 %v5889
    %5980 = vmatprep.mubr.f32.mxu0 %v5914
    %5981 = vmatmul.mubr.f32.gmra.mxu0 %v5211
    %v5982 = vpop.f32.mrf.mxu0
    %v5983 = vadd.f32 0.0, %v5982
    %v5984 = vpop.f32.mrf.mxu0
    %v5985 = vadd.f32 0.0, %v5984
    %5986 = vdwg.mxu0
    %5987 = vmatprep.subr.mxu0 %v5888
    %5988 = vmatpush1.msra.mxu0 %v5887
    %5989 = vmatprep.subr.mxu0 %v5884
    %5990 = vmatpush1.msra.mxu0 %v5883
    %5991 = vmatprep.subr.mxu0 %v5880
    %5992 = vmatpush1.msra.mxu0 %v5879
    %5993 = vmatprep.subr.mxu0 %v5876
    %5994 = vmatpush1.msra.mxu0 %v5875
    %5995 = vmatprep.subr.mxu0 %v5872
    %5996 = vmatpush1.msra.mxu0 %v5871
    %5997 = vmatprep.subr.mxu0 %v5868
    %5998 = vmatpush1.msra.mxu0 %v5867
    %5999 = vmatprep.subr.mxu0 %v5864
    %6000 = vmatpush1.msra.mxu0 %v5863
    %6001 = vmatprep.subr.mxu0 %v5860
    %6002 = vmatpush1.msra.mxu0 %v5859
    %6003 = vmatprep.subr.mxu0 %v5856
    %6004 = vmatpush1.msra.mxu0 %v5855
    %6005 = vmatprep.subr.mxu0 %v5852
    %6006 = vmatpush1.msra.mxu0 %v5851
    %6007 = vmatprep.subr.mxu0 %v5848
    %6008 = vmatpush1.msra.mxu0 %v5847
    %6009 = vmatprep.subr.mxu0 %v5844
    %6010 = vmatpush1.msra.mxu0 %v5843
    %6011 = vmatprep.subr.mxu0 %v5840
    %6012 = vmatpush1.msra.mxu0 %v5839
    %6013 = vmatprep.subr.mxu0 %v5836
    %6014 = vmatpush1.msra.mxu0 %v5835
    %6015 = vmatprep.subr.mxu0 %v5832
    %6016 = vmatpush1.msra.mxu0 %v5831
    %6017 = vmatprep.subr.mxu0 %v5828
    %6018 = vmatpush1.msra.mxu0 %v5827
    %6019 = vmatprep.subr.mxu0 0.0
    %6020 = vmatpush2.msra.mxu0 0.0
    %6021 = vmatprep.subr.mxu0 0.0
    %6022 = vmatpush2.msra.mxu0 0.0
    %6023 = vmatprep.subr.mxu0 0.0
    %6024 = vmatpush2.msra.mxu0 0.0
    %6025 = vmatprep.subr.mxu0 0.0
    %6026 = vmatpush2.msra.mxu0 0.0
    %6027 = vmatprep.subr.mxu0 0.0
    %6028 = vmatpush2.msra.mxu0 0.0
    %6029 = vmatprep.subr.mxu0 0.0
    %6030 = vmatpush2.msra.mxu0 0.0
    %6031 = vmatprep.subr.mxu0 0.0
    %6032 = vmatpush2.msra.mxu0 0.0
    %6033 = vmatprep.subr.mxu0 0.0
    %6034 = vmatpush2.msra.mxu0 0.0
    %6035 = vmatprep.subr.mxu0 0.0
    %6036 = vmatpush2.msra.mxu0 0.0
    %6037 = vmatprep.subr.mxu0 0.0
    %6038 = vmatpush2.msra.mxu0 0.0
    %6039 = vmatprep.subr.mxu0 %v5912
    %6040 = vmatpush2.msra.mxu0 %v5911
    %6041 = vmatprep.subr.mxu0 %v5908
    %6042 = vmatpush2.msra.mxu0 %v5907
    %6043 = vmatprep.subr.mxu0 %v5904
    %6044 = vmatpush2.msra.mxu0 %v5903
    %6045 = vmatprep.subr.mxu0 %v5900
    %6046 = vmatpush2.msra.mxu0 %v5899
    %6047 = vmatprep.subr.mxu0 %v5896
    %6048 = vmatpush2.msra.mxu0 %v5895
    %6049 = vmatprep.subr.mxu0 %v5892
    %6050 = vmatpush2.msra.mxu0 %v5891
    %6051 = vmatprep.mubr.f32.mxu0 %v5914
    %6052 = vmatmul.mubr.f32.gmra.mxu0 %v5211
    %v6053 = vpop.f32.mrf.mxu0
    %v6054 = vadd.f32 0.0, %v6053
    %v6055 = vpop.f32.mrf.mxu0
    %v6056 = vadd.f32 0.0, %v6055
    %6057 = vdwg.mxu0
    %v6058 = vadd.f32 %v5749, %v5983
    %v6059 = vadd.f32 %v5751, %v5985
    %v6060 = vadd.f32 %v5820, %v6054
    %v6061 = vadd.f32 %v5822, %v6056
    %s6062 = scalar_lea.vmem [#allocation18], 2112
    %v6063 = vld [vmem:[%s6062] sm:$0xff]
    %v6064 = vld [vmem:[%s6062 + $0x8] sm:$0xff]
    %v6065 = vld [vmem:[%s6062 + $0x10] sm:$0xff]
    %v6066 = vld [vmem:[%s6062 + $0x18] sm:$0xff]
    %v6067 = vld [vmem:[%s6062 + $0x20] sm:$0xff]
    %v6068 = vld [vmem:[%s6062 + $0x28] sm:$0xff]
    %v6069 = vld [vmem:[%s6062 + $0x30] sm:$0xff]
    %v6070 = vld [vmem:[%s6062 + $0x38] sm:$0xff]
    %v6071 = vld [vmem:[%s6062 + $0x40] sm:$0xff]
    %v6072 = vld [vmem:[%s6062 + $0x48] sm:$0xff]
    %v6073 = vld [vmem:[%s6062 + $0x50] sm:$0xff]
    %v6074 = vld [vmem:[%s6062 + $0x58] sm:$0xff]
    %v6075 = vld [vmem:[%s6062 + $0x60] sm:$0xff]
    %v6076 = vld [vmem:[%s6062 + $0x68] sm:$0xff]
    %v6077 = vld [vmem:[%s6062 + $0x70] sm:$0xff]
    %v6078 = vld [vmem:[%s6062 + $0x78] sm:$0xff]
    %v6079 = vld [vmem:[%s6062 + $0x80] sm:$0xff]
    %v6080 = vld [vmem:[%s6062 + $0x88] sm:$0xff]
    %v6081 = vld [vmem:[%s6062 + $0x90] sm:$0xff]
    %v6082 = vld [vmem:[%s6062 + $0x98] sm:$0xff]
    %v6083 = vld [vmem:[%s6062 + $0xa0] sm:$0xff]
    %v6084 = vld [vmem:[%s6062 + $0xa8] sm:$0xff]
    %v6085 = vld [vmem:[%s6062 + $0xb0] sm:$0xff]
    %v6086 = vld [vmem:[%s6062 + $0xb8] sm:$0xff]
    %v6087 = vld [vmem:[%s6062 + $0xc0] sm:$0xff]
    %v6088 = vld [vmem:[%s6062 + $0xc8] sm:$0xff]
    %v6089 = vld [vmem:[%s6062 + $0xd0] sm:$0xff]
    %v6090 = vld [vmem:[%s6062 + $0xd8] sm:$0xff]
    %v6091 = vld [vmem:[%s6062 + $0xe0] sm:$0xff]
    %v6092 = vld [vmem:[%s6062 + $0xe8] sm:$0xff]
    %v6093 = vld [vmem:[%s6062 + $0xf0] sm:$0xff]
    %v6094 = vld [vmem:[%s6062 + $0xf8] sm:$0xff]
    %v6095 = vld [vmem:[%s6062 + $0x100] sm:$0xff]
    %v6096 = vld [vmem:[%s6062 + $0x108] sm:$0xff]
    %v6097 = vld [vmem:[%s6062 + $0x110] sm:$0xff]
    %v6098 = vld [vmem:[%s6062 + $0x118] sm:$0xff]
    %v6099 = vld [vmem:[%s6062 + $0x120] sm:$0xff]
    %v6100 = vld [vmem:[%s6062 + $0x128] sm:$0xff]
    %v6101 = vld [vmem:[%s6062 + $0x130] sm:$0xff]
    %v6102 = vld [vmem:[%s6062 + $0x138] sm:$0xff]
    %v6103 = vld [vmem:[%s6062 + $0x140] sm:$0xff]
    %v6104 = vld [vmem:[%s6062 + $0x148] sm:$0xff]
    %v6105 = vld [vmem:[%s6062 + $0x150] sm:$0xff]
    %v6106 = vld [vmem:[%s6062 + $0x158] sm:$0xff]
    %v6107 = vld [vmem:[%s6062 + $0x160] sm:$0xff]
    %v6108 = vld [vmem:[%s6062 + $0x168] sm:$0xff]
    %v6109 = vld [vmem:[%s6062 + $0x170] sm:$0xff]
    %v6110 = vld [vmem:[%s6062 + $0x178] sm:$0xff]
    %v6111 = vld [vmem:[%s6062 + $0x180] sm:$0xff]
    %v6112 = vld [vmem:[%s6062 + $0x188] sm:$0xff]
    %v6113 = vld [vmem:[%s6062 + $0x190] sm:$0xff]
    %v6114 = vld [vmem:[%s6062 + $0x198] sm:$0xff]
    %v6115 = vld [vmem:[%s6062 + $0x1a0] sm:$0xff]
    %v6116 = vld [vmem:[%s6062 + $0x1a8] sm:$0xff]
    %v6117 = vld [vmem:[%s6062 + $0x1b0] sm:$0xff]
    %v6118 = vld [vmem:[%s6062 + $0x1b8] sm:$0xff]
    %v6119 = vld [vmem:[%s6062 + $0x1c0] sm:$0xff]
    %v6120 = vld [vmem:[%s6062 + $0x1c8] sm:$0xff]
    %v6121 = vld [vmem:[%s6062 + $0x1d0] sm:$0xff]
    %v6122 = vld [vmem:[%s6062 + $0x1d8] sm:$0xff]
    %v6123 = vld [vmem:[%s6062 + $0x1e0] sm:$0xff]
    %v6124 = vld [vmem:[%s6062 + $0x1e8] sm:$0xff]
    %v6125 = vld [vmem:[%s6062 + $0x1f0] sm:$0xff]
    %v6126 = vld [vmem:[%s6062 + $0x1f8] sm:$0xff]
    %v6127 = vld [vmem:[%s6062 + $0x200] sm:$0xff]
    %v6128 = vld [vmem:[%s6062 + $0x208] sm:$0xff]
    %v6129 = vld [vmem:[%s6062 + $0x210] sm:$0xff]
    %v6130 = vld [vmem:[%s6062 + $0x218] sm:$0xff]
    %v6131 = vld [vmem:[%s6062 + $0x220] sm:$0xff]
    %v6132 = vld [vmem:[%s6062 + $0x228] sm:$0xff]
    %v6133 = vld [vmem:[%s6062 + $0x230] sm:$0xff]
    %v6134 = vld [vmem:[%s6062 + $0x238] sm:$0xff]
    %v6135 = vld [vmem:[%s6062 + $0x240] sm:$0xff]
    %v6136 = vld [vmem:[%s6062 + $0x248] sm:$0xff]
    %v6137 = vld [vmem:[%s6062 + $0x250] sm:$0xff]
    %v6138 = vld [vmem:[%s6062 + $0x258] sm:$0xff]
    %v6139 = vld [vmem:[%s6062 + $0x260] sm:$0xff]
    %v6140 = vld [vmem:[%s6062 + $0x268] sm:$0xff]
    %v6141 = vld [vmem:[%s6062 + $0x270] sm:$0xff]
    %v6142 = vld [vmem:[%s6062 + $0x278] sm:$0xff]
    %v6143 = vld [vmem:[%s6062 + $0x280] sm:$0xff]
    %v6144 = vld [vmem:[%s6062 + $0x288] sm:$0xff]
    %v6145 = vld [vmem:[%s6062 + $0x290] sm:$0xff]
    %v6146 = vld [vmem:[%s6062 + $0x298] sm:$0xff]
    %v6147 = vld [vmem:[%s6062 + $0x2a0] sm:$0xff]
    %v6148 = vld [vmem:[%s6062 + $0x2a8] sm:$0xff]
    %v6149 = vld [vmem:[%s6062 + $0x2b0] sm:$0xff]
    %v6150 = vld [vmem:[%s6062 + $0x2b8] sm:$0xff]
    %v6152 = vsel %vm2173, %v5284, 0
    %6154 = vmatprep.subr.mxu0 %v6124
    %6155 = vmatpush1.msra.mxu0 %v6123
    %6156 = vmatprep.subr.mxu0 %v6120
    %6157 = vmatpush1.msra.mxu0 %v6119
    %6158 = vmatprep.subr.mxu0 %v6116
    %6159 = vmatpush1.msra.mxu0 %v6115
    %6160 = vmatprep.subr.mxu0 %v6112
    %6161 = vmatpush1.msra.mxu0 %v6111
    %6162 = vmatprep.subr.mxu0 %v6108
    %6163 = vmatpush1.msra.mxu0 %v6107
    %6164 = vmatprep.subr.mxu0 %v6104
    %6165 = vmatpush1.msra.mxu0 %v6103
    %6166 = vmatprep.subr.mxu0 %v6100
    %6167 = vmatpush1.msra.mxu0 %v6099
    %6168 = vmatprep.subr.mxu0 %v6096
    %6169 = vmatpush1.msra.mxu0 %v6095
    %6170 = vmatprep.subr.mxu0 %v6092
    %6171 = vmatpush1.msra.mxu0 %v6091
    %6172 = vmatprep.subr.mxu0 %v6088
    %6173 = vmatpush1.msra.mxu0 %v6087
    %6174 = vmatprep.subr.mxu0 %v6084
    %6175 = vmatpush1.msra.mxu0 %v6083
    %6176 = vmatprep.subr.mxu0 %v6080
    %6177 = vmatpush1.msra.mxu0 %v6079
    %6178 = vmatprep.subr.mxu0 %v6076
    %6179 = vmatpush1.msra.mxu0 %v6075
    %6180 = vmatprep.subr.mxu0 %v6072
    %6181 = vmatpush1.msra.mxu0 %v6071
    %6182 = vmatprep.subr.mxu0 %v6068
    %6183 = vmatpush1.msra.mxu0 %v6067
    %6184 = vmatprep.subr.mxu0 %v6064
    %6185 = vmatpush1.msra.mxu0 %v6063
    %6186 = vmatprep.subr.mxu0 0.0
    %6187 = vmatpush2.msra.mxu0 0.0
    %6188 = vmatprep.subr.mxu0 0.0
    %6189 = vmatpush2.msra.mxu0 0.0
    %6190 = vmatprep.subr.mxu0 0.0
    %6191 = vmatpush2.msra.mxu0 0.0
    %6192 = vmatprep.subr.mxu0 0.0
    %6193 = vmatpush2.msra.mxu0 0.0
    %6194 = vmatprep.subr.mxu0 0.0
    %6195 = vmatpush2.msra.mxu0 0.0
    %6196 = vmatprep.subr.mxu0 0.0
    %6197 = vmatpush2.msra.mxu0 0.0
    %6198 = vmatprep.subr.mxu0 0.0
    %6199 = vmatpush2.msra.mxu0 0.0
    %6200 = vmatprep.subr.mxu0 0.0
    %6201 = vmatpush2.msra.mxu0 0.0
    %6202 = vmatprep.subr.mxu0 0.0
    %6203 = vmatpush2.msra.mxu0 0.0
    %6204 = vmatprep.subr.mxu0 0.0
    %6205 = vmatpush2.msra.mxu0 0.0
    %6206 = vmatprep.subr.mxu0 %v6148
    %6207 = vmatpush2.msra.mxu0 %v6147
    %6208 = vmatprep.subr.mxu0 %v6144
    %6209 = vmatpush2.msra.mxu0 %v6143
    %6210 = vmatprep.subr.mxu0 %v6140
    %6211 = vmatpush2.msra.mxu0 %v6139
    %6212 = vmatprep.subr.mxu0 %v6136
    %6213 = vmatpush2.msra.mxu0 %v6135
    %6214 = vmatprep.subr.mxu0 %v6132
    %6215 = vmatpush2.msra.mxu0 %v6131
    %6216 = vmatprep.subr.mxu0 %v6128
    %6217 = vmatpush2.msra.mxu0 %v6127
    %6218 = vmatprep.mubr.f32.mxu0 %v6152
    %6219 = vmatmul.mubr.f32.gmra.mxu0 %v5282
    %v6220 = vpop.f32.mrf.mxu0
    %v6221 = vadd.f32 0.0, %v6220
    %v6222 = vpop.f32.mrf.mxu0
    %v6223 = vadd.f32 0.0, %v6222
    %6224 = vdwg.mxu0
    %6225 = vmatprep.subr.mxu0 %v6126
    %6226 = vmatpush1.msra.mxu0 %v6125
    %6227 = vmatprep.subr.mxu0 %v6122
    %6228 = vmatpush1.msra.mxu0 %v6121
    %6229 = vmatprep.subr.mxu0 %v6118
    %6230 = vmatpush1.msra.mxu0 %v6117
    %6231 = vmatprep.subr.mxu0 %v6114
    %6232 = vmatpush1.msra.mxu0 %v6113
    %6233 = vmatprep.subr.mxu0 %v6110
    %6234 = vmatpush1.msra.mxu0 %v6109
    %6235 = vmatprep.subr.mxu0 %v6106
    %6236 = vmatpush1.msra.mxu0 %v6105
    %6237 = vmatprep.subr.mxu0 %v6102
    %6238 = vmatpush1.msra.mxu0 %v6101
    %6239 = vmatprep.subr.mxu0 %v6098
    %6240 = vmatpush1.msra.mxu0 %v6097
    %6241 = vmatprep.subr.mxu0 %v6094
    %6242 = vmatpush1.msra.mxu0 %v6093
    %6243 = vmatprep.subr.mxu0 %v6090
    %6244 = vmatpush1.msra.mxu0 %v6089
    %6245 = vmatprep.subr.mxu0 %v6086
    %6246 = vmatpush1.msra.mxu0 %v6085
    %6247 = vmatprep.subr.mxu0 %v6082
    %6248 = vmatpush1.msra.mxu0 %v6081
    %6249 = vmatprep.subr.mxu0 %v6078
    %6250 = vmatpush1.msra.mxu0 %v6077
    %6251 = vmatprep.subr.mxu0 %v6074
    %6252 = vmatpush1.msra.mxu0 %v6073
    %6253 = vmatprep.subr.mxu0 %v6070
    %6254 = vmatpush1.msra.mxu0 %v6069
    %6255 = vmatprep.subr.mxu0 %v6066
    %6256 = vmatpush1.msra.mxu0 %v6065
    %6257 = vmatprep.subr.mxu0 0.0
    %6258 = vmatpush2.msra.mxu0 0.0
    %6259 = vmatprep.subr.mxu0 0.0
    %6260 = vmatpush2.msra.mxu0 0.0
    %6261 = vmatprep.subr.mxu0 0.0
    %6262 = vmatpush2.msra.mxu0 0.0
    %6263 = vmatprep.subr.mxu0 0.0
    %6264 = vmatpush2.msra.mxu0 0.0
    %6265 = vmatprep.subr.mxu0 0.0
    %6266 = vmatpush2.msra.mxu0 0.0
    %6267 = vmatprep.subr.mxu0 0.0
    %6268 = vmatpush2.msra.mxu0 0.0
    %6269 = vmatprep.subr.mxu0 0.0
    %6270 = vmatpush2.msra.mxu0 0.0
    %6271 = vmatprep.subr.mxu0 0.0
    %6272 = vmatpush2.msra.mxu0 0.0
    %6273 = vmatprep.subr.mxu0 0.0
    %6274 = vmatpush2.msra.mxu0 0.0
    %6275 = vmatprep.subr.mxu0 0.0
    %6276 = vmatpush2.msra.mxu0 0.0
    %6277 = vmatprep.subr.mxu0 %v6150
    %6278 = vmatpush2.msra.mxu0 %v6149
    %6279 = vmatprep.subr.mxu0 %v6146
    %6280 = vmatpush2.msra.mxu0 %v6145
    %6281 = vmatprep.subr.mxu0 %v6142
    %6282 = vmatpush2.msra.mxu0 %v6141
    %6283 = vmatprep.subr.mxu0 %v6138
    %6284 = vmatpush2.msra.mxu0 %v6137
    %6285 = vmatprep.subr.mxu0 %v6134
    %6286 = vmatpush2.msra.mxu0 %v6133
    %6287 = vmatprep.subr.mxu0 %v6130
    %6288 = vmatpush2.msra.mxu0 %v6129
    %6289 = vmatprep.mubr.f32.mxu0 %v6152
    %6290 = vmatmul.mubr.f32.gmra.mxu0 %v5282
    %v6291 = vpop.f32.mrf.mxu0
    %v6292 = vadd.f32 0.0, %v6291
    %v6293 = vpop.f32.mrf.mxu0
    %v6294 = vadd.f32 0.0, %v6293
    %6295 = vdwg.mxu0
    %v6296 = vadd.f32 %v6058, %v6221
    %v6297 = vadd.f32 %v6059, %v6223
    %v6298 = vadd.f32 %v6060, %v6292
    %v6299 = vadd.f32 %v6061, %v6294
    %s6300 = scalar_lea.vmem [#allocation18], 2816
    %v6301 = vld [vmem:[%s6300] sm:$0xff]
    %v6302 = vld [vmem:[%s6300 + $0x8] sm:$0xff]
    %v6303 = vld [vmem:[%s6300 + $0x10] sm:$0xff]
    %v6304 = vld [vmem:[%s6300 + $0x18] sm:$0xff]
    %v6305 = vld [vmem:[%s6300 + $0x20] sm:$0xff]
    %v6306 = vld [vmem:[%s6300 + $0x28] sm:$0xff]
    %v6307 = vld [vmem:[%s6300 + $0x30] sm:$0xff]
    %v6308 = vld [vmem:[%s6300 + $0x38] sm:$0xff]
    %v6309 = vld [vmem:[%s6300 + $0x40] sm:$0xff]
    %v6310 = vld [vmem:[%s6300 + $0x48] sm:$0xff]
    %v6311 = vld [vmem:[%s6300 + $0x50] sm:$0xff]
    %v6312 = vld [vmem:[%s6300 + $0x58] sm:$0xff]
    %v6313 = vld [vmem:[%s6300 + $0x60] sm:$0xff]
    %v6314 = vld [vmem:[%s6300 + $0x68] sm:$0xff]
    %v6315 = vld [vmem:[%s6300 + $0x70] sm:$0xff]
    %v6316 = vld [vmem:[%s6300 + $0x78] sm:$0xff]
    %v6317 = vld [vmem:[%s6300 + $0x80] sm:$0xff]
    %v6318 = vld [vmem:[%s6300 + $0x88] sm:$0xff]
    %v6319 = vld [vmem:[%s6300 + $0x90] sm:$0xff]
    %v6320 = vld [vmem:[%s6300 + $0x98] sm:$0xff]
    %v6321 = vld [vmem:[%s6300 + $0xa0] sm:$0xff]
    %v6322 = vld [vmem:[%s6300 + $0xa8] sm:$0xff]
    %v6323 = vld [vmem:[%s6300 + $0xb0] sm:$0xff]
    %v6324 = vld [vmem:[%s6300 + $0xb8] sm:$0xff]
    %v6325 = vld [vmem:[%s6300 + $0xc0] sm:$0xff]
    %v6326 = vld [vmem:[%s6300 + $0xc8] sm:$0xff]
    %v6327 = vld [vmem:[%s6300 + $0xd0] sm:$0xff]
    %v6328 = vld [vmem:[%s6300 + $0xd8] sm:$0xff]
    %v6329 = vld [vmem:[%s6300 + $0xe0] sm:$0xff]
    %v6330 = vld [vmem:[%s6300 + $0xe8] sm:$0xff]
    %v6331 = vld [vmem:[%s6300 + $0xf0] sm:$0xff]
    %v6332 = vld [vmem:[%s6300 + $0xf8] sm:$0xff]
    %v6333 = vld [vmem:[%s6300 + $0x100] sm:$0xff]
    %v6334 = vld [vmem:[%s6300 + $0x108] sm:$0xff]
    %v6335 = vld [vmem:[%s6300 + $0x110] sm:$0xff]
    %v6336 = vld [vmem:[%s6300 + $0x118] sm:$0xff]
    %v6337 = vld [vmem:[%s6300 + $0x120] sm:$0xff]
    %v6338 = vld [vmem:[%s6300 + $0x128] sm:$0xff]
    %v6339 = vld [vmem:[%s6300 + $0x130] sm:$0xff]
    %v6340 = vld [vmem:[%s6300 + $0x138] sm:$0xff]
    %v6341 = vld [vmem:[%s6300 + $0x140] sm:$0xff]
    %v6342 = vld [vmem:[%s6300 + $0x148] sm:$0xff]
    %v6343 = vld [vmem:[%s6300 + $0x150] sm:$0xff]
    %v6344 = vld [vmem:[%s6300 + $0x158] sm:$0xff]
    %v6345 = vld [vmem:[%s6300 + $0x160] sm:$0xff]
    %v6346 = vld [vmem:[%s6300 + $0x168] sm:$0xff]
    %v6347 = vld [vmem:[%s6300 + $0x170] sm:$0xff]
    %v6348 = vld [vmem:[%s6300 + $0x178] sm:$0xff]
    %v6349 = vld [vmem:[%s6300 + $0x180] sm:$0xff]
    %v6350 = vld [vmem:[%s6300 + $0x188] sm:$0xff]
    %v6351 = vld [vmem:[%s6300 + $0x190] sm:$0xff]
    %v6352 = vld [vmem:[%s6300 + $0x198] sm:$0xff]
    %v6353 = vld [vmem:[%s6300 + $0x1a0] sm:$0xff]
    %v6354 = vld [vmem:[%s6300 + $0x1a8] sm:$0xff]
    %v6355 = vld [vmem:[%s6300 + $0x1b0] sm:$0xff]
    %v6356 = vld [vmem:[%s6300 + $0x1b8] sm:$0xff]
    %v6357 = vld [vmem:[%s6300 + $0x1c0] sm:$0xff]
    %v6358 = vld [vmem:[%s6300 + $0x1c8] sm:$0xff]
    %v6359 = vld [vmem:[%s6300 + $0x1d0] sm:$0xff]
    %v6360 = vld [vmem:[%s6300 + $0x1d8] sm:$0xff]
    %v6361 = vld [vmem:[%s6300 + $0x1e0] sm:$0xff]
    %v6362 = vld [vmem:[%s6300 + $0x1e8] sm:$0xff]
    %v6363 = vld [vmem:[%s6300 + $0x1f0] sm:$0xff]
    %v6364 = vld [vmem:[%s6300 + $0x1f8] sm:$0xff]
    %v6365 = vld [vmem:[%s6300 + $0x200] sm:$0xff]
    %v6366 = vld [vmem:[%s6300 + $0x208] sm:$0xff]
    %v6367 = vld [vmem:[%s6300 + $0x210] sm:$0xff]
    %v6368 = vld [vmem:[%s6300 + $0x218] sm:$0xff]
    %v6369 = vld [vmem:[%s6300 + $0x220] sm:$0xff]
    %v6370 = vld [vmem:[%s6300 + $0x228] sm:$0xff]
    %v6371 = vld [vmem:[%s6300 + $0x230] sm:$0xff]
    %v6372 = vld [vmem:[%s6300 + $0x238] sm:$0xff]
    %v6373 = vld [vmem:[%s6300 + $0x240] sm:$0xff]
    %v6374 = vld [vmem:[%s6300 + $0x248] sm:$0xff]
    %v6375 = vld [vmem:[%s6300 + $0x250] sm:$0xff]
    %v6376 = vld [vmem:[%s6300 + $0x258] sm:$0xff]
    %v6377 = vld [vmem:[%s6300 + $0x260] sm:$0xff]
    %v6378 = vld [vmem:[%s6300 + $0x268] sm:$0xff]
    %v6379 = vld [vmem:[%s6300 + $0x270] sm:$0xff]
    %v6380 = vld [vmem:[%s6300 + $0x278] sm:$0xff]
    %v6381 = vld [vmem:[%s6300 + $0x280] sm:$0xff]
    %v6382 = vld [vmem:[%s6300 + $0x288] sm:$0xff]
    %v6383 = vld [vmem:[%s6300 + $0x290] sm:$0xff]
    %v6384 = vld [vmem:[%s6300 + $0x298] sm:$0xff]
    %v6385 = vld [vmem:[%s6300 + $0x2a0] sm:$0xff]
    %v6386 = vld [vmem:[%s6300 + $0x2a8] sm:$0xff]
    %v6387 = vld [vmem:[%s6300 + $0x2b0] sm:$0xff]
    %v6388 = vld [vmem:[%s6300 + $0x2b8] sm:$0xff]
    %v6390 = vsel %vm2173, %v5355, 0
    %6392 = vmatprep.subr.mxu0 %v6362
    %6393 = vmatpush1.msra.mxu0 %v6361
    %6394 = vmatprep.subr.mxu0 %v6358
    %6395 = vmatpush1.msra.mxu0 %v6357
    %6396 = vmatprep.subr.mxu0 %v6354
    %6397 = vmatpush1.msra.mxu0 %v6353
    %6398 = vmatprep.subr.mxu0 %v6350
    %6399 = vmatpush1.msra.mxu0 %v6349
    %6400 = vmatprep.subr.mxu0 %v6346
    %6401 = vmatpush1.msra.mxu0 %v6345
    %6402 = vmatprep.subr.mxu0 %v6342
    %6403 = vmatpush1.msra.mxu0 %v6341
    %6404 = vmatprep.subr.mxu0 %v6338
    %6405 = vmatpush1.msra.mxu0 %v6337
    %6406 = vmatprep.subr.mxu0 %v6334
    %6407 = vmatpush1.msra.mxu0 %v6333
    %6408 = vmatprep.subr.mxu0 %v6330
    %6409 = vmatpush1.msra.mxu0 %v6329
    %6410 = vmatprep.subr.mxu0 %v6326
    %6411 = vmatpush1.msra.mxu0 %v6325
    %6412 = vmatprep.subr.mxu0 %v6322
    %6413 = vmatpush1.msra.mxu0 %v6321
    %6414 = vmatprep.subr.mxu0 %v6318
    %6415 = vmatpush1.msra.mxu0 %v6317
    %6416 = vmatprep.subr.mxu0 %v6314
    %6417 = vmatpush1.msra.mxu0 %v6313
    %6418 = vmatprep.subr.mxu0 %v6310
    %6419 = vmatpush1.msra.mxu0 %v6309
    %6420 = vmatprep.subr.mxu0 %v6306
    %6421 = vmatpush1.msra.mxu0 %v6305
    %6422 = vmatprep.subr.mxu0 %v6302
    %6423 = vmatpush1.msra.mxu0 %v6301
    %6424 = vmatprep.subr.mxu0 0.0
    %6425 = vmatpush2.msra.mxu0 0.0
    %6426 = vmatprep.subr.mxu0 0.0
    %6427 = vmatpush2.msra.mxu0 0.0
    %6428 = vmatprep.subr.mxu0 0.0
    %6429 = vmatpush2.msra.mxu0 0.0
    %6430 = vmatprep.subr.mxu0 0.0
    %6431 = vmatpush2.msra.mxu0 0.0
    %6432 = vmatprep.subr.mxu0 0.0
    %6433 = vmatpush2.msra.mxu0 0.0
    %6434 = vmatprep.subr.mxu0 0.0
    %6435 = vmatpush2.msra.mxu0 0.0
    %6436 = vmatprep.subr.mxu0 0.0
    %6437 = vmatpush2.msra.mxu0 0.0
    %6438 = vmatprep.subr.mxu0 0.0
    %6439 = vmatpush2.msra.mxu0 0.0
    %6440 = vmatprep.subr.mxu0 0.0
    %6441 = vmatpush2.msra.mxu0 0.0
    %6442 = vmatprep.subr.mxu0 0.0
    %6443 = vmatpush2.msra.mxu0 0.0
    %6444 = vmatprep.subr.mxu0 %v6386
    %6445 = vmatpush2.msra.mxu0 %v6385
    %6446 = vmatprep.subr.mxu0 %v6382
    %6447 = vmatpush2.msra.mxu0 %v6381
    %6448 = vmatprep.subr.mxu0 %v6378
    %6449 = vmatpush2.msra.mxu0 %v6377
    %6450 = vmatprep.subr.mxu0 %v6374
    %6451 = vmatpush2.msra.mxu0 %v6373
    %6452 = vmatprep.subr.mxu0 %v6370
    %6453 = vmatpush2.msra.mxu0 %v6369
    %6454 = vmatprep.subr.mxu0 %v6366
    %6455 = vmatpush2.msra.mxu0 %v6365
    %6456 = vmatprep.mubr.f32.mxu0 %v6390
    %6457 = vmatmul.mubr.f32.gmra.mxu0 %v5353
    %v6458 = vpop.f32.mrf.mxu0
    %v6459 = vadd.f32 0.0, %v6458
    %v6460 = vpop.f32.mrf.mxu0
    %v6461 = vadd.f32 0.0, %v6460
    %6462 = vdwg.mxu0
    %6463 = vmatprep.subr.mxu0 %v6364
    %6464 = vmatpush1.msra.mxu0 %v6363
    %6465 = vmatprep.subr.mxu0 %v6360
    %6466 = vmatpush1.msra.mxu0 %v6359
    %6467 = vmatprep.subr.mxu0 %v6356
    %6468 = vmatpush1.msra.mxu0 %v6355
    %6469 = vmatprep.subr.mxu0 %v6352
    %6470 = vmatpush1.msra.mxu0 %v6351
    %6471 = vmatprep.subr.mxu0 %v6348
    %6472 = vmatpush1.msra.mxu0 %v6347
    %6473 = vmatprep.subr.mxu0 %v6344
    %6474 = vmatpush1.msra.mxu0 %v6343
    %6475 = vmatprep.subr.mxu0 %v6340
    %6476 = vmatpush1.msra.mxu0 %v6339
    %6477 = vmatprep.subr.mxu0 %v6336
    %6478 = vmatpush1.msra.mxu0 %v6335
    %6479 = vmatprep.subr.mxu0 %v6332
    %6480 = vmatpush1.msra.mxu0 %v6331
    %6481 = vmatprep.subr.mxu0 %v6328
    %6482 = vmatpush1.msra.mxu0 %v6327
    %6483 = vmatprep.subr.mxu0 %v6324
    %6484 = vmatpush1.msra.mxu0 %v6323
    %6485 = vmatprep.subr.mxu0 %v6320
    %6486 = vmatpush1.msra.mxu0 %v6319
    %6487 = vmatprep.subr.mxu0 %v6316
    %6488 = vmatpush1.msra.mxu0 %v6315
    %6489 = vmatprep.subr.mxu0 %v6312
    %6490 = vmatpush1.msra.mxu0 %v6311
    %6491 = vmatprep.subr.mxu0 %v6308
    %6492 = vmatpush1.msra.mxu0 %v6307
    %6493 = vmatprep.subr.mxu0 %v6304
    %6494 = vmatpush1.msra.mxu0 %v6303
    %6495 = vmatprep.subr.mxu0 0.0
    %6496 = vmatpush2.msra.mxu0 0.0
    %6497 = vmatprep.subr.mxu0 0.0
    %6498 = vmatpush2.msra.mxu0 0.0
    %6499 = vmatprep.subr.mxu0 0.0
    %6500 = vmatpush2.msra.mxu0 0.0
    %6501 = vmatprep.subr.mxu0 0.0
    %6502 = vmatpush2.msra.mxu0 0.0
    %6503 = vmatprep.subr.mxu0 0.0
    %6504 = vmatpush2.msra.mxu0 0.0
    %6505 = vmatprep.subr.mxu0 0.0
    %6506 = vmatpush2.msra.mxu0 0.0
    %6507 = vmatprep.subr.mxu0 0.0
    %6508 = vmatpush2.msra.mxu0 0.0
    %6509 = vmatprep.subr.mxu0 0.0
    %6510 = vmatpush2.msra.mxu0 0.0
    %6511 = vmatprep.subr.mxu0 0.0
    %6512 = vmatpush2.msra.mxu0 0.0
    %6513 = vmatprep.subr.mxu0 0.0
    %6514 = vmatpush2.msra.mxu0 0.0
    %6515 = vmatprep.subr.mxu0 %v6388
    %6516 = vmatpush2.msra.mxu0 %v6387
    %6517 = vmatprep.subr.mxu0 %v6384
    %6518 = vmatpush2.msra.mxu0 %v6383
    %6519 = vmatprep.subr.mxu0 %v6380
    %6520 = vmatpush2.msra.mxu0 %v6379
    %6521 = vmatprep.subr.mxu0 %v6376
    %6522 = vmatpush2.msra.mxu0 %v6375
    %6523 = vmatprep.subr.mxu0 %v6372
    %6524 = vmatpush2.msra.mxu0 %v6371
    %6525 = vmatprep.subr.mxu0 %v6368
    %6526 = vmatpush2.msra.mxu0 %v6367
    %6527 = vmatprep.mubr.f32.mxu0 %v6390
    %6528 = vmatmul.mubr.f32.gmra.mxu0 %v5353
    %v6529 = vpop.f32.mrf.mxu0
    %v6530 = vadd.f32 0.0, %v6529
    %v6531 = vpop.f32.mrf.mxu0
    %v6532 = vadd.f32 0.0, %v6531
    %6533 = vdwg.mxu0
    %v6534 = vadd.f32 %v6296, %v6459
    %v6535 = vadd.f32 %v6297, %v6461
    %v6536 = vadd.f32 %v6298, %v6530
    %v6537 = vadd.f32 %v6299, %v6532
    %v6538 = vld [vmem:[#allocation19] sm:$0xf]
    %v6540 = vlaneseq
    %v6541 = vshrl.u32 %v6540, 7
    %v6542 = vsub.s32 0, %v6541
    %v6543 = vrot.slane %v6538, %v6542
    %v6544 = vlaneseq
    %v6545 = vshrl.u32 %v6544, 7
    %v6546 = vsub.s32 1, %v6545
    %v6547 = vrot.slane %v6538, %v6546
    %v6548 = vlaneseq
    %v6549 = vshrl.u32 %v6548, 7
    %v6550 = vsub.s32 2, %v6549
    %v6551 = vrot.slane %v6538, %v6550
    %v6552 = vlaneseq
    %v6553 = vshrl.u32 %v6552, 7
    %v6554 = vsub.s32 3, %v6553
    %v6555 = vrot.slane %v6538, %v6554
    %v6560 = vadd.f32 %v6534, %v6543
    %v6561 = vadd.f32 %v6535, %v6547
    %v6562 = vadd.f32 %v6536, %v6551
    %v6563 = vadd.f32 %v6537, %v6555
    %v6564 = vmax.f32 %v6560, 0.0
    %v6565 = vmax.f32 %v6561, 0.0
    %v6566 = vmax.f32 %v6562, 0.0
    %v6567 = vmax.f32 %v6563, 0.0
    %v6568 = vld [vmem:[%s13] sm:$0xff]
    %v6569 = vld [vmem:[%s13 + $0x8] sm:$0xff]
    %v6570 = vld [vmem:[%s13 + $0x10] sm:$0xff]
    %v6571 = vld [vmem:[%s13 + $0x18] sm:$0xff]
    %v6572 = vld [vmem:[%s13 + $0x20] sm:$0xff]
    %v6573 = vld [vmem:[%s13 + $0x28] sm:$0xff]
    %v6574 = vld [vmem:[%s13 + $0x30] sm:$0xff]
    %v6575 = vld [vmem:[%s13 + $0x38] sm:$0xff]
    %v6576 = vld [vmem:[%s13 + $0x40] sm:$0xff]
    %v6577 = vld [vmem:[%s13 + $0x48] sm:$0xff]
    %v6578 = vld [vmem:[%s13 + $0x50] sm:$0xff]
    %v6579 = vld [vmem:[%s13 + $0x58] sm:$0xff]
    %v6580 = vld [vmem:[%s13 + $0x60] sm:$0xff]
    %v6581 = vld [vmem:[%s13 + $0x68] sm:$0xff]
    %v6582 = vld [vmem:[%s13 + $0x70] sm:$0xff]
    %v6583 = vld [vmem:[%s13 + $0x78] sm:$0xff]
    %v6584 = vld [vmem:[%s13 + $0x80] sm:$0xff]
    %v6585 = vld [vmem:[%s13 + $0x88] sm:$0xff]
    %v6586 = vld [vmem:[%s13 + $0x90] sm:$0xff]
    %v6587 = vld [vmem:[%s13 + $0x98] sm:$0xff]
    %v6588 = vld [vmem:[%s13 + $0xa0] sm:$0xff]
    %v6589 = vld [vmem:[%s13 + $0xa8] sm:$0xff]
    %v6590 = vld [vmem:[%s13 + $0xb0] sm:$0xff]
    %v6591 = vld [vmem:[%s13 + $0xb8] sm:$0xff]
    %v6592 = vld [vmem:[%s13 + $0xc0] sm:$0xff]
    %v6593 = vld [vmem:[%s13 + $0xc8] sm:$0xff]
    %v6594 = vld [vmem:[%s13 + $0xd0] sm:$0xff]
    %v6595 = vld [vmem:[%s13 + $0xd8] sm:$0xff]
    %v6596 = vld [vmem:[%s13 + $0xe0] sm:$0xff]
    %v6597 = vld [vmem:[%s13 + $0xe8] sm:$0xff]
    %v6598 = vld [vmem:[%s13 + $0xf0] sm:$0xff]
    %v6599 = vld [vmem:[%s13 + $0xf8] sm:$0xff]
    %v6600 = vld [vmem:[%s13 + $0x100] sm:$0xff]
    %v6601 = vld [vmem:[%s13 + $0x108] sm:$0xff]
    %v6602 = vld [vmem:[%s13 + $0x110] sm:$0xff]
    %v6603 = vld [vmem:[%s13 + $0x118] sm:$0xff]
    %v6604 = vld [vmem:[%s13 + $0x120] sm:$0xff]
    %v6605 = vld [vmem:[%s13 + $0x128] sm:$0xff]
    %v6606 = vld [vmem:[%s13 + $0x130] sm:$0xff]
    %v6607 = vld [vmem:[%s13 + $0x138] sm:$0xff]
    %v6608 = vld [vmem:[%s13 + $0x140] sm:$0xff]
    %v6609 = vld [vmem:[%s13 + $0x148] sm:$0xff]
    %v6610 = vld [vmem:[%s13 + $0x150] sm:$0xff]
    %v6611 = vld [vmem:[%s13 + $0x158] sm:$0xff]
    %v6612 = vld [vmem:[%s13 + $0x160] sm:$0xff]
    %v6613 = vld [vmem:[%s13 + $0x168] sm:$0xff]
    %v6614 = vld [vmem:[%s13 + $0x170] sm:$0xff]
    %v6615 = vld [vmem:[%s13 + $0x178] sm:$0xff]
    %v6616 = vld [vmem:[%s13 + $0x180] sm:$0xff]
    %v6617 = vld [vmem:[%s13 + $0x188] sm:$0xff]
    %v6618 = vld [vmem:[%s13 + $0x190] sm:$0xff]
    %v6619 = vld [vmem:[%s13 + $0x198] sm:$0xff]
    %v6620 = vld [vmem:[%s13 + $0x1a0] sm:$0xff]
    %v6621 = vld [vmem:[%s13 + $0x1a8] sm:$0xff]
    %v6622 = vld [vmem:[%s13 + $0x1b0] sm:$0xff]
    %v6623 = vld [vmem:[#allocation21] sm:$0x1]
    %v6625 = vlaneseq
    %v6626 = vshrl.u32 %v6625, 7
    %v6627 = vsub.s32 0, %v6626
    %v6628 = vrot.slane %v6623, %v6627
    %vm6630 = vcmask 457728
    %v6632 = vsel %vm6630, %v6567, 0
    %6634 = vmatprep.subr.mxu0 0.0
    %6635 = vmatpush1.msra.mxu0 %v6583
    %6636 = vmatprep.subr.mxu0 0.0
    %6637 = vmatpush1.msra.mxu0 %v6582
    %6638 = vmatprep.subr.mxu0 0.0
    %6639 = vmatpush1.msra.mxu0 %v6581
    %6640 = vmatprep.subr.mxu0 0.0
    %6641 = vmatpush1.msra.mxu0 %v6580
    %6642 = vmatprep.subr.mxu0 0.0
    %6643 = vmatpush1.msra.mxu0 %v6579
    %6644 = vmatprep.subr.mxu0 0.0
    %6645 = vmatpush1.msra.mxu0 %v6578
    %6646 = vmatprep.subr.mxu0 0.0
    %6647 = vmatpush1.msra.mxu0 %v6577
    %6648 = vmatprep.subr.mxu0 0.0
    %6649 = vmatpush1.msra.mxu0 %v6576
    %6650 = vmatprep.subr.mxu0 0.0
    %6651 = vmatpush1.msra.mxu0 %v6575
    %6652 = vmatprep.subr.mxu0 0.0
    %6653 = vmatpush1.msra.mxu0 %v6574
    %6654 = vmatprep.subr.mxu0 0.0
    %6655 = vmatpush1.msra.mxu0 %v6573
    %6656 = vmatprep.subr.mxu0 0.0
    %6657 = vmatpush1.msra.mxu0 %v6572
    %6658 = vmatprep.subr.mxu0 0.0
    %6659 = vmatpush1.msra.mxu0 %v6571
    %6660 = vmatprep.subr.mxu0 0.0
    %6661 = vmatpush1.msra.mxu0 %v6570
    %6662 = vmatprep.subr.mxu0 0.0
    %6663 = vmatpush1.msra.mxu0 %v6569
    %6664 = vmatprep.subr.mxu0 0.0
    %6665 = vmatpush1.msra.mxu0 %v6568
    %6666 = vmatprep.subr.mxu0 0.0
    %6667 = vmatpush2.msra.mxu0 %v6599
    %6668 = vmatprep.subr.mxu0 0.0
    %6669 = vmatpush2.msra.mxu0 %v6598
    %6670 = vmatprep.subr.mxu0 0.0
    %6671 = vmatpush2.msra.mxu0 %v6597
    %6672 = vmatprep.subr.mxu0 0.0
    %6673 = vmatpush2.msra.mxu0 %v6596
    %6674 = vmatprep.subr.mxu0 0.0
    %6675 = vmatpush2.msra.mxu0 %v6595
    %6676 = vmatprep.subr.mxu0 0.0
    %6677 = vmatpush2.msra.mxu0 %v6594
    %6678 = vmatprep.subr.mxu0 0.0
    %6679 = vmatpush2.msra.mxu0 %v6593
    %6680 = vmatprep.subr.mxu0 0.0
    %6681 = vmatpush2.msra.mxu0 %v6592
    %6682 = vmatprep.subr.mxu0 0.0
    %6683 = vmatpush2.msra.mxu0 %v6591
    %6684 = vmatprep.subr.mxu0 0.0
    %6685 = vmatpush2.msra.mxu0 %v6590
    %6686 = vmatprep.subr.mxu0 0.0
    %6687 = vmatpush2.msra.mxu0 %v6589
    %6688 = vmatprep.subr.mxu0 0.0
    %6689 = vmatpush2.msra.mxu0 %v6588
    %6690 = vmatprep.subr.mxu0 0.0
    %6691 = vmatpush2.msra.mxu0 %v6587
    %6692 = vmatprep.subr.mxu0 0.0
    %6693 = vmatpush2.msra.mxu0 %v6586
    %6694 = vmatprep.subr.mxu0 0.0
    %6695 = vmatpush2.msra.mxu0 %v6585
    %6696 = vmatprep.subr.mxu0 0.0
    %6697 = vmatpush2.msra.mxu0 %v6584
    %6698 = vmatprep.mubr.f32.mxu0 %v6565
    %6699 = vmatmul.mubr.f32.gmra.mxu0 %v6564
    %v6700 = vpop.f32.mrf.mxu0
    %v6701 = vadd.f32 %v6628, %v6700
    %v6702 = vpop.f32.mrf.mxu0
    %6703 = vdwg.mxu0
    %6704 = vmatprep.subr.mxu0 0.0
    %6705 = vmatpush1.msra.mxu0 %v6615
    %6706 = vmatprep.subr.mxu0 0.0
    %6707 = vmatpush1.msra.mxu0 %v6614
    %6708 = vmatprep.subr.mxu0 0.0
    %6709 = vmatpush1.msra.mxu0 %v6613
    %6710 = vmatprep.subr.mxu0 0.0
    %6711 = vmatpush1.msra.mxu0 %v6612
    %6712 = vmatprep.subr.mxu0 0.0
    %6713 = vmatpush1.msra.mxu0 %v6611
    %6714 = vmatprep.subr.mxu0 0.0
    %6715 = vmatpush1.msra.mxu0 %v6610
    %6716 = vmatprep.subr.mxu0 0.0
    %6717 = vmatpush1.msra.mxu0 %v6609
    %6718 = vmatprep.subr.mxu0 0.0
    %6719 = vmatpush1.msra.mxu0 %v6608
    %6720 = vmatprep.subr.mxu0 0.0
    %6721 = vmatpush1.msra.mxu0 %v6607
    %6722 = vmatprep.subr.mxu0 0.0
    %6723 = vmatpush1.msra.mxu0 %v6606
    %6724 = vmatprep.subr.mxu0 0.0
    %6725 = vmatpush1.msra.mxu0 %v6605
    %6726 = vmatprep.subr.mxu0 0.0
    %6727 = vmatpush1.msra.mxu0 %v6604
    %6728 = vmatprep.subr.mxu0 0.0
    %6729 = vmatpush1.msra.mxu0 %v6603
    %6730 = vmatprep.subr.mxu0 0.0
    %6731 = vmatpush1.msra.mxu0 %v6602
    %6732 = vmatprep.subr.mxu0 0.0
    %6733 = vmatpush1.msra.mxu0 %v6601
    %6734 = vmatprep.subr.mxu0 0.0
    %6735 = vmatpush1.msra.mxu0 %v6600
    %6736 = vmatprep.subr.mxu0 0.0
    %6737 = vmatpush2.msra.mxu0 0.0
    %6738 = vmatprep.subr.mxu0 0.0
    %6739 = vmatpush2.msra.mxu0 0.0
    %6740 = vmatprep.subr.mxu0 0.0
    %6741 = vmatpush2.msra.mxu0 0.0
    %6742 = vmatprep.subr.mxu0 0.0
    %6743 = vmatpush2.msra.mxu0 0.0
    %6744 = vmatprep.subr.mxu0 0.0
    %6745 = vmatpush2.msra.mxu0 0.0
    %6746 = vmatprep.subr.mxu0 0.0
    %6747 = vmatpush2.msra.mxu0 0.0
    %6748 = vmatprep.subr.mxu0 0.0
    %6749 = vmatpush2.msra.mxu0 0.0
    %6750 = vmatprep.subr.mxu0 0.0
    %6751 = vmatpush2.msra.mxu0 0.0
    %6752 = vmatprep.subr.mxu0 0.0
    %6753 = vmatpush2.msra.mxu0 0.0
    %6754 = vmatprep.subr.mxu0 0.0
    %6755 = vmatpush2.msra.mxu0 %v6622
    %6756 = vmatprep.subr.mxu0 0.0
    %6757 = vmatpush2.msra.mxu0 %v6621
    %6758 = vmatprep.subr.mxu0 0.0
    %6759 = vmatpush2.msra.mxu0 %v6620
    %6760 = vmatprep.subr.mxu0 0.0
    %6761 = vmatpush2.msra.mxu0 %v6619
    %6762 = vmatprep.subr.mxu0 0.0
    %6763 = vmatpush2.msra.mxu0 %v6618
    %6764 = vmatprep.subr.mxu0 0.0
    %6765 = vmatpush2.msra.mxu0 %v6617
    %6766 = vmatprep.subr.mxu0 0.0
    %6767 = vmatpush2.msra.mxu0 %v6616
    %6768 = vmatprep.mubr.f32.mxu0 %v6632
    %6769 = vmatmul.mubr.f32.gmra.mxu0 %v6566
    %v6770 = vpop.f32.mrf.mxu0
    %v6771 = vadd.f32 %v6701, %v6770
    %v6772 = vpop.f32.mrf.mxu0
    %6773 = vdwg.mxu0
    %v6774 = vmax.f32 %v6771, 0.0
    %v6775 = vld [vmem:[#allocation22] sm:$0xff]
    %v6776 = vld [vmem:[#allocation22 + $0x8] sm:$0xff]
    %v6777 = vld [vmem:[#allocation22 + $0x10] sm:$0xff]
    %v6778 = vld [vmem:[#allocation22 + $0x18] sm:$0xff]
    %v6779 = vld [vmem:[#allocation24] sm:$0x1]
    %v6781 = vlaneseq
    %v6782 = vshrl.u32 %v6781, 7
    %v6783 = vsub.s32 0, %v6782
    %v6784 = vrot.slane %v6779, %v6783
    %vm6786 = vcmask 261120
    %v6788 = vsel %vm6786, %v6774, 0
    %6790 = vmatprep.subr.mxu0 0.0
    %6791 = vmatpush1.msra.mxu0 0.0
    %6792 = vmatprep.subr.mxu0 0.0
    %6793 = vmatpush1.msra.mxu0 0.0
    %6794 = vmatprep.subr.mxu0 0.0
    %6795 = vmatpush1.msra.mxu0 0.0
    %6796 = vmatprep.subr.mxu0 0.0
    %6797 = vmatpush1.msra.mxu0 0.0
    %6798 = vmatprep.subr.mxu0 0.0
    %6799 = vmatpush1.msra.mxu0 0.0
    %6800 = vmatprep.subr.mxu0 0.0
    %6801 = vmatpush1.msra.mxu0 0.0
    %6802 = vmatprep.subr.mxu0 0.0
    %6803 = vmatpush1.msra.mxu0 0.0
    %6804 = vmatprep.subr.mxu0 0.0
    %6805 = vmatpush1.msra.mxu0 0.0
    %6806 = vmatprep.subr.mxu0 0.0
    %6807 = vmatpush1.msra.mxu0 0.0
    %6808 = vmatprep.subr.mxu0 0.0
    %6809 = vmatpush1.msra.mxu0 0.0
    %6810 = vmatprep.subr.mxu0 0.0
    %6811 = vmatpush1.msra.mxu0 0.0
    %6812 = vmatprep.subr.mxu0 0.0
    %6813 = vmatpush1.msra.mxu0 0.0
    %6814 = vmatprep.subr.mxu0 0.0
    %6815 = vmatpush1.msra.mxu0 %v6778
    %6816 = vmatprep.subr.mxu0 0.0
    %6817 = vmatpush1.msra.mxu0 %v6777
    %6818 = vmatprep.subr.mxu0 0.0
    %6819 = vmatpush1.msra.mxu0 %v6776
    %6820 = vmatprep.subr.mxu0 0.0
    %6821 = vmatpush1.msra.mxu0 %v6775
    %6822 = vmatprep.subr.mxu0 0.0
    %6823 = vmatpush2.msra.mxu0 0.0
    %6824 = vmatprep.subr.mxu0 0.0
    %6825 = vmatpush2.msra.mxu0 0.0
    %6826 = vmatprep.subr.mxu0 0.0
    %6827 = vmatpush2.msra.mxu0 0.0
    %6828 = vmatprep.subr.mxu0 0.0
    %6829 = vmatpush2.msra.mxu0 0.0
    %6830 = vmatprep.subr.mxu0 0.0
    %6831 = vmatpush2.msra.mxu0 0.0
    %6832 = vmatprep.subr.mxu0 0.0
    %6833 = vmatpush2.msra.mxu0 0.0
    %6834 = vmatprep.subr.mxu0 0.0
    %6835 = vmatpush2.msra.mxu0 0.0
    %6836 = vmatprep.subr.mxu0 0.0
    %6837 = vmatpush2.msra.mxu0 0.0
    %6838 = vmatprep.subr.mxu0 0.0
    %6839 = vmatpush2.msra.mxu0 0.0
    %6840 = vmatprep.subr.mxu0 0.0
    %6841 = vmatpush2.msra.mxu0 0.0
    %6842 = vmatprep.subr.mxu0 0.0
    %6843 = vmatpush2.msra.mxu0 0.0
    %6844 = vmatprep.subr.mxu0 0.0
    %6845 = vmatpush2.msra.mxu0 0.0
    %6846 = vmatprep.subr.mxu0 0.0
    %6847 = vmatpush2.msra.mxu0 0.0
    %6848 = vmatprep.subr.mxu0 0.0
    %6849 = vmatpush2.msra.mxu0 0.0
    %6850 = vmatprep.subr.mxu0 0.0
    %6851 = vmatpush2.msra.mxu0 0.0
    %6852 = vmatprep.subr.mxu0 0.0
    %6853 = vmatpush2.msra.mxu0 0.0
    %6854 = vmatprep.mubr.f32.mxu0 0.0
    %6855 = vmatmul.mubr.f32.gmra.mxu0 %v6788
    %v6856 = vpop.f32.mrf.mxu0
    %v6857 = vadd.f32 %v6784, %v6856
    %v6858 = vpop.f32.mrf.mxu0
    %6859 = vdwg.mxu0
    %v6860 = vsub.f32 %v6857, %v3376
    %v6861 = vadd.f32 %v6860, 1e-06
    %v6862 = vmul.f32 %v6861, %v6861
    %vm6863 = vcmask 254976
    %v6864 = vsel %vm6863, %v6862, 0.0
    %6865 = vadd.xlane.f32.xlu0 %v6864
    %v6866 = vpop.xlane.xlu0 %6865
    %v6867 = vrsqrt.pop %v6866
    %v6868 = vmul.f32 %v6866, %v6867
    %vm6869 = vcmp.eq.f32.partialorder %v6866, inf
    %v6870 = vsel %vm6869, %v6866, %v6868
    %vm6871 = vcmp.eq.f32.partialorder %v6866, 0.0
    %v6872 = vand.u32 %v6866, 2147483648
    %v6873 = vsel %vm6871, %v6872, %v6870
    %vm6874 = vcmask 1024
    %6875 = vst.msk [vmem:[%s25] sm:$0x3] %vm6874, %v6873
    // Predicated region
    $region190: #{rnd_forward.1} parent=1 // pred_check
      _
    $region191: #{rnd_forward.1} parent=1 // pred_check_branch
      %6877 = sbr.rel (0) target = $region193
    $region192: #{rnd_forward.1} parent=1 // pred_region
      _
    $region193: #{rnd_forward.1} parent=1 // pred_fallthru
      _
    // Predicated region
    $region194: #{rnd_forward.1} parent=1 // pred_check
      _
    $region195: #{rnd_forward.1} parent=1 // pred_check_branch
      %6879 = sbr.rel (0) target = $region197
    $region196: #{rnd_forward.1} parent=1 // pred_region
      _
    $region197: #{rnd_forward.1} parent=1 // pred_fallthru
      _
    %6880 = vsyncpa [#allocation3], 1
    %6881 = vsyncpa [#allocation5], 1
    %6882 = vsyncpa [#allocation8], 1
    %6883 = vsyncpa [#allocation11], 1
    %6884 = vsyncpa [#allocation14], 1
    %6885 = vsyncpa [#allocation17], 1
    %6886 = vsyncpa [#allocation20], 1
    %6887 = vsyncpa [#allocation23], 1
    %6888 = vsyncpa [#allocation26], 1
    %6889 = vsyncpa [#allocation29], 1
    %6890 = vsyncpa [#allocation32], 1
    %6891 = vsyncpa [#allocation35], 1

</llo_original>
